<compile_context>
chip_gen: v6e
topology: v6e:2x2x1
jax: 0.10.0
libtpu: 0.0.40
codegen_flags: <defaults>
</compile_context>

<pallas_src>
import math

import jax
import jax.numpy as jnp
from jax.experimental import pallas as pl
from jax.experimental.pallas import tpu as pltpu


def _make_convnext_kernel(exact_gelu):
    def kernel(x_ref, dwk_ref, dwb_ref, lng_ref, lnb_ref,
               w1_ref, b1_ref, w2_ref, b2_ref,
               out_ref, pad_ref):
        # x_ref/out_ref: (1, H, W, C); pad_ref: (H+6, W+6, C) VMEM scratch.
        # dwk (7,7,C) f32; 1-D params shipped as (1,C)/(1,4C) f32;
        # w1 (C,4C) bf16; w2 (4C,C) bf16.
        _, H, W, C = x_ref.shape

        # ---- zero-padded halo: zero ONLY the 3-wide border strips (the
        # scratch persists across grid steps, so re-zeroing the tiny border is
        # cheap insurance); the interior is written exactly once.
        zrow = jnp.zeros((3, W + 6, C), jnp.float32)
        pad_ref[0:3, :, :] = zrow                      # top rows (leading axis)
        pad_ref[H + 3:H + 6, :, :] = zrow              # bottom rows
        zcol = jnp.zeros((H, 3, C), jnp.float32)
        pad_ref[3:3 + H, 0:3, :] = zcol                # left columns
        pad_ref[3:3 + H, W + 3:W + 6, :] = zcol        # right columns
        pad_ref[3:3 + H, 3:3 + W, :] = x_ref[0]        # interior, single write

        xpad = pad_ref[...]                            # (H+6, W+6, C)
        dwk = dwk_ref[...]                             # (7, 7, C)

        # ---- depthwise 7x7 conv (VPU) ----
        # One sublane-shifted W-band per kw (7 bands, 6 misaligned); the kh
        # loop only slices the untiled leading axis (free).  The accumulator
        # is seeded by the first tap instead of zeros + add.
        acc = None
        for kw in range(7):
            band = xpad[:, kw:kw + W, :]               # (H+6, W, C)
            for kh in range(7):
                term = band[kh:kh + H, :, :] * dwk[kh, kw]
                acc = term if acc is None else acc + term
        acc = acc + dwb_ref[0]                         # (C,) broadcast

        # ---- LayerNorm over channels: single-pass stats (f32) ----
        xc = acc.reshape(H * W, C)                     # sublane merge only (free)
        inv_c = 1.0 / C
        s1 = jnp.sum(xc, axis=-1, keepdims=True)
        s2 = jnp.sum(xc * xc, axis=-1, keepdims=True)
        mean = s1 * inv_c
        var = s2 * inv_c - mean * mean                 # E[x^2] - mean^2
        xn = (xc - mean) * jax.lax.rsqrt(var + 1e-6)
        xn = xn * lng_ref[0] + lnb_ref[0]

        # ---- pointwise MLP: bf16 operands on the MXU, f32 accumulation ----
        h1 = jnp.dot(xn.astype(jnp.bfloat16), w1_ref[...],
                     preferred_element_type=jnp.float32) + b1_ref[0]
        if exact_gelu:
            # torch.nn.GELU default (exact erf) — VALU polynomial.
            h1 = 0.5 * h1 * (1.0 + jax.lax.erf(h1 * 0.7071067811865476))
        else:
            # tanh approximation -> tanh goes to the otherwise-idle EUP slot.
            h1 = jax.nn.gelu(h1, approximate=True)
        h2 = jnp.dot(h1.astype(jnp.bfloat16), w2_ref[...],
                     preferred_element_type=jnp.float32) + b2_ref[0]

        # layer-scale: the reference forward computes `self.gamma * x` but
        # never assigns it -> faithful no-op.
        # TODO(synk): training-mode DropPath (stochastic depth) not implemented;
        # identity at inference.
        # Residual is re-read from the pipelined input buffer here (short live
        # range) instead of being held across the MLP section.
        out_ref[0] = (x_ref[0] + h2.reshape(H, W, C)).astype(out_ref.dtype)

    return kernel


def _vmem_limit_bytes():
    # ~3/4 of physical VMEM, capped at 96 MiB: ~96 MiB on v5e/v6e (128 MiB
    # physical), ~48 MiB on v7x (64 MiB physical).
    try:
        cap = pltpu.get_tpu_info().vmem_capacity_bytes
    except Exception:
        cap = 64 * 1024 * 1024
    return int(min(cap * 3 // 4, 96 * 1024 * 1024))


def convnext_block_nhwc(x_nhwc, params, *, exact_gelu=False):
    """Fused ConvNeXt block on NHWC input (preferred layout; no transposes)."""
    B, H, W, C = x_nhwc.shape
    x = x_nhwc.astype(jnp.float32)

    # Parameter plumbing (glue): dwconv weight (C,1,7,7)->(7,7,C);
    # Linear weights (out,in)->(in,out), cast to bf16 for the MXU.
    dwk = jnp.transpose(params["dw_weight"].reshape(C, 7, 7), (1, 2, 0)).astype(jnp.float32)
    dwb = params["dw_bias"].reshape(1, C).astype(jnp.float32)
    lng = params["ln_weight"].reshape(1, C).astype(jnp.float32)
    lnb = params["ln_bias"].reshape(1, C).astype(jnp.float32)
    w1 = jnp.transpose(params["pw1_weight"]).astype(jnp.bfloat16)    # (C, 4C)
    b1 = params["pw1_bias"].reshape(1, 4 * C).astype(jnp.float32)
    w2 = jnp.transpose(params["pw2_weight"]).astype(jnp.bfloat16)    # (4C, C)
    b2 = params["pw2_bias"].reshape(1, C).astype(jnp.float32)

    return pl.pallas_call(
        _make_convnext_kernel(exact_gelu),
        out_shape=jax.ShapeDtypeStruct((B, H, W, C), jnp.float32),
        grid=(B,),
        in_specs=[
            pl.BlockSpec((1, H, W, C), lambda b: (b, 0, 0, 0)),   # x (residual + conv source)
            pl.BlockSpec((7, 7, C), lambda b: (0, 0, 0)),         # depthwise kernel
            pl.BlockSpec((1, C), lambda b: (0, 0)),               # dw bias
            pl.BlockSpec((1, C), lambda b: (0, 0)),               # ln gamma
            pl.BlockSpec((1, C), lambda b: (0, 0)),               # ln beta
            pl.BlockSpec((C, 4 * C), lambda b: (0, 0)),           # w1 (bf16)
            pl.BlockSpec((1, 4 * C), lambda b: (0, 0)),           # b1
            pl.BlockSpec((4 * C, C), lambda b: (0, 0)),           # w2 (bf16)
            pl.BlockSpec((1, C), lambda b: (0, 0)),               # b2
        ],
        out_specs=pl.BlockSpec((1, H, W, C), lambda b: (b, 0, 0, 0)),
        scratch_shapes=[pltpu.VMEM((H + 6, W + 6, C), jnp.float32)],
        compiler_params=pltpu.CompilerParams(
            dimension_semantics=("parallel",),        # batch steps are independent
            vmem_limit_bytes=_vmem_limit_bytes()),
    )(x, dwk, dwb, lng, lnb, w1, b1, w2, b2)


def convnext_block(x_nchw, params, *, exact_gelu=False):
    """NCHW adapter matching the PyTorch module interface."""
    x = jnp.transpose(x_nchw, (0, 2, 3, 1))           # NCHW -> NHWC
    y = convnext_block_nhwc(x, params, exact_gelu=exact_gelu)
    return jnp.transpose(y, (0, 3, 1, 2))             # NHWC -> NCHW


def _init_params(key, dim):
    ks = jax.random.split(key, 6)
    fan_dw = 1.0 / math.sqrt(7 * 7)          # groups=dim -> fan_in = 1*7*7
    fan_1 = 1.0 / math.sqrt(dim)
    fan_2 = 1.0 / math.sqrt(4 * dim)
    return {
        "dw_weight": jax.random.uniform(ks[0], (dim, 1, 7, 7), jnp.float32,
                                        -fan_dw, fan_dw),
        "dw_bias": jax.random.uniform(ks[1], (dim,), jnp.float32,
                                      -fan_dw, fan_dw),
        "ln_weight": jnp.ones((dim,), jnp.float32),
        "ln_bias": jnp.zeros((dim,), jnp.float32),
        "pw1_weight": jax.random.uniform(ks[2], (4 * dim, dim), jnp.float32,
                                         -fan_1, fan_1),
        "pw1_bias": jax.random.uniform(ks[3], (4 * dim,), jnp.float32,
                                       -fan_1, fan_1),
        "pw2_weight": jax.random.uniform(ks[4], (dim, 4 * dim), jnp.float32,
                                         -fan_2, fan_2),
        "pw2_bias": jax.random.uniform(ks[5], (dim,), jnp.float32,
                                       -fan_2, fan_2),
        # gamma exists in __init__ but the forward never assigns `gamma * x`.
        "gamma": 1e-6 * jnp.ones((dim,), jnp.float32),
    }


def _reference(x_nchw, p, approximate_gelu=False):
    """Pure-JAX f32 reference mirroring the PyTorch forward (sanity check)."""
    x = jnp.transpose(x_nchw, (0, 2, 3, 1))
    C = x.shape[-1]
    xpad = jnp.pad(x, ((0, 0), (3, 3), (3, 3), (0, 0)))
    dwk = jnp.transpose(p["dw_weight"].reshape(C, 7, 7), (1, 2, 0))
    H, W = x.shape[1], x.shape[2]
    acc = jnp.zeros_like(x)
    for kh in range(7):
        for kw in range(7):
            acc = acc + xpad[:, kh:kh + H, kw:kw + W, :] * dwk[kh, kw]
    acc = acc + p["dw_bias"]
    mean = jnp.mean(acc, axis=-1, keepdims=True)
    var = jnp.mean((acc - mean) ** 2, axis=-1, keepdims=True)
    xn = (acc - mean) / jnp.sqrt(var + 1e-6) * p["ln_weight"] + p["ln_bias"]
    h1 = xn @ p["pw1_weight"].T + p["pw1_bias"]
    if approximate_gelu:
        h1 = jax.nn.gelu(h1, approximate=True)
    else:
        h1 = 0.5 * h1 * (1.0 + jax.lax.erf(h1 / jnp.sqrt(2.0)))
    h2 = h1 @ p["pw2_weight"].T + p["pw2_bias"]
    return x_nchw + jnp.transpose(h2, (0, 3, 1, 2))


if __name__ == "__main__":
    key = jax.random.PRNGKey(0)
    k_x, k_p = jax.random.split(key)

    B, dim, H, W = 2, 32, 16, 16
    x = jax.random.normal(k_x, (B, dim, H, W), jnp.float32)
    params = _init_params(k_p, dim)

    out = convnext_block(x, params)
    out = jax.block_until_ready(out)
    assert out.shape == (B, dim, H, W)

    # Check 1: against a reference using the same (tanh) GELU — residual error
    # comes only from the bf16-operand MXU matmuls (f32 accumulation).
    ref_approx = _reference(x, params, approximate_gelu=True)
    assert jnp.allclose(out, ref_approx, atol=3e-2, rtol=3e-2)

    # Check 2: against the exact torch-semantics reference (exact-erf GELU);
    # slightly wider tolerance absorbs the documented tanh-GELU deviation.
    ref_exact = _reference(x, params, approximate_gelu=False)
    assert jnp.allclose(out, ref_exact, atol=5e-2, rtol=5e-2)

    print("KERNEL_OK")
</pallas_src>

<mosaic_0001>
module attributes {stable_mosaic.version = 11 : i64} {
  func.func @kernel(%arg0: i32, %arg1: memref<1x16x16x32xf32, #tpu.memory_space<vmem>>, %arg2: memref<7x7x32xf32, #tpu.memory_space<vmem>>, %arg3: memref<1x32xf32, #tpu.memory_space<vmem>>, %arg4: memref<1x32xf32, #tpu.memory_space<vmem>>, %arg5: memref<1x32xf32, #tpu.memory_space<vmem>>, %arg6: memref<32x128xbf16, #tpu.memory_space<vmem>>, %arg7: memref<1x128xf32, #tpu.memory_space<vmem>>, %arg8: memref<128x32xbf16, #tpu.memory_space<vmem>>, %arg9: memref<1x32xf32, #tpu.memory_space<vmem>>, %arg10: memref<1x16x16x32xf32, #tpu.memory_space<vmem>>, %arg11: memref<22x22x32xf32, #tpu.memory_space<vmem>>) attributes {dimension_semantics = [#tpu.dimension_semantics<parallel>], iteration_bounds = array<i64: 2>, scalar_prefetch = 0 : i64, scratch_operands = 1 : i64, tpu.core_type = #tpu.core_type<tc>, window_params = [{transform_indices = @transform_0, window_bounds = array<i64: 1, 16, 16, 32>}, {pipeline_mode = #tpu.pipeline_mode<synchronous>, transform_indices = @transform_1, window_bounds = array<i64: 7, 7, 32>}, {pipeline_mode = #tpu.pipeline_mode<synchronous>, transform_indices = @transform_2, window_bounds = array<i64: 1, 32>}, {pipeline_mode = #tpu.pipeline_mode<synchronous>, transform_indices = @transform_3, window_bounds = array<i64: 1, 32>}, {pipeline_mode = #tpu.pipeline_mode<synchronous>, transform_indices = @transform_4, window_bounds = array<i64: 1, 32>}, {pipeline_mode = #tpu.pipeline_mode<synchronous>, transform_indices = @transform_5, window_bounds = array<i64: 32, 128>}, {pipeline_mode = #tpu.pipeline_mode<synchronous>, transform_indices = @transform_6, window_bounds = array<i64: 1, 128>}, {pipeline_mode = #tpu.pipeline_mode<synchronous>, transform_indices = @transform_7, window_bounds = array<i64: 128, 32>}, {pipeline_mode = #tpu.pipeline_mode<synchronous>, transform_indices = @transform_8, window_bounds = array<i64: 1, 32>}, {transform_indices = @transform_9, window_bounds = array<i64: 1, 16, 16, 32>}]} {
    %cst = arith.constant 0.000000e+00 : f32
    %0 = vector.broadcast %cst : f32 to vector<3x22x32xf32>
    %c0 = arith.constant 0 : index
    %c0_0 = arith.constant 0 : index
    %c0_1 = arith.constant 0 : index
    %1 = vector.load %arg11[%c0, %c0_0, %c0_1] : memref<22x22x32xf32, #tpu.memory_space<vmem>>, vector<3x22x32xf32>
    tpu.vector_store %arg11[%c0, %c0_0, %c0_1], %0 {strides = array<i32>} : memref<22x22x32xf32, #tpu.memory_space<vmem>>, vector<3x22x32xf32>,
    %c19 = arith.constant 19 : index
    %c0_2 = arith.constant 0 : index
    %c0_3 = arith.constant 0 : index
    %2 = vector.load %arg11[%c19, %c0_2, %c0_3] : memref<22x22x32xf32, #tpu.memory_space<vmem>>, vector<3x22x32xf32>
    tpu.vector_store %arg11[%c19, %c0_2, %c0_3], %0 {strides = array<i32>} : memref<22x22x32xf32, #tpu.memory_space<vmem>>, vector<3x22x32xf32>,
    %cst_4 = arith.constant 0.000000e+00 : f32
    %3 = vector.broadcast %cst_4 : f32 to vector<16x3x32xf32>
    %c3 = arith.constant 3 : index
    %c0_5 = arith.constant 0 : index
    %c0_6 = arith.constant 0 : index
    %4 = vector.load %arg11[%c3, %c0_5, %c0_6] : memref<22x22x32xf32, #tpu.memory_space<vmem>>, vector<16x3x32xf32>
    tpu.vector_store %arg11[%c3, %c0_5, %c0_6], %3 {strides = array<i32>} : memref<22x22x32xf32, #tpu.memory_space<vmem>>, vector<16x3x32xf32>,
    %c3_7 = arith.constant 3 : index
    %c19_8 = arith.constant 19 : index
    %c0_9 = arith.constant 0 : index
    %5 = vector.load %arg11[%c3_7, %c19_8, %c0_9] : memref<22x22x32xf32, #tpu.memory_space<vmem>>, vector<16x3x32xf32>
    tpu.vector_store %arg11[%c3_7, %c19_8, %c0_9], %3 {strides = array<i32>} : memref<22x22x32xf32, #tpu.memory_space<vmem>>, vector<16x3x32xf32>,
    %c0_10 = arith.constant 0 : index
    %c0_11 = arith.constant 0 : index
    %c0_12 = arith.constant 0 : index
    %c0_13 = arith.constant 0 : index
    %6 = vector.load %arg1[%c0_10, %c0_11, %c0_12, %c0_13] : memref<1x16x16x32xf32, #tpu.memory_space<vmem>>, vector<1x16x16x32xf32>
    %7 = vector.shape_cast %6 : vector<1x16x16x32xf32> to vector<16x16x32xf32>
    %c3_14 = arith.constant 3 : index
    %c3_15 = arith.constant 3 : index
    %c0_16 = arith.constant 0 : index
    %8 = vector.load %arg11[%c3_14, %c3_15, %c0_16] : memref<22x22x32xf32, #tpu.memory_space<vmem>>, vector<16x16x32xf32>
    tpu.vector_store %arg11[%c3_14, %c3_15, %c0_16], %7 {strides = array<i32>} : memref<22x22x32xf32, #tpu.memory_space<vmem>>, vector<16x16x32xf32>,
    %c0_17 = arith.constant 0 : index
    %c0_18 = arith.constant 0 : index
    %c0_19 = arith.constant 0 : index
    %9 = vector.load %arg11[%c0_17, %c0_18, %c0_19] : memref<22x22x32xf32, #tpu.memory_space<vmem>>, vector<22x22x32xf32>
    %c0_20 = arith.constant 0 : index
    %c0_21 = arith.constant 0 : index
    %c0_22 = arith.constant 0 : index
    %10 = vector.load %arg2[%c0_20, %c0_21, %c0_22] : memref<7x7x32xf32, #tpu.memory_space<vmem>>, vector<7x7x32xf32>
    %11 = vector.extract_strided_slice %9 {offsets = [0, 0, 0], sizes = [22, 16, 32], strides = [1, 1, 1]} : vector<22x22x32xf32> to vector<22x16x32xf32>
    %12 = vector.extract_strided_slice %11 {offsets = [0, 0, 0], sizes = [16, 16, 32], strides = [1, 1, 1]} : vector<22x16x32xf32> to vector<16x16x32xf32>
    %13 = vector.extract_strided_slice %10 {offsets = [0, 0, 0], sizes = [1, 1, 32], strides = [1, 1, 1]} : vector<7x7x32xf32> to vector<1x1x32xf32>
    %14 = vector.shape_cast %13 : vector<1x1x32xf32> to vector<32xf32>
    %15 = vector.shape_cast %14 : vector<32xf32> to vector<1x1x32xf32>
    %16 = vector.broadcast %15 : vector<1x1x32xf32> to vector<16x16x32xf32>
    %17 = arith.mulf %12, %16 : vector<16x16x32xf32>
    %18 = vector.extract_strided_slice %11 {offsets = [1, 0, 0], sizes = [16, 16, 32], strides = [1, 1, 1]} : vector<22x16x32xf32> to vector<16x16x32xf32>
    %19 = vector.extract_strided_slice %10 {offsets = [1, 0, 0], sizes = [1, 1, 32], strides = [1, 1, 1]} : vector<7x7x32xf32> to vector<1x1x32xf32>
    %20 = vector.shape_cast %19 : vector<1x1x32xf32> to vector<32xf32>
    %21 = vector.shape_cast %20 : vector<32xf32> to vector<1x1x32xf32>
    %22 = vector.broadcast %21 : vector<1x1x32xf32> to vector<16x16x32xf32>
    %23 = arith.mulf %18, %22 : vector<16x16x32xf32>
    %24 = arith.addf %17, %23 : vector<16x16x32xf32>
    %25 = vector.extract_strided_slice %11 {offsets = [2, 0, 0], sizes = [16, 16, 32], strides = [1, 1, 1]} : vector<22x16x32xf32> to vector<16x16x32xf32>
    %26 = vector.extract_strided_slice %10 {offsets = [2, 0, 0], sizes = [1, 1, 32], strides = [1, 1, 1]} : vector<7x7x32xf32> to vector<1x1x32xf32>
    %27 = vector.shape_cast %26 : vector<1x1x32xf32> to vector<32xf32>
    %28 = vector.shape_cast %27 : vector<32xf32> to vector<1x1x32xf32>
    %29 = vector.broadcast %28 : vector<1x1x32xf32> to vector<16x16x32xf32>
    %30 = arith.mulf %25, %29 : vector<16x16x32xf32>
    %31 = arith.addf %24, %30 : vector<16x16x32xf32>
    %32 = vector.extract_strided_slice %11 {offsets = [3, 0, 0], sizes = [16, 16, 32], strides = [1, 1, 1]} : vector<22x16x32xf32> to vector<16x16x32xf32>
    %33 = vector.extract_strided_slice %10 {offsets = [3, 0, 0], sizes = [1, 1, 32], strides = [1, 1, 1]} : vector<7x7x32xf32> to vector<1x1x32xf32>
    %34 = vector.shape_cast %33 : vector<1x1x32xf32> to vector<32xf32>
    %35 = vector.shape_cast %34 : vector<32xf32> to vector<1x1x32xf32>
    %36 = vector.broadcast %35 : vector<1x1x32xf32> to vector<16x16x32xf32>
    %37 = arith.mulf %32, %36 : vector<16x16x32xf32>
    %38 = arith.addf %31, %37 : vector<16x16x32xf32>
    %39 = vector.extract_strided_slice %11 {offsets = [4, 0, 0], sizes = [16, 16, 32], strides = [1, 1, 1]} : vector<22x16x32xf32> to vector<16x16x32xf32>
    %40 = vector.extract_strided_slice %10 {offsets = [4, 0, 0], sizes = [1, 1, 32], strides = [1, 1, 1]} : vector<7x7x32xf32> to vector<1x1x32xf32>
    %41 = vector.shape_cast %40 : vector<1x1x32xf32> to vector<32xf32>
    %42 = vector.shape_cast %41 : vector<32xf32> to vector<1x1x32xf32>
    %43 = vector.broadcast %42 : vector<1x1x32xf32> to vector<16x16x32xf32>
    %44 = arith.mulf %39, %43 : vector<16x16x32xf32>
    %45 = arith.addf %38, %44 : vector<16x16x32xf32>
    %46 = vector.extract_strided_slice %11 {offsets = [5, 0, 0], sizes = [16, 16, 32], strides = [1, 1, 1]} : vector<22x16x32xf32> to vector<16x16x32xf32>
    %47 = vector.extract_strided_slice %10 {offsets = [5, 0, 0], sizes = [1, 1, 32], strides = [1, 1, 1]} : vector<7x7x32xf32> to vector<1x1x32xf32>
    %48 = vector.shape_cast %47 : vector<1x1x32xf32> to vector<32xf32>
    %49 = vector.shape_cast %48 : vector<32xf32> to vector<1x1x32xf32>
    %50 = vector.broadcast %49 : vector<1x1x32xf32> to vector<16x16x32xf32>
    %51 = arith.mulf %46, %50 : vector<16x16x32xf32>
    %52 = arith.addf %45, %51 : vector<16x16x32xf32>
    %53 = vector.extract_strided_slice %11 {offsets = [6, 0, 0], sizes = [16, 16, 32], strides = [1, 1, 1]} : vector<22x16x32xf32> to vector<16x16x32xf32>
    %54 = vector.extract_strided_slice %10 {offsets = [6, 0, 0], sizes = [1, 1, 32], strides = [1, 1, 1]} : vector<7x7x32xf32> to vector<1x1x32xf32>
    %55 = vector.shape_cast %54 : vector<1x1x32xf32> to vector<32xf32>
    %56 = vector.shape_cast %55 : vector<32xf32> to vector<1x1x32xf32>
    %57 = vector.broadcast %56 : vector<1x1x32xf32> to vector<16x16x32xf32>
    %58 = arith.mulf %53, %57 : vector<16x16x32xf32>
    %59 = arith.addf %52, %58 : vector<16x16x32xf32>
    %60 = vector.extract_strided_slice %9 {offsets = [0, 1, 0], sizes = [22, 16, 32], strides = [1, 1, 1]} : vector<22x22x32xf32> to vector<22x16x32xf32>
    %61 = vector.extract_strided_slice %60 {offsets = [0, 0, 0], sizes = [16, 16, 32], strides = [1, 1, 1]} : vector<22x16x32xf32> to vector<16x16x32xf32>
    %62 = vector.extract_strided_slice %10 {offsets = [0, 1, 0], sizes = [1, 1, 32], strides = [1, 1, 1]} : vector<7x7x32xf32> to vector<1x1x32xf32>
    %63 = vector.shape_cast %62 : vector<1x1x32xf32> to vector<32xf32>
    %64 = vector.shape_cast %63 : vector<32xf32> to vector<1x1x32xf32>
    %65 = vector.broadcast %64 : vector<1x1x32xf32> to vector<16x16x32xf32>
    %66 = arith.mulf %61, %65 : vector<16x16x32xf32>
    %67 = arith.addf %59, %66 : vector<16x16x32xf32>
    %68 = vector.extract_strided_slice %60 {offsets = [1, 0, 0], sizes = [16, 16, 32], strides = [1, 1, 1]} : vector<22x16x32xf32> to vector<16x16x32xf32>
    %69 = vector.extract_strided_slice %10 {offsets = [1, 1, 0], sizes = [1, 1, 32], strides = [1, 1, 1]} : vector<7x7x32xf32> to vector<1x1x32xf32>
    %70 = vector.shape_cast %69 : vector<1x1x32xf32> to vector<32xf32>
    %71 = vector.shape_cast %70 : vector<32xf32> to vector<1x1x32xf32>
    %72 = vector.broadcast %71 : vector<1x1x32xf32> to vector<16x16x32xf32>
    %73 = arith.mulf %68, %72 : vector<16x16x32xf32>
    %74 = arith.addf %67, %73 : vector<16x16x32xf32>
    %75 = vector.extract_strided_slice %60 {offsets = [2, 0, 0], sizes = [16, 16, 32], strides = [1, 1, 1]} : vector<22x16x32xf32> to vector<16x16x32xf32>
    %76 = vector.extract_strided_slice %10 {offsets = [2, 1, 0], sizes = [1, 1, 32], strides = [1, 1, 1]} : vector<7x7x32xf32> to vector<1x1x32xf32>
    %77 = vector.shape_cast %76 : vector<1x1x32xf32> to vector<32xf32>
    %78 = vector.shape_cast %77 : vector<32xf32> to vector<1x1x32xf32>
    %79 = vector.broadcast %78 : vector<1x1x32xf32> to vector<16x16x32xf32>
    %80 = arith.mulf %75, %79 : vector<16x16x32xf32>
    %81 = arith.addf %74, %80 : vector<16x16x32xf32>
    %82 = vector.extract_strided_slice %60 {offsets = [3, 0, 0], sizes = [16, 16, 32], strides = [1, 1, 1]} : vector<22x16x32xf32> to vector<16x16x32xf32>
    %83 = vector.extract_strided_slice %10 {offsets = [3, 1, 0], sizes = [1, 1, 32], strides = [1, 1, 1]} : vector<7x7x32xf32> to vector<1x1x32xf32>
    %84 = vector.shape_cast %83 : vector<1x1x32xf32> to vector<32xf32>
    %85 = vector.shape_cast %84 : vector<32xf32> to vector<1x1x32xf32>
    %86 = vector.broadcast %85 : vector<1x1x32xf32> to vector<16x16x32xf32>
    %87 = arith.mulf %82, %86 : vector<16x16x32xf32>
    %88 = arith.addf %81, %87 : vector<16x16x32xf32>
    %89 = vector.extract_strided_slice %60 {offsets = [4, 0, 0], sizes = [16, 16, 32], strides = [1, 1, 1]} : vector<22x16x32xf32> to vector<16x16x32xf32>
    %90 = vector.extract_strided_slice %10 {offsets = [4, 1, 0], sizes = [1, 1, 32], strides = [1, 1, 1]} : vector<7x7x32xf32> to vector<1x1x32xf32>
    %91 = vector.shape_cast %90 : vector<1x1x32xf32> to vector<32xf32>
    %92 = vector.shape_cast %91 : vector<32xf32> to vector<1x1x32xf32>
    %93 = vector.broadcast %92 : vector<1x1x32xf32> to vector<16x16x32xf32>
    %94 = arith.mulf %89, %93 : vector<16x16x32xf32>
    %95 = arith.addf %88, %94 : vector<16x16x32xf32>
    %96 = vector.extract_strided_slice %60 {offsets = [5, 0, 0], sizes = [16, 16, 32], strides = [1, 1, 1]} : vector<22x16x32xf32> to vector<16x16x32xf32>
    %97 = vector.extract_strided_slice %10 {offsets = [5, 1, 0], sizes = [1, 1, 32], strides = [1, 1, 1]} : vector<7x7x32xf32> to vector<1x1x32xf32>
    %98 = vector.shape_cast %97 : vector<1x1x32xf32> to vector<32xf32>
    %99 = vector.shape_cast %98 : vector<32xf32> to vector<1x1x32xf32>
    %100 = vector.broadcast %99 : vector<1x1x32xf32> to vector<16x16x32xf32>
    %101 = arith.mulf %96, %100 : vector<16x16x32xf32>
    %102 = arith.addf %95, %101 : vector<16x16x32xf32>
    %103 = vector.extract_strided_slice %60 {offsets = [6, 0, 0], sizes = [16, 16, 32], strides = [1, 1, 1]} : vector<22x16x32xf32> to vector<16x16x32xf32>
    %104 = vector.extract_strided_slice %10 {offsets = [6, 1, 0], sizes = [1, 1, 32], strides = [1, 1, 1]} : vector<7x7x32xf32> to vector<1x1x32xf32>
    %105 = vector.shape_cast %104 : vector<1x1x32xf32> to vector<32xf32>
    %106 = vector.shape_cast %105 : vector<32xf32> to vector<1x1x32xf32>
    %107 = vector.broadcast %106 : vector<1x1x32xf32> to vector<16x16x32xf32>
    %108 = arith.mulf %103, %107 : vector<16x16x32xf32>
    %109 = arith.addf %102, %108 : vector<16x16x32xf32>
    %110 = vector.extract_strided_slice %9 {offsets = [0, 2, 0], sizes = [22, 16, 32], strides = [1, 1, 1]} : vector<22x22x32xf32> to vector<22x16x32xf32>
    %111 = vector.extract_strided_slice %110 {offsets = [0, 0, 0], sizes = [16, 16, 32], strides = [1, 1, 1]} : vector<22x16x32xf32> to vector<16x16x32xf32>
    %112 = vector.extract_strided_slice %10 {offsets = [0, 2, 0], sizes = [1, 1, 32], strides = [1, 1, 1]} : vector<7x7x32xf32> to vector<1x1x32xf32>
    %113 = vector.shape_cast %112 : vector<1x1x32xf32> to vector<32xf32>
    %114 = vector.shape_cast %113 : vector<32xf32> to vector<1x1x32xf32>
    %115 = vector.broadcast %114 : vector<1x1x32xf32> to vector<16x16x32xf32>
    %116 = arith.mulf %111, %115 : vector<16x16x32xf32>
    %117 = arith.addf %109, %116 : vector<16x16x32xf32>
    %118 = vector.extract_strided_slice %110 {offsets = [1, 0, 0], sizes = [16, 16, 32], strides = [1, 1, 1]} : vector<22x16x32xf32> to vector<16x16x32xf32>
    %119 = vector.extract_strided_slice %10 {offsets = [1, 2, 0], sizes = [1, 1, 32], strides = [1, 1, 1]} : vector<7x7x32xf32> to vector<1x1x32xf32>
    %120 = vector.shape_cast %119 : vector<1x1x32xf32> to vector<32xf32>
    %121 = vector.shape_cast %120 : vector<32xf32> to vector<1x1x32xf32>
    %122 = vector.broadcast %121 : vector<1x1x32xf32> to vector<16x16x32xf32>
    %123 = arith.mulf %118, %122 : vector<16x16x32xf32>
    %124 = arith.addf %117, %123 : vector<16x16x32xf32>
    %125 = vector.extract_strided_slice %110 {offsets = [2, 0, 0], sizes = [16, 16, 32], strides = [1, 1, 1]} : vector<22x16x32xf32> to vector<16x16x32xf32>
    %126 = vector.extract_strided_slice %10 {offsets = [2, 2, 0], sizes = [1, 1, 32], strides = [1, 1, 1]} : vector<7x7x32xf32> to vector<1x1x32xf32>
    %127 = vector.shape_cast %126 : vector<1x1x32xf32> to vector<32xf32>
    %128 = vector.shape_cast %127 : vector<32xf32> to vector<1x1x32xf32>
    %129 = vector.broadcast %128 : vector<1x1x32xf32> to vector<16x16x32xf32>
    %130 = arith.mulf %125, %129 : vector<16x16x32xf32>
    %131 = arith.addf %124, %130 : vector<16x16x32xf32>
    %132 = vector.extract_strided_slice %110 {offsets = [3, 0, 0], sizes = [16, 16, 32], strides = [1, 1, 1]} : vector<22x16x32xf32> to vector<16x16x32xf32>
    %133 = vector.extract_strided_slice %10 {offsets = [3, 2, 0], sizes = [1, 1, 32], strides = [1, 1, 1]} : vector<7x7x32xf32> to vector<1x1x32xf32>
    %134 = vector.shape_cast %133 : vector<1x1x32xf32> to vector<32xf32>
    %135 = vector.shape_cast %134 : vector<32xf32> to vector<1x1x32xf32>
    %136 = vector.broadcast %135 : vector<1x1x32xf32> to vector<16x16x32xf32>
    %137 = arith.mulf %132, %136 : vector<16x16x32xf32>
    %138 = arith.addf %131, %137 : vector<16x16x32xf32>
    %139 = vector.extract_strided_slice %110 {offsets = [4, 0, 0], sizes = [16, 16, 32], strides = [1, 1, 1]} : vector<22x16x32xf32> to vector<16x16x32xf32>
    %140 = vector.extract_strided_slice %10 {offsets = [4, 2, 0], sizes = [1, 1, 32], strides = [1, 1, 1]} : vector<7x7x32xf32> to vector<1x1x32xf32>
    %141 = vector.shape_cast %140 : vector<1x1x32xf32> to vector<32xf32>
    %142 = vector.shape_cast %141 : vector<32xf32> to vector<1x1x32xf32>
    %143 = vector.broadcast %142 : vector<1x1x32xf32> to vector<16x16x32xf32>
    %144 = arith.mulf %139, %143 : vector<16x16x32xf32>
    %145 = arith.addf %138, %144 : vector<16x16x32xf32>
    %146 = vector.extract_strided_slice %110 {offsets = [5, 0, 0], sizes = [16, 16, 32], strides = [1, 1, 1]} : vector<22x16x32xf32> to vector<16x16x32xf32>
    %147 = vector.extract_strided_slice %10 {offsets = [5, 2, 0], sizes = [1, 1, 32], strides = [1, 1, 1]} : vector<7x7x32xf32> to vector<1x1x32xf32>
    %148 = vector.shape_cast %147 : vector<1x1x32xf32> to vector<32xf32>
    %149 = vector.shape_cast %148 : vector<32xf32> to vector<1x1x32xf32>
    %150 = vector.broadcast %149 : vector<1x1x32xf32> to vector<16x16x32xf32>
    %151 = arith.mulf %146, %150 : vector<16x16x32xf32>
    %152 = arith.addf %145, %151 : vector<16x16x32xf32>
    %153 = vector.extract_strided_slice %110 {offsets = [6, 0, 0], sizes = [16, 16, 32], strides = [1, 1, 1]} : vector<22x16x32xf32> to vector<16x16x32xf32>
    %154 = vector.extract_strided_slice %10 {offsets = [6, 2, 0], sizes = [1, 1, 32], strides = [1, 1, 1]} : vector<7x7x32xf32> to vector<1x1x32xf32>
    %155 = vector.shape_cast %154 : vector<1x1x32xf32> to vector<32xf32>
    %156 = vector.shape_cast %155 : vector<32xf32> to vector<1x1x32xf32>
    %157 = vector.broadcast %156 : vector<1x1x32xf32> to vector<16x16x32xf32>
    %158 = arith.mulf %153, %157 : vector<16x16x32xf32>
    %159 = arith.addf %152, %158 : vector<16x16x32xf32>
    %160 = vector.extract_strided_slice %9 {offsets = [0, 3, 0], sizes = [22, 16, 32], strides = [1, 1, 1]} : vector<22x22x32xf32> to vector<22x16x32xf32>
    %161 = vector.extract_strided_slice %160 {offsets = [0, 0, 0], sizes = [16, 16, 32], strides = [1, 1, 1]} : vector<22x16x32xf32> to vector<16x16x32xf32>
    %162 = vector.extract_strided_slice %10 {offsets = [0, 3, 0], sizes = [1, 1, 32], strides = [1, 1, 1]} : vector<7x7x32xf32> to vector<1x1x32xf32>
    %163 = vector.shape_cast %162 : vector<1x1x32xf32> to vector<32xf32>
    %164 = vector.shape_cast %163 : vector<32xf32> to vector<1x1x32xf32>
    %165 = vector.broadcast %164 : vector<1x1x32xf32> to vector<16x16x32xf32>
    %166 = arith.mulf %161, %165 : vector<16x16x32xf32>
    %167 = arith.addf %159, %166 : vector<16x16x32xf32>
    %168 = vector.extract_strided_slice %160 {offsets = [1, 0, 0], sizes = [16, 16, 32], strides = [1, 1, 1]} : vector<22x16x32xf32> to vector<16x16x32xf32>
    %169 = vector.extract_strided_slice %10 {offsets = [1, 3, 0], sizes = [1, 1, 32], strides = [1, 1, 1]} : vector<7x7x32xf32> to vector<1x1x32xf32>
    %170 = vector.shape_cast %169 : vector<1x1x32xf32> to vector<32xf32>
    %171 = vector.shape_cast %170 : vector<32xf32> to vector<1x1x32xf32>
    %172 = vector.broadcast %171 : vector<1x1x32xf32> to vector<16x16x32xf32>
    %173 = arith.mulf %168, %172 : vector<16x16x32xf32>
    %174 = arith.addf %167, %173 : vector<16x16x32xf32>
    %175 = vector.extract_strided_slice %160 {offsets = [2, 0, 0], sizes = [16, 16, 32], strides = [1, 1, 1]} : vector<22x16x32xf32> to vector<16x16x32xf32>
    %176 = vector.extract_strided_slice %10 {offsets = [2, 3, 0], sizes = [1, 1, 32], strides = [1, 1, 1]} : vector<7x7x32xf32> to vector<1x1x32xf32>
    %177 = vector.shape_cast %176 : vector<1x1x32xf32> to vector<32xf32>
    %178 = vector.shape_cast %177 : vector<32xf32> to vector<1x1x32xf32>
    %179 = vector.broadcast %178 : vector<1x1x32xf32> to vector<16x16x32xf32>
    %180 = arith.mulf %175, %179 : vector<16x16x32xf32>
    %181 = arith.addf %174, %180 : vector<16x16x32xf32>
    %182 = vector.extract_strided_slice %160 {offsets = [3, 0, 0], sizes = [16, 16, 32], strides = [1, 1, 1]} : vector<22x16x32xf32> to vector<16x16x32xf32>
    %183 = vector.extract_strided_slice %10 {offsets = [3, 3, 0], sizes = [1, 1, 32], strides = [1, 1, 1]} : vector<7x7x32xf32> to vector<1x1x32xf32>
    %184 = vector.shape_cast %183 : vector<1x1x32xf32> to vector<32xf32>
    %185 = vector.shape_cast %184 : vector<32xf32> to vector<1x1x32xf32>
    %186 = vector.broadcast %185 : vector<1x1x32xf32> to vector<16x16x32xf32>
    %187 = arith.mulf %182, %186 : vector<16x16x32xf32>
    %188 = arith.addf %181, %187 : vector<16x16x32xf32>
    %189 = vector.extract_strided_slice %160 {offsets = [4, 0, 0], sizes = [16, 16, 32], strides = [1, 1, 1]} : vector<22x16x32xf32> to vector<16x16x32xf32>
    %190 = vector.extract_strided_slice %10 {offsets = [4, 3, 0], sizes = [1, 1, 32], strides = [1, 1, 1]} : vector<7x7x32xf32> to vector<1x1x32xf32>
    %191 = vector.shape_cast %190 : vector<1x1x32xf32> to vector<32xf32>
    %192 = vector.shape_cast %191 : vector<32xf32> to vector<1x1x32xf32>
    %193 = vector.broadcast %192 : vector<1x1x32xf32> to vector<16x16x32xf32>
    %194 = arith.mulf %189, %193 : vector<16x16x32xf32>
    %195 = arith.addf %188, %194 : vector<16x16x32xf32>
    %196 = vector.extract_strided_slice %160 {offsets = [5, 0, 0], sizes = [16, 16, 32], strides = [1, 1, 1]} : vector<22x16x32xf32> to vector<16x16x32xf32>
    %197 = vector.extract_strided_slice %10 {offsets = [5, 3, 0], sizes = [1, 1, 32], strides = [1, 1, 1]} : vector<7x7x32xf32> to vector<1x1x32xf32>
    %198 = vector.shape_cast %197 : vector<1x1x32xf32> to vector<32xf32>
    %199 = vector.shape_cast %198 : vector<32xf32> to vector<1x1x32xf32>
    %200 = vector.broadcast %199 : vector<1x1x32xf32> to vector<16x16x32xf32>
    %201 = arith.mulf %196, %200 : vector<16x16x32xf32>
    %202 = arith.addf %195, %201 : vector<16x16x32xf32>
    %203 = vector.extract_strided_slice %160 {offsets = [6, 0, 0], sizes = [16, 16, 32], strides = [1, 1, 1]} : vector<22x16x32xf32> to vector<16x16x32xf32>
    %204 = vector.extract_strided_slice %10 {offsets = [6, 3, 0], sizes = [1, 1, 32], strides = [1, 1, 1]} : vector<7x7x32xf32> to vector<1x1x32xf32>
    %205 = vector.shape_cast %204 : vector<1x1x32xf32> to vector<32xf32>
    %206 = vector.shape_cast %205 : vector<32xf32> to vector<1x1x32xf32>
    %207 = vector.broadcast %206 : vector<1x1x32xf32> to vector<16x16x32xf32>
    %208 = arith.mulf %203, %207 : vector<16x16x32xf32>
    %209 = arith.addf %202, %208 : vector<16x16x32xf32>
    %210 = vector.extract_strided_slice %9 {offsets = [0, 4, 0], sizes = [22, 16, 32], strides = [1, 1, 1]} : vector<22x22x32xf32> to vector<22x16x32xf32>
    %211 = vector.extract_strided_slice %210 {offsets = [0, 0, 0], sizes = [16, 16, 32], strides = [1, 1, 1]} : vector<22x16x32xf32> to vector<16x16x32xf32>
    %212 = vector.extract_strided_slice %10 {offsets = [0, 4, 0], sizes = [1, 1, 32], strides = [1, 1, 1]} : vector<7x7x32xf32> to vector<1x1x32xf32>
    %213 = vector.shape_cast %212 : vector<1x1x32xf32> to vector<32xf32>
    %214 = vector.shape_cast %213 : vector<32xf32> to vector<1x1x32xf32>
    %215 = vector.broadcast %214 : vector<1x1x32xf32> to vector<16x16x32xf32>
    %216 = arith.mulf %211, %215 : vector<16x16x32xf32>
    %217 = arith.addf %209, %216 : vector<16x16x32xf32>
    %218 = vector.extract_strided_slice %210 {offsets = [1, 0, 0], sizes = [16, 16, 32], strides = [1, 1, 1]} : vector<22x16x32xf32> to vector<16x16x32xf32>
    %219 = vector.extract_strided_slice %10 {offsets = [1, 4, 0], sizes = [1, 1, 32], strides = [1, 1, 1]} : vector<7x7x32xf32> to vector<1x1x32xf32>
    %220 = vector.shape_cast %219 : vector<1x1x32xf32> to vector<32xf32>
    %221 = vector.shape_cast %220 : vector<32xf32> to vector<1x1x32xf32>
    %222 = vector.broadcast %221 : vector<1x1x32xf32> to vector<16x16x32xf32>
    %223 = arith.mulf %218, %222 : vector<16x16x32xf32>
    %224 = arith.addf %217, %223 : vector<16x16x32xf32>
    %225 = vector.extract_strided_slice %210 {offsets = [2, 0, 0], sizes = [16, 16, 32], strides = [1, 1, 1]} : vector<22x16x32xf32> to vector<16x16x32xf32>
    %226 = vector.extract_strided_slice %10 {offsets = [2, 4, 0], sizes = [1, 1, 32], strides = [1, 1, 1]} : vector<7x7x32xf32> to vector<1x1x32xf32>
    %227 = vector.shape_cast %226 : vector<1x1x32xf32> to vector<32xf32>
    %228 = vector.shape_cast %227 : vector<32xf32> to vector<1x1x32xf32>
    %229 = vector.broadcast %228 : vector<1x1x32xf32> to vector<16x16x32xf32>
    %230 = arith.mulf %225, %229 : vector<16x16x32xf32>
    %231 = arith.addf %224, %230 : vector<16x16x32xf32>
    %232 = vector.extract_strided_slice %210 {offsets = [3, 0, 0], sizes = [16, 16, 32], strides = [1, 1, 1]} : vector<22x16x32xf32> to vector<16x16x32xf32>
    %233 = vector.extract_strided_slice %10 {offsets = [3, 4, 0], sizes = [1, 1, 32], strides = [1, 1, 1]} : vector<7x7x32xf32> to vector<1x1x32xf32>
    %234 = vector.shape_cast %233 : vector<1x1x32xf32> to vector<32xf32>
    %235 = vector.shape_cast %234 : vector<32xf32> to vector<1x1x32xf32>
    %236 = vector.broadcast %235 : vector<1x1x32xf32> to vector<16x16x32xf32>
    %237 = arith.mulf %232, %236 : vector<16x16x32xf32>
    %238 = arith.addf %231, %237 : vector<16x16x32xf32>
    %239 = vector.extract_strided_slice %210 {offsets = [4, 0, 0], sizes = [16, 16, 32], strides = [1, 1, 1]} : vector<22x16x32xf32> to vector<16x16x32xf32>
    %240 = vector.extract_strided_slice %10 {offsets = [4, 4, 0], sizes = [1, 1, 32], strides = [1, 1, 1]} : vector<7x7x32xf32> to vector<1x1x32xf32>
    %241 = vector.shape_cast %240 : vector<1x1x32xf32> to vector<32xf32>
    %242 = vector.shape_cast %241 : vector<32xf32> to vector<1x1x32xf32>
    %243 = vector.broadcast %242 : vector<1x1x32xf32> to vector<16x16x32xf32>
    %244 = arith.mulf %239, %243 : vector<16x16x32xf32>
    %245 = arith.addf %238, %244 : vector<16x16x32xf32>
    %246 = vector.extract_strided_slice %210 {offsets = [5, 0, 0], sizes = [16, 16, 32], strides = [1, 1, 1]} : vector<22x16x32xf32> to vector<16x16x32xf32>
    %247 = vector.extract_strided_slice %10 {offsets = [5, 4, 0], sizes = [1, 1, 32], strides = [1, 1, 1]} : vector<7x7x32xf32> to vector<1x1x32xf32>
    %248 = vector.shape_cast %247 : vector<1x1x32xf32> to vector<32xf32>
    %249 = vector.shape_cast %248 : vector<32xf32> to vector<1x1x32xf32>
    %250 = vector.broadcast %249 : vector<1x1x32xf32> to vector<16x16x32xf32>
    %251 = arith.mulf %246, %250 : vector<16x16x32xf32>
    %252 = arith.addf %245, %251 : vector<16x16x32xf32>
    %253 = vector.extract_strided_slice %210 {offsets = [6, 0, 0], sizes = [16, 16, 32], strides = [1, 1, 1]} : vector<22x16x32xf32> to vector<16x16x32xf32>
    %254 = vector.extract_strided_slice %10 {offsets = [6, 4, 0], sizes = [1, 1, 32], strides = [1, 1, 1]} : vector<7x7x32xf32> to vector<1x1x32xf32>
    %255 = vector.shape_cast %254 : vector<1x1x32xf32> to vector<32xf32>
    %256 = vector.shape_cast %255 : vector<32xf32> to vector<1x1x32xf32>
    %257 = vector.broadcast %256 : vector<1x1x32xf32> to vector<16x16x32xf32>
    %258 = arith.mulf %253, %257 : vector<16x16x32xf32>
    %259 = arith.addf %252, %258 : vector<16x16x32xf32>
    %260 = vector.extract_strided_slice %9 {offsets = [0, 5, 0], sizes = [22, 16, 32], strides = [1, 1, 1]} : vector<22x22x32xf32> to vector<22x16x32xf32>
    %261 = vector.extract_strided_slice %260 {offsets = [0, 0, 0], sizes = [16, 16, 32], strides = [1, 1, 1]} : vector<22x16x32xf32> to vector<16x16x32xf32>
    %262 = vector.extract_strided_slice %10 {offsets = [0, 5, 0], sizes = [1, 1, 32], strides = [1, 1, 1]} : vector<7x7x32xf32> to vector<1x1x32xf32>
    %263 = vector.shape_cast %262 : vector<1x1x32xf32> to vector<32xf32>
    %264 = vector.shape_cast %263 : vector<32xf32> to vector<1x1x32xf32>
    %265 = vector.broadcast %264 : vector<1x1x32xf32> to vector<16x16x32xf32>
    %266 = arith.mulf %261, %265 : vector<16x16x32xf32>
    %267 = arith.addf %259, %266 : vector<16x16x32xf32>
    %268 = vector.extract_strided_slice %260 {offsets = [1, 0, 0], sizes = [16, 16, 32], strides = [1, 1, 1]} : vector<22x16x32xf32> to vector<16x16x32xf32>
    %269 = vector.extract_strided_slice %10 {offsets = [1, 5, 0], sizes = [1, 1, 32], strides = [1, 1, 1]} : vector<7x7x32xf32> to vector<1x1x32xf32>
    %270 = vector.shape_cast %269 : vector<1x1x32xf32> to vector<32xf32>
    %271 = vector.shape_cast %270 : vector<32xf32> to vector<1x1x32xf32>
    %272 = vector.broadcast %271 : vector<1x1x32xf32> to vector<16x16x32xf32>
    %273 = arith.mulf %268, %272 : vector<16x16x32xf32>
    %274 = arith.addf %267, %273 : vector<16x16x32xf32>
    %275 = vector.extract_strided_slice %260 {offsets = [2, 0, 0], sizes = [16, 16, 32], strides = [1, 1, 1]} : vector<22x16x32xf32> to vector<16x16x32xf32>
    %276 = vector.extract_strided_slice %10 {offsets = [2, 5, 0], sizes = [1, 1, 32], strides = [1, 1, 1]} : vector<7x7x32xf32> to vector<1x1x32xf32>
    %277 = vector.shape_cast %276 : vector<1x1x32xf32> to vector<32xf32>
    %278 = vector.shape_cast %277 : vector<32xf32> to vector<1x1x32xf32>
    %279 = vector.broadcast %278 : vector<1x1x32xf32> to vector<16x16x32xf32>
    %280 = arith.mulf %275, %279 : vector<16x16x32xf32>
    %281 = arith.addf %274, %280 : vector<16x16x32xf32>
    %282 = vector.extract_strided_slice %260 {offsets = [3, 0, 0], sizes = [16, 16, 32], strides = [1, 1, 1]} : vector<22x16x32xf32> to vector<16x16x32xf32>
    %283 = vector.extract_strided_slice %10 {offsets = [3, 5, 0], sizes = [1, 1, 32], strides = [1, 1, 1]} : vector<7x7x32xf32> to vector<1x1x32xf32>
    %284 = vector.shape_cast %283 : vector<1x1x32xf32> to vector<32xf32>
    %285 = vector.shape_cast %284 : vector<32xf32> to vector<1x1x32xf32>
    %286 = vector.broadcast %285 : vector<1x1x32xf32> to vector<16x16x32xf32>
    %287 = arith.mulf %282, %286 : vector<16x16x32xf32>
    %288 = arith.addf %281, %287 : vector<16x16x32xf32>
    %289 = vector.extract_strided_slice %260 {offsets = [4, 0, 0], sizes = [16, 16, 32], strides = [1, 1, 1]} : vector<22x16x32xf32> to vector<16x16x32xf32>
    %290 = vector.extract_strided_slice %10 {offsets = [4, 5, 0], sizes = [1, 1, 32], strides = [1, 1, 1]} : vector<7x7x32xf32> to vector<1x1x32xf32>
    %291 = vector.shape_cast %290 : vector<1x1x32xf32> to vector<32xf32>
    %292 = vector.shape_cast %291 : vector<32xf32> to vector<1x1x32xf32>
    %293 = vector.broadcast %292 : vector<1x1x32xf32> to vector<16x16x32xf32>
    %294 = arith.mulf %289, %293 : vector<16x16x32xf32>
    %295 = arith.addf %288, %294 : vector<16x16x32xf32>
    %296 = vector.extract_strided_slice %260 {offsets = [5, 0, 0], sizes = [16, 16, 32], strides = [1, 1, 1]} : vector<22x16x32xf32> to vector<16x16x32xf32>
    %297 = vector.extract_strided_slice %10 {offsets = [5, 5, 0], sizes = [1, 1, 32], strides = [1, 1, 1]} : vector<7x7x32xf32> to vector<1x1x32xf32>
    %298 = vector.shape_cast %297 : vector<1x1x32xf32> to vector<32xf32>
    %299 = vector.shape_cast %298 : vector<32xf32> to vector<1x1x32xf32>
    %300 = vector.broadcast %299 : vector<1x1x32xf32> to vector<16x16x32xf32>
    %301 = arith.mulf %296, %300 : vector<16x16x32xf32>
    %302 = arith.addf %295, %301 : vector<16x16x32xf32>
    %303 = vector.extract_strided_slice %260 {offsets = [6, 0, 0], sizes = [16, 16, 32], strides = [1, 1, 1]} : vector<22x16x32xf32> to vector<16x16x32xf32>
    %304 = vector.extract_strided_slice %10 {offsets = [6, 5, 0], sizes = [1, 1, 32], strides = [1, 1, 1]} : vector<7x7x32xf32> to vector<1x1x32xf32>
    %305 = vector.shape_cast %304 : vector<1x1x32xf32> to vector<32xf32>
    %306 = vector.shape_cast %305 : vector<32xf32> to vector<1x1x32xf32>
    %307 = vector.broadcast %306 : vector<1x1x32xf32> to vector<16x16x32xf32>
    %308 = arith.mulf %303, %307 : vector<16x16x32xf32>
    %309 = arith.addf %302, %308 : vector<16x16x32xf32>
    %310 = vector.extract_strided_slice %9 {offsets = [0, 6, 0], sizes = [22, 16, 32], strides = [1, 1, 1]} : vector<22x22x32xf32> to vector<22x16x32xf32>
    %311 = vector.extract_strided_slice %310 {offsets = [0, 0, 0], sizes = [16, 16, 32], strides = [1, 1, 1]} : vector<22x16x32xf32> to vector<16x16x32xf32>
    %312 = vector.extract_strided_slice %10 {offsets = [0, 6, 0], sizes = [1, 1, 32], strides = [1, 1, 1]} : vector<7x7x32xf32> to vector<1x1x32xf32>
    %313 = vector.shape_cast %312 : vector<1x1x32xf32> to vector<32xf32>
    %314 = vector.shape_cast %313 : vector<32xf32> to vector<1x1x32xf32>
    %315 = vector.broadcast %314 : vector<1x1x32xf32> to vector<16x16x32xf32>
    %316 = arith.mulf %311, %315 : vector<16x16x32xf32>
    %317 = arith.addf %309, %316 : vector<16x16x32xf32>
    %318 = vector.extract_strided_slice %310 {offsets = [1, 0, 0], sizes = [16, 16, 32], strides = [1, 1, 1]} : vector<22x16x32xf32> to vector<16x16x32xf32>
    %319 = vector.extract_strided_slice %10 {offsets = [1, 6, 0], sizes = [1, 1, 32], strides = [1, 1, 1]} : vector<7x7x32xf32> to vector<1x1x32xf32>
    %320 = vector.shape_cast %319 : vector<1x1x32xf32> to vector<32xf32>
    %321 = vector.shape_cast %320 : vector<32xf32> to vector<1x1x32xf32>
    %322 = vector.broadcast %321 : vector<1x1x32xf32> to vector<16x16x32xf32>
    %323 = arith.mulf %318, %322 : vector<16x16x32xf32>
    %324 = arith.addf %317, %323 : vector<16x16x32xf32>
    %325 = vector.extract_strided_slice %310 {offsets = [2, 0, 0], sizes = [16, 16, 32], strides = [1, 1, 1]} : vector<22x16x32xf32> to vector<16x16x32xf32>
    %326 = vector.extract_strided_slice %10 {offsets = [2, 6, 0], sizes = [1, 1, 32], strides = [1, 1, 1]} : vector<7x7x32xf32> to vector<1x1x32xf32>
    %327 = vector.shape_cast %326 : vector<1x1x32xf32> to vector<32xf32>
    %328 = vector.shape_cast %327 : vector<32xf32> to vector<1x1x32xf32>
    %329 = vector.broadcast %328 : vector<1x1x32xf32> to vector<16x16x32xf32>
    %330 = arith.mulf %325, %329 : vector<16x16x32xf32>
    %331 = arith.addf %324, %330 : vector<16x16x32xf32>
    %332 = vector.extract_strided_slice %310 {offsets = [3, 0, 0], sizes = [16, 16, 32], strides = [1, 1, 1]} : vector<22x16x32xf32> to vector<16x16x32xf32>
    %333 = vector.extract_strided_slice %10 {offsets = [3, 6, 0], sizes = [1, 1, 32], strides = [1, 1, 1]} : vector<7x7x32xf32> to vector<1x1x32xf32>
    %334 = vector.shape_cast %333 : vector<1x1x32xf32> to vector<32xf32>
    %335 = vector.shape_cast %334 : vector<32xf32> to vector<1x1x32xf32>
    %336 = vector.broadcast %335 : vector<1x1x32xf32> to vector<16x16x32xf32>
    %337 = arith.mulf %332, %336 : vector<16x16x32xf32>
    %338 = arith.addf %331, %337 : vector<16x16x32xf32>
    %339 = vector.extract_strided_slice %310 {offsets = [4, 0, 0], sizes = [16, 16, 32], strides = [1, 1, 1]} : vector<22x16x32xf32> to vector<16x16x32xf32>
    %340 = vector.extract_strided_slice %10 {offsets = [4, 6, 0], sizes = [1, 1, 32], strides = [1, 1, 1]} : vector<7x7x32xf32> to vector<1x1x32xf32>
    %341 = vector.shape_cast %340 : vector<1x1x32xf32> to vector<32xf32>
    %342 = vector.shape_cast %341 : vector<32xf32> to vector<1x1x32xf32>
    %343 = vector.broadcast %342 : vector<1x1x32xf32> to vector<16x16x32xf32>
    %344 = arith.mulf %339, %343 : vector<16x16x32xf32>
    %345 = arith.addf %338, %344 : vector<16x16x32xf32>
    %346 = vector.extract_strided_slice %310 {offsets = [5, 0, 0], sizes = [16, 16, 32], strides = [1, 1, 1]} : vector<22x16x32xf32> to vector<16x16x32xf32>
    %347 = vector.extract_strided_slice %10 {offsets = [5, 6, 0], sizes = [1, 1, 32], strides = [1, 1, 1]} : vector<7x7x32xf32> to vector<1x1x32xf32>
    %348 = vector.shape_cast %347 : vector<1x1x32xf32> to vector<32xf32>
    %349 = vector.shape_cast %348 : vector<32xf32> to vector<1x1x32xf32>
    %350 = vector.broadcast %349 : vector<1x1x32xf32> to vector<16x16x32xf32>
    %351 = arith.mulf %346, %350 : vector<16x16x32xf32>
    %352 = arith.addf %345, %351 : vector<16x16x32xf32>
    %353 = vector.extract_strided_slice %310 {offsets = [6, 0, 0], sizes = [16, 16, 32], strides = [1, 1, 1]} : vector<22x16x32xf32> to vector<16x16x32xf32>
    %354 = vector.extract_strided_slice %10 {offsets = [6, 6, 0], sizes = [1, 1, 32], strides = [1, 1, 1]} : vector<7x7x32xf32> to vector<1x1x32xf32>
    %355 = vector.shape_cast %354 : vector<1x1x32xf32> to vector<32xf32>
    %356 = vector.shape_cast %355 : vector<32xf32> to vector<1x1x32xf32>
    %357 = vector.broadcast %356 : vector<1x1x32xf32> to vector<16x16x32xf32>
    %358 = arith.mulf %353, %357 : vector<16x16x32xf32>
    %359 = arith.addf %352, %358 : vector<16x16x32xf32>
    %c0_23 = arith.constant 0 : index
    %c0_24 = arith.constant 0 : index
    %360 = vector.load %arg3[%c0_23, %c0_24] : memref<1x32xf32, #tpu.memory_space<vmem>>, vector<1x32xf32>
    %361 = vector.shape_cast %360 : vector<1x32xf32> to vector<32xf32>
    %362 = vector.shape_cast %361 : vector<32xf32> to vector<1x1x32xf32>
    %363 = vector.broadcast %362 : vector<1x1x32xf32> to vector<16x16x32xf32>
    %364 = arith.addf %359, %363 : vector<16x16x32xf32>
    %365 = vector.shape_cast %364 : vector<16x16x32xf32> to vector<256x32xf32>
    %cst_25 = arith.constant dense<0.000000e+00> : vector<256xf32>
    %366 = vector.multi_reduction <add>, %365, %cst_25 [1] : vector<256x32xf32> to vector<256xf32>
    %367 = vector.shape_cast %366 : vector<256xf32> to vector<256x1xf32>
    %368 = arith.mulf %365, %365 : vector<256x32xf32>
    %cst_26 = arith.constant dense<0.000000e+00> : vector<256xf32>
    %369 = vector.multi_reduction <add>, %368, %cst_26 [1] : vector<256x32xf32> to vector<256xf32>
    %370 = vector.shape_cast %369 : vector<256xf32> to vector<256x1xf32>
    %cst_27 = arith.constant 3.125000e-02 : f32
    %371 = vector.broadcast %cst_27 : f32 to vector<256x1xf32>
    %372 = arith.mulf %367, %371 : vector<256x1xf32>
    %cst_28 = arith.constant 3.125000e-02 : f32
    %373 = vector.broadcast %cst_28 : f32 to vector<256x1xf32>
    %374 = arith.mulf %370, %373 : vector<256x1xf32>
    %375 = arith.mulf %372, %372 : vector<256x1xf32>
    %376 = arith.subf %374, %375 : vector<256x1xf32>
    %377 = vector.broadcast %372 : vector<256x1xf32> to vector<256x32xf32>
    %378 = arith.subf %365, %377 : vector<256x32xf32>
    %cst_29 = arith.constant 9.99999997E-7 : f32
    %379 = vector.broadcast %cst_29 : f32 to vector<256x1xf32>
    %380 = arith.addf %376, %379 : vector<256x1xf32>
    %381 = math.rsqrt %380 : vector<256x1xf32>
    %382 = vector.broadcast %381 : vector<256x1xf32> to vector<256x32xf32>
    %383 = arith.mulf %378, %382 : vector<256x32xf32>
    %c0_30 = arith.constant 0 : index
    %c0_31 = arith.constant 0 : index
    %384 = vector.load %arg4[%c0_30, %c0_31] : memref<1x32xf32, #tpu.memory_space<vmem>>, vector<1x32xf32>
    %385 = vector.shape_cast %384 : vector<1x32xf32> to vector<32xf32>
    %386 = vector.shape_cast %385 : vector<32xf32> to vector<1x32xf32>
    %387 = vector.broadcast %386 : vector<1x32xf32> to vector<256x32xf32>
    %388 = arith.mulf %383, %387 : vector<256x32xf32>
    %c0_32 = arith.constant 0 : index
    %c0_33 = arith.constant 0 : index
    %389 = vector.load %arg5[%c0_32, %c0_33] : memref<1x32xf32, #tpu.memory_space<vmem>>, vector<1x32xf32>
    %390 = vector.shape_cast %389 : vector<1x32xf32> to vector<32xf32>
    %391 = vector.shape_cast %390 : vector<32xf32> to vector<1x32xf32>
    %392 = vector.broadcast %391 : vector<1x32xf32> to vector<256x32xf32>
    %393 = arith.addf %388, %392 : vector<256x32xf32>
    %394 = arith.truncf %393 : vector<256x32xf32> to vector<256x32xbf16>
    %c0_34 = arith.constant 0 : index
    %c0_35 = arith.constant 0 : index
    %395 = vector.load %arg6[%c0_34, %c0_35] : memref<32x128xbf16, #tpu.memory_space<vmem>>, vector<32x128xbf16>
    %cst_36 = arith.constant dense<0.000000e+00> : vector<256x128xf32>
    %396 = tpu.matmul %394, %395, %cst_36 {dimension_numbers = #tpu.dot_dimension_numbers<[1], [0], [0], [1], [0, 0, 1, 1], [], []>} : vector<256x32xbf16>, vector<32x128xbf16>, vector<256x128xf32> -> vector<256x128xf32>
    %c0_37 = arith.constant 0 : index
    %c0_38 = arith.constant 0 : index
    %397 = vector.load %arg7[%c0_37, %c0_38] : memref<1x128xf32, #tpu.memory_space<vmem>>, vector<1x128xf32>
    %398 = vector.shape_cast %397 : vector<1x128xf32> to vector<128xf32>
    %399 = vector.shape_cast %398 : vector<128xf32> to vector<1x128xf32>
    %400 = vector.broadcast %399 : vector<1x128xf32> to vector<256x128xf32>
    %401 = arith.addf %396, %400 : vector<256x128xf32>
    %402 = arith.mulf %401, %401 : vector<256x128xf32>
    %403 = arith.mulf %401, %402 : vector<256x128xf32>
    %cst_39 = arith.constant 4.471500e-02 : f32
    %404 = vector.broadcast %cst_39 : f32 to vector<256x128xf32>
    %405 = arith.mulf %404, %403 : vector<256x128xf32>
    %406 = arith.addf %401, %405 : vector<256x128xf32>
    %cst_40 = arith.constant 0.797884583 : f32
    %407 = vector.broadcast %cst_40 : f32 to vector<256x128xf32>
    %408 = arith.mulf %407, %406 : vector<256x128xf32>
    %409 = math.tanh %408 : vector<256x128xf32>
    %cst_41 = arith.constant 1.000000e+00 : f32
    %410 = vector.broadcast %cst_41 : f32 to vector<256x128xf32>
    %411 = arith.addf %410, %409 : vector<256x128xf32>
    %cst_42 = arith.constant 5.000000e-01 : f32
    %412 = vector.broadcast %cst_42 : f32 to vector<256x128xf32>
    %413 = arith.mulf %412, %411 : vector<256x128xf32>
    %414 = arith.mulf %401, %413 : vector<256x128xf32>
    %415 = arith.truncf %414 : vector<256x128xf32> to vector<256x128xbf16>
    %c0_43 = arith.constant 0 : index
    %c0_44 = arith.constant 0 : index
    %416 = vector.load %arg8[%c0_43, %c0_44] : memref<128x32xbf16, #tpu.memory_space<vmem>>, vector<128x32xbf16>
    %cst_45 = arith.constant dense<0.000000e+00> : vector<256x32xf32>
    %417 = tpu.matmul %415, %416, %cst_45 {dimension_numbers = #tpu.dot_dimension_numbers<[1], [0], [0], [1], [0, 0, 1, 1], [], []>} : vector<256x128xbf16>, vector<128x32xbf16>, vector<256x32xf32> -> vector<256x32xf32>
    %c0_46 = arith.constant 0 : index
    %c0_47 = arith.constant 0 : index
    %418 = vector.load %arg9[%c0_46, %c0_47] : memref<1x32xf32, #tpu.memory_space<vmem>>, vector<1x32xf32>
    %419 = vector.shape_cast %418 : vector<1x32xf32> to vector<32xf32>
    %420 = vector.shape_cast %419 : vector<32xf32> to vector<1x32xf32>
    %421 = vector.broadcast %420 : vector<1x32xf32> to vector<256x32xf32>
    %422 = arith.addf %417, %421 : vector<256x32xf32>
    %c0_48 = arith.constant 0 : index
    %c0_49 = arith.constant 0 : index
    %c0_50 = arith.constant 0 : index
    %c0_51 = arith.constant 0 : index
    %423 = vector.load %arg1[%c0_48, %c0_49, %c0_50, %c0_51] : memref<1x16x16x32xf32, #tpu.memory_space<vmem>>, vector<1x16x16x32xf32>
    %424 = vector.shape_cast %423 : vector<1x16x16x32xf32> to vector<16x16x32xf32>
    %425 = vector.shape_cast %422 : vector<256x32xf32> to vector<16x16x32xf32>
    %426 = arith.addf %424, %425 : vector<16x16x32xf32>
    %c0_52 = arith.constant 0 : index
    %c0_53 = arith.constant 0 : index
    %c0_54 = arith.constant 0 : index
    %c0_55 = arith.constant 0 : index
    %427 = vector.load %arg10[%c0_52, %c0_53, %c0_54, %c0_55] : memref<1x16x16x32xf32, #tpu.memory_space<vmem>>, vector<1x16x16x32xf32>
    %428 = vector.shape_cast %427 : vector<1x16x16x32xf32> to vector<16x16x32xf32>
    %429 = vector.shape_cast %426 : vector<16x16x32xf32> to vector<1x16x16x32xf32>
    tpu.vector_store %arg10[%c0_52, %c0_53, %c0_54, %c0_55], %429 {strides = array<i32>} : memref<1x16x16x32xf32, #tpu.memory_space<vmem>>, vector<1x16x16x32xf32>,
    return
  }
  func.func @transform_0(%arg0: i32) -> (i32, i32, i32, i32) {
    %c0_i32 = arith.constant 0 : i32
    %c0_i32_0 = arith.constant 0 : i32
    %c0_i32_1 = arith.constant 0 : i32
    %c0_i32_2 = arith.constant 0 : i32
    return %arg0, %c0_i32, %c0_i32_0, %c0_i32_1 : i32, i32, i32, i32
  }
  func.func @transform_1(%arg0: i32) -> (i32, i32, i32) {
    %c0_i32 = arith.constant 0 : i32
    %c0_i32_0 = arith.constant 0 : i32
    %c0_i32_1 = arith.constant 0 : i32
    %c0_i32_2 = arith.constant 0 : i32
    return %c0_i32, %c0_i32_0, %c0_i32_1 : i32, i32, i32
  }
  func.func @transform_2(%arg0: i32) -> (i32, i32) {
    %c0_i32 = arith.constant 0 : i32
    %c0_i32_0 = arith.constant 0 : i32
    %c0_i32_1 = arith.constant 0 : i32
    return %c0_i32, %c0_i32_0 : i32, i32
  }
  func.func @transform_3(%arg0: i32) -> (i32, i32) {
    %c0_i32 = arith.constant 0 : i32
    %c0_i32_0 = arith.constant 0 : i32
    %c0_i32_1 = arith.constant 0 : i32
    return %c0_i32, %c0_i32_0 : i32, i32
  }
  func.func @transform_4(%arg0: i32) -> (i32, i32) {
    %c0_i32 = arith.constant 0 : i32
    %c0_i32_0 = arith.constant 0 : i32
    %c0_i32_1 = arith.constant 0 : i32
    return %c0_i32, %c0_i32_0 : i32, i32
  }
  func.func @transform_5(%arg0: i32) -> (i32, i32) {
    %c0_i32 = arith.constant 0 : i32
    %c0_i32_0 = arith.constant 0 : i32
    %c0_i32_1 = arith.constant 0 : i32
    return %c0_i32, %c0_i32_0 : i32, i32
  }
  func.func @transform_6(%arg0: i32) -> (i32, i32) {
    %c0_i32 = arith.constant 0 : i32
    %c0_i32_0 = arith.constant 0 : i32
    %c0_i32_1 = arith.constant 0 : i32
    return %c0_i32, %c0_i32_0 : i32, i32
  }
  func.func @transform_7(%arg0: i32) -> (i32, i32) {
    %c0_i32 = arith.constant 0 : i32
    %c0_i32_0 = arith.constant 0 : i32
    %c0_i32_1 = arith.constant 0 : i32
    return %c0_i32, %c0_i32_0 : i32, i32
  }
  func.func @transform_8(%arg0: i32) -> (i32, i32) {
    %c0_i32 = arith.constant 0 : i32
    %c0_i32_0 = arith.constant 0 : i32
    %c0_i32_1 = arith.constant 0 : i32
    return %c0_i32, %c0_i32_0 : i32, i32
  }
  func.func @transform_9(%arg0: i32) -> (i32, i32, i32, i32) {
    %c0_i32 = arith.constant 0 : i32
    %c0_i32_0 = arith.constant 0 : i32
    %c0_i32_1 = arith.constant 0 : i32
    %c0_i32_2 = arith.constant 0 : i32
    return %arg0, %c0_i32, %c0_i32_0, %c0_i32_1 : i32, i32, i32, i32
  }
}

</mosaic_0001>

<llo_original>
// kernel: tpu_custom_call.1
$region0: #{tpu_custom_call.1}
  #allocation0 [shape = 'u32[]', space=smem, size = 0x4, offset = 0x4, fixed_abs, tag = 'smem constant byte address 0x4 - core index']
  #allocation1 [shape = 'u32[144,128]{1,0:T(1,128)}', space=vmem, size = 0x12000, scoped, tag = 'internal scratch']
  #allocation2 [shape = 'f32[22,22,32]{2,1,0:T(8,128)}', space=vmem, size = 0x42000, scoped, tag = 'scratch operand']
  %s0 = inlined_call_operand.hbm [shape: f32[2,16,16,32], index: 0, kind: input, shape index: {}]
  %s1 = inlined_call_operand.vmem [shape: f32[7,7,32], index: 1, kind: input, shape index: {}]
  %s2 = inlined_call_operand.vmem [shape: f32[1,32], index: 2, kind: input, shape index: {}]
  %s3 = inlined_call_operand.vmem [shape: f32[1,32], index: 3, kind: input, shape index: {}]
  %s4 = inlined_call_operand.vmem [shape: f32[1,32], index: 4, kind: input, shape index: {}]
  %s5 = inlined_call_operand.vmem [shape: bf16[32,128], index: 5, kind: input, shape index: {}]
  %s6 = inlined_call_operand.vmem [shape: f32[1,128], index: 6, kind: input, shape index: {}]
  %s7 = inlined_call_operand.vmem [shape: bf16[128,32], index: 7, kind: input, shape index: {}]
  %s8 = inlined_call_operand.vmem [shape: f32[1,32], index: 8, kind: input, shape index: {}]
  %s9 = inlined_call_operand.hbm [shape: f32[2,16,16,32], index: 9, kind: output, shape index: {}]
  %s10 = sld [smem:[#allocation0]]
  $region73: #{tpu_custom_call.1} parent=0
    _
  %s12 = ssub.s32 1, %s10
  %s13 = scalar_select 0, %s12, %s10
  $region1: #{tpu_custom_call.1} parent=0
    #allocation3 [shape = 'u8[262144]{0}', space=vmem, size = 0x40000, scoped, tag = 'input window, operand 0']
    #allocation4 [shape = 's32[2]{0}', space=sflag, size = 0x8, scoped, tag = 'scoped memory for tpu_custom_call.1']
    #allocation5 [shape = 's32[2]{0}', space=sflag, size = 0x8, scoped, tag = 'scoped memory for tpu_custom_call.1']
    #allocation6 [shape = 'u8[262144]{0}', space=vmem, size = 0x40000, scoped, tag = 'output window, operand 0']
    %14 = vsyncpa [#allocation4], 0
    %s15 = scalar_lea.sflag [#allocation4], 1
    %16 = vsyncpa %s15, 0
    %17 = vsyncpa [#allocation5], 0
    %s18 = scalar_lea.sflag [#allocation5], 1
    %19 = vsyncpa %s18, 0
    loop: start=0, step=1, limit=4
    $region2: #{tpu_custom_call.1} parent=1 // loop_pre_header
      _
    $region3: #{tpu_custom_call.1} parent=1 // loop_header
      %s21 = sphi 0, %s25
      %p22 = scmp.ge.s32.totalorder %s21, 4
      %s31 = sphi 0, %s33
      %s34 = sphi 0, %s31
      %s35 = sphi 0, %s34
      %s51 = sphi 0, %s35
      %s55 = sphi 0, %s55
      %s57 = sphi 0, %s55
      %s58 = sphi 0, %s57
      %s72 = sphi 0, %s58
      %s76 = sphi 0, %s76
      %s78 = sphi 0, %s76
      %s79 = sphi 0, %s78
      %s93 = sphi 0, %s79
      %s97 = sphi 0, %s97
      %s99 = sphi 0, %s97
      %s100 = sphi 0, %s99
      %s114 = sphi 0, %s100
      %s118 = sphi 0, %s118
      %s120 = sphi 0, %s118
      %s121 = sphi 0, %s120
      %s135 = sphi 0, %s121
      %s139 = sphi 0, %s139
      %s141 = sphi 0, %s139
      %s142 = sphi 0, %s141
      %s156 = sphi 0, %s142
      %s160 = sphi 0, %s160
      %s162 = sphi 0, %s160
      %s163 = sphi 0, %s162
      %s177 = sphi 0, %s163
      %s181 = sphi 0, %s181
      %s183 = sphi 0, %s181
      %s184 = sphi 0, %s183
      %s198 = sphi 0, %s184
      %s202 = sphi 0, %s202
      %s204 = sphi 0, %s202
      %s205 = sphi 0, %s204
      %s219 = sphi 0, %s205
      %s225 = sphi 0, %s227
      %s228 = sphi 0, %s225
      %s229 = sphi 0, %s228
      %s245 = sphi 0, %s229
    $region4: #{tpu_custom_call.1} parent=1 // loop_header_branch
      %24 = sbr.rel (%p22) target = $region8
    $region5: #{tpu_custom_call.1} parent=1 // loop_body
      %s26 = ssub.s32 %s21, 1
      %s27 = ssub.s32 %s21, 2
      %s28 = sadd.s32 %s21, 1
      %s29 = ssub.s32 %s21, %s28
      %p30 = scmp.eq.s32.totalorder %s29, 0
      %s32 = sadd.s32 %s31, 1
      %s33 = scalar_select %p30, %s31, %s32
      %p36 = pneg %p30
      %p37 = scmp.eq.s32.totalorder %s21, 1
      %p38 = por %p36, %p37
      %p39 = scmp.ne.s32.totalorder %s31, %s34
      %p40 = scmp.eq.s32.totalorder %s21, 0
      %p41 = por %p39, %p40
      %p42 = scmp.ne.s32.totalorder %s31, %s34
      %p43 = scmp.eq.s32.totalorder %s26, 1
      %p44 = por %p42, %p43
      %p45 = scmp.ne.s32.totalorder %s34, %s35
      %p46 = scmp.eq.s32.totalorder %s26, 0
      %p47 = por %p45, %p46
      %p48 = scmp.ne.s32.totalorder %s34, %s35
      %p49 = scmp.eq.s32.totalorder %s27, 1
      %p50 = por %p48, %p49
      %p52 = scmp.ne.s32.totalorder %s35, %s51
      %p53 = scmp.eq.s32.totalorder %s27, 0
      %p54 = por %p52, %p53
      %s56 = sadd.s32 %s55, 1
      %p59 = scmp.eq.s32.totalorder %s21, 1
      %p60 = scmp.ne.s32.totalorder %s55, %s57
      %p61 = scmp.eq.s32.totalorder %s21, 0
      %p62 = por %p60, %p61
      %p63 = scmp.ne.s32.totalorder %s55, %s57
      %p64 = scmp.eq.s32.totalorder %s26, 1
      %p65 = por %p63, %p64
      %p66 = scmp.ne.s32.totalorder %s57, %s58
      %p67 = scmp.eq.s32.totalorder %s26, 0
      %p68 = por %p66, %p67
      %p69 = scmp.ne.s32.totalorder %s57, %s58
      %p70 = scmp.eq.s32.totalorder %s27, 1
      %p71 = por %p69, %p70
      %p73 = scmp.ne.s32.totalorder %s58, %s72
      %p74 = scmp.eq.s32.totalorder %s27, 0
      %p75 = por %p73, %p74
      %s77 = sadd.s32 %s76, 1
      %p80 = scmp.eq.s32.totalorder %s21, 1
      %p81 = scmp.ne.s32.totalorder %s76, %s78
      %p82 = scmp.eq.s32.totalorder %s21, 0
      %p83 = por %p81, %p82
      %p84 = scmp.ne.s32.totalorder %s76, %s78
      %p85 = scmp.eq.s32.totalorder %s26, 1
      %p86 = por %p84, %p85
      %p87 = scmp.ne.s32.totalorder %s78, %s79
      %p88 = scmp.eq.s32.totalorder %s26, 0
      %p89 = por %p87, %p88
      %p90 = scmp.ne.s32.totalorder %s78, %s79
      %p91 = scmp.eq.s32.totalorder %s27, 1
      %p92 = por %p90, %p91
      %p94 = scmp.ne.s32.totalorder %s79, %s93
      %p95 = scmp.eq.s32.totalorder %s27, 0
      %p96 = por %p94, %p95
      %s98 = sadd.s32 %s97, 1
      %p101 = scmp.eq.s32.totalorder %s21, 1
      %p102 = scmp.ne.s32.totalorder %s97, %s99
      %p103 = scmp.eq.s32.totalorder %s21, 0
      %p104 = por %p102, %p103
      %p105 = scmp.ne.s32.totalorder %s97, %s99
      %p106 = scmp.eq.s32.totalorder %s26, 1
      %p107 = por %p105, %p106
      %p108 = scmp.ne.s32.totalorder %s99, %s100
      %p109 = scmp.eq.s32.totalorder %s26, 0
      %p110 = por %p108, %p109
      %p111 = scmp.ne.s32.totalorder %s99, %s100
      %p112 = scmp.eq.s32.totalorder %s27, 1
      %p113 = por %p111, %p112
      %p115 = scmp.ne.s32.totalorder %s100, %s114
      %p116 = scmp.eq.s32.totalorder %s27, 0
      %p117 = por %p115, %p116
      %s119 = sadd.s32 %s118, 1
      %p122 = scmp.eq.s32.totalorder %s21, 1
      %p123 = scmp.ne.s32.totalorder %s118, %s120
      %p124 = scmp.eq.s32.totalorder %s21, 0
      %p125 = por %p123, %p124
      %p126 = scmp.ne.s32.totalorder %s118, %s120
      %p127 = scmp.eq.s32.totalorder %s26, 1
      %p128 = por %p126, %p127
      %p129 = scmp.ne.s32.totalorder %s120, %s121
      %p130 = scmp.eq.s32.totalorder %s26, 0
      %p131 = por %p129, %p130
      %p132 = scmp.ne.s32.totalorder %s120, %s121
      %p133 = scmp.eq.s32.totalorder %s27, 1
      %p134 = por %p132, %p133
      %p136 = scmp.ne.s32.totalorder %s121, %s135
      %p137 = scmp.eq.s32.totalorder %s27, 0
      %p138 = por %p136, %p137
      %s140 = sadd.s32 %s139, 1
      %p143 = scmp.eq.s32.totalorder %s21, 1
      %p144 = scmp.ne.s32.totalorder %s139, %s141
      %p145 = scmp.eq.s32.totalorder %s21, 0
      %p146 = por %p144, %p145
      %p147 = scmp.ne.s32.totalorder %s139, %s141
      %p148 = scmp.eq.s32.totalorder %s26, 1
      %p149 = por %p147, %p148
      %p150 = scmp.ne.s32.totalorder %s141, %s142
      %p151 = scmp.eq.s32.totalorder %s26, 0
      %p152 = por %p150, %p151
      %p153 = scmp.ne.s32.totalorder %s141, %s142
      %p154 = scmp.eq.s32.totalorder %s27, 1
      %p155 = por %p153, %p154
      %p157 = scmp.ne.s32.totalorder %s142, %s156
      %p158 = scmp.eq.s32.totalorder %s27, 0
      %p159 = por %p157, %p158
      %s161 = sadd.s32 %s160, 1
      %p164 = scmp.eq.s32.totalorder %s21, 1
      %p165 = scmp.ne.s32.totalorder %s160, %s162
      %p166 = scmp.eq.s32.totalorder %s21, 0
      %p167 = por %p165, %p166
      %p168 = scmp.ne.s32.totalorder %s160, %s162
      %p169 = scmp.eq.s32.totalorder %s26, 1
      %p170 = por %p168, %p169
      %p171 = scmp.ne.s32.totalorder %s162, %s163
      %p172 = scmp.eq.s32.totalorder %s26, 0
      %p173 = por %p171, %p172
      %p174 = scmp.ne.s32.totalorder %s162, %s163
      %p175 = scmp.eq.s32.totalorder %s27, 1
      %p176 = por %p174, %p175
      %p178 = scmp.ne.s32.totalorder %s163, %s177
      %p179 = scmp.eq.s32.totalorder %s27, 0
      %p180 = por %p178, %p179
      %s182 = sadd.s32 %s181, 1
      %p185 = scmp.eq.s32.totalorder %s21, 1
      %p186 = scmp.ne.s32.totalorder %s181, %s183
      %p187 = scmp.eq.s32.totalorder %s21, 0
      %p188 = por %p186, %p187
      %p189 = scmp.ne.s32.totalorder %s181, %s183
      %p190 = scmp.eq.s32.totalorder %s26, 1
      %p191 = por %p189, %p190
      %p192 = scmp.ne.s32.totalorder %s183, %s184
      %p193 = scmp.eq.s32.totalorder %s26, 0
      %p194 = por %p192, %p193
      %p195 = scmp.ne.s32.totalorder %s183, %s184
      %p196 = scmp.eq.s32.totalorder %s27, 1
      %p197 = por %p195, %p196
      %p199 = scmp.ne.s32.totalorder %s184, %s198
      %p200 = scmp.eq.s32.totalorder %s27, 0
      %p201 = por %p199, %p200
      %s203 = sadd.s32 %s202, 1
      %p206 = scmp.eq.s32.totalorder %s21, 1
      %p207 = scmp.ne.s32.totalorder %s202, %s204
      %p208 = scmp.eq.s32.totalorder %s21, 0
      %p209 = por %p207, %p208
      %p210 = scmp.ne.s32.totalorder %s202, %s204
      %p211 = scmp.eq.s32.totalorder %s26, 1
      %p212 = por %p210, %p211
      %p213 = scmp.ne.s32.totalorder %s204, %s205
      %p214 = scmp.eq.s32.totalorder %s26, 0
      %p215 = por %p213, %p214
      %p216 = scmp.ne.s32.totalorder %s204, %s205
      %p217 = scmp.eq.s32.totalorder %s27, 1
      %p218 = por %p216, %p217
      %p220 = scmp.ne.s32.totalorder %s205, %s219
      %p221 = scmp.eq.s32.totalorder %s27, 0
      %p222 = por %p220, %p221
      %s223 = ssub.s32 %s21, %s28
      %p224 = scmp.eq.s32.totalorder %s223, 0
      %s226 = sadd.s32 %s225, 1
      %s227 = scalar_select %p224, %s225, %s226
      %p230 = pneg %p224
      %p231 = scmp.eq.s32.totalorder %s21, 1
      %p232 = por %p230, %p231
      %p233 = scmp.ne.s32.totalorder %s225, %s228
      %p234 = scmp.eq.s32.totalorder %s21, 0
      %p235 = por %p233, %p234
      %p236 = scmp.ne.s32.totalorder %s225, %s228
      %p237 = scmp.eq.s32.totalorder %s26, 1
      %p238 = por %p236, %p237
      %p239 = scmp.ne.s32.totalorder %s228, %s229
      %p240 = scmp.eq.s32.totalorder %s26, 0
      %p241 = por %p239, %p240
      %p242 = scmp.ne.s32.totalorder %s228, %s229
      %p243 = scmp.eq.s32.totalorder %s27, 1
      %p244 = por %p242, %p243
      %p246 = scmp.ne.s32.totalorder %s229, %s245
      %p247 = scmp.eq.s32.totalorder %s27, 0
      %p248 = por %p246, %p247
      %p249 = scmp.le.s32.totalorder 1, %s21
      %p250 = scmp.lt.s32.totalorder %s21, 3
      %p251 = pnand %p249, %p250
      %p252 = pneg %p251
      // Predicated region
      $region9: #{tpu_custom_call.1} parent=5 // pred_check
        _
      $region10: #{tpu_custom_call.1} parent=5 // pred_check_branch
        %254 = sbr.rel (%p251) target = $region12
      $region11: #{tpu_custom_call.1} parent=5 // pred_region
        %s255 = ssub.s32 %s21, 1
        // Predicated region
        $region13: #{tpu_custom_call.1} parent=11 // pred_check
          %p256 = pneg %p68
        $region14: #{tpu_custom_call.1} parent=11 // pred_check_branch
          %258 = sbr.rel (%p256) target = $region16
        $region15: #{tpu_custom_call.1} parent=11 // pred_region
          _
        $region16: #{tpu_custom_call.1} parent=11 // pred_fallthru
          _
        // Predicated region
        $region17: #{tpu_custom_call.1} parent=11 // pred_check
          %p259 = pneg %p89
        $region18: #{tpu_custom_call.1} parent=11 // pred_check_branch
          %261 = sbr.rel (%p259) target = $region20
        $region19: #{tpu_custom_call.1} parent=11 // pred_region
          _
        $region20: #{tpu_custom_call.1} parent=11 // pred_fallthru
          _
        // Predicated region
        $region21: #{tpu_custom_call.1} parent=11 // pred_check
          %p262 = pneg %p110
        $region22: #{tpu_custom_call.1} parent=11 // pred_check_branch
          %264 = sbr.rel (%p262) target = $region24
        $region23: #{tpu_custom_call.1} parent=11 // pred_region
          _
        $region24: #{tpu_custom_call.1} parent=11 // pred_fallthru
          _
        // Predicated region
        $region25: #{tpu_custom_call.1} parent=11 // pred_check
          %p265 = pneg %p131
        $region26: #{tpu_custom_call.1} parent=11 // pred_check_branch
          %267 = sbr.rel (%p265) target = $region28
        $region27: #{tpu_custom_call.1} parent=11 // pred_region
          _
        $region28: #{tpu_custom_call.1} parent=11 // pred_fallthru
          _
        // Predicated region
        $region29: #{tpu_custom_call.1} parent=11 // pred_check
          %p268 = pneg %p152
        $region30: #{tpu_custom_call.1} parent=11 // pred_check_branch
          %270 = sbr.rel (%p268) target = $region32
        $region31: #{tpu_custom_call.1} parent=11 // pred_region
          _
        $region32: #{tpu_custom_call.1} parent=11 // pred_fallthru
          _
        // Predicated region
        $region33: #{tpu_custom_call.1} parent=11 // pred_check
          %p271 = pneg %p173
        $region34: #{tpu_custom_call.1} parent=11 // pred_check_branch
          %273 = sbr.rel (%p271) target = $region36
        $region35: #{tpu_custom_call.1} parent=11 // pred_region
          _
        $region36: #{tpu_custom_call.1} parent=11 // pred_fallthru
          _
        // Predicated region
        $region37: #{tpu_custom_call.1} parent=11 // pred_check
          %p274 = pneg %p194
        $region38: #{tpu_custom_call.1} parent=11 // pred_check_branch
          %276 = sbr.rel (%p274) target = $region40
        $region39: #{tpu_custom_call.1} parent=11 // pred_region
          _
        $region40: #{tpu_custom_call.1} parent=11 // pred_fallthru
          _
        // Predicated region
        $region41: #{tpu_custom_call.1} parent=11 // pred_check
          %p277 = pneg %p215
        $region42: #{tpu_custom_call.1} parent=11 // pred_check_branch
          %279 = sbr.rel (%p277) target = $region44
        $region43: #{tpu_custom_call.1} parent=11 // pred_region
          _
        $region44: #{tpu_custom_call.1} parent=11 // pred_fallthru
          _
      $region12: #{tpu_custom_call.1} parent=5 // pred_fallthru
        _
      %p280 = scmp.lt.s32.totalorder %s21, 2
      // Predicated region
      $region45: #{tpu_custom_call.1} parent=5 // pred_check
        %p281 = pneg %p280
      $region46: #{tpu_custom_call.1} parent=5 // pred_check_branch
        %283 = sbr.rel (%p281) target = $region48
      $region47: #{tpu_custom_call.1} parent=5 // pred_region
        // Predicated region
        $region49: #{tpu_custom_call.1} parent=47 // pred_check
          %p284 = pneg %p41
        $region50: #{tpu_custom_call.1} parent=47 // pred_check_branch
          %286 = sbr.rel (%p284) target = $region52
        $region51: #{tpu_custom_call.1} parent=47 // pred_region
          %s287 = sand.u32 %s31, 1
          %s288 = scalar_lea.sflag [#allocation4], %s287
          %s289 = sand.u32 %s31, 1
          %s290 = smul.addr %s289, 256
          %s291 = scalar_lea.vmem [#allocation3], %s290
          %s293 = ssub.s32 4096, 4096
          %294 = vsyncadd %s288, %s293
          %s295 = smul.addr %s21, 32
          %s296 = smul.addr %s295, 128
          %s297 = scalar_lea.hbm %s0, %s296
          %s298 = sshll.u32 %s291, 4
          %s299 = int_to_ptr.vmem [resolvable:$true] %s298
          %304 = dma.hbm_to_vmem [thread:$0]  %s297, 4096, %s299, %s288, 128, 128, 8
        $region52: #{tpu_custom_call.1} parent=47 // pred_fallthru
          _
      $region48: #{tpu_custom_call.1} parent=5 // pred_fallthru
        _
      %p305 = scmp.le.s32.totalorder 1, %s21
      %p306 = scmp.lt.s32.totalorder %s21, 3
      %p307 = pnand %p305, %p306
      %p308 = pneg %p307
      // Predicated region
      $region53: #{tpu_custom_call.1} parent=5 // pred_check
        _
      $region54: #{tpu_custom_call.1} parent=5 // pred_check_branch
        %310 = sbr.rel (%p307) target = $region56
      $region55: #{tpu_custom_call.1} parent=5 // pred_region
        %s311 = ssub.s32 %s21, 1
        %s312 = sand.u32 %s34, 1
        %s313 = scalar_lea.sflag [#allocation4], %s312
        %s314 = sand.u32 %s34, 1
        %s315 = smul.addr %s314, 256
        %s316 = scalar_lea.vmem [#allocation3], %s315
        // Predicated region
        $region57: #{tpu_custom_call.1} parent=55 // pred_check
          %p317 = pneg %p47
        $region58: #{tpu_custom_call.1} parent=55 // pred_check_branch
          %319 = sbr.rel (%p317) target = $region60
        $region59: #{tpu_custom_call.1} parent=55 // pred_region
          %320 = dma.done %s313, 4096
        $region60: #{tpu_custom_call.1} parent=55 // pred_fallthru
          _
        %s321 = sand.u32 %s34, 1
        %s322 = scalar_lea.sflag [#allocation4], %s321
        %s323 = sand.u32 %s34, 1
        %s324 = smul.addr %s323, 256
        %s325 = scalar_lea.vmem [#allocation3], %s324
        %p326 = pneg %p47
        %p327 = pneg %p44
        %p328 = pneg %p68
        %p329 = pneg %p65
        %p330 = pneg %p89
        %p331 = pneg %p86
        %p332 = pneg %p110
        %p333 = pneg %p107
        %p334 = pneg %p131
        %p335 = pneg %p128
        %p336 = pneg %p152
        %p337 = pneg %p149
        %p338 = pneg %p173
        %p339 = pneg %p170
        %p340 = pneg %p194
        %p341 = pneg %p191
        %p342 = pneg %p215
        %p343 = pneg %p212
        %p344 = pneg %p241
        %p345 = pneg %p238
        %s346 = sand.u32 %s228, 1
        %s347 = scalar_lea.sflag [#allocation5], %s346
        %s348 = sand.u32 %s228, 1
        %s349 = smul.addr %s348, 256
        %s350 = scalar_lea.vmem [#allocation6], %s349
        %vm352 = vcmask 261120
        %353 = vst.msk [vmem:[#allocation2] sm:$0xff] %vm352, 0.0
        %354 = vst.msk [vmem:[#allocation2 + $0x8] sm:$0xff] %vm352, 0.0
        %vm355 = vcmask 259072
        %356 = vst.msk [vmem:[#allocation2 + $0x10] sm:$0x3f] %vm355, 0.0
        %357 = vst.msk [vmem:[#allocation2 + $0x18] sm:$0xff] %vm352, 0.0
        %358 = vst.msk [vmem:[#allocation2 + $0x20] sm:$0xff] %vm352, 0.0
        %359 = vst.msk [vmem:[#allocation2 + $0x28] sm:$0x3f] %vm355, 0.0
        %360 = vst.msk [vmem:[#allocation2 + $0x30] sm:$0xff] %vm352, 0.0
        %361 = vst.msk [vmem:[#allocation2 + $0x38] sm:$0xff] %vm352, 0.0
        %362 = vst.msk [vmem:[#allocation2 + $0x40] sm:$0x3f] %vm355, 0.0
        %s363 = scalar_lea.vmem [#allocation2], 456
        %364 = vst.msk [vmem:[%s363] sm:$0xff] %vm352, 0.0
        %365 = vst.msk [vmem:[%s363 + $0x8] sm:$0xff] %vm352, 0.0
        %366 = vst.msk [vmem:[%s363 + $0x10] sm:$0x3f] %vm355, 0.0
        %367 = vst.msk [vmem:[%s363 + $0x18] sm:$0xff] %vm352, 0.0
        %368 = vst.msk [vmem:[%s363 + $0x20] sm:$0xff] %vm352, 0.0
        %369 = vst.msk [vmem:[%s363 + $0x28] sm:$0x3f] %vm355, 0.0
        %370 = vst.msk [vmem:[%s363 + $0x30] sm:$0xff] %vm352, 0.0
        %371 = vst.msk [vmem:[%s363 + $0x38] sm:$0xff] %vm352, 0.0
        %372 = vst.msk [vmem:[%s363 + $0x40] sm:$0x3f] %vm355, 0.0
        %s373 = scalar_lea.vmem [#allocation2], 72
        %vm374 = vcmask 256000
        %375 = vst.msk [vmem:[%s373] sm:$0x7] %vm374, 0.0
        %376 = vst.msk [vmem:[%s373 + $0x18] sm:$0x7] %vm374, 0.0
        %377 = vst.msk [vmem:[%s373 + $0x30] sm:$0x7] %vm374, 0.0
        %378 = vst.msk [vmem:[%s373 + $0x48] sm:$0x7] %vm374, 0.0
        %379 = vst.msk [vmem:[%s373 + $0x60] sm:$0x7] %vm374, 0.0
        %380 = vst.msk [vmem:[%s373 + $0x78] sm:$0x7] %vm374, 0.0
        %381 = vst.msk [vmem:[%s373 + $0x90] sm:$0x7] %vm374, 0.0
        %382 = vst.msk [vmem:[%s373 + $0xa8] sm:$0x7] %vm374, 0.0
        %383 = vst.msk [vmem:[%s373 + $0xc0] sm:$0x7] %vm374, 0.0
        %384 = vst.msk [vmem:[%s373 + $0xd8] sm:$0x7] %vm374, 0.0
        %385 = vst.msk [vmem:[%s373 + $0xf0] sm:$0x7] %vm374, 0.0
        %386 = vst.msk [vmem:[%s373 + $0x108] sm:$0x7] %vm374, 0.0
        %387 = vst.msk [vmem:[%s373 + $0x120] sm:$0x7] %vm374, 0.0
        %388 = vst.msk [vmem:[%s373 + $0x138] sm:$0x7] %vm374, 0.0
        %389 = vst.msk [vmem:[%s373 + $0x150] sm:$0x7] %vm374, 0.0
        %390 = vst.msk [vmem:[%s373 + $0x168] sm:$0x7] %vm374, 0.0
        %391 = vst.msk [vmem:[%s373 + $0x13] sm:$0x7] %vm374, 0.0
        %392 = vst.msk [vmem:[%s373 + $0x2b] sm:$0x7] %vm374, 0.0
        %393 = vst.msk [vmem:[%s373 + $0x43] sm:$0x7] %vm374, 0.0
        %394 = vst.msk [vmem:[%s373 + $0x5b] sm:$0x7] %vm374, 0.0
        %395 = vst.msk [vmem:[%s373 + $0x73] sm:$0x7] %vm374, 0.0
        %396 = vst.msk [vmem:[%s373 + $0x8b] sm:$0x7] %vm374, 0.0
        %397 = vst.msk [vmem:[%s373 + $0xa3] sm:$0x7] %vm374, 0.0
        %398 = vst.msk [vmem:[%s373 + $0xbb] sm:$0x7] %vm374, 0.0
        %399 = vst.msk [vmem:[%s373 + $0xd3] sm:$0x7] %vm374, 0.0
        %400 = vst.msk [vmem:[%s373 + $0xeb] sm:$0x7] %vm374, 0.0
        %401 = vst.msk [vmem:[%s373 + $0x103] sm:$0x7] %vm374, 0.0
        %402 = vst.msk [vmem:[%s373 + $0x11b] sm:$0x7] %vm374, 0.0
        %403 = vst.msk [vmem:[%s373 + $0x133] sm:$0x7] %vm374, 0.0
        %404 = vst.msk [vmem:[%s373 + $0x14b] sm:$0x7] %vm374, 0.0
        %405 = vst.msk [vmem:[%s373 + $0x163] sm:$0x7] %vm374, 0.0
        %406 = vst.msk [vmem:[%s373 + $0x17b] sm:$0x7] %vm374, 0.0
        %v407 = vld [vmem:[%s316] sm:$0xff]
        %v408 = vld [vmem:[%s316 + $0x8] sm:$0xff]
        %v409 = vld [vmem:[%s316 + $0x10] sm:$0xff]
        %v410 = vld [vmem:[%s316 + $0x18] sm:$0xff]
        %v411 = vld [vmem:[%s316 + $0x20] sm:$0xff]
        %v412 = vld [vmem:[%s316 + $0x28] sm:$0xff]
        %v413 = vld [vmem:[%s316 + $0x30] sm:$0xff]
        %v414 = vld [vmem:[%s316 + $0x38] sm:$0xff]
        %v415 = vld [vmem:[%s316 + $0x40] sm:$0xff]
        %v416 = vld [vmem:[%s316 + $0x48] sm:$0xff]
        %v417 = vld [vmem:[%s316 + $0x50] sm:$0xff]
        %v418 = vld [vmem:[%s316 + $0x58] sm:$0xff]
        %v419 = vld [vmem:[%s316 + $0x60] sm:$0xff]
        %v420 = vld [vmem:[%s316 + $0x68] sm:$0xff]
        %v421 = vld [vmem:[%s316 + $0x70] sm:$0xff]
        %v422 = vld [vmem:[%s316 + $0x78] sm:$0xff]
        %v423 = vld [vmem:[%s316 + $0x80] sm:$0xff]
        %v424 = vld [vmem:[%s316 + $0x88] sm:$0xff]
        %v425 = vld [vmem:[%s316 + $0x90] sm:$0xff]
        %v426 = vld [vmem:[%s316 + $0x98] sm:$0xff]
        %v427 = vld [vmem:[%s316 + $0xa0] sm:$0xff]
        %v428 = vld [vmem:[%s316 + $0xa8] sm:$0xff]
        %v429 = vld [vmem:[%s316 + $0xb0] sm:$0xff]
        %v430 = vld [vmem:[%s316 + $0xb8] sm:$0xff]
        %v431 = vld [vmem:[%s316 + $0xc0] sm:$0xff]
        %v432 = vld [vmem:[%s316 + $0xc8] sm:$0xff]
        %v433 = vld [vmem:[%s316 + $0xd0] sm:$0xff]
        %v434 = vld [vmem:[%s316 + $0xd8] sm:$0xff]
        %v435 = vld [vmem:[%s316 + $0xe0] sm:$0xff]
        %v436 = vld [vmem:[%s316 + $0xe8] sm:$0xff]
        %v437 = vld [vmem:[%s316 + $0xf0] sm:$0xff]
        %v438 = vld [vmem:[%s316 + $0xf8] sm:$0xff]
        %439 = vst.msk [vmem:[%s373 + $0x3] sm:$0xff] %vm352, %v407
        %440 = vst.msk [vmem:[%s373 + $0xb] sm:$0xff] %vm352, %v408
        %441 = vst.msk [vmem:[%s373 + $0x1b] sm:$0xff] %vm352, %v409
        %442 = vst.msk [vmem:[%s373 + $0x23] sm:$0xff] %vm352, %v410
        %443 = vst.msk [vmem:[%s373 + $0x33] sm:$0xff] %vm352, %v411
        %444 = vst.msk [vmem:[%s373 + $0x3b] sm:$0xff] %vm352, %v412
        %445 = vst.msk [vmem:[%s373 + $0x4b] sm:$0xff] %vm352, %v413
        %446 = vst.msk [vmem:[%s373 + $0x53] sm:$0xff] %vm352, %v414
        %447 = vst.msk [vmem:[%s373 + $0x63] sm:$0xff] %vm352, %v415
        %448 = vst.msk [vmem:[%s373 + $0x6b] sm:$0xff] %vm352, %v416
        %449 = vst.msk [vmem:[%s373 + $0x7b] sm:$0xff] %vm352, %v417
        %450 = vst.msk [vmem:[%s373 + $0x83] sm:$0xff] %vm352, %v418
        %451 = vst.msk [vmem:[%s373 + $0x93] sm:$0xff] %vm352, %v419
        %452 = vst.msk [vmem:[%s373 + $0x9b] sm:$0xff] %vm352, %v420
        %453 = vst.msk [vmem:[%s373 + $0xab] sm:$0xff] %vm352, %v421
        %454 = vst.msk [vmem:[%s373 + $0xb3] sm:$0xff] %vm352, %v422
        %455 = vst.msk [vmem:[%s373 + $0xc3] sm:$0xff] %vm352, %v423
        %456 = vst.msk [vmem:[%s373 + $0xcb] sm:$0xff] %vm352, %v424
        %457 = vst.msk [vmem:[%s373 + $0xdb] sm:$0xff] %vm352, %v425
        %458 = vst.msk [vmem:[%s373 + $0xe3] sm:$0xff] %vm352, %v426
        %459 = vst.msk [vmem:[%s373 + $0xf3] sm:$0xff] %vm352, %v427
        %460 = vst.msk [vmem:[%s373 + $0xfb] sm:$0xff] %vm352, %v428
        %461 = vst.msk [vmem:[%s373 + $0x10b] sm:$0xff] %vm352, %v429
        %462 = vst.msk [vmem:[%s373 + $0x113] sm:$0xff] %vm352, %v430
        %463 = vst.msk [vmem:[%s373 + $0x123] sm:$0xff] %vm352, %v431
        %464 = vst.msk [vmem:[%s373 + $0x12b] sm:$0xff] %vm352, %v432
        %465 = vst.msk [vmem:[%s373 + $0x13b] sm:$0xff] %vm352, %v433
        %466 = vst.msk [vmem:[%s373 + $0x143] sm:$0xff] %vm352, %v434
        %467 = vst.msk [vmem:[%s373 + $0x153] sm:$0xff] %vm352, %v435
        %468 = vst.msk [vmem:[%s373 + $0x15b] sm:$0xff] %vm352, %v436
        %469 = vst.msk [vmem:[%s373 + $0x16b] sm:$0xff] %vm352, %v437
        %470 = vst.msk [vmem:[%s373 + $0x173] sm:$0xff] %vm352, %v438
        %v471 = vld [vmem:[#allocation2] sm:$0xff]
        %v472 = vld [vmem:[#allocation2 + $0x8] sm:$0xff]
        %v473 = vld [vmem:[#allocation2 + $0x10] sm:$0x3f]
        %v474 = vld [vmem:[#allocation2 + $0x18] sm:$0xff]
        %v475 = vld [vmem:[#allocation2 + $0x20] sm:$0xff]
        %v476 = vld [vmem:[#allocation2 + $0x28] sm:$0x3f]
        %v477 = vld [vmem:[#allocation2 + $0x30] sm:$0xff]
        %v478 = vld [vmem:[#allocation2 + $0x38] sm:$0xff]
        %v479 = vld [vmem:[#allocation2 + $0x40] sm:$0x3f]
        %v480 = vld [vmem:[#allocation2 + $0x48] sm:$0xff]
        %v481 = vld [vmem:[#allocation2 + $0x50] sm:$0xff]
        %v482 = vld [vmem:[#allocation2 + $0x58] sm:$0x3f]
        %v483 = vld [vmem:[#allocation2 + $0x60] sm:$0xff]
        %v484 = vld [vmem:[#allocation2 + $0x68] sm:$0xff]
        %v485 = vld [vmem:[#allocation2 + $0x70] sm:$0x3f]
        %v486 = vld [vmem:[#allocation2 + $0x78] sm:$0xff]
        %v487 = vld [vmem:[#allocation2 + $0x80] sm:$0xff]
        %v488 = vld [vmem:[#allocation2 + $0x88] sm:$0x3f]
        %v489 = vld [vmem:[#allocation2 + $0x90] sm:$0xff]
        %v490 = vld [vmem:[#allocation2 + $0x98] sm:$0xff]
        %v491 = vld [vmem:[#allocation2 + $0xa0] sm:$0x3f]
        %v492 = vld [vmem:[#allocation2 + $0xa8] sm:$0xff]
        %v493 = vld [vmem:[#allocation2 + $0xb0] sm:$0xff]
        %v494 = vld [vmem:[#allocation2 + $0xb8] sm:$0x3f]
        %v495 = vld [vmem:[#allocation2 + $0xc0] sm:$0xff]
        %v496 = vld [vmem:[#allocation2 + $0xc8] sm:$0xff]
        %v497 = vld [vmem:[#allocation2 + $0xd0] sm:$0x3f]
        %v498 = vld [vmem:[#allocation2 + $0xd8] sm:$0xff]
        %v499 = vld [vmem:[#allocation2 + $0xe0] sm:$0xff]
        %v500 = vld [vmem:[#allocation2 + $0xe8] sm:$0x3f]
        %v501 = vld [vmem:[#allocation2 + $0xf0] sm:$0xff]
        %v502 = vld [vmem:[#allocation2 + $0xf8] sm:$0xff]
        %v503 = vld [vmem:[#allocation2 + $0x100] sm:$0x3f]
        %v504 = vld [vmem:[#allocation2 + $0x108] sm:$0xff]
        %v505 = vld [vmem:[#allocation2 + $0x110] sm:$0xff]
        %v506 = vld [vmem:[#allocation2 + $0x118] sm:$0x3f]
        %v507 = vld [vmem:[#allocation2 + $0x120] sm:$0xff]
        %v508 = vld [vmem:[#allocation2 + $0x128] sm:$0xff]
        %v509 = vld [vmem:[#allocation2 + $0x130] sm:$0x3f]
        %v510 = vld [vmem:[#allocation2 + $0x138] sm:$0xff]
        %v511 = vld [vmem:[#allocation2 + $0x140] sm:$0xff]
        %v512 = vld [vmem:[#allocation2 + $0x148] sm:$0x3f]
        %v513 = vld [vmem:[#allocation2 + $0x150] sm:$0xff]
        %v514 = vld [vmem:[#allocation2 + $0x158] sm:$0xff]
        %v515 = vld [vmem:[#allocation2 + $0x160] sm:$0x3f]
        %v516 = vld [vmem:[#allocation2 + $0x168] sm:$0xff]
        %v517 = vld [vmem:[#allocation2 + $0x170] sm:$0xff]
        %v518 = vld [vmem:[#allocation2 + $0x178] sm:$0x3f]
        %v519 = vld [vmem:[#allocation2 + $0x180] sm:$0xff]
        %v520 = vld [vmem:[#allocation2 + $0x188] sm:$0xff]
        %v521 = vld [vmem:[#allocation2 + $0x190] sm:$0x3f]
        %v522 = vld [vmem:[#allocation2 + $0x198] sm:$0xff]
        %v523 = vld [vmem:[#allocation2 + $0x1a0] sm:$0xff]
        %v524 = vld [vmem:[#allocation2 + $0x1a8] sm:$0x3f]
        %v525 = vld [vmem:[#allocation2 + $0x1b0] sm:$0xff]
        %v526 = vld [vmem:[#allocation2 + $0x1b8] sm:$0xff]
        %v527 = vld [vmem:[#allocation2 + $0x1c0] sm:$0x3f]
        %v528 = vld [vmem:[#allocation2 + $0x1c8] sm:$0xff]
        %v529 = vld [vmem:[#allocation2 + $0x1d0] sm:$0xff]
        %v530 = vld [vmem:[#allocation2 + $0x1d8] sm:$0x3f]
        %v531 = vld [vmem:[#allocation2 + $0x1e0] sm:$0xff]
        %v532 = vld [vmem:[#allocation2 + $0x1e8] sm:$0xff]
        %v533 = vld [vmem:[#allocation2 + $0x1f0] sm:$0x3f]
        %v534 = vld [vmem:[#allocation2 + $0x1f8] sm:$0xff]
        %v535 = vld [vmem:[#allocation2 + $0x200] sm:$0xff]
        %v536 = vld [vmem:[#allocation2 + $0x208] sm:$0x3f]
        %v537 = vld [vmem:[%s1] sm:$0x7f]
        %v538 = vld [vmem:[%s1 + $0x8] sm:$0x7f]
        %v539 = vld [vmem:[%s1 + $0x10] sm:$0x7f]
        %v540 = vld [vmem:[%s1 + $0x18] sm:$0x7f]
        %v541 = vld [vmem:[%s1 + $0x20] sm:$0x7f]
        %v542 = vld [vmem:[%s1 + $0x28] sm:$0x7f]
        %v543 = vld [vmem:[%s1 + $0x30] sm:$0x7f]
        %v544 = vlaneseq
        %v545 = vshrl.u32 %v544, 7
        %v546 = vsub.s32 0, %v545
        %v547 = vrot.slane %v537, %v546
        %v548 = vmul.f32 %v471, %v547
        %v549 = vmul.f32 %v472, %v547
        %v550 = vmul.f32 %v474, %v547
        %v551 = vmul.f32 %v475, %v547
        %v552 = vmul.f32 %v477, %v547
        %v553 = vmul.f32 %v478, %v547
        %v554 = vmul.f32 %v480, %v547
        %v555 = vmul.f32 %v481, %v547
        %v556 = vmul.f32 %v483, %v547
        %v557 = vmul.f32 %v484, %v547
        %v558 = vmul.f32 %v486, %v547
        %v559 = vmul.f32 %v487, %v547
        %v560 = vmul.f32 %v489, %v547
        %v561 = vmul.f32 %v490, %v547
        %v562 = vmul.f32 %v492, %v547
        %v563 = vmul.f32 %v493, %v547
        %v564 = vmul.f32 %v495, %v547
        %v565 = vmul.f32 %v496, %v547
        %v566 = vmul.f32 %v498, %v547
        %v567 = vmul.f32 %v499, %v547
        %v568 = vmul.f32 %v501, %v547
        %v569 = vmul.f32 %v502, %v547
        %v570 = vmul.f32 %v504, %v547
        %v571 = vmul.f32 %v505, %v547
        %v572 = vmul.f32 %v507, %v547
        %v573 = vmul.f32 %v508, %v547
        %v574 = vmul.f32 %v510, %v547
        %v575 = vmul.f32 %v511, %v547
        %v576 = vmul.f32 %v513, %v547
        %v577 = vmul.f32 %v514, %v547
        %v578 = vmul.f32 %v516, %v547
        %v579 = vmul.f32 %v517, %v547
        %v580 = vlaneseq
        %v581 = vshrl.u32 %v580, 7
        %v582 = vsub.s32 0, %v581
        %v583 = vrot.slane %v538, %v582
        %v584 = vmul.f32 %v474, %v583
        %v585 = vmul.f32 %v475, %v583
        %v586 = vmul.f32 %v477, %v583
        %v587 = vmul.f32 %v478, %v583
        %v588 = vmul.f32 %v480, %v583
        %v589 = vmul.f32 %v481, %v583
        %v590 = vmul.f32 %v483, %v583
        %v591 = vmul.f32 %v484, %v583
        %v592 = vmul.f32 %v486, %v583
        %v593 = vmul.f32 %v487, %v583
        %v594 = vmul.f32 %v489, %v583
        %v595 = vmul.f32 %v490, %v583
        %v596 = vmul.f32 %v492, %v583
        %v597 = vmul.f32 %v493, %v583
        %v598 = vmul.f32 %v495, %v583
        %v599 = vmul.f32 %v496, %v583
        %v600 = vmul.f32 %v498, %v583
        %v601 = vmul.f32 %v499, %v583
        %v602 = vmul.f32 %v501, %v583
        %v603 = vmul.f32 %v502, %v583
        %v604 = vmul.f32 %v504, %v583
        %v605 = vmul.f32 %v505, %v583
        %v606 = vmul.f32 %v507, %v583
        %v607 = vmul.f32 %v508, %v583
        %v608 = vmul.f32 %v510, %v583
        %v609 = vmul.f32 %v511, %v583
        %v610 = vmul.f32 %v513, %v583
        %v611 = vmul.f32 %v514, %v583
        %v612 = vmul.f32 %v516, %v583
        %v613 = vmul.f32 %v517, %v583
        %v614 = vmul.f32 %v519, %v583
        %v615 = vmul.f32 %v520, %v583
        %v616 = vadd.f32 %v548, %v584
        %v617 = vadd.f32 %v549, %v585
        %v618 = vadd.f32 %v550, %v586
        %v619 = vadd.f32 %v551, %v587
        %v620 = vadd.f32 %v552, %v588
        %v621 = vadd.f32 %v553, %v589
        %v622 = vadd.f32 %v554, %v590
        %v623 = vadd.f32 %v555, %v591
        %v624 = vadd.f32 %v556, %v592
        %v625 = vadd.f32 %v557, %v593
        %v626 = vadd.f32 %v558, %v594
        %v627 = vadd.f32 %v559, %v595
        %v628 = vadd.f32 %v560, %v596
        %v629 = vadd.f32 %v561, %v597
        %v630 = vadd.f32 %v562, %v598
        %v631 = vadd.f32 %v563, %v599
        %v632 = vadd.f32 %v564, %v600
        %v633 = vadd.f32 %v565, %v601
        %v634 = vadd.f32 %v566, %v602
        %v635 = vadd.f32 %v567, %v603
        %v636 = vadd.f32 %v568, %v604
        %v637 = vadd.f32 %v569, %v605
        %v638 = vadd.f32 %v570, %v606
        %v639 = vadd.f32 %v571, %v607
        %v640 = vadd.f32 %v572, %v608
        %v641 = vadd.f32 %v573, %v609
        %v642 = vadd.f32 %v574, %v610
        %v643 = vadd.f32 %v575, %v611
        %v644 = vadd.f32 %v576, %v612
        %v645 = vadd.f32 %v577, %v613
        %v646 = vadd.f32 %v578, %v614
        %v647 = vadd.f32 %v579, %v615
        %v648 = vlaneseq
        %v649 = vshrl.u32 %v648, 7
        %v650 = vsub.s32 0, %v649
        %v651 = vrot.slane %v539, %v650
        %v652 = vmul.f32 %v477, %v651
        %v653 = vmul.f32 %v478, %v651
        %v654 = vmul.f32 %v480, %v651
        %v655 = vmul.f32 %v481, %v651
        %v656 = vmul.f32 %v483, %v651
        %v657 = vmul.f32 %v484, %v651
        %v658 = vmul.f32 %v486, %v651
        %v659 = vmul.f32 %v487, %v651
        %v660 = vmul.f32 %v489, %v651
        %v661 = vmul.f32 %v490, %v651
        %v662 = vmul.f32 %v492, %v651
        %v663 = vmul.f32 %v493, %v651
        %v664 = vmul.f32 %v495, %v651
        %v665 = vmul.f32 %v496, %v651
        %v666 = vmul.f32 %v498, %v651
        %v667 = vmul.f32 %v499, %v651
        %v668 = vmul.f32 %v501, %v651
        %v669 = vmul.f32 %v502, %v651
        %v670 = vmul.f32 %v504, %v651
        %v671 = vmul.f32 %v505, %v651
        %v672 = vmul.f32 %v507, %v651
        %v673 = vmul.f32 %v508, %v651
        %v674 = vmul.f32 %v510, %v651
        %v675 = vmul.f32 %v511, %v651
        %v676 = vmul.f32 %v513, %v651
        %v677 = vmul.f32 %v514, %v651
        %v678 = vmul.f32 %v516, %v651
        %v679 = vmul.f32 %v517, %v651
        %v680 = vmul.f32 %v519, %v651
        %v681 = vmul.f32 %v520, %v651
        %v682 = vmul.f32 %v522, %v651
        %v683 = vmul.f32 %v523, %v651
        %v684 = vadd.f32 %v616, %v652
        %v685 = vadd.f32 %v617, %v653
        %v686 = vadd.f32 %v618, %v654
        %v687 = vadd.f32 %v619, %v655
        %v688 = vadd.f32 %v620, %v656
        %v689 = vadd.f32 %v621, %v657
        %v690 = vadd.f32 %v622, %v658
        %v691 = vadd.f32 %v623, %v659
        %v692 = vadd.f32 %v624, %v660
        %v693 = vadd.f32 %v625, %v661
        %v694 = vadd.f32 %v626, %v662
        %v695 = vadd.f32 %v627, %v663
        %v696 = vadd.f32 %v628, %v664
        %v697 = vadd.f32 %v629, %v665
        %v698 = vadd.f32 %v630, %v666
        %v699 = vadd.f32 %v631, %v667
        %v700 = vadd.f32 %v632, %v668
        %v701 = vadd.f32 %v633, %v669
        %v702 = vadd.f32 %v634, %v670
        %v703 = vadd.f32 %v635, %v671
        %v704 = vadd.f32 %v636, %v672
        %v705 = vadd.f32 %v637, %v673
        %v706 = vadd.f32 %v638, %v674
        %v707 = vadd.f32 %v639, %v675
        %v708 = vadd.f32 %v640, %v676
        %v709 = vadd.f32 %v641, %v677
        %v710 = vadd.f32 %v642, %v678
        %v711 = vadd.f32 %v643, %v679
        %v712 = vadd.f32 %v644, %v680
        %v713 = vadd.f32 %v645, %v681
        %v714 = vadd.f32 %v646, %v682
        %v715 = vadd.f32 %v647, %v683
        %v716 = vlaneseq
        %v717 = vshrl.u32 %v716, 7
        %v718 = vsub.s32 0, %v717
        %v719 = vrot.slane %v540, %v718
        %v720 = vmul.f32 %v480, %v719
        %v721 = vmul.f32 %v481, %v719
        %v722 = vmul.f32 %v483, %v719
        %v723 = vmul.f32 %v484, %v719
        %v724 = vmul.f32 %v486, %v719
        %v725 = vmul.f32 %v487, %v719
        %v726 = vmul.f32 %v489, %v719
        %v727 = vmul.f32 %v490, %v719
        %v728 = vmul.f32 %v492, %v719
        %v729 = vmul.f32 %v493, %v719
        %v730 = vmul.f32 %v495, %v719
        %v731 = vmul.f32 %v496, %v719
        %v732 = vmul.f32 %v498, %v719
        %v733 = vmul.f32 %v499, %v719
        %v734 = vmul.f32 %v501, %v719
        %v735 = vmul.f32 %v502, %v719
        %v736 = vmul.f32 %v504, %v719
        %v737 = vmul.f32 %v505, %v719
        %v738 = vmul.f32 %v507, %v719
        %v739 = vmul.f32 %v508, %v719
        %v740 = vmul.f32 %v510, %v719
        %v741 = vmul.f32 %v511, %v719
        %v742 = vmul.f32 %v513, %v719
        %v743 = vmul.f32 %v514, %v719
        %v744 = vmul.f32 %v516, %v719
        %v745 = vmul.f32 %v517, %v719
        %v746 = vmul.f32 %v519, %v719
        %v747 = vmul.f32 %v520, %v719
        %v748 = vmul.f32 %v522, %v719
        %v749 = vmul.f32 %v523, %v719
        %v750 = vmul.f32 %v525, %v719
        %v751 = vmul.f32 %v526, %v719
        %v752 = vadd.f32 %v684, %v720
        %v753 = vadd.f32 %v685, %v721
        %v754 = vadd.f32 %v686, %v722
        %v755 = vadd.f32 %v687, %v723
        %v756 = vadd.f32 %v688, %v724
        %v757 = vadd.f32 %v689, %v725
        %v758 = vadd.f32 %v690, %v726
        %v759 = vadd.f32 %v691, %v727
        %v760 = vadd.f32 %v692, %v728
        %v761 = vadd.f32 %v693, %v729
        %v762 = vadd.f32 %v694, %v730
        %v763 = vadd.f32 %v695, %v731
        %v764 = vadd.f32 %v696, %v732
        %v765 = vadd.f32 %v697, %v733
        %v766 = vadd.f32 %v698, %v734
        %v767 = vadd.f32 %v699, %v735
        %v768 = vadd.f32 %v700, %v736
        %v769 = vadd.f32 %v701, %v737
        %v770 = vadd.f32 %v702, %v738
        %v771 = vadd.f32 %v703, %v739
        %v772 = vadd.f32 %v704, %v740
        %v773 = vadd.f32 %v705, %v741
        %v774 = vadd.f32 %v706, %v742
        %v775 = vadd.f32 %v707, %v743
        %v776 = vadd.f32 %v708, %v744
        %v777 = vadd.f32 %v709, %v745
        %v778 = vadd.f32 %v710, %v746
        %v779 = vadd.f32 %v711, %v747
        %v780 = vadd.f32 %v712, %v748
        %v781 = vadd.f32 %v713, %v749
        %v782 = vadd.f32 %v714, %v750
        %v783 = vadd.f32 %v715, %v751
        %v784 = vlaneseq
        %v785 = vshrl.u32 %v784, 7
        %v786 = vsub.s32 0, %v785
        %v787 = vrot.slane %v541, %v786
        %v788 = vmul.f32 %v483, %v787
        %v789 = vmul.f32 %v484, %v787
        %v790 = vmul.f32 %v486, %v787
        %v791 = vmul.f32 %v487, %v787
        %v792 = vmul.f32 %v489, %v787
        %v793 = vmul.f32 %v490, %v787
        %v794 = vmul.f32 %v492, %v787
        %v795 = vmul.f32 %v493, %v787
        %v796 = vmul.f32 %v495, %v787
        %v797 = vmul.f32 %v496, %v787
        %v798 = vmul.f32 %v498, %v787
        %v799 = vmul.f32 %v499, %v787
        %v800 = vmul.f32 %v501, %v787
        %v801 = vmul.f32 %v502, %v787
        %v802 = vmul.f32 %v504, %v787
        %v803 = vmul.f32 %v505, %v787
        %v804 = vmul.f32 %v507, %v787
        %v805 = vmul.f32 %v508, %v787
        %v806 = vmul.f32 %v510, %v787
        %v807 = vmul.f32 %v511, %v787
        %v808 = vmul.f32 %v513, %v787
        %v809 = vmul.f32 %v514, %v787
        %v810 = vmul.f32 %v516, %v787
        %v811 = vmul.f32 %v517, %v787
        %v812 = vmul.f32 %v519, %v787
        %v813 = vmul.f32 %v520, %v787
        %v814 = vmul.f32 %v522, %v787
        %v815 = vmul.f32 %v523, %v787
        %v816 = vmul.f32 %v525, %v787
        %v817 = vmul.f32 %v526, %v787
        %v818 = vmul.f32 %v528, %v787
        %v819 = vmul.f32 %v529, %v787
        %v820 = vadd.f32 %v752, %v788
        %v821 = vadd.f32 %v753, %v789
        %v822 = vadd.f32 %v754, %v790
        %v823 = vadd.f32 %v755, %v791
        %v824 = vadd.f32 %v756, %v792
        %v825 = vadd.f32 %v757, %v793
        %v826 = vadd.f32 %v758, %v794
        %v827 = vadd.f32 %v759, %v795
        %v828 = vadd.f32 %v760, %v796
        %v829 = vadd.f32 %v761, %v797
        %v830 = vadd.f32 %v762, %v798
        %v831 = vadd.f32 %v763, %v799
        %v832 = vadd.f32 %v764, %v800
        %v833 = vadd.f32 %v765, %v801
        %v834 = vadd.f32 %v766, %v802
        %v835 = vadd.f32 %v767, %v803
        %v836 = vadd.f32 %v768, %v804
        %v837 = vadd.f32 %v769, %v805
        %v838 = vadd.f32 %v770, %v806
        %v839 = vadd.f32 %v771, %v807
        %v840 = vadd.f32 %v772, %v808
        %v841 = vadd.f32 %v773, %v809
        %v842 = vadd.f32 %v774, %v810
        %v843 = vadd.f32 %v775, %v811
        %v844 = vadd.f32 %v776, %v812
        %v845 = vadd.f32 %v777, %v813
        %v846 = vadd.f32 %v778, %v814
        %v847 = vadd.f32 %v779, %v815
        %v848 = vadd.f32 %v780, %v816
        %v849 = vadd.f32 %v781, %v817
        %v850 = vadd.f32 %v782, %v818
        %v851 = vadd.f32 %v783, %v819
        %v852 = vlaneseq
        %v853 = vshrl.u32 %v852, 7
        %v854 = vsub.s32 0, %v853
        %v855 = vrot.slane %v542, %v854
        %v856 = vmul.f32 %v486, %v855
        %v857 = vmul.f32 %v487, %v855
        %v858 = vmul.f32 %v489, %v855
        %v859 = vmul.f32 %v490, %v855
        %v860 = vmul.f32 %v492, %v855
        %v861 = vmul.f32 %v493, %v855
        %v862 = vmul.f32 %v495, %v855
        %v863 = vmul.f32 %v496, %v855
        %v864 = vmul.f32 %v498, %v855
        %v865 = vmul.f32 %v499, %v855
        %v866 = vmul.f32 %v501, %v855
        %v867 = vmul.f32 %v502, %v855
        %v868 = vmul.f32 %v504, %v855
        %v869 = vmul.f32 %v505, %v855
        %v870 = vmul.f32 %v507, %v855
        %v871 = vmul.f32 %v508, %v855
        %v872 = vmul.f32 %v510, %v855
        %v873 = vmul.f32 %v511, %v855
        %v874 = vmul.f32 %v513, %v855
        %v875 = vmul.f32 %v514, %v855
        %v876 = vmul.f32 %v516, %v855
        %v877 = vmul.f32 %v517, %v855
        %v878 = vmul.f32 %v519, %v855
        %v879 = vmul.f32 %v520, %v855
        %v880 = vmul.f32 %v522, %v855
        %v881 = vmul.f32 %v523, %v855
        %v882 = vmul.f32 %v525, %v855
        %v883 = vmul.f32 %v526, %v855
        %v884 = vmul.f32 %v528, %v855
        %v885 = vmul.f32 %v529, %v855
        %v886 = vmul.f32 %v531, %v855
        %v887 = vmul.f32 %v532, %v855
        %v888 = vadd.f32 %v820, %v856
        %v889 = vadd.f32 %v821, %v857
        %v890 = vadd.f32 %v822, %v858
        %v891 = vadd.f32 %v823, %v859
        %v892 = vadd.f32 %v824, %v860
        %v893 = vadd.f32 %v825, %v861
        %v894 = vadd.f32 %v826, %v862
        %v895 = vadd.f32 %v827, %v863
        %v896 = vadd.f32 %v828, %v864
        %v897 = vadd.f32 %v829, %v865
        %v898 = vadd.f32 %v830, %v866
        %v899 = vadd.f32 %v831, %v867
        %v900 = vadd.f32 %v832, %v868
        %v901 = vadd.f32 %v833, %v869
        %v902 = vadd.f32 %v834, %v870
        %v903 = vadd.f32 %v835, %v871
        %v904 = vadd.f32 %v836, %v872
        %v905 = vadd.f32 %v837, %v873
        %v906 = vadd.f32 %v838, %v874
        %v907 = vadd.f32 %v839, %v875
        %v908 = vadd.f32 %v840, %v876
        %v909 = vadd.f32 %v841, %v877
        %v910 = vadd.f32 %v842, %v878
        %v911 = vadd.f32 %v843, %v879
        %v912 = vadd.f32 %v844, %v880
        %v913 = vadd.f32 %v845, %v881
        %v914 = vadd.f32 %v846, %v882
        %v915 = vadd.f32 %v847, %v883
        %v916 = vadd.f32 %v848, %v884
        %v917 = vadd.f32 %v849, %v885
        %v918 = vadd.f32 %v850, %v886
        %v919 = vadd.f32 %v851, %v887
        %v920 = vlaneseq
        %v921 = vshrl.u32 %v920, 7
        %v922 = vsub.s32 0, %v921
        %v923 = vrot.slane %v543, %v922
        %v924 = vmul.f32 %v489, %v923
        %v925 = vmul.f32 %v490, %v923
        %v926 = vmul.f32 %v492, %v923
        %v927 = vmul.f32 %v493, %v923
        %v928 = vmul.f32 %v495, %v923
        %v929 = vmul.f32 %v496, %v923
        %v930 = vmul.f32 %v498, %v923
        %v931 = vmul.f32 %v499, %v923
        %v932 = vmul.f32 %v501, %v923
        %v933 = vmul.f32 %v502, %v923
        %v934 = vmul.f32 %v504, %v923
        %v935 = vmul.f32 %v505, %v923
        %v936 = vmul.f32 %v507, %v923
        %v937 = vmul.f32 %v508, %v923
        %v938 = vmul.f32 %v510, %v923
        %v939 = vmul.f32 %v511, %v923
        %v940 = vmul.f32 %v513, %v923
        %v941 = vmul.f32 %v514, %v923
        %v942 = vmul.f32 %v516, %v923
        %v943 = vmul.f32 %v517, %v923
        %v944 = vmul.f32 %v519, %v923
        %v945 = vmul.f32 %v520, %v923
        %v946 = vmul.f32 %v522, %v923
        %v947 = vmul.f32 %v523, %v923
        %v948 = vmul.f32 %v525, %v923
        %v949 = vmul.f32 %v526, %v923
        %v950 = vmul.f32 %v528, %v923
        %v951 = vmul.f32 %v529, %v923
        %v952 = vmul.f32 %v531, %v923
        %v953 = vmul.f32 %v532, %v923
        %v954 = vmul.f32 %v534, %v923
        %v955 = vmul.f32 %v535, %v923
        %v956 = vadd.f32 %v888, %v924
        %v957 = vadd.f32 %v889, %v925
        %v958 = vadd.f32 %v890, %v926
        %v959 = vadd.f32 %v891, %v927
        %v960 = vadd.f32 %v892, %v928
        %v961 = vadd.f32 %v893, %v929
        %v962 = vadd.f32 %v894, %v930
        %v963 = vadd.f32 %v895, %v931
        %v964 = vadd.f32 %v896, %v932
        %v965 = vadd.f32 %v897, %v933
        %v966 = vadd.f32 %v898, %v934
        %v967 = vadd.f32 %v899, %v935
        %v968 = vadd.f32 %v900, %v936
        %v969 = vadd.f32 %v901, %v937
        %v970 = vadd.f32 %v902, %v938
        %v971 = vadd.f32 %v903, %v939
        %v972 = vadd.f32 %v904, %v940
        %v973 = vadd.f32 %v905, %v941
        %v974 = vadd.f32 %v906, %v942
        %v975 = vadd.f32 %v907, %v943
        %v976 = vadd.f32 %v908, %v944
        %v977 = vadd.f32 %v909, %v945
        %v978 = vadd.f32 %v910, %v946
        %v979 = vadd.f32 %v911, %v947
        %v980 = vadd.f32 %v912, %v948
        %v981 = vadd.f32 %v913, %v949
        %v982 = vadd.f32 %v914, %v950
        %v983 = vadd.f32 %v915, %v951
        %v984 = vadd.f32 %v916, %v952
        %v985 = vadd.f32 %v917, %v953
        %v986 = vadd.f32 %v918, %v954
        %v987 = vadd.f32 %v919, %v955
        %v988 = vlaneseq
        %v989 = vshrl.u32 %v988, 7
        %v990 = vsub.s32 1, %v989
        %v991 = vrot.slane %v537, %v990
        %v992 = vmul.f32 %v471, %v991
        %v993 = vmul.f32 %v472, %v991
        %v994 = vmul.f32 %v473, %v991
        %v995 = vmul.f32 %v474, %v991
        %v996 = vmul.f32 %v475, %v991
        %v997 = vmul.f32 %v476, %v991
        %v998 = vmul.f32 %v477, %v991
        %v999 = vmul.f32 %v478, %v991
        %v1000 = vmul.f32 %v479, %v991
        %v1001 = vmul.f32 %v480, %v991
        %v1002 = vmul.f32 %v481, %v991
        %v1003 = vmul.f32 %v482, %v991
        %v1004 = vmul.f32 %v483, %v991
        %v1005 = vmul.f32 %v484, %v991
        %v1006 = vmul.f32 %v485, %v991
        %v1007 = vmul.f32 %v486, %v991
        %v1008 = vmul.f32 %v487, %v991
        %v1009 = vmul.f32 %v488, %v991
        %v1010 = vmul.f32 %v489, %v991
        %v1011 = vmul.f32 %v490, %v991
        %v1012 = vmul.f32 %v491, %v991
        %v1013 = vmul.f32 %v492, %v991
        %v1014 = vmul.f32 %v493, %v991
        %v1015 = vmul.f32 %v494, %v991
        %v1016 = vmul.f32 %v495, %v991
        %v1017 = vmul.f32 %v496, %v991
        %v1018 = vmul.f32 %v497, %v991
        %v1019 = vmul.f32 %v498, %v991
        %v1020 = vmul.f32 %v499, %v991
        %v1021 = vmul.f32 %v500, %v991
        %v1022 = vmul.f32 %v501, %v991
        %v1023 = vmul.f32 %v502, %v991
        %v1024 = vmul.f32 %v503, %v991
        %v1025 = vmul.f32 %v504, %v991
        %v1026 = vmul.f32 %v505, %v991
        %v1027 = vmul.f32 %v506, %v991
        %v1028 = vmul.f32 %v507, %v991
        %v1029 = vmul.f32 %v508, %v991
        %v1030 = vmul.f32 %v509, %v991
        %v1031 = vmul.f32 %v510, %v991
        %v1032 = vmul.f32 %v511, %v991
        %v1033 = vmul.f32 %v512, %v991
        %v1034 = vmul.f32 %v513, %v991
        %v1035 = vmul.f32 %v514, %v991
        %v1036 = vmul.f32 %v515, %v991
        %v1037 = vmul.f32 %v516, %v991
        %v1038 = vmul.f32 %v517, %v991
        %v1039 = vmul.f32 %v518, %v991
        %vm1088 = vcmask 1046528
        %v1089 = vrot.slane %v992, 1
        %v1090 = vrot.slane %v993, 1
        %v1091 = vsel %vm1088, %v1089, %v1090
        %v1092 = vrot.slane %v994, 1
        %v1093 = vsel %vm1088, %v1090, %v1092
        %v1094 = vrot.slane %v995, 1
        %v1095 = vrot.slane %v996, 1
        %v1096 = vsel %vm1088, %v1094, %v1095
        %v1097 = vrot.slane %v997, 1
        %v1098 = vsel %vm1088, %v1095, %v1097
        %v1099 = vrot.slane %v998, 1
        %v1100 = vrot.slane %v999, 1
        %v1101 = vsel %vm1088, %v1099, %v1100
        %v1102 = vrot.slane %v1000, 1
        %v1103 = vsel %vm1088, %v1100, %v1102
        %v1104 = vrot.slane %v1001, 1
        %v1105 = vrot.slane %v1002, 1
        %v1106 = vsel %vm1088, %v1104, %v1105
        %v1107 = vrot.slane %v1003, 1
        %v1108 = vsel %vm1088, %v1105, %v1107
        %v1109 = vrot.slane %v1004, 1
        %v1110 = vrot.slane %v1005, 1
        %v1111 = vsel %vm1088, %v1109, %v1110
        %v1112 = vrot.slane %v1006, 1
        %v1113 = vsel %vm1088, %v1110, %v1112
        %v1114 = vrot.slane %v1007, 1
        %v1115 = vrot.slane %v1008, 1
        %v1116 = vsel %vm1088, %v1114, %v1115
        %v1117 = vrot.slane %v1009, 1
        %v1118 = vsel %vm1088, %v1115, %v1117
        %v1119 = vrot.slane %v1010, 1
        %v1120 = vrot.slane %v1011, 1
        %v1121 = vsel %vm1088, %v1119, %v1120
        %v1122 = vrot.slane %v1012, 1
        %v1123 = vsel %vm1088, %v1120, %v1122
        %v1124 = vrot.slane %v1013, 1
        %v1125 = vrot.slane %v1014, 1
        %v1126 = vsel %vm1088, %v1124, %v1125
        %v1127 = vrot.slane %v1015, 1
        %v1128 = vsel %vm1088, %v1125, %v1127
        %v1129 = vrot.slane %v1016, 1
        %v1130 = vrot.slane %v1017, 1
        %v1131 = vsel %vm1088, %v1129, %v1130
        %v1132 = vrot.slane %v1018, 1
        %v1133 = vsel %vm1088, %v1130, %v1132
        %v1134 = vrot.slane %v1019, 1
        %v1135 = vrot.slane %v1020, 1
        %v1136 = vsel %vm1088, %v1134, %v1135
        %v1137 = vrot.slane %v1021, 1
        %v1138 = vsel %vm1088, %v1135, %v1137
        %v1139 = vrot.slane %v1022, 1
        %v1140 = vrot.slane %v1023, 1
        %v1141 = vsel %vm1088, %v1139, %v1140
        %v1142 = vrot.slane %v1024, 1
        %v1143 = vsel %vm1088, %v1140, %v1142
        %v1144 = vrot.slane %v1025, 1
        %v1145 = vrot.slane %v1026, 1
        %v1146 = vsel %vm1088, %v1144, %v1145
        %v1147 = vrot.slane %v1027, 1
        %v1148 = vsel %vm1088, %v1145, %v1147
        %v1149 = vrot.slane %v1028, 1
        %v1150 = vrot.slane %v1029, 1
        %v1151 = vsel %vm1088, %v1149, %v1150
        %v1152 = vrot.slane %v1030, 1
        %v1153 = vsel %vm1088, %v1150, %v1152
        %v1154 = vrot.slane %v1031, 1
        %v1155 = vrot.slane %v1032, 1
        %v1156 = vsel %vm1088, %v1154, %v1155
        %v1157 = vrot.slane %v1033, 1
        %v1158 = vsel %vm1088, %v1155, %v1157
        %v1159 = vrot.slane %v1034, 1
        %v1160 = vrot.slane %v1035, 1
        %v1161 = vsel %vm1088, %v1159, %v1160
        %v1162 = vrot.slane %v1036, 1
        %v1163 = vsel %vm1088, %v1160, %v1162
        %v1164 = vrot.slane %v1037, 1
        %v1165 = vrot.slane %v1038, 1
        %v1166 = vsel %vm1088, %v1164, %v1165
        %v1167 = vrot.slane %v1039, 1
        %v1168 = vsel %vm1088, %v1165, %v1167
        %v1201 = vadd.f32 %v956, %v1091
        %v1202 = vadd.f32 %v957, %v1093
        %v1203 = vadd.f32 %v958, %v1096
        %v1204 = vadd.f32 %v959, %v1098
        %v1205 = vadd.f32 %v960, %v1101
        %v1206 = vadd.f32 %v961, %v1103
        %v1207 = vadd.f32 %v962, %v1106
        %v1208 = vadd.f32 %v963, %v1108
        %v1209 = vadd.f32 %v964, %v1111
        %v1210 = vadd.f32 %v965, %v1113
        %v1211 = vadd.f32 %v966, %v1116
        %v1212 = vadd.f32 %v967, %v1118
        %v1213 = vadd.f32 %v968, %v1121
        %v1214 = vadd.f32 %v969, %v1123
        %v1215 = vadd.f32 %v970, %v1126
        %v1216 = vadd.f32 %v971, %v1128
        %v1217 = vadd.f32 %v972, %v1131
        %v1218 = vadd.f32 %v973, %v1133
        %v1219 = vadd.f32 %v974, %v1136
        %v1220 = vadd.f32 %v975, %v1138
        %v1221 = vadd.f32 %v976, %v1141
        %v1222 = vadd.f32 %v977, %v1143
        %v1223 = vadd.f32 %v978, %v1146
        %v1224 = vadd.f32 %v979, %v1148
        %v1225 = vadd.f32 %v980, %v1151
        %v1226 = vadd.f32 %v981, %v1153
        %v1227 = vadd.f32 %v982, %v1156
        %v1228 = vadd.f32 %v983, %v1158
        %v1229 = vadd.f32 %v984, %v1161
        %v1230 = vadd.f32 %v985, %v1163
        %v1231 = vadd.f32 %v986, %v1166
        %v1232 = vadd.f32 %v987, %v1168
        %v1233 = vlaneseq
        %v1234 = vshrl.u32 %v1233, 7
        %v1235 = vsub.s32 1, %v1234
        %v1236 = vrot.slane %v538, %v1235
        %v1237 = vmul.f32 %v474, %v1236
        %v1238 = vmul.f32 %v475, %v1236
        %v1239 = vmul.f32 %v476, %v1236
        %v1240 = vmul.f32 %v477, %v1236
        %v1241 = vmul.f32 %v478, %v1236
        %v1242 = vmul.f32 %v479, %v1236
        %v1243 = vmul.f32 %v480, %v1236
        %v1244 = vmul.f32 %v481, %v1236
        %v1245 = vmul.f32 %v482, %v1236
        %v1246 = vmul.f32 %v483, %v1236
        %v1247 = vmul.f32 %v484, %v1236
        %v1248 = vmul.f32 %v485, %v1236
        %v1249 = vmul.f32 %v486, %v1236
        %v1250 = vmul.f32 %v487, %v1236
        %v1251 = vmul.f32 %v488, %v1236
        %v1252 = vmul.f32 %v489, %v1236
        %v1253 = vmul.f32 %v490, %v1236
        %v1254 = vmul.f32 %v491, %v1236
        %v1255 = vmul.f32 %v492, %v1236
        %v1256 = vmul.f32 %v493, %v1236
        %v1257 = vmul.f32 %v494, %v1236
        %v1258 = vmul.f32 %v495, %v1236
        %v1259 = vmul.f32 %v496, %v1236
        %v1260 = vmul.f32 %v497, %v1236
        %v1261 = vmul.f32 %v498, %v1236
        %v1262 = vmul.f32 %v499, %v1236
        %v1263 = vmul.f32 %v500, %v1236
        %v1264 = vmul.f32 %v501, %v1236
        %v1265 = vmul.f32 %v502, %v1236
        %v1266 = vmul.f32 %v503, %v1236
        %v1267 = vmul.f32 %v504, %v1236
        %v1268 = vmul.f32 %v505, %v1236
        %v1269 = vmul.f32 %v506, %v1236
        %v1270 = vmul.f32 %v507, %v1236
        %v1271 = vmul.f32 %v508, %v1236
        %v1272 = vmul.f32 %v509, %v1236
        %v1273 = vmul.f32 %v510, %v1236
        %v1274 = vmul.f32 %v511, %v1236
        %v1275 = vmul.f32 %v512, %v1236
        %v1276 = vmul.f32 %v513, %v1236
        %v1277 = vmul.f32 %v514, %v1236
        %v1278 = vmul.f32 %v515, %v1236
        %v1279 = vmul.f32 %v516, %v1236
        %v1280 = vmul.f32 %v517, %v1236
        %v1281 = vmul.f32 %v518, %v1236
        %v1282 = vmul.f32 %v519, %v1236
        %v1283 = vmul.f32 %v520, %v1236
        %v1284 = vmul.f32 %v521, %v1236
        %v1333 = vrot.slane %v1237, 1
        %v1334 = vrot.slane %v1238, 1
        %v1335 = vsel %vm1088, %v1333, %v1334
        %v1336 = vrot.slane %v1239, 1
        %v1337 = vsel %vm1088, %v1334, %v1336
        %v1338 = vrot.slane %v1240, 1
        %v1339 = vrot.slane %v1241, 1
        %v1340 = vsel %vm1088, %v1338, %v1339
        %v1341 = vrot.slane %v1242, 1
        %v1342 = vsel %vm1088, %v1339, %v1341
        %v1343 = vrot.slane %v1243, 1
        %v1344 = vrot.slane %v1244, 1
        %v1345 = vsel %vm1088, %v1343, %v1344
        %v1346 = vrot.slane %v1245, 1
        %v1347 = vsel %vm1088, %v1344, %v1346
        %v1348 = vrot.slane %v1246, 1
        %v1349 = vrot.slane %v1247, 1
        %v1350 = vsel %vm1088, %v1348, %v1349
        %v1351 = vrot.slane %v1248, 1
        %v1352 = vsel %vm1088, %v1349, %v1351
        %v1353 = vrot.slane %v1249, 1
        %v1354 = vrot.slane %v1250, 1
        %v1355 = vsel %vm1088, %v1353, %v1354
        %v1356 = vrot.slane %v1251, 1
        %v1357 = vsel %vm1088, %v1354, %v1356
        %v1358 = vrot.slane %v1252, 1
        %v1359 = vrot.slane %v1253, 1
        %v1360 = vsel %vm1088, %v1358, %v1359
        %v1361 = vrot.slane %v1254, 1
        %v1362 = vsel %vm1088, %v1359, %v1361
        %v1363 = vrot.slane %v1255, 1
        %v1364 = vrot.slane %v1256, 1
        %v1365 = vsel %vm1088, %v1363, %v1364
        %v1366 = vrot.slane %v1257, 1
        %v1367 = vsel %vm1088, %v1364, %v1366
        %v1368 = vrot.slane %v1258, 1
        %v1369 = vrot.slane %v1259, 1
        %v1370 = vsel %vm1088, %v1368, %v1369
        %v1371 = vrot.slane %v1260, 1
        %v1372 = vsel %vm1088, %v1369, %v1371
        %v1373 = vrot.slane %v1261, 1
        %v1374 = vrot.slane %v1262, 1
        %v1375 = vsel %vm1088, %v1373, %v1374
        %v1376 = vrot.slane %v1263, 1
        %v1377 = vsel %vm1088, %v1374, %v1376
        %v1378 = vrot.slane %v1264, 1
        %v1379 = vrot.slane %v1265, 1
        %v1380 = vsel %vm1088, %v1378, %v1379
        %v1381 = vrot.slane %v1266, 1
        %v1382 = vsel %vm1088, %v1379, %v1381
        %v1383 = vrot.slane %v1267, 1
        %v1384 = vrot.slane %v1268, 1
        %v1385 = vsel %vm1088, %v1383, %v1384
        %v1386 = vrot.slane %v1269, 1
        %v1387 = vsel %vm1088, %v1384, %v1386
        %v1388 = vrot.slane %v1270, 1
        %v1389 = vrot.slane %v1271, 1
        %v1390 = vsel %vm1088, %v1388, %v1389
        %v1391 = vrot.slane %v1272, 1
        %v1392 = vsel %vm1088, %v1389, %v1391
        %v1393 = vrot.slane %v1273, 1
        %v1394 = vrot.slane %v1274, 1
        %v1395 = vsel %vm1088, %v1393, %v1394
        %v1396 = vrot.slane %v1275, 1
        %v1397 = vsel %vm1088, %v1394, %v1396
        %v1398 = vrot.slane %v1276, 1
        %v1399 = vrot.slane %v1277, 1
        %v1400 = vsel %vm1088, %v1398, %v1399
        %v1401 = vrot.slane %v1278, 1
        %v1402 = vsel %vm1088, %v1399, %v1401
        %v1403 = vrot.slane %v1279, 1
        %v1404 = vrot.slane %v1280, 1
        %v1405 = vsel %vm1088, %v1403, %v1404
        %v1406 = vrot.slane %v1281, 1
        %v1407 = vsel %vm1088, %v1404, %v1406
        %v1408 = vrot.slane %v1282, 1
        %v1409 = vrot.slane %v1283, 1
        %v1410 = vsel %vm1088, %v1408, %v1409
        %v1411 = vrot.slane %v1284, 1
        %v1412 = vsel %vm1088, %v1409, %v1411
        %v1445 = vadd.f32 %v1201, %v1335
        %v1446 = vadd.f32 %v1202, %v1337
        %v1447 = vadd.f32 %v1203, %v1340
        %v1448 = vadd.f32 %v1204, %v1342
        %v1449 = vadd.f32 %v1205, %v1345
        %v1450 = vadd.f32 %v1206, %v1347
        %v1451 = vadd.f32 %v1207, %v1350
        %v1452 = vadd.f32 %v1208, %v1352
        %v1453 = vadd.f32 %v1209, %v1355
        %v1454 = vadd.f32 %v1210, %v1357
        %v1455 = vadd.f32 %v1211, %v1360
        %v1456 = vadd.f32 %v1212, %v1362
        %v1457 = vadd.f32 %v1213, %v1365
        %v1458 = vadd.f32 %v1214, %v1367
        %v1459 = vadd.f32 %v1215, %v1370
        %v1460 = vadd.f32 %v1216, %v1372
        %v1461 = vadd.f32 %v1217, %v1375
        %v1462 = vadd.f32 %v1218, %v1377
        %v1463 = vadd.f32 %v1219, %v1380
        %v1464 = vadd.f32 %v1220, %v1382
        %v1465 = vadd.f32 %v1221, %v1385
        %v1466 = vadd.f32 %v1222, %v1387
        %v1467 = vadd.f32 %v1223, %v1390
        %v1468 = vadd.f32 %v1224, %v1392
        %v1469 = vadd.f32 %v1225, %v1395
        %v1470 = vadd.f32 %v1226, %v1397
        %v1471 = vadd.f32 %v1227, %v1400
        %v1472 = vadd.f32 %v1228, %v1402
        %v1473 = vadd.f32 %v1229, %v1405
        %v1474 = vadd.f32 %v1230, %v1407
        %v1475 = vadd.f32 %v1231, %v1410
        %v1476 = vadd.f32 %v1232, %v1412
        %v1477 = vlaneseq
        %v1478 = vshrl.u32 %v1477, 7
        %v1479 = vsub.s32 1, %v1478
        %v1480 = vrot.slane %v539, %v1479
        %v1481 = vmul.f32 %v477, %v1480
        %v1482 = vmul.f32 %v478, %v1480
        %v1483 = vmul.f32 %v479, %v1480
        %v1484 = vmul.f32 %v480, %v1480
        %v1485 = vmul.f32 %v481, %v1480
        %v1486 = vmul.f32 %v482, %v1480
        %v1487 = vmul.f32 %v483, %v1480
        %v1488 = vmul.f32 %v484, %v1480
        %v1489 = vmul.f32 %v485, %v1480
        %v1490 = vmul.f32 %v486, %v1480
        %v1491 = vmul.f32 %v487, %v1480
        %v1492 = vmul.f32 %v488, %v1480
        %v1493 = vmul.f32 %v489, %v1480
        %v1494 = vmul.f32 %v490, %v1480
        %v1495 = vmul.f32 %v491, %v1480
        %v1496 = vmul.f32 %v492, %v1480
        %v1497 = vmul.f32 %v493, %v1480
        %v1498 = vmul.f32 %v494, %v1480
        %v1499 = vmul.f32 %v495, %v1480
        %v1500 = vmul.f32 %v496, %v1480
        %v1501 = vmul.f32 %v497, %v1480
        %v1502 = vmul.f32 %v498, %v1480
        %v1503 = vmul.f32 %v499, %v1480
        %v1504 = vmul.f32 %v500, %v1480
        %v1505 = vmul.f32 %v501, %v1480
        %v1506 = vmul.f32 %v502, %v1480
        %v1507 = vmul.f32 %v503, %v1480
        %v1508 = vmul.f32 %v504, %v1480
        %v1509 = vmul.f32 %v505, %v1480
        %v1510 = vmul.f32 %v506, %v1480
        %v1511 = vmul.f32 %v507, %v1480
        %v1512 = vmul.f32 %v508, %v1480
        %v1513 = vmul.f32 %v509, %v1480
        %v1514 = vmul.f32 %v510, %v1480
        %v1515 = vmul.f32 %v511, %v1480
        %v1516 = vmul.f32 %v512, %v1480
        %v1517 = vmul.f32 %v513, %v1480
        %v1518 = vmul.f32 %v514, %v1480
        %v1519 = vmul.f32 %v515, %v1480
        %v1520 = vmul.f32 %v516, %v1480
        %v1521 = vmul.f32 %v517, %v1480
        %v1522 = vmul.f32 %v518, %v1480
        %v1523 = vmul.f32 %v519, %v1480
        %v1524 = vmul.f32 %v520, %v1480
        %v1525 = vmul.f32 %v521, %v1480
        %v1526 = vmul.f32 %v522, %v1480
        %v1527 = vmul.f32 %v523, %v1480
        %v1528 = vmul.f32 %v524, %v1480
        %v1577 = vrot.slane %v1481, 1
        %v1578 = vrot.slane %v1482, 1
        %v1579 = vsel %vm1088, %v1577, %v1578
        %v1580 = vrot.slane %v1483, 1
        %v1581 = vsel %vm1088, %v1578, %v1580
        %v1582 = vrot.slane %v1484, 1
        %v1583 = vrot.slane %v1485, 1
        %v1584 = vsel %vm1088, %v1582, %v1583
        %v1585 = vrot.slane %v1486, 1
        %v1586 = vsel %vm1088, %v1583, %v1585
        %v1587 = vrot.slane %v1487, 1
        %v1588 = vrot.slane %v1488, 1
        %v1589 = vsel %vm1088, %v1587, %v1588
        %v1590 = vrot.slane %v1489, 1
        %v1591 = vsel %vm1088, %v1588, %v1590
        %v1592 = vrot.slane %v1490, 1
        %v1593 = vrot.slane %v1491, 1
        %v1594 = vsel %vm1088, %v1592, %v1593
        %v1595 = vrot.slane %v1492, 1
        %v1596 = vsel %vm1088, %v1593, %v1595
        %v1597 = vrot.slane %v1493, 1
        %v1598 = vrot.slane %v1494, 1
        %v1599 = vsel %vm1088, %v1597, %v1598
        %v1600 = vrot.slane %v1495, 1
        %v1601 = vsel %vm1088, %v1598, %v1600
        %v1602 = vrot.slane %v1496, 1
        %v1603 = vrot.slane %v1497, 1
        %v1604 = vsel %vm1088, %v1602, %v1603
        %v1605 = vrot.slane %v1498, 1
        %v1606 = vsel %vm1088, %v1603, %v1605
        %v1607 = vrot.slane %v1499, 1
        %v1608 = vrot.slane %v1500, 1
        %v1609 = vsel %vm1088, %v1607, %v1608
        %v1610 = vrot.slane %v1501, 1
        %v1611 = vsel %vm1088, %v1608, %v1610
        %v1612 = vrot.slane %v1502, 1
        %v1613 = vrot.slane %v1503, 1
        %v1614 = vsel %vm1088, %v1612, %v1613
        %v1615 = vrot.slane %v1504, 1
        %v1616 = vsel %vm1088, %v1613, %v1615
        %v1617 = vrot.slane %v1505, 1
        %v1618 = vrot.slane %v1506, 1
        %v1619 = vsel %vm1088, %v1617, %v1618
        %v1620 = vrot.slane %v1507, 1
        %v1621 = vsel %vm1088, %v1618, %v1620
        %v1622 = vrot.slane %v1508, 1
        %v1623 = vrot.slane %v1509, 1
        %v1624 = vsel %vm1088, %v1622, %v1623
        %v1625 = vrot.slane %v1510, 1
        %v1626 = vsel %vm1088, %v1623, %v1625
        %v1627 = vrot.slane %v1511, 1
        %v1628 = vrot.slane %v1512, 1
        %v1629 = vsel %vm1088, %v1627, %v1628
        %v1630 = vrot.slane %v1513, 1
        %v1631 = vsel %vm1088, %v1628, %v1630
        %v1632 = vrot.slane %v1514, 1
        %v1633 = vrot.slane %v1515, 1
        %v1634 = vsel %vm1088, %v1632, %v1633
        %v1635 = vrot.slane %v1516, 1
        %v1636 = vsel %vm1088, %v1633, %v1635
        %v1637 = vrot.slane %v1517, 1
        %v1638 = vrot.slane %v1518, 1
        %v1639 = vsel %vm1088, %v1637, %v1638
        %v1640 = vrot.slane %v1519, 1
        %v1641 = vsel %vm1088, %v1638, %v1640
        %v1642 = vrot.slane %v1520, 1
        %v1643 = vrot.slane %v1521, 1
        %v1644 = vsel %vm1088, %v1642, %v1643
        %v1645 = vrot.slane %v1522, 1
        %v1646 = vsel %vm1088, %v1643, %v1645
        %v1647 = vrot.slane %v1523, 1
        %v1648 = vrot.slane %v1524, 1
        %v1649 = vsel %vm1088, %v1647, %v1648
        %v1650 = vrot.slane %v1525, 1
        %v1651 = vsel %vm1088, %v1648, %v1650
        %v1652 = vrot.slane %v1526, 1
        %v1653 = vrot.slane %v1527, 1
        %v1654 = vsel %vm1088, %v1652, %v1653
        %v1655 = vrot.slane %v1528, 1
        %v1656 = vsel %vm1088, %v1653, %v1655
        %v1689 = vadd.f32 %v1445, %v1579
        %v1690 = vadd.f32 %v1446, %v1581
        %v1691 = vadd.f32 %v1447, %v1584
        %v1692 = vadd.f32 %v1448, %v1586
        %v1693 = vadd.f32 %v1449, %v1589
        %v1694 = vadd.f32 %v1450, %v1591
        %v1695 = vadd.f32 %v1451, %v1594
        %v1696 = vadd.f32 %v1452, %v1596
        %v1697 = vadd.f32 %v1453, %v1599
        %v1698 = vadd.f32 %v1454, %v1601
        %v1699 = vadd.f32 %v1455, %v1604
        %v1700 = vadd.f32 %v1456, %v1606
        %v1701 = vadd.f32 %v1457, %v1609
        %v1702 = vadd.f32 %v1458, %v1611
        %v1703 = vadd.f32 %v1459, %v1614
        %v1704 = vadd.f32 %v1460, %v1616
        %v1705 = vadd.f32 %v1461, %v1619
        %v1706 = vadd.f32 %v1462, %v1621
        %v1707 = vadd.f32 %v1463, %v1624
        %v1708 = vadd.f32 %v1464, %v1626
        %v1709 = vadd.f32 %v1465, %v1629
        %v1710 = vadd.f32 %v1466, %v1631
        %v1711 = vadd.f32 %v1467, %v1634
        %v1712 = vadd.f32 %v1468, %v1636
        %v1713 = vadd.f32 %v1469, %v1639
        %v1714 = vadd.f32 %v1470, %v1641
        %v1715 = vadd.f32 %v1471, %v1644
        %v1716 = vadd.f32 %v1472, %v1646
        %v1717 = vadd.f32 %v1473, %v1649
        %v1718 = vadd.f32 %v1474, %v1651
        %v1719 = vadd.f32 %v1475, %v1654
        %v1720 = vadd.f32 %v1476, %v1656
        %v1721 = vlaneseq
        %v1722 = vshrl.u32 %v1721, 7
        %v1723 = vsub.s32 1, %v1722
        %v1724 = vrot.slane %v540, %v1723
        %v1725 = vmul.f32 %v480, %v1724
        %v1726 = vmul.f32 %v481, %v1724
        %v1727 = vmul.f32 %v482, %v1724
        %v1728 = vmul.f32 %v483, %v1724
        %v1729 = vmul.f32 %v484, %v1724
        %v1730 = vmul.f32 %v485, %v1724
        %v1731 = vmul.f32 %v486, %v1724
        %v1732 = vmul.f32 %v487, %v1724
        %v1733 = vmul.f32 %v488, %v1724
        %v1734 = vmul.f32 %v489, %v1724
        %v1735 = vmul.f32 %v490, %v1724
        %v1736 = vmul.f32 %v491, %v1724
        %v1737 = vmul.f32 %v492, %v1724
        %v1738 = vmul.f32 %v493, %v1724
        %v1739 = vmul.f32 %v494, %v1724
        %v1740 = vmul.f32 %v495, %v1724
        %v1741 = vmul.f32 %v496, %v1724
        %v1742 = vmul.f32 %v497, %v1724
        %v1743 = vmul.f32 %v498, %v1724
        %v1744 = vmul.f32 %v499, %v1724
        %v1745 = vmul.f32 %v500, %v1724
        %v1746 = vmul.f32 %v501, %v1724
        %v1747 = vmul.f32 %v502, %v1724
        %v1748 = vmul.f32 %v503, %v1724
        %v1749 = vmul.f32 %v504, %v1724
        %v1750 = vmul.f32 %v505, %v1724
        %v1751 = vmul.f32 %v506, %v1724
        %v1752 = vmul.f32 %v507, %v1724
        %v1753 = vmul.f32 %v508, %v1724
        %v1754 = vmul.f32 %v509, %v1724
        %v1755 = vmul.f32 %v510, %v1724
        %v1756 = vmul.f32 %v511, %v1724
        %v1757 = vmul.f32 %v512, %v1724
        %v1758 = vmul.f32 %v513, %v1724
        %v1759 = vmul.f32 %v514, %v1724
        %v1760 = vmul.f32 %v515, %v1724
        %v1761 = vmul.f32 %v516, %v1724
        %v1762 = vmul.f32 %v517, %v1724
        %v1763 = vmul.f32 %v518, %v1724
        %v1764 = vmul.f32 %v519, %v1724
        %v1765 = vmul.f32 %v520, %v1724
        %v1766 = vmul.f32 %v521, %v1724
        %v1767 = vmul.f32 %v522, %v1724
        %v1768 = vmul.f32 %v523, %v1724
        %v1769 = vmul.f32 %v524, %v1724
        %v1770 = vmul.f32 %v525, %v1724
        %v1771 = vmul.f32 %v526, %v1724
        %v1772 = vmul.f32 %v527, %v1724
        %v1821 = vrot.slane %v1725, 1
        %v1822 = vrot.slane %v1726, 1
        %v1823 = vsel %vm1088, %v1821, %v1822
        %v1824 = vrot.slane %v1727, 1
        %v1825 = vsel %vm1088, %v1822, %v1824
        %v1826 = vrot.slane %v1728, 1
        %v1827 = vrot.slane %v1729, 1
        %v1828 = vsel %vm1088, %v1826, %v1827
        %v1829 = vrot.slane %v1730, 1
        %v1830 = vsel %vm1088, %v1827, %v1829
        %v1831 = vrot.slane %v1731, 1
        %v1832 = vrot.slane %v1732, 1
        %v1833 = vsel %vm1088, %v1831, %v1832
        %v1834 = vrot.slane %v1733, 1
        %v1835 = vsel %vm1088, %v1832, %v1834
        %v1836 = vrot.slane %v1734, 1
        %v1837 = vrot.slane %v1735, 1
        %v1838 = vsel %vm1088, %v1836, %v1837
        %v1839 = vrot.slane %v1736, 1
        %v1840 = vsel %vm1088, %v1837, %v1839
        %v1841 = vrot.slane %v1737, 1
        %v1842 = vrot.slane %v1738, 1
        %v1843 = vsel %vm1088, %v1841, %v1842
        %v1844 = vrot.slane %v1739, 1
        %v1845 = vsel %vm1088, %v1842, %v1844
        %v1846 = vrot.slane %v1740, 1
        %v1847 = vrot.slane %v1741, 1
        %v1848 = vsel %vm1088, %v1846, %v1847
        %v1849 = vrot.slane %v1742, 1
        %v1850 = vsel %vm1088, %v1847, %v1849
        %v1851 = vrot.slane %v1743, 1
        %v1852 = vrot.slane %v1744, 1
        %v1853 = vsel %vm1088, %v1851, %v1852
        %v1854 = vrot.slane %v1745, 1
        %v1855 = vsel %vm1088, %v1852, %v1854
        %v1856 = vrot.slane %v1746, 1
        %v1857 = vrot.slane %v1747, 1
        %v1858 = vsel %vm1088, %v1856, %v1857
        %v1859 = vrot.slane %v1748, 1
        %v1860 = vsel %vm1088, %v1857, %v1859
        %v1861 = vrot.slane %v1749, 1
        %v1862 = vrot.slane %v1750, 1
        %v1863 = vsel %vm1088, %v1861, %v1862
        %v1864 = vrot.slane %v1751, 1
        %v1865 = vsel %vm1088, %v1862, %v1864
        %v1866 = vrot.slane %v1752, 1
        %v1867 = vrot.slane %v1753, 1
        %v1868 = vsel %vm1088, %v1866, %v1867
        %v1869 = vrot.slane %v1754, 1
        %v1870 = vsel %vm1088, %v1867, %v1869
        %v1871 = vrot.slane %v1755, 1
        %v1872 = vrot.slane %v1756, 1
        %v1873 = vsel %vm1088, %v1871, %v1872
        %v1874 = vrot.slane %v1757, 1
        %v1875 = vsel %vm1088, %v1872, %v1874
        %v1876 = vrot.slane %v1758, 1
        %v1877 = vrot.slane %v1759, 1
        %v1878 = vsel %vm1088, %v1876, %v1877
        %v1879 = vrot.slane %v1760, 1
        %v1880 = vsel %vm1088, %v1877, %v1879
        %v1881 = vrot.slane %v1761, 1
        %v1882 = vrot.slane %v1762, 1
        %v1883 = vsel %vm1088, %v1881, %v1882
        %v1884 = vrot.slane %v1763, 1
        %v1885 = vsel %vm1088, %v1882, %v1884
        %v1886 = vrot.slane %v1764, 1
        %v1887 = vrot.slane %v1765, 1
        %v1888 = vsel %vm1088, %v1886, %v1887
        %v1889 = vrot.slane %v1766, 1
        %v1890 = vsel %vm1088, %v1887, %v1889
        %v1891 = vrot.slane %v1767, 1
        %v1892 = vrot.slane %v1768, 1
        %v1893 = vsel %vm1088, %v1891, %v1892
        %v1894 = vrot.slane %v1769, 1
        %v1895 = vsel %vm1088, %v1892, %v1894
        %v1896 = vrot.slane %v1770, 1
        %v1897 = vrot.slane %v1771, 1
        %v1898 = vsel %vm1088, %v1896, %v1897
        %v1899 = vrot.slane %v1772, 1
        %v1900 = vsel %vm1088, %v1897, %v1899
        %v1933 = vadd.f32 %v1689, %v1823
        %v1934 = vadd.f32 %v1690, %v1825
        %v1935 = vadd.f32 %v1691, %v1828
        %v1936 = vadd.f32 %v1692, %v1830
        %v1937 = vadd.f32 %v1693, %v1833
        %v1938 = vadd.f32 %v1694, %v1835
        %v1939 = vadd.f32 %v1695, %v1838
        %v1940 = vadd.f32 %v1696, %v1840
        %v1941 = vadd.f32 %v1697, %v1843
        %v1942 = vadd.f32 %v1698, %v1845
        %v1943 = vadd.f32 %v1699, %v1848
        %v1944 = vadd.f32 %v1700, %v1850
        %v1945 = vadd.f32 %v1701, %v1853
        %v1946 = vadd.f32 %v1702, %v1855
        %v1947 = vadd.f32 %v1703, %v1858
        %v1948 = vadd.f32 %v1704, %v1860
        %v1949 = vadd.f32 %v1705, %v1863
        %v1950 = vadd.f32 %v1706, %v1865
        %v1951 = vadd.f32 %v1707, %v1868
        %v1952 = vadd.f32 %v1708, %v1870
        %v1953 = vadd.f32 %v1709, %v1873
        %v1954 = vadd.f32 %v1710, %v1875
        %v1955 = vadd.f32 %v1711, %v1878
        %v1956 = vadd.f32 %v1712, %v1880
        %v1957 = vadd.f32 %v1713, %v1883
        %v1958 = vadd.f32 %v1714, %v1885
        %v1959 = vadd.f32 %v1715, %v1888
        %v1960 = vadd.f32 %v1716, %v1890
        %v1961 = vadd.f32 %v1717, %v1893
        %v1962 = vadd.f32 %v1718, %v1895
        %v1963 = vadd.f32 %v1719, %v1898
        %v1964 = vadd.f32 %v1720, %v1900
        %v1965 = vlaneseq
        %v1966 = vshrl.u32 %v1965, 7
        %v1967 = vsub.s32 1, %v1966
        %v1968 = vrot.slane %v541, %v1967
        %v1969 = vmul.f32 %v483, %v1968
        %v1970 = vmul.f32 %v484, %v1968
        %v1971 = vmul.f32 %v485, %v1968
        %v1972 = vmul.f32 %v486, %v1968
        %v1973 = vmul.f32 %v487, %v1968
        %v1974 = vmul.f32 %v488, %v1968
        %v1975 = vmul.f32 %v489, %v1968
        %v1976 = vmul.f32 %v490, %v1968
        %v1977 = vmul.f32 %v491, %v1968
        %v1978 = vmul.f32 %v492, %v1968
        %v1979 = vmul.f32 %v493, %v1968
        %v1980 = vmul.f32 %v494, %v1968
        %v1981 = vmul.f32 %v495, %v1968
        %v1982 = vmul.f32 %v496, %v1968
        %v1983 = vmul.f32 %v497, %v1968
        %v1984 = vmul.f32 %v498, %v1968
        %v1985 = vmul.f32 %v499, %v1968
        %v1986 = vmul.f32 %v500, %v1968
        %v1987 = vmul.f32 %v501, %v1968
        %v1988 = vmul.f32 %v502, %v1968
        %v1989 = vmul.f32 %v503, %v1968
        %v1990 = vmul.f32 %v504, %v1968
        %v1991 = vmul.f32 %v505, %v1968
        %v1992 = vmul.f32 %v506, %v1968
        %v1993 = vmul.f32 %v507, %v1968
        %v1994 = vmul.f32 %v508, %v1968
        %v1995 = vmul.f32 %v509, %v1968
        %v1996 = vmul.f32 %v510, %v1968
        %v1997 = vmul.f32 %v511, %v1968
        %v1998 = vmul.f32 %v512, %v1968
        %v1999 = vmul.f32 %v513, %v1968
        %v2000 = vmul.f32 %v514, %v1968
        %v2001 = vmul.f32 %v515, %v1968
        %v2002 = vmul.f32 %v516, %v1968
        %v2003 = vmul.f32 %v517, %v1968
        %v2004 = vmul.f32 %v518, %v1968
        %v2005 = vmul.f32 %v519, %v1968
        %v2006 = vmul.f32 %v520, %v1968
        %v2007 = vmul.f32 %v521, %v1968
        %v2008 = vmul.f32 %v522, %v1968
        %v2009 = vmul.f32 %v523, %v1968
        %v2010 = vmul.f32 %v524, %v1968
        %v2011 = vmul.f32 %v525, %v1968
        %v2012 = vmul.f32 %v526, %v1968
        %v2013 = vmul.f32 %v527, %v1968
        %v2014 = vmul.f32 %v528, %v1968
        %v2015 = vmul.f32 %v529, %v1968
        %v2016 = vmul.f32 %v530, %v1968
        %v2065 = vrot.slane %v1969, 1
        %v2066 = vrot.slane %v1970, 1
        %v2067 = vsel %vm1088, %v2065, %v2066
        %v2068 = vrot.slane %v1971, 1
        %v2069 = vsel %vm1088, %v2066, %v2068
        %v2070 = vrot.slane %v1972, 1
        %v2071 = vrot.slane %v1973, 1
        %v2072 = vsel %vm1088, %v2070, %v2071
        %v2073 = vrot.slane %v1974, 1
        %v2074 = vsel %vm1088, %v2071, %v2073
        %v2075 = vrot.slane %v1975, 1
        %v2076 = vrot.slane %v1976, 1
        %v2077 = vsel %vm1088, %v2075, %v2076
        %v2078 = vrot.slane %v1977, 1
        %v2079 = vsel %vm1088, %v2076, %v2078
        %v2080 = vrot.slane %v1978, 1
        %v2081 = vrot.slane %v1979, 1
        %v2082 = vsel %vm1088, %v2080, %v2081
        %v2083 = vrot.slane %v1980, 1
        %v2084 = vsel %vm1088, %v2081, %v2083
        %v2085 = vrot.slane %v1981, 1
        %v2086 = vrot.slane %v1982, 1
        %v2087 = vsel %vm1088, %v2085, %v2086
        %v2088 = vrot.slane %v1983, 1
        %v2089 = vsel %vm1088, %v2086, %v2088
        %v2090 = vrot.slane %v1984, 1
        %v2091 = vrot.slane %v1985, 1
        %v2092 = vsel %vm1088, %v2090, %v2091
        %v2093 = vrot.slane %v1986, 1
        %v2094 = vsel %vm1088, %v2091, %v2093
        %v2095 = vrot.slane %v1987, 1
        %v2096 = vrot.slane %v1988, 1
        %v2097 = vsel %vm1088, %v2095, %v2096
        %v2098 = vrot.slane %v1989, 1
        %v2099 = vsel %vm1088, %v2096, %v2098
        %v2100 = vrot.slane %v1990, 1
        %v2101 = vrot.slane %v1991, 1
        %v2102 = vsel %vm1088, %v2100, %v2101
        %v2103 = vrot.slane %v1992, 1
        %v2104 = vsel %vm1088, %v2101, %v2103
        %v2105 = vrot.slane %v1993, 1
        %v2106 = vrot.slane %v1994, 1
        %v2107 = vsel %vm1088, %v2105, %v2106
        %v2108 = vrot.slane %v1995, 1
        %v2109 = vsel %vm1088, %v2106, %v2108
        %v2110 = vrot.slane %v1996, 1
        %v2111 = vrot.slane %v1997, 1
        %v2112 = vsel %vm1088, %v2110, %v2111
        %v2113 = vrot.slane %v1998, 1
        %v2114 = vsel %vm1088, %v2111, %v2113
        %v2115 = vrot.slane %v1999, 1
        %v2116 = vrot.slane %v2000, 1
        %v2117 = vsel %vm1088, %v2115, %v2116
        %v2118 = vrot.slane %v2001, 1
        %v2119 = vsel %vm1088, %v2116, %v2118
        %v2120 = vrot.slane %v2002, 1
        %v2121 = vrot.slane %v2003, 1
        %v2122 = vsel %vm1088, %v2120, %v2121
        %v2123 = vrot.slane %v2004, 1
        %v2124 = vsel %vm1088, %v2121, %v2123
        %v2125 = vrot.slane %v2005, 1
        %v2126 = vrot.slane %v2006, 1
        %v2127 = vsel %vm1088, %v2125, %v2126
        %v2128 = vrot.slane %v2007, 1
        %v2129 = vsel %vm1088, %v2126, %v2128
        %v2130 = vrot.slane %v2008, 1
        %v2131 = vrot.slane %v2009, 1
        %v2132 = vsel %vm1088, %v2130, %v2131
        %v2133 = vrot.slane %v2010, 1
        %v2134 = vsel %vm1088, %v2131, %v2133
        %v2135 = vrot.slane %v2011, 1
        %v2136 = vrot.slane %v2012, 1
        %v2137 = vsel %vm1088, %v2135, %v2136
        %v2138 = vrot.slane %v2013, 1
        %v2139 = vsel %vm1088, %v2136, %v2138
        %v2140 = vrot.slane %v2014, 1
        %v2141 = vrot.slane %v2015, 1
        %v2142 = vsel %vm1088, %v2140, %v2141
        %v2143 = vrot.slane %v2016, 1
        %v2144 = vsel %vm1088, %v2141, %v2143
        %v2177 = vadd.f32 %v1933, %v2067
        %v2178 = vadd.f32 %v1934, %v2069
        %v2179 = vadd.f32 %v1935, %v2072
        %v2180 = vadd.f32 %v1936, %v2074
        %v2181 = vadd.f32 %v1937, %v2077
        %v2182 = vadd.f32 %v1938, %v2079
        %v2183 = vadd.f32 %v1939, %v2082
        %v2184 = vadd.f32 %v1940, %v2084
        %v2185 = vadd.f32 %v1941, %v2087
        %v2186 = vadd.f32 %v1942, %v2089
        %v2187 = vadd.f32 %v1943, %v2092
        %v2188 = vadd.f32 %v1944, %v2094
        %v2189 = vadd.f32 %v1945, %v2097
        %v2190 = vadd.f32 %v1946, %v2099
        %v2191 = vadd.f32 %v1947, %v2102
        %v2192 = vadd.f32 %v1948, %v2104
        %v2193 = vadd.f32 %v1949, %v2107
        %v2194 = vadd.f32 %v1950, %v2109
        %v2195 = vadd.f32 %v1951, %v2112
        %v2196 = vadd.f32 %v1952, %v2114
        %v2197 = vadd.f32 %v1953, %v2117
        %v2198 = vadd.f32 %v1954, %v2119
        %v2199 = vadd.f32 %v1955, %v2122
        %v2200 = vadd.f32 %v1956, %v2124
        %v2201 = vadd.f32 %v1957, %v2127
        %v2202 = vadd.f32 %v1958, %v2129
        %v2203 = vadd.f32 %v1959, %v2132
        %v2204 = vadd.f32 %v1960, %v2134
        %v2205 = vadd.f32 %v1961, %v2137
        %v2206 = vadd.f32 %v1962, %v2139
        %v2207 = vadd.f32 %v1963, %v2142
        %v2208 = vadd.f32 %v1964, %v2144
        %v2209 = vlaneseq
        %v2210 = vshrl.u32 %v2209, 7
        %v2211 = vsub.s32 1, %v2210
        %v2212 = vrot.slane %v542, %v2211
        %v2213 = vmul.f32 %v486, %v2212
        %v2214 = vmul.f32 %v487, %v2212
        %v2215 = vmul.f32 %v488, %v2212
        %v2216 = vmul.f32 %v489, %v2212
        %v2217 = vmul.f32 %v490, %v2212
        %v2218 = vmul.f32 %v491, %v2212
        %v2219 = vmul.f32 %v492, %v2212
        %v2220 = vmul.f32 %v493, %v2212
        %v2221 = vmul.f32 %v494, %v2212
        %v2222 = vmul.f32 %v495, %v2212
        %v2223 = vmul.f32 %v496, %v2212
        %v2224 = vmul.f32 %v497, %v2212
        %v2225 = vmul.f32 %v498, %v2212
        %v2226 = vmul.f32 %v499, %v2212
        %v2227 = vmul.f32 %v500, %v2212
        %v2228 = vmul.f32 %v501, %v2212
        %v2229 = vmul.f32 %v502, %v2212
        %v2230 = vmul.f32 %v503, %v2212
        %v2231 = vmul.f32 %v504, %v2212
        %v2232 = vmul.f32 %v505, %v2212
        %v2233 = vmul.f32 %v506, %v2212
        %v2234 = vmul.f32 %v507, %v2212
        %v2235 = vmul.f32 %v508, %v2212
        %v2236 = vmul.f32 %v509, %v2212
        %v2237 = vmul.f32 %v510, %v2212
        %v2238 = vmul.f32 %v511, %v2212
        %v2239 = vmul.f32 %v512, %v2212
        %v2240 = vmul.f32 %v513, %v2212
        %v2241 = vmul.f32 %v514, %v2212
        %v2242 = vmul.f32 %v515, %v2212
        %v2243 = vmul.f32 %v516, %v2212
        %v2244 = vmul.f32 %v517, %v2212
        %v2245 = vmul.f32 %v518, %v2212
        %v2246 = vmul.f32 %v519, %v2212
        %v2247 = vmul.f32 %v520, %v2212
        %v2248 = vmul.f32 %v521, %v2212
        %v2249 = vmul.f32 %v522, %v2212
        %v2250 = vmul.f32 %v523, %v2212
        %v2251 = vmul.f32 %v524, %v2212
        %v2252 = vmul.f32 %v525, %v2212
        %v2253 = vmul.f32 %v526, %v2212
        %v2254 = vmul.f32 %v527, %v2212
        %v2255 = vmul.f32 %v528, %v2212
        %v2256 = vmul.f32 %v529, %v2212
        %v2257 = vmul.f32 %v530, %v2212
        %v2258 = vmul.f32 %v531, %v2212
        %v2259 = vmul.f32 %v532, %v2212
        %v2260 = vmul.f32 %v533, %v2212
        %v2309 = vrot.slane %v2213, 1
        %v2310 = vrot.slane %v2214, 1
        %v2311 = vsel %vm1088, %v2309, %v2310
        %v2312 = vrot.slane %v2215, 1
        %v2313 = vsel %vm1088, %v2310, %v2312
        %v2314 = vrot.slane %v2216, 1
        %v2315 = vrot.slane %v2217, 1
        %v2316 = vsel %vm1088, %v2314, %v2315
        %v2317 = vrot.slane %v2218, 1
        %v2318 = vsel %vm1088, %v2315, %v2317
        %v2319 = vrot.slane %v2219, 1
        %v2320 = vrot.slane %v2220, 1
        %v2321 = vsel %vm1088, %v2319, %v2320
        %v2322 = vrot.slane %v2221, 1
        %v2323 = vsel %vm1088, %v2320, %v2322
        %v2324 = vrot.slane %v2222, 1
        %v2325 = vrot.slane %v2223, 1
        %v2326 = vsel %vm1088, %v2324, %v2325
        %v2327 = vrot.slane %v2224, 1
        %v2328 = vsel %vm1088, %v2325, %v2327
        %v2329 = vrot.slane %v2225, 1
        %v2330 = vrot.slane %v2226, 1
        %v2331 = vsel %vm1088, %v2329, %v2330
        %v2332 = vrot.slane %v2227, 1
        %v2333 = vsel %vm1088, %v2330, %v2332
        %v2334 = vrot.slane %v2228, 1
        %v2335 = vrot.slane %v2229, 1
        %v2336 = vsel %vm1088, %v2334, %v2335
        %v2337 = vrot.slane %v2230, 1
        %v2338 = vsel %vm1088, %v2335, %v2337
        %v2339 = vrot.slane %v2231, 1
        %v2340 = vrot.slane %v2232, 1
        %v2341 = vsel %vm1088, %v2339, %v2340
        %v2342 = vrot.slane %v2233, 1
        %v2343 = vsel %vm1088, %v2340, %v2342
        %v2344 = vrot.slane %v2234, 1
        %v2345 = vrot.slane %v2235, 1
        %v2346 = vsel %vm1088, %v2344, %v2345
        %v2347 = vrot.slane %v2236, 1
        %v2348 = vsel %vm1088, %v2345, %v2347
        %v2349 = vrot.slane %v2237, 1
        %v2350 = vrot.slane %v2238, 1
        %v2351 = vsel %vm1088, %v2349, %v2350
        %v2352 = vrot.slane %v2239, 1
        %v2353 = vsel %vm1088, %v2350, %v2352
        %v2354 = vrot.slane %v2240, 1
        %v2355 = vrot.slane %v2241, 1
        %v2356 = vsel %vm1088, %v2354, %v2355
        %v2357 = vrot.slane %v2242, 1
        %v2358 = vsel %vm1088, %v2355, %v2357
        %v2359 = vrot.slane %v2243, 1
        %v2360 = vrot.slane %v2244, 1
        %v2361 = vsel %vm1088, %v2359, %v2360
        %v2362 = vrot.slane %v2245, 1
        %v2363 = vsel %vm1088, %v2360, %v2362
        %v2364 = vrot.slane %v2246, 1
        %v2365 = vrot.slane %v2247, 1
        %v2366 = vsel %vm1088, %v2364, %v2365
        %v2367 = vrot.slane %v2248, 1
        %v2368 = vsel %vm1088, %v2365, %v2367
        %v2369 = vrot.slane %v2249, 1
        %v2370 = vrot.slane %v2250, 1
        %v2371 = vsel %vm1088, %v2369, %v2370
        %v2372 = vrot.slane %v2251, 1
        %v2373 = vsel %vm1088, %v2370, %v2372
        %v2374 = vrot.slane %v2252, 1
        %v2375 = vrot.slane %v2253, 1
        %v2376 = vsel %vm1088, %v2374, %v2375
        %v2377 = vrot.slane %v2254, 1
        %v2378 = vsel %vm1088, %v2375, %v2377
        %v2379 = vrot.slane %v2255, 1
        %v2380 = vrot.slane %v2256, 1
        %v2381 = vsel %vm1088, %v2379, %v2380
        %v2382 = vrot.slane %v2257, 1
        %v2383 = vsel %vm1088, %v2380, %v2382
        %v2384 = vrot.slane %v2258, 1
        %v2385 = vrot.slane %v2259, 1
        %v2386 = vsel %vm1088, %v2384, %v2385
        %v2387 = vrot.slane %v2260, 1
        %v2388 = vsel %vm1088, %v2385, %v2387
        %v2421 = vadd.f32 %v2177, %v2311
        %v2422 = vadd.f32 %v2178, %v2313
        %v2423 = vadd.f32 %v2179, %v2316
        %v2424 = vadd.f32 %v2180, %v2318
        %v2425 = vadd.f32 %v2181, %v2321
        %v2426 = vadd.f32 %v2182, %v2323
        %v2427 = vadd.f32 %v2183, %v2326
        %v2428 = vadd.f32 %v2184, %v2328
        %v2429 = vadd.f32 %v2185, %v2331
        %v2430 = vadd.f32 %v2186, %v2333
        %v2431 = vadd.f32 %v2187, %v2336
        %v2432 = vadd.f32 %v2188, %v2338
        %v2433 = vadd.f32 %v2189, %v2341
        %v2434 = vadd.f32 %v2190, %v2343
        %v2435 = vadd.f32 %v2191, %v2346
        %v2436 = vadd.f32 %v2192, %v2348
        %v2437 = vadd.f32 %v2193, %v2351
        %v2438 = vadd.f32 %v2194, %v2353
        %v2439 = vadd.f32 %v2195, %v2356
        %v2440 = vadd.f32 %v2196, %v2358
        %v2441 = vadd.f32 %v2197, %v2361
        %v2442 = vadd.f32 %v2198, %v2363
        %v2443 = vadd.f32 %v2199, %v2366
        %v2444 = vadd.f32 %v2200, %v2368
        %v2445 = vadd.f32 %v2201, %v2371
        %v2446 = vadd.f32 %v2202, %v2373
        %v2447 = vadd.f32 %v2203, %v2376
        %v2448 = vadd.f32 %v2204, %v2378
        %v2449 = vadd.f32 %v2205, %v2381
        %v2450 = vadd.f32 %v2206, %v2383
        %v2451 = vadd.f32 %v2207, %v2386
        %v2452 = vadd.f32 %v2208, %v2388
        %v2453 = vlaneseq
        %v2454 = vshrl.u32 %v2453, 7
        %v2455 = vsub.s32 1, %v2454
        %v2456 = vrot.slane %v543, %v2455
        %v2457 = vmul.f32 %v489, %v2456
        %v2458 = vmul.f32 %v490, %v2456
        %v2459 = vmul.f32 %v491, %v2456
        %v2460 = vmul.f32 %v492, %v2456
        %v2461 = vmul.f32 %v493, %v2456
        %v2462 = vmul.f32 %v494, %v2456
        %v2463 = vmul.f32 %v495, %v2456
        %v2464 = vmul.f32 %v496, %v2456
        %v2465 = vmul.f32 %v497, %v2456
        %v2466 = vmul.f32 %v498, %v2456
        %v2467 = vmul.f32 %v499, %v2456
        %v2468 = vmul.f32 %v500, %v2456
        %v2469 = vmul.f32 %v501, %v2456
        %v2470 = vmul.f32 %v502, %v2456
        %v2471 = vmul.f32 %v503, %v2456
        %v2472 = vmul.f32 %v504, %v2456
        %v2473 = vmul.f32 %v505, %v2456
        %v2474 = vmul.f32 %v506, %v2456
        %v2475 = vmul.f32 %v507, %v2456
        %v2476 = vmul.f32 %v508, %v2456
        %v2477 = vmul.f32 %v509, %v2456
        %v2478 = vmul.f32 %v510, %v2456
        %v2479 = vmul.f32 %v511, %v2456
        %v2480 = vmul.f32 %v512, %v2456
        %v2481 = vmul.f32 %v513, %v2456
        %v2482 = vmul.f32 %v514, %v2456
        %v2483 = vmul.f32 %v515, %v2456
        %v2484 = vmul.f32 %v516, %v2456
        %v2485 = vmul.f32 %v517, %v2456
        %v2486 = vmul.f32 %v518, %v2456
        %v2487 = vmul.f32 %v519, %v2456
        %v2488 = vmul.f32 %v520, %v2456
        %v2489 = vmul.f32 %v521, %v2456
        %v2490 = vmul.f32 %v522, %v2456
        %v2491 = vmul.f32 %v523, %v2456
        %v2492 = vmul.f32 %v524, %v2456
        %v2493 = vmul.f32 %v525, %v2456
        %v2494 = vmul.f32 %v526, %v2456
        %v2495 = vmul.f32 %v527, %v2456
        %v2496 = vmul.f32 %v528, %v2456
        %v2497 = vmul.f32 %v529, %v2456
        %v2498 = vmul.f32 %v530, %v2456
        %v2499 = vmul.f32 %v531, %v2456
        %v2500 = vmul.f32 %v532, %v2456
        %v2501 = vmul.f32 %v533, %v2456
        %v2502 = vmul.f32 %v534, %v2456
        %v2503 = vmul.f32 %v535, %v2456
        %v2504 = vmul.f32 %v536, %v2456
        %v2553 = vrot.slane %v2457, 1
        %v2554 = vrot.slane %v2458, 1
        %v2555 = vsel %vm1088, %v2553, %v2554
        %v2556 = vrot.slane %v2459, 1
        %v2557 = vsel %vm1088, %v2554, %v2556
        %v2558 = vrot.slane %v2460, 1
        %v2559 = vrot.slane %v2461, 1
        %v2560 = vsel %vm1088, %v2558, %v2559
        %v2561 = vrot.slane %v2462, 1
        %v2562 = vsel %vm1088, %v2559, %v2561
        %v2563 = vrot.slane %v2463, 1
        %v2564 = vrot.slane %v2464, 1
        %v2565 = vsel %vm1088, %v2563, %v2564
        %v2566 = vrot.slane %v2465, 1
        %v2567 = vsel %vm1088, %v2564, %v2566
        %v2568 = vrot.slane %v2466, 1
        %v2569 = vrot.slane %v2467, 1
        %v2570 = vsel %vm1088, %v2568, %v2569
        %v2571 = vrot.slane %v2468, 1
        %v2572 = vsel %vm1088, %v2569, %v2571
        %v2573 = vrot.slane %v2469, 1
        %v2574 = vrot.slane %v2470, 1
        %v2575 = vsel %vm1088, %v2573, %v2574
        %v2576 = vrot.slane %v2471, 1
        %v2577 = vsel %vm1088, %v2574, %v2576
        %v2578 = vrot.slane %v2472, 1
        %v2579 = vrot.slane %v2473, 1
        %v2580 = vsel %vm1088, %v2578, %v2579
        %v2581 = vrot.slane %v2474, 1
        %v2582 = vsel %vm1088, %v2579, %v2581
        %v2583 = vrot.slane %v2475, 1
        %v2584 = vrot.slane %v2476, 1
        %v2585 = vsel %vm1088, %v2583, %v2584
        %v2586 = vrot.slane %v2477, 1
        %v2587 = vsel %vm1088, %v2584, %v2586
        %v2588 = vrot.slane %v2478, 1
        %v2589 = vrot.slane %v2479, 1
        %v2590 = vsel %vm1088, %v2588, %v2589
        %v2591 = vrot.slane %v2480, 1
        %v2592 = vsel %vm1088, %v2589, %v2591
        %v2593 = vrot.slane %v2481, 1
        %v2594 = vrot.slane %v2482, 1
        %v2595 = vsel %vm1088, %v2593, %v2594
        %v2596 = vrot.slane %v2483, 1
        %v2597 = vsel %vm1088, %v2594, %v2596
        %v2598 = vrot.slane %v2484, 1
        %v2599 = vrot.slane %v2485, 1
        %v2600 = vsel %vm1088, %v2598, %v2599
        %v2601 = vrot.slane %v2486, 1
        %v2602 = vsel %vm1088, %v2599, %v2601
        %v2603 = vrot.slane %v2487, 1
        %v2604 = vrot.slane %v2488, 1
        %v2605 = vsel %vm1088, %v2603, %v2604
        %v2606 = vrot.slane %v2489, 1
        %v2607 = vsel %vm1088, %v2604, %v2606
        %v2608 = vrot.slane %v2490, 1
        %v2609 = vrot.slane %v2491, 1
        %v2610 = vsel %vm1088, %v2608, %v2609
        %v2611 = vrot.slane %v2492, 1
        %v2612 = vsel %vm1088, %v2609, %v2611
        %v2613 = vrot.slane %v2493, 1
        %v2614 = vrot.slane %v2494, 1
        %v2615 = vsel %vm1088, %v2613, %v2614
        %v2616 = vrot.slane %v2495, 1
        %v2617 = vsel %vm1088, %v2614, %v2616
        %v2618 = vrot.slane %v2496, 1
        %v2619 = vrot.slane %v2497, 1
        %v2620 = vsel %vm1088, %v2618, %v2619
        %v2621 = vrot.slane %v2498, 1
        %v2622 = vsel %vm1088, %v2619, %v2621
        %v2623 = vrot.slane %v2499, 1
        %v2624 = vrot.slane %v2500, 1
        %v2625 = vsel %vm1088, %v2623, %v2624
        %v2626 = vrot.slane %v2501, 1
        %v2627 = vsel %vm1088, %v2624, %v2626
        %v2628 = vrot.slane %v2502, 1
        %v2629 = vrot.slane %v2503, 1
        %v2630 = vsel %vm1088, %v2628, %v2629
        %v2631 = vrot.slane %v2504, 1
        %v2632 = vsel %vm1088, %v2629, %v2631
        %v2665 = vadd.f32 %v2421, %v2555
        %v2666 = vadd.f32 %v2422, %v2557
        %v2667 = vadd.f32 %v2423, %v2560
        %v2668 = vadd.f32 %v2424, %v2562
        %v2669 = vadd.f32 %v2425, %v2565
        %v2670 = vadd.f32 %v2426, %v2567
        %v2671 = vadd.f32 %v2427, %v2570
        %v2672 = vadd.f32 %v2428, %v2572
        %v2673 = vadd.f32 %v2429, %v2575
        %v2674 = vadd.f32 %v2430, %v2577
        %v2675 = vadd.f32 %v2431, %v2580
        %v2676 = vadd.f32 %v2432, %v2582
        %v2677 = vadd.f32 %v2433, %v2585
        %v2678 = vadd.f32 %v2434, %v2587
        %v2679 = vadd.f32 %v2435, %v2590
        %v2680 = vadd.f32 %v2436, %v2592
        %v2681 = vadd.f32 %v2437, %v2595
        %v2682 = vadd.f32 %v2438, %v2597
        %v2683 = vadd.f32 %v2439, %v2600
        %v2684 = vadd.f32 %v2440, %v2602
        %v2685 = vadd.f32 %v2441, %v2605
        %v2686 = vadd.f32 %v2442, %v2607
        %v2687 = vadd.f32 %v2443, %v2610
        %v2688 = vadd.f32 %v2444, %v2612
        %v2689 = vadd.f32 %v2445, %v2615
        %v2690 = vadd.f32 %v2446, %v2617
        %v2691 = vadd.f32 %v2447, %v2620
        %v2692 = vadd.f32 %v2448, %v2622
        %v2693 = vadd.f32 %v2449, %v2625
        %v2694 = vadd.f32 %v2450, %v2627
        %v2695 = vadd.f32 %v2451, %v2630
        %v2696 = vadd.f32 %v2452, %v2632
        %v2697 = vlaneseq
        %v2698 = vshrl.u32 %v2697, 7
        %v2699 = vsub.s32 2, %v2698
        %v2700 = vrot.slane %v537, %v2699
        %v2701 = vmul.f32 %v471, %v2700
        %v2702 = vmul.f32 %v472, %v2700
        %v2703 = vmul.f32 %v473, %v2700
        %v2704 = vmul.f32 %v474, %v2700
        %v2705 = vmul.f32 %v475, %v2700
        %v2706 = vmul.f32 %v476, %v2700
        %v2707 = vmul.f32 %v477, %v2700
        %v2708 = vmul.f32 %v478, %v2700
        %v2709 = vmul.f32 %v479, %v2700
        %v2710 = vmul.f32 %v480, %v2700
        %v2711 = vmul.f32 %v481, %v2700
        %v2712 = vmul.f32 %v482, %v2700
        %v2713 = vmul.f32 %v483, %v2700
        %v2714 = vmul.f32 %v484, %v2700
        %v2715 = vmul.f32 %v485, %v2700
        %v2716 = vmul.f32 %v486, %v2700
        %v2717 = vmul.f32 %v487, %v2700
        %v2718 = vmul.f32 %v488, %v2700
        %v2719 = vmul.f32 %v489, %v2700
        %v2720 = vmul.f32 %v490, %v2700
        %v2721 = vmul.f32 %v491, %v2700
        %v2722 = vmul.f32 %v492, %v2700
        %v2723 = vmul.f32 %v493, %v2700
        %v2724 = vmul.f32 %v494, %v2700
        %v2725 = vmul.f32 %v495, %v2700
        %v2726 = vmul.f32 %v496, %v2700
        %v2727 = vmul.f32 %v497, %v2700
        %v2728 = vmul.f32 %v498, %v2700
        %v2729 = vmul.f32 %v499, %v2700
        %v2730 = vmul.f32 %v500, %v2700
        %v2731 = vmul.f32 %v501, %v2700
        %v2732 = vmul.f32 %v502, %v2700
        %v2733 = vmul.f32 %v503, %v2700
        %v2734 = vmul.f32 %v504, %v2700
        %v2735 = vmul.f32 %v505, %v2700
        %v2736 = vmul.f32 %v506, %v2700
        %v2737 = vmul.f32 %v507, %v2700
        %v2738 = vmul.f32 %v508, %v2700
        %v2739 = vmul.f32 %v509, %v2700
        %v2740 = vmul.f32 %v510, %v2700
        %v2741 = vmul.f32 %v511, %v2700
        %v2742 = vmul.f32 %v512, %v2700
        %v2743 = vmul.f32 %v513, %v2700
        %v2744 = vmul.f32 %v514, %v2700
        %v2745 = vmul.f32 %v515, %v2700
        %v2746 = vmul.f32 %v516, %v2700
        %v2747 = vmul.f32 %v517, %v2700
        %v2748 = vmul.f32 %v518, %v2700
        %vm2797 = vcmask 1045504
        %v2798 = vrot.slane %v2701, 2
        %v2799 = vrot.slane %v2702, 2
        %v2800 = vsel %vm2797, %v2798, %v2799
        %v2801 = vrot.slane %v2703, 2
        %v2802 = vsel %vm2797, %v2799, %v2801
        %v2803 = vrot.slane %v2704, 2
        %v2804 = vrot.slane %v2705, 2
        %v2805 = vsel %vm2797, %v2803, %v2804
        %v2806 = vrot.slane %v2706, 2
        %v2807 = vsel %vm2797, %v2804, %v2806
        %v2808 = vrot.slane %v2707, 2
        %v2809 = vrot.slane %v2708, 2
        %v2810 = vsel %vm2797, %v2808, %v2809
        %v2811 = vrot.slane %v2709, 2
        %v2812 = vsel %vm2797, %v2809, %v2811
        %v2813 = vrot.slane %v2710, 2
        %v2814 = vrot.slane %v2711, 2
        %v2815 = vsel %vm2797, %v2813, %v2814
        %v2816 = vrot.slane %v2712, 2
        %v2817 = vsel %vm2797, %v2814, %v2816
        %v2818 = vrot.slane %v2713, 2
        %v2819 = vrot.slane %v2714, 2
        %v2820 = vsel %vm2797, %v2818, %v2819
        %v2821 = vrot.slane %v2715, 2
        %v2822 = vsel %vm2797, %v2819, %v2821
        %v2823 = vrot.slane %v2716, 2
        %v2824 = vrot.slane %v2717, 2
        %v2825 = vsel %vm2797, %v2823, %v2824
        %v2826 = vrot.slane %v2718, 2
        %v2827 = vsel %vm2797, %v2824, %v2826
        %v2828 = vrot.slane %v2719, 2
        %v2829 = vrot.slane %v2720, 2
        %v2830 = vsel %vm2797, %v2828, %v2829
        %v2831 = vrot.slane %v2721, 2
        %v2832 = vsel %vm2797, %v2829, %v2831
        %v2833 = vrot.slane %v2722, 2
        %v2834 = vrot.slane %v2723, 2
        %v2835 = vsel %vm2797, %v2833, %v2834
        %v2836 = vrot.slane %v2724, 2
        %v2837 = vsel %vm2797, %v2834, %v2836
        %v2838 = vrot.slane %v2725, 2
        %v2839 = vrot.slane %v2726, 2
        %v2840 = vsel %vm2797, %v2838, %v2839
        %v2841 = vrot.slane %v2727, 2
        %v2842 = vsel %vm2797, %v2839, %v2841
        %v2843 = vrot.slane %v2728, 2
        %v2844 = vrot.slane %v2729, 2
        %v2845 = vsel %vm2797, %v2843, %v2844
        %v2846 = vrot.slane %v2730, 2
        %v2847 = vsel %vm2797, %v2844, %v2846
        %v2848 = vrot.slane %v2731, 2
        %v2849 = vrot.slane %v2732, 2
        %v2850 = vsel %vm2797, %v2848, %v2849
        %v2851 = vrot.slane %v2733, 2
        %v2852 = vsel %vm2797, %v2849, %v2851
        %v2853 = vrot.slane %v2734, 2
        %v2854 = vrot.slane %v2735, 2
        %v2855 = vsel %vm2797, %v2853, %v2854
        %v2856 = vrot.slane %v2736, 2
        %v2857 = vsel %vm2797, %v2854, %v2856
        %v2858 = vrot.slane %v2737, 2
        %v2859 = vrot.slane %v2738, 2
        %v2860 = vsel %vm2797, %v2858, %v2859
        %v2861 = vrot.slane %v2739, 2
        %v2862 = vsel %vm2797, %v2859, %v2861
        %v2863 = vrot.slane %v2740, 2
        %v2864 = vrot.slane %v2741, 2
        %v2865 = vsel %vm2797, %v2863, %v2864
        %v2866 = vrot.slane %v2742, 2
        %v2867 = vsel %vm2797, %v2864, %v2866
        %v2868 = vrot.slane %v2743, 2
        %v2869 = vrot.slane %v2744, 2
        %v2870 = vsel %vm2797, %v2868, %v2869
        %v2871 = vrot.slane %v2745, 2
        %v2872 = vsel %vm2797, %v2869, %v2871
        %v2873 = vrot.slane %v2746, 2
        %v2874 = vrot.slane %v2747, 2
        %v2875 = vsel %vm2797, %v2873, %v2874
        %v2876 = vrot.slane %v2748, 2
        %v2877 = vsel %vm2797, %v2874, %v2876
        %v2910 = vadd.f32 %v2665, %v2800
        %v2911 = vadd.f32 %v2666, %v2802
        %v2912 = vadd.f32 %v2667, %v2805
        %v2913 = vadd.f32 %v2668, %v2807
        %v2914 = vadd.f32 %v2669, %v2810
        %v2915 = vadd.f32 %v2670, %v2812
        %v2916 = vadd.f32 %v2671, %v2815
        %v2917 = vadd.f32 %v2672, %v2817
        %v2918 = vadd.f32 %v2673, %v2820
        %v2919 = vadd.f32 %v2674, %v2822
        %v2920 = vadd.f32 %v2675, %v2825
        %v2921 = vadd.f32 %v2676, %v2827
        %v2922 = vadd.f32 %v2677, %v2830
        %v2923 = vadd.f32 %v2678, %v2832
        %v2924 = vadd.f32 %v2679, %v2835
        %v2925 = vadd.f32 %v2680, %v2837
        %v2926 = vadd.f32 %v2681, %v2840
        %v2927 = vadd.f32 %v2682, %v2842
        %v2928 = vadd.f32 %v2683, %v2845
        %v2929 = vadd.f32 %v2684, %v2847
        %v2930 = vadd.f32 %v2685, %v2850
        %v2931 = vadd.f32 %v2686, %v2852
        %v2932 = vadd.f32 %v2687, %v2855
        %v2933 = vadd.f32 %v2688, %v2857
        %v2934 = vadd.f32 %v2689, %v2860
        %v2935 = vadd.f32 %v2690, %v2862
        %v2936 = vadd.f32 %v2691, %v2865
        %v2937 = vadd.f32 %v2692, %v2867
        %v2938 = vadd.f32 %v2693, %v2870
        %v2939 = vadd.f32 %v2694, %v2872
        %v2940 = vadd.f32 %v2695, %v2875
        %v2941 = vadd.f32 %v2696, %v2877
        %v2942 = vlaneseq
        %v2943 = vshrl.u32 %v2942, 7
        %v2944 = vsub.s32 2, %v2943
        %v2945 = vrot.slane %v538, %v2944
        %v2946 = vmul.f32 %v474, %v2945
        %v2947 = vmul.f32 %v475, %v2945
        %v2948 = vmul.f32 %v476, %v2945
        %v2949 = vmul.f32 %v477, %v2945
        %v2950 = vmul.f32 %v478, %v2945
        %v2951 = vmul.f32 %v479, %v2945
        %v2952 = vmul.f32 %v480, %v2945
        %v2953 = vmul.f32 %v481, %v2945
        %v2954 = vmul.f32 %v482, %v2945
        %v2955 = vmul.f32 %v483, %v2945
        %v2956 = vmul.f32 %v484, %v2945
        %v2957 = vmul.f32 %v485, %v2945
        %v2958 = vmul.f32 %v486, %v2945
        %v2959 = vmul.f32 %v487, %v2945
        %v2960 = vmul.f32 %v488, %v2945
        %v2961 = vmul.f32 %v489, %v2945
        %v2962 = vmul.f32 %v490, %v2945
        %v2963 = vmul.f32 %v491, %v2945
        %v2964 = vmul.f32 %v492, %v2945
        %v2965 = vmul.f32 %v493, %v2945
        %v2966 = vmul.f32 %v494, %v2945
        %v2967 = vmul.f32 %v495, %v2945
        %v2968 = vmul.f32 %v496, %v2945
        %v2969 = vmul.f32 %v497, %v2945
        %v2970 = vmul.f32 %v498, %v2945
        %v2971 = vmul.f32 %v499, %v2945
        %v2972 = vmul.f32 %v500, %v2945
        %v2973 = vmul.f32 %v501, %v2945
        %v2974 = vmul.f32 %v502, %v2945
        %v2975 = vmul.f32 %v503, %v2945
        %v2976 = vmul.f32 %v504, %v2945
        %v2977 = vmul.f32 %v505, %v2945
        %v2978 = vmul.f32 %v506, %v2945
        %v2979 = vmul.f32 %v507, %v2945
        %v2980 = vmul.f32 %v508, %v2945
        %v2981 = vmul.f32 %v509, %v2945
        %v2982 = vmul.f32 %v510, %v2945
        %v2983 = vmul.f32 %v511, %v2945
        %v2984 = vmul.f32 %v512, %v2945
        %v2985 = vmul.f32 %v513, %v2945
        %v2986 = vmul.f32 %v514, %v2945
        %v2987 = vmul.f32 %v515, %v2945
        %v2988 = vmul.f32 %v516, %v2945
        %v2989 = vmul.f32 %v517, %v2945
        %v2990 = vmul.f32 %v518, %v2945
        %v2991 = vmul.f32 %v519, %v2945
        %v2992 = vmul.f32 %v520, %v2945
        %v2993 = vmul.f32 %v521, %v2945
        %v3042 = vrot.slane %v2946, 2
        %v3043 = vrot.slane %v2947, 2
        %v3044 = vsel %vm2797, %v3042, %v3043
        %v3045 = vrot.slane %v2948, 2
        %v3046 = vsel %vm2797, %v3043, %v3045
        %v3047 = vrot.slane %v2949, 2
        %v3048 = vrot.slane %v2950, 2
        %v3049 = vsel %vm2797, %v3047, %v3048
        %v3050 = vrot.slane %v2951, 2
        %v3051 = vsel %vm2797, %v3048, %v3050
        %v3052 = vrot.slane %v2952, 2
        %v3053 = vrot.slane %v2953, 2
        %v3054 = vsel %vm2797, %v3052, %v3053
        %v3055 = vrot.slane %v2954, 2
        %v3056 = vsel %vm2797, %v3053, %v3055
        %v3057 = vrot.slane %v2955, 2
        %v3058 = vrot.slane %v2956, 2
        %v3059 = vsel %vm2797, %v3057, %v3058
        %v3060 = vrot.slane %v2957, 2
        %v3061 = vsel %vm2797, %v3058, %v3060
        %v3062 = vrot.slane %v2958, 2
        %v3063 = vrot.slane %v2959, 2
        %v3064 = vsel %vm2797, %v3062, %v3063
        %v3065 = vrot.slane %v2960, 2
        %v3066 = vsel %vm2797, %v3063, %v3065
        %v3067 = vrot.slane %v2961, 2
        %v3068 = vrot.slane %v2962, 2
        %v3069 = vsel %vm2797, %v3067, %v3068
        %v3070 = vrot.slane %v2963, 2
        %v3071 = vsel %vm2797, %v3068, %v3070
        %v3072 = vrot.slane %v2964, 2
        %v3073 = vrot.slane %v2965, 2
        %v3074 = vsel %vm2797, %v3072, %v3073
        %v3075 = vrot.slane %v2966, 2
        %v3076 = vsel %vm2797, %v3073, %v3075
        %v3077 = vrot.slane %v2967, 2
        %v3078 = vrot.slane %v2968, 2
        %v3079 = vsel %vm2797, %v3077, %v3078
        %v3080 = vrot.slane %v2969, 2
        %v3081 = vsel %vm2797, %v3078, %v3080
        %v3082 = vrot.slane %v2970, 2
        %v3083 = vrot.slane %v2971, 2
        %v3084 = vsel %vm2797, %v3082, %v3083
        %v3085 = vrot.slane %v2972, 2
        %v3086 = vsel %vm2797, %v3083, %v3085
        %v3087 = vrot.slane %v2973, 2
        %v3088 = vrot.slane %v2974, 2
        %v3089 = vsel %vm2797, %v3087, %v3088
        %v3090 = vrot.slane %v2975, 2
        %v3091 = vsel %vm2797, %v3088, %v3090
        %v3092 = vrot.slane %v2976, 2
        %v3093 = vrot.slane %v2977, 2
        %v3094 = vsel %vm2797, %v3092, %v3093
        %v3095 = vrot.slane %v2978, 2
        %v3096 = vsel %vm2797, %v3093, %v3095
        %v3097 = vrot.slane %v2979, 2
        %v3098 = vrot.slane %v2980, 2
        %v3099 = vsel %vm2797, %v3097, %v3098
        %v3100 = vrot.slane %v2981, 2
        %v3101 = vsel %vm2797, %v3098, %v3100
        %v3102 = vrot.slane %v2982, 2
        %v3103 = vrot.slane %v2983, 2
        %v3104 = vsel %vm2797, %v3102, %v3103
        %v3105 = vrot.slane %v2984, 2
        %v3106 = vsel %vm2797, %v3103, %v3105
        %v3107 = vrot.slane %v2985, 2
        %v3108 = vrot.slane %v2986, 2
        %v3109 = vsel %vm2797, %v3107, %v3108
        %v3110 = vrot.slane %v2987, 2
        %v3111 = vsel %vm2797, %v3108, %v3110
        %v3112 = vrot.slane %v2988, 2
        %v3113 = vrot.slane %v2989, 2
        %v3114 = vsel %vm2797, %v3112, %v3113
        %v3115 = vrot.slane %v2990, 2
        %v3116 = vsel %vm2797, %v3113, %v3115
        %v3117 = vrot.slane %v2991, 2
        %v3118 = vrot.slane %v2992, 2
        %v3119 = vsel %vm2797, %v3117, %v3118
        %v3120 = vrot.slane %v2993, 2
        %v3121 = vsel %vm2797, %v3118, %v3120
        %v3154 = vadd.f32 %v2910, %v3044
        %v3155 = vadd.f32 %v2911, %v3046
        %v3156 = vadd.f32 %v2912, %v3049
        %v3157 = vadd.f32 %v2913, %v3051
        %v3158 = vadd.f32 %v2914, %v3054
        %v3159 = vadd.f32 %v2915, %v3056
        %v3160 = vadd.f32 %v2916, %v3059
        %v3161 = vadd.f32 %v2917, %v3061
        %v3162 = vadd.f32 %v2918, %v3064
        %v3163 = vadd.f32 %v2919, %v3066
        %v3164 = vadd.f32 %v2920, %v3069
        %v3165 = vadd.f32 %v2921, %v3071
        %v3166 = vadd.f32 %v2922, %v3074
        %v3167 = vadd.f32 %v2923, %v3076
        %v3168 = vadd.f32 %v2924, %v3079
        %v3169 = vadd.f32 %v2925, %v3081
        %v3170 = vadd.f32 %v2926, %v3084
        %v3171 = vadd.f32 %v2927, %v3086
        %v3172 = vadd.f32 %v2928, %v3089
        %v3173 = vadd.f32 %v2929, %v3091
        %v3174 = vadd.f32 %v2930, %v3094
        %v3175 = vadd.f32 %v2931, %v3096
        %v3176 = vadd.f32 %v2932, %v3099
        %v3177 = vadd.f32 %v2933, %v3101
        %v3178 = vadd.f32 %v2934, %v3104
        %v3179 = vadd.f32 %v2935, %v3106
        %v3180 = vadd.f32 %v2936, %v3109
        %v3181 = vadd.f32 %v2937, %v3111
        %v3182 = vadd.f32 %v2938, %v3114
        %v3183 = vadd.f32 %v2939, %v3116
        %v3184 = vadd.f32 %v2940, %v3119
        %v3185 = vadd.f32 %v2941, %v3121
        %v3186 = vlaneseq
        %v3187 = vshrl.u32 %v3186, 7
        %v3188 = vsub.s32 2, %v3187
        %v3189 = vrot.slane %v539, %v3188
        %v3190 = vmul.f32 %v477, %v3189
        %v3191 = vmul.f32 %v478, %v3189
        %v3192 = vmul.f32 %v479, %v3189
        %v3193 = vmul.f32 %v480, %v3189
        %v3194 = vmul.f32 %v481, %v3189
        %v3195 = vmul.f32 %v482, %v3189
        %v3196 = vmul.f32 %v483, %v3189
        %v3197 = vmul.f32 %v484, %v3189
        %v3198 = vmul.f32 %v485, %v3189
        %v3199 = vmul.f32 %v486, %v3189
        %v3200 = vmul.f32 %v487, %v3189
        %v3201 = vmul.f32 %v488, %v3189
        %v3202 = vmul.f32 %v489, %v3189
        %v3203 = vmul.f32 %v490, %v3189
        %v3204 = vmul.f32 %v491, %v3189
        %v3205 = vmul.f32 %v492, %v3189
        %v3206 = vmul.f32 %v493, %v3189
        %v3207 = vmul.f32 %v494, %v3189
        %v3208 = vmul.f32 %v495, %v3189
        %v3209 = vmul.f32 %v496, %v3189
        %v3210 = vmul.f32 %v497, %v3189
        %v3211 = vmul.f32 %v498, %v3189
        %v3212 = vmul.f32 %v499, %v3189
        %v3213 = vmul.f32 %v500, %v3189
        %v3214 = vmul.f32 %v501, %v3189
        %v3215 = vmul.f32 %v502, %v3189
        %v3216 = vmul.f32 %v503, %v3189
        %v3217 = vmul.f32 %v504, %v3189
        %v3218 = vmul.f32 %v505, %v3189
        %v3219 = vmul.f32 %v506, %v3189
        %v3220 = vmul.f32 %v507, %v3189
        %v3221 = vmul.f32 %v508, %v3189
        %v3222 = vmul.f32 %v509, %v3189
        %v3223 = vmul.f32 %v510, %v3189
        %v3224 = vmul.f32 %v511, %v3189
        %v3225 = vmul.f32 %v512, %v3189
        %v3226 = vmul.f32 %v513, %v3189
        %v3227 = vmul.f32 %v514, %v3189
        %v3228 = vmul.f32 %v515, %v3189
        %v3229 = vmul.f32 %v516, %v3189
        %v3230 = vmul.f32 %v517, %v3189
        %v3231 = vmul.f32 %v518, %v3189
        %v3232 = vmul.f32 %v519, %v3189
        %v3233 = vmul.f32 %v520, %v3189
        %v3234 = vmul.f32 %v521, %v3189
        %v3235 = vmul.f32 %v522, %v3189
        %v3236 = vmul.f32 %v523, %v3189
        %v3237 = vmul.f32 %v524, %v3189
        %v3286 = vrot.slane %v3190, 2
        %v3287 = vrot.slane %v3191, 2
        %v3288 = vsel %vm2797, %v3286, %v3287
        %v3289 = vrot.slane %v3192, 2
        %v3290 = vsel %vm2797, %v3287, %v3289
        %v3291 = vrot.slane %v3193, 2
        %v3292 = vrot.slane %v3194, 2
        %v3293 = vsel %vm2797, %v3291, %v3292
        %v3294 = vrot.slane %v3195, 2
        %v3295 = vsel %vm2797, %v3292, %v3294
        %v3296 = vrot.slane %v3196, 2
        %v3297 = vrot.slane %v3197, 2
        %v3298 = vsel %vm2797, %v3296, %v3297
        %v3299 = vrot.slane %v3198, 2
        %v3300 = vsel %vm2797, %v3297, %v3299
        %v3301 = vrot.slane %v3199, 2
        %v3302 = vrot.slane %v3200, 2
        %v3303 = vsel %vm2797, %v3301, %v3302
        %v3304 = vrot.slane %v3201, 2
        %v3305 = vsel %vm2797, %v3302, %v3304
        %v3306 = vrot.slane %v3202, 2
        %v3307 = vrot.slane %v3203, 2
        %v3308 = vsel %vm2797, %v3306, %v3307
        %v3309 = vrot.slane %v3204, 2
        %v3310 = vsel %vm2797, %v3307, %v3309
        %v3311 = vrot.slane %v3205, 2
        %v3312 = vrot.slane %v3206, 2
        %v3313 = vsel %vm2797, %v3311, %v3312
        %v3314 = vrot.slane %v3207, 2
        %v3315 = vsel %vm2797, %v3312, %v3314
        %v3316 = vrot.slane %v3208, 2
        %v3317 = vrot.slane %v3209, 2
        %v3318 = vsel %vm2797, %v3316, %v3317
        %v3319 = vrot.slane %v3210, 2
        %v3320 = vsel %vm2797, %v3317, %v3319
        %v3321 = vrot.slane %v3211, 2
        %v3322 = vrot.slane %v3212, 2
        %v3323 = vsel %vm2797, %v3321, %v3322
        %v3324 = vrot.slane %v3213, 2
        %v3325 = vsel %vm2797, %v3322, %v3324
        %v3326 = vrot.slane %v3214, 2
        %v3327 = vrot.slane %v3215, 2
        %v3328 = vsel %vm2797, %v3326, %v3327
        %v3329 = vrot.slane %v3216, 2
        %v3330 = vsel %vm2797, %v3327, %v3329
        %v3331 = vrot.slane %v3217, 2
        %v3332 = vrot.slane %v3218, 2
        %v3333 = vsel %vm2797, %v3331, %v3332
        %v3334 = vrot.slane %v3219, 2
        %v3335 = vsel %vm2797, %v3332, %v3334
        %v3336 = vrot.slane %v3220, 2
        %v3337 = vrot.slane %v3221, 2
        %v3338 = vsel %vm2797, %v3336, %v3337
        %v3339 = vrot.slane %v3222, 2
        %v3340 = vsel %vm2797, %v3337, %v3339
        %v3341 = vrot.slane %v3223, 2
        %v3342 = vrot.slane %v3224, 2
        %v3343 = vsel %vm2797, %v3341, %v3342
        %v3344 = vrot.slane %v3225, 2
        %v3345 = vsel %vm2797, %v3342, %v3344
        %v3346 = vrot.slane %v3226, 2
        %v3347 = vrot.slane %v3227, 2
        %v3348 = vsel %vm2797, %v3346, %v3347
        %v3349 = vrot.slane %v3228, 2
        %v3350 = vsel %vm2797, %v3347, %v3349
        %v3351 = vrot.slane %v3229, 2
        %v3352 = vrot.slane %v3230, 2
        %v3353 = vsel %vm2797, %v3351, %v3352
        %v3354 = vrot.slane %v3231, 2
        %v3355 = vsel %vm2797, %v3352, %v3354
        %v3356 = vrot.slane %v3232, 2
        %v3357 = vrot.slane %v3233, 2
        %v3358 = vsel %vm2797, %v3356, %v3357
        %v3359 = vrot.slane %v3234, 2
        %v3360 = vsel %vm2797, %v3357, %v3359
        %v3361 = vrot.slane %v3235, 2
        %v3362 = vrot.slane %v3236, 2
        %v3363 = vsel %vm2797, %v3361, %v3362
        %v3364 = vrot.slane %v3237, 2
        %v3365 = vsel %vm2797, %v3362, %v3364
        %v3398 = vadd.f32 %v3154, %v3288
        %v3399 = vadd.f32 %v3155, %v3290
        %v3400 = vadd.f32 %v3156, %v3293
        %v3401 = vadd.f32 %v3157, %v3295
        %v3402 = vadd.f32 %v3158, %v3298
        %v3403 = vadd.f32 %v3159, %v3300
        %v3404 = vadd.f32 %v3160, %v3303
        %v3405 = vadd.f32 %v3161, %v3305
        %v3406 = vadd.f32 %v3162, %v3308
        %v3407 = vadd.f32 %v3163, %v3310
        %v3408 = vadd.f32 %v3164, %v3313
        %v3409 = vadd.f32 %v3165, %v3315
        %v3410 = vadd.f32 %v3166, %v3318
        %v3411 = vadd.f32 %v3167, %v3320
        %v3412 = vadd.f32 %v3168, %v3323
        %v3413 = vadd.f32 %v3169, %v3325
        %v3414 = vadd.f32 %v3170, %v3328
        %v3415 = vadd.f32 %v3171, %v3330
        %v3416 = vadd.f32 %v3172, %v3333
        %v3417 = vadd.f32 %v3173, %v3335
        %v3418 = vadd.f32 %v3174, %v3338
        %v3419 = vadd.f32 %v3175, %v3340
        %v3420 = vadd.f32 %v3176, %v3343
        %v3421 = vadd.f32 %v3177, %v3345
        %v3422 = vadd.f32 %v3178, %v3348
        %v3423 = vadd.f32 %v3179, %v3350
        %v3424 = vadd.f32 %v3180, %v3353
        %v3425 = vadd.f32 %v3181, %v3355
        %v3426 = vadd.f32 %v3182, %v3358
        %v3427 = vadd.f32 %v3183, %v3360
        %v3428 = vadd.f32 %v3184, %v3363
        %v3429 = vadd.f32 %v3185, %v3365
        %v3430 = vlaneseq
        %v3431 = vshrl.u32 %v3430, 7
        %v3432 = vsub.s32 2, %v3431
        %v3433 = vrot.slane %v540, %v3432
        %v3434 = vmul.f32 %v480, %v3433
        %v3435 = vmul.f32 %v481, %v3433
        %v3436 = vmul.f32 %v482, %v3433
        %v3437 = vmul.f32 %v483, %v3433
        %v3438 = vmul.f32 %v484, %v3433
        %v3439 = vmul.f32 %v485, %v3433
        %v3440 = vmul.f32 %v486, %v3433
        %v3441 = vmul.f32 %v487, %v3433
        %v3442 = vmul.f32 %v488, %v3433
        %v3443 = vmul.f32 %v489, %v3433
        %v3444 = vmul.f32 %v490, %v3433
        %v3445 = vmul.f32 %v491, %v3433
        %v3446 = vmul.f32 %v492, %v3433
        %v3447 = vmul.f32 %v493, %v3433
        %v3448 = vmul.f32 %v494, %v3433
        %v3449 = vmul.f32 %v495, %v3433
        %v3450 = vmul.f32 %v496, %v3433
        %v3451 = vmul.f32 %v497, %v3433
        %v3452 = vmul.f32 %v498, %v3433
        %v3453 = vmul.f32 %v499, %v3433
        %v3454 = vmul.f32 %v500, %v3433
        %v3455 = vmul.f32 %v501, %v3433
        %v3456 = vmul.f32 %v502, %v3433
        %v3457 = vmul.f32 %v503, %v3433
        %v3458 = vmul.f32 %v504, %v3433
        %v3459 = vmul.f32 %v505, %v3433
        %v3460 = vmul.f32 %v506, %v3433
        %v3461 = vmul.f32 %v507, %v3433
        %v3462 = vmul.f32 %v508, %v3433
        %v3463 = vmul.f32 %v509, %v3433
        %v3464 = vmul.f32 %v510, %v3433
        %v3465 = vmul.f32 %v511, %v3433
        %v3466 = vmul.f32 %v512, %v3433
        %v3467 = vmul.f32 %v513, %v3433
        %v3468 = vmul.f32 %v514, %v3433
        %v3469 = vmul.f32 %v515, %v3433
        %v3470 = vmul.f32 %v516, %v3433
        %v3471 = vmul.f32 %v517, %v3433
        %v3472 = vmul.f32 %v518, %v3433
        %v3473 = vmul.f32 %v519, %v3433
        %v3474 = vmul.f32 %v520, %v3433
        %v3475 = vmul.f32 %v521, %v3433
        %v3476 = vmul.f32 %v522, %v3433
        %v3477 = vmul.f32 %v523, %v3433
        %v3478 = vmul.f32 %v524, %v3433
        %v3479 = vmul.f32 %v525, %v3433
        %v3480 = vmul.f32 %v526, %v3433
        %v3481 = vmul.f32 %v527, %v3433
        %v3530 = vrot.slane %v3434, 2
        %v3531 = vrot.slane %v3435, 2
        %v3532 = vsel %vm2797, %v3530, %v3531
        %v3533 = vrot.slane %v3436, 2
        %v3534 = vsel %vm2797, %v3531, %v3533
        %v3535 = vrot.slane %v3437, 2
        %v3536 = vrot.slane %v3438, 2
        %v3537 = vsel %vm2797, %v3535, %v3536
        %v3538 = vrot.slane %v3439, 2
        %v3539 = vsel %vm2797, %v3536, %v3538
        %v3540 = vrot.slane %v3440, 2
        %v3541 = vrot.slane %v3441, 2
        %v3542 = vsel %vm2797, %v3540, %v3541
        %v3543 = vrot.slane %v3442, 2
        %v3544 = vsel %vm2797, %v3541, %v3543
        %v3545 = vrot.slane %v3443, 2
        %v3546 = vrot.slane %v3444, 2
        %v3547 = vsel %vm2797, %v3545, %v3546
        %v3548 = vrot.slane %v3445, 2
        %v3549 = vsel %vm2797, %v3546, %v3548
        %v3550 = vrot.slane %v3446, 2
        %v3551 = vrot.slane %v3447, 2
        %v3552 = vsel %vm2797, %v3550, %v3551
        %v3553 = vrot.slane %v3448, 2
        %v3554 = vsel %vm2797, %v3551, %v3553
        %v3555 = vrot.slane %v3449, 2
        %v3556 = vrot.slane %v3450, 2
        %v3557 = vsel %vm2797, %v3555, %v3556
        %v3558 = vrot.slane %v3451, 2
        %v3559 = vsel %vm2797, %v3556, %v3558
        %v3560 = vrot.slane %v3452, 2
        %v3561 = vrot.slane %v3453, 2
        %v3562 = vsel %vm2797, %v3560, %v3561
        %v3563 = vrot.slane %v3454, 2
        %v3564 = vsel %vm2797, %v3561, %v3563
        %v3565 = vrot.slane %v3455, 2
        %v3566 = vrot.slane %v3456, 2
        %v3567 = vsel %vm2797, %v3565, %v3566
        %v3568 = vrot.slane %v3457, 2
        %v3569 = vsel %vm2797, %v3566, %v3568
        %v3570 = vrot.slane %v3458, 2
        %v3571 = vrot.slane %v3459, 2
        %v3572 = vsel %vm2797, %v3570, %v3571
        %v3573 = vrot.slane %v3460, 2
        %v3574 = vsel %vm2797, %v3571, %v3573
        %v3575 = vrot.slane %v3461, 2
        %v3576 = vrot.slane %v3462, 2
        %v3577 = vsel %vm2797, %v3575, %v3576
        %v3578 = vrot.slane %v3463, 2
        %v3579 = vsel %vm2797, %v3576, %v3578
        %v3580 = vrot.slane %v3464, 2
        %v3581 = vrot.slane %v3465, 2
        %v3582 = vsel %vm2797, %v3580, %v3581
        %v3583 = vrot.slane %v3466, 2
        %v3584 = vsel %vm2797, %v3581, %v3583
        %v3585 = vrot.slane %v3467, 2
        %v3586 = vrot.slane %v3468, 2
        %v3587 = vsel %vm2797, %v3585, %v3586
        %v3588 = vrot.slane %v3469, 2
        %v3589 = vsel %vm2797, %v3586, %v3588
        %v3590 = vrot.slane %v3470, 2
        %v3591 = vrot.slane %v3471, 2
        %v3592 = vsel %vm2797, %v3590, %v3591
        %v3593 = vrot.slane %v3472, 2
        %v3594 = vsel %vm2797, %v3591, %v3593
        %v3595 = vrot.slane %v3473, 2
        %v3596 = vrot.slane %v3474, 2
        %v3597 = vsel %vm2797, %v3595, %v3596
        %v3598 = vrot.slane %v3475, 2
        %v3599 = vsel %vm2797, %v3596, %v3598
        %v3600 = vrot.slane %v3476, 2
        %v3601 = vrot.slane %v3477, 2
        %v3602 = vsel %vm2797, %v3600, %v3601
        %v3603 = vrot.slane %v3478, 2
        %v3604 = vsel %vm2797, %v3601, %v3603
        %v3605 = vrot.slane %v3479, 2
        %v3606 = vrot.slane %v3480, 2
        %v3607 = vsel %vm2797, %v3605, %v3606
        %v3608 = vrot.slane %v3481, 2
        %v3609 = vsel %vm2797, %v3606, %v3608
        %v3642 = vadd.f32 %v3398, %v3532
        %v3643 = vadd.f32 %v3399, %v3534
        %v3644 = vadd.f32 %v3400, %v3537
        %v3645 = vadd.f32 %v3401, %v3539
        %v3646 = vadd.f32 %v3402, %v3542
        %v3647 = vadd.f32 %v3403, %v3544
        %v3648 = vadd.f32 %v3404, %v3547
        %v3649 = vadd.f32 %v3405, %v3549
        %v3650 = vadd.f32 %v3406, %v3552
        %v3651 = vadd.f32 %v3407, %v3554
        %v3652 = vadd.f32 %v3408, %v3557
        %v3653 = vadd.f32 %v3409, %v3559
        %v3654 = vadd.f32 %v3410, %v3562
        %v3655 = vadd.f32 %v3411, %v3564
        %v3656 = vadd.f32 %v3412, %v3567
        %v3657 = vadd.f32 %v3413, %v3569
        %v3658 = vadd.f32 %v3414, %v3572
        %v3659 = vadd.f32 %v3415, %v3574
        %v3660 = vadd.f32 %v3416, %v3577
        %v3661 = vadd.f32 %v3417, %v3579
        %v3662 = vadd.f32 %v3418, %v3582
        %v3663 = vadd.f32 %v3419, %v3584
        %v3664 = vadd.f32 %v3420, %v3587
        %v3665 = vadd.f32 %v3421, %v3589
        %v3666 = vadd.f32 %v3422, %v3592
        %v3667 = vadd.f32 %v3423, %v3594
        %v3668 = vadd.f32 %v3424, %v3597
        %v3669 = vadd.f32 %v3425, %v3599
        %v3670 = vadd.f32 %v3426, %v3602
        %v3671 = vadd.f32 %v3427, %v3604
        %v3672 = vadd.f32 %v3428, %v3607
        %v3673 = vadd.f32 %v3429, %v3609
        %v3674 = vlaneseq
        %v3675 = vshrl.u32 %v3674, 7
        %v3676 = vsub.s32 2, %v3675
        %v3677 = vrot.slane %v541, %v3676
        %v3678 = vmul.f32 %v483, %v3677
        %v3679 = vmul.f32 %v484, %v3677
        %v3680 = vmul.f32 %v485, %v3677
        %v3681 = vmul.f32 %v486, %v3677
        %v3682 = vmul.f32 %v487, %v3677
        %v3683 = vmul.f32 %v488, %v3677
        %v3684 = vmul.f32 %v489, %v3677
        %v3685 = vmul.f32 %v490, %v3677
        %v3686 = vmul.f32 %v491, %v3677
        %v3687 = vmul.f32 %v492, %v3677
        %v3688 = vmul.f32 %v493, %v3677
        %v3689 = vmul.f32 %v494, %v3677
        %v3690 = vmul.f32 %v495, %v3677
        %v3691 = vmul.f32 %v496, %v3677
        %v3692 = vmul.f32 %v497, %v3677
        %v3693 = vmul.f32 %v498, %v3677
        %v3694 = vmul.f32 %v499, %v3677
        %v3695 = vmul.f32 %v500, %v3677
        %v3696 = vmul.f32 %v501, %v3677
        %v3697 = vmul.f32 %v502, %v3677
        %v3698 = vmul.f32 %v503, %v3677
        %v3699 = vmul.f32 %v504, %v3677
        %v3700 = vmul.f32 %v505, %v3677
        %v3701 = vmul.f32 %v506, %v3677
        %v3702 = vmul.f32 %v507, %v3677
        %v3703 = vmul.f32 %v508, %v3677
        %v3704 = vmul.f32 %v509, %v3677
        %v3705 = vmul.f32 %v510, %v3677
        %v3706 = vmul.f32 %v511, %v3677
        %v3707 = vmul.f32 %v512, %v3677
        %v3708 = vmul.f32 %v513, %v3677
        %v3709 = vmul.f32 %v514, %v3677
        %v3710 = vmul.f32 %v515, %v3677
        %v3711 = vmul.f32 %v516, %v3677
        %v3712 = vmul.f32 %v517, %v3677
        %v3713 = vmul.f32 %v518, %v3677
        %v3714 = vmul.f32 %v519, %v3677
        %v3715 = vmul.f32 %v520, %v3677
        %v3716 = vmul.f32 %v521, %v3677
        %v3717 = vmul.f32 %v522, %v3677
        %v3718 = vmul.f32 %v523, %v3677
        %v3719 = vmul.f32 %v524, %v3677
        %v3720 = vmul.f32 %v525, %v3677
        %v3721 = vmul.f32 %v526, %v3677
        %v3722 = vmul.f32 %v527, %v3677
        %v3723 = vmul.f32 %v528, %v3677
        %v3724 = vmul.f32 %v529, %v3677
        %v3725 = vmul.f32 %v530, %v3677
        %v3774 = vrot.slane %v3678, 2
        %v3775 = vrot.slane %v3679, 2
        %v3776 = vsel %vm2797, %v3774, %v3775
        %v3777 = vrot.slane %v3680, 2
        %v3778 = vsel %vm2797, %v3775, %v3777
        %v3779 = vrot.slane %v3681, 2
        %v3780 = vrot.slane %v3682, 2
        %v3781 = vsel %vm2797, %v3779, %v3780
        %v3782 = vrot.slane %v3683, 2
        %v3783 = vsel %vm2797, %v3780, %v3782
        %v3784 = vrot.slane %v3684, 2
        %v3785 = vrot.slane %v3685, 2
        %v3786 = vsel %vm2797, %v3784, %v3785
        %v3787 = vrot.slane %v3686, 2
        %v3788 = vsel %vm2797, %v3785, %v3787
        %v3789 = vrot.slane %v3687, 2
        %v3790 = vrot.slane %v3688, 2
        %v3791 = vsel %vm2797, %v3789, %v3790
        %v3792 = vrot.slane %v3689, 2
        %v3793 = vsel %vm2797, %v3790, %v3792
        %v3794 = vrot.slane %v3690, 2
        %v3795 = vrot.slane %v3691, 2
        %v3796 = vsel %vm2797, %v3794, %v3795
        %v3797 = vrot.slane %v3692, 2
        %v3798 = vsel %vm2797, %v3795, %v3797
        %v3799 = vrot.slane %v3693, 2
        %v3800 = vrot.slane %v3694, 2
        %v3801 = vsel %vm2797, %v3799, %v3800
        %v3802 = vrot.slane %v3695, 2
        %v3803 = vsel %vm2797, %v3800, %v3802
        %v3804 = vrot.slane %v3696, 2
        %v3805 = vrot.slane %v3697, 2
        %v3806 = vsel %vm2797, %v3804, %v3805
        %v3807 = vrot.slane %v3698, 2
        %v3808 = vsel %vm2797, %v3805, %v3807
        %v3809 = vrot.slane %v3699, 2
        %v3810 = vrot.slane %v3700, 2
        %v3811 = vsel %vm2797, %v3809, %v3810
        %v3812 = vrot.slane %v3701, 2
        %v3813 = vsel %vm2797, %v3810, %v3812
        %v3814 = vrot.slane %v3702, 2
        %v3815 = vrot.slane %v3703, 2
        %v3816 = vsel %vm2797, %v3814, %v3815
        %v3817 = vrot.slane %v3704, 2
        %v3818 = vsel %vm2797, %v3815, %v3817
        %v3819 = vrot.slane %v3705, 2
        %v3820 = vrot.slane %v3706, 2
        %v3821 = vsel %vm2797, %v3819, %v3820
        %v3822 = vrot.slane %v3707, 2
        %v3823 = vsel %vm2797, %v3820, %v3822
        %v3824 = vrot.slane %v3708, 2
        %v3825 = vrot.slane %v3709, 2
        %v3826 = vsel %vm2797, %v3824, %v3825
        %v3827 = vrot.slane %v3710, 2
        %v3828 = vsel %vm2797, %v3825, %v3827
        %v3829 = vrot.slane %v3711, 2
        %v3830 = vrot.slane %v3712, 2
        %v3831 = vsel %vm2797, %v3829, %v3830
        %v3832 = vrot.slane %v3713, 2
        %v3833 = vsel %vm2797, %v3830, %v3832
        %v3834 = vrot.slane %v3714, 2
        %v3835 = vrot.slane %v3715, 2
        %v3836 = vsel %vm2797, %v3834, %v3835
        %v3837 = vrot.slane %v3716, 2
        %v3838 = vsel %vm2797, %v3835, %v3837
        %v3839 = vrot.slane %v3717, 2
        %v3840 = vrot.slane %v3718, 2
        %v3841 = vsel %vm2797, %v3839, %v3840
        %v3842 = vrot.slane %v3719, 2
        %v3843 = vsel %vm2797, %v3840, %v3842
        %v3844 = vrot.slane %v3720, 2
        %v3845 = vrot.slane %v3721, 2
        %v3846 = vsel %vm2797, %v3844, %v3845
        %v3847 = vrot.slane %v3722, 2
        %v3848 = vsel %vm2797, %v3845, %v3847
        %v3849 = vrot.slane %v3723, 2
        %v3850 = vrot.slane %v3724, 2
        %v3851 = vsel %vm2797, %v3849, %v3850
        %v3852 = vrot.slane %v3725, 2
        %v3853 = vsel %vm2797, %v3850, %v3852
        %v3886 = vadd.f32 %v3642, %v3776
        %v3887 = vadd.f32 %v3643, %v3778
        %v3888 = vadd.f32 %v3644, %v3781
        %v3889 = vadd.f32 %v3645, %v3783
        %v3890 = vadd.f32 %v3646, %v3786
        %v3891 = vadd.f32 %v3647, %v3788
        %v3892 = vadd.f32 %v3648, %v3791
        %v3893 = vadd.f32 %v3649, %v3793
        %v3894 = vadd.f32 %v3650, %v3796
        %v3895 = vadd.f32 %v3651, %v3798
        %v3896 = vadd.f32 %v3652, %v3801
        %v3897 = vadd.f32 %v3653, %v3803
        %v3898 = vadd.f32 %v3654, %v3806
        %v3899 = vadd.f32 %v3655, %v3808
        %v3900 = vadd.f32 %v3656, %v3811
        %v3901 = vadd.f32 %v3657, %v3813
        %v3902 = vadd.f32 %v3658, %v3816
        %v3903 = vadd.f32 %v3659, %v3818
        %v3904 = vadd.f32 %v3660, %v3821
        %v3905 = vadd.f32 %v3661, %v3823
        %v3906 = vadd.f32 %v3662, %v3826
        %v3907 = vadd.f32 %v3663, %v3828
        %v3908 = vadd.f32 %v3664, %v3831
        %v3909 = vadd.f32 %v3665, %v3833
        %v3910 = vadd.f32 %v3666, %v3836
        %v3911 = vadd.f32 %v3667, %v3838
        %v3912 = vadd.f32 %v3668, %v3841
        %v3913 = vadd.f32 %v3669, %v3843
        %v3914 = vadd.f32 %v3670, %v3846
        %v3915 = vadd.f32 %v3671, %v3848
        %v3916 = vadd.f32 %v3672, %v3851
        %v3917 = vadd.f32 %v3673, %v3853
        %v3918 = vlaneseq
        %v3919 = vshrl.u32 %v3918, 7
        %v3920 = vsub.s32 2, %v3919
        %v3921 = vrot.slane %v542, %v3920
        %v3922 = vmul.f32 %v486, %v3921
        %v3923 = vmul.f32 %v487, %v3921
        %v3924 = vmul.f32 %v488, %v3921
        %v3925 = vmul.f32 %v489, %v3921
        %v3926 = vmul.f32 %v490, %v3921
        %v3927 = vmul.f32 %v491, %v3921
        %v3928 = vmul.f32 %v492, %v3921
        %v3929 = vmul.f32 %v493, %v3921
        %v3930 = vmul.f32 %v494, %v3921
        %v3931 = vmul.f32 %v495, %v3921
        %v3932 = vmul.f32 %v496, %v3921
        %v3933 = vmul.f32 %v497, %v3921
        %v3934 = vmul.f32 %v498, %v3921
        %v3935 = vmul.f32 %v499, %v3921
        %v3936 = vmul.f32 %v500, %v3921
        %v3937 = vmul.f32 %v501, %v3921
        %v3938 = vmul.f32 %v502, %v3921
        %v3939 = vmul.f32 %v503, %v3921
        %v3940 = vmul.f32 %v504, %v3921
        %v3941 = vmul.f32 %v505, %v3921
        %v3942 = vmul.f32 %v506, %v3921
        %v3943 = vmul.f32 %v507, %v3921
        %v3944 = vmul.f32 %v508, %v3921
        %v3945 = vmul.f32 %v509, %v3921
        %v3946 = vmul.f32 %v510, %v3921
        %v3947 = vmul.f32 %v511, %v3921
        %v3948 = vmul.f32 %v512, %v3921
        %v3949 = vmul.f32 %v513, %v3921
        %v3950 = vmul.f32 %v514, %v3921
        %v3951 = vmul.f32 %v515, %v3921
        %v3952 = vmul.f32 %v516, %v3921
        %v3953 = vmul.f32 %v517, %v3921
        %v3954 = vmul.f32 %v518, %v3921
        %v3955 = vmul.f32 %v519, %v3921
        %v3956 = vmul.f32 %v520, %v3921
        %v3957 = vmul.f32 %v521, %v3921
        %v3958 = vmul.f32 %v522, %v3921
        %v3959 = vmul.f32 %v523, %v3921
        %v3960 = vmul.f32 %v524, %v3921
        %v3961 = vmul.f32 %v525, %v3921
        %v3962 = vmul.f32 %v526, %v3921
        %v3963 = vmul.f32 %v527, %v3921
        %v3964 = vmul.f32 %v528, %v3921
        %v3965 = vmul.f32 %v529, %v3921
        %v3966 = vmul.f32 %v530, %v3921
        %v3967 = vmul.f32 %v531, %v3921
        %v3968 = vmul.f32 %v532, %v3921
        %v3969 = vmul.f32 %v533, %v3921
        %v4018 = vrot.slane %v3922, 2
        %v4019 = vrot.slane %v3923, 2
        %v4020 = vsel %vm2797, %v4018, %v4019
        %v4021 = vrot.slane %v3924, 2
        %v4022 = vsel %vm2797, %v4019, %v4021
        %v4023 = vrot.slane %v3925, 2
        %v4024 = vrot.slane %v3926, 2
        %v4025 = vsel %vm2797, %v4023, %v4024
        %v4026 = vrot.slane %v3927, 2
        %v4027 = vsel %vm2797, %v4024, %v4026
        %v4028 = vrot.slane %v3928, 2
        %v4029 = vrot.slane %v3929, 2
        %v4030 = vsel %vm2797, %v4028, %v4029
        %v4031 = vrot.slane %v3930, 2
        %v4032 = vsel %vm2797, %v4029, %v4031
        %v4033 = vrot.slane %v3931, 2
        %v4034 = vrot.slane %v3932, 2
        %v4035 = vsel %vm2797, %v4033, %v4034
        %v4036 = vrot.slane %v3933, 2
        %v4037 = vsel %vm2797, %v4034, %v4036
        %v4038 = vrot.slane %v3934, 2
        %v4039 = vrot.slane %v3935, 2
        %v4040 = vsel %vm2797, %v4038, %v4039
        %v4041 = vrot.slane %v3936, 2
        %v4042 = vsel %vm2797, %v4039, %v4041
        %v4043 = vrot.slane %v3937, 2
        %v4044 = vrot.slane %v3938, 2
        %v4045 = vsel %vm2797, %v4043, %v4044
        %v4046 = vrot.slane %v3939, 2
        %v4047 = vsel %vm2797, %v4044, %v4046
        %v4048 = vrot.slane %v3940, 2
        %v4049 = vrot.slane %v3941, 2
        %v4050 = vsel %vm2797, %v4048, %v4049
        %v4051 = vrot.slane %v3942, 2
        %v4052 = vsel %vm2797, %v4049, %v4051
        %v4053 = vrot.slane %v3943, 2
        %v4054 = vrot.slane %v3944, 2
        %v4055 = vsel %vm2797, %v4053, %v4054
        %v4056 = vrot.slane %v3945, 2
        %v4057 = vsel %vm2797, %v4054, %v4056
        %v4058 = vrot.slane %v3946, 2
        %v4059 = vrot.slane %v3947, 2
        %v4060 = vsel %vm2797, %v4058, %v4059
        %v4061 = vrot.slane %v3948, 2
        %v4062 = vsel %vm2797, %v4059, %v4061
        %v4063 = vrot.slane %v3949, 2
        %v4064 = vrot.slane %v3950, 2
        %v4065 = vsel %vm2797, %v4063, %v4064
        %v4066 = vrot.slane %v3951, 2
        %v4067 = vsel %vm2797, %v4064, %v4066
        %v4068 = vrot.slane %v3952, 2
        %v4069 = vrot.slane %v3953, 2
        %v4070 = vsel %vm2797, %v4068, %v4069
        %v4071 = vrot.slane %v3954, 2
        %v4072 = vsel %vm2797, %v4069, %v4071
        %v4073 = vrot.slane %v3955, 2
        %v4074 = vrot.slane %v3956, 2
        %v4075 = vsel %vm2797, %v4073, %v4074
        %v4076 = vrot.slane %v3957, 2
        %v4077 = vsel %vm2797, %v4074, %v4076
        %v4078 = vrot.slane %v3958, 2
        %v4079 = vrot.slane %v3959, 2
        %v4080 = vsel %vm2797, %v4078, %v4079
        %v4081 = vrot.slane %v3960, 2
        %v4082 = vsel %vm2797, %v4079, %v4081
        %v4083 = vrot.slane %v3961, 2
        %v4084 = vrot.slane %v3962, 2
        %v4085 = vsel %vm2797, %v4083, %v4084
        %v4086 = vrot.slane %v3963, 2
        %v4087 = vsel %vm2797, %v4084, %v4086
        %v4088 = vrot.slane %v3964, 2
        %v4089 = vrot.slane %v3965, 2
        %v4090 = vsel %vm2797, %v4088, %v4089
        %v4091 = vrot.slane %v3966, 2
        %v4092 = vsel %vm2797, %v4089, %v4091
        %v4093 = vrot.slane %v3967, 2
        %v4094 = vrot.slane %v3968, 2
        %v4095 = vsel %vm2797, %v4093, %v4094
        %v4096 = vrot.slane %v3969, 2
        %v4097 = vsel %vm2797, %v4094, %v4096
        %v4130 = vadd.f32 %v3886, %v4020
        %v4131 = vadd.f32 %v3887, %v4022
        %v4132 = vadd.f32 %v3888, %v4025
        %v4133 = vadd.f32 %v3889, %v4027
        %v4134 = vadd.f32 %v3890, %v4030
        %v4135 = vadd.f32 %v3891, %v4032
        %v4136 = vadd.f32 %v3892, %v4035
        %v4137 = vadd.f32 %v3893, %v4037
        %v4138 = vadd.f32 %v3894, %v4040
        %v4139 = vadd.f32 %v3895, %v4042
        %v4140 = vadd.f32 %v3896, %v4045
        %v4141 = vadd.f32 %v3897, %v4047
        %v4142 = vadd.f32 %v3898, %v4050
        %v4143 = vadd.f32 %v3899, %v4052
        %v4144 = vadd.f32 %v3900, %v4055
        %v4145 = vadd.f32 %v3901, %v4057
        %v4146 = vadd.f32 %v3902, %v4060
        %v4147 = vadd.f32 %v3903, %v4062
        %v4148 = vadd.f32 %v3904, %v4065
        %v4149 = vadd.f32 %v3905, %v4067
        %v4150 = vadd.f32 %v3906, %v4070
        %v4151 = vadd.f32 %v3907, %v4072
        %v4152 = vadd.f32 %v3908, %v4075
        %v4153 = vadd.f32 %v3909, %v4077
        %v4154 = vadd.f32 %v3910, %v4080
        %v4155 = vadd.f32 %v3911, %v4082
        %v4156 = vadd.f32 %v3912, %v4085
        %v4157 = vadd.f32 %v3913, %v4087
        %v4158 = vadd.f32 %v3914, %v4090
        %v4159 = vadd.f32 %v3915, %v4092
        %v4160 = vadd.f32 %v3916, %v4095
        %v4161 = vadd.f32 %v3917, %v4097
        %v4162 = vlaneseq
        %v4163 = vshrl.u32 %v4162, 7
        %v4164 = vsub.s32 2, %v4163
        %v4165 = vrot.slane %v543, %v4164
        %v4166 = vmul.f32 %v489, %v4165
        %v4167 = vmul.f32 %v490, %v4165
        %v4168 = vmul.f32 %v491, %v4165
        %v4169 = vmul.f32 %v492, %v4165
        %v4170 = vmul.f32 %v493, %v4165
        %v4171 = vmul.f32 %v494, %v4165
        %v4172 = vmul.f32 %v495, %v4165
        %v4173 = vmul.f32 %v496, %v4165
        %v4174 = vmul.f32 %v497, %v4165
        %v4175 = vmul.f32 %v498, %v4165
        %v4176 = vmul.f32 %v499, %v4165
        %v4177 = vmul.f32 %v500, %v4165
        %v4178 = vmul.f32 %v501, %v4165
        %v4179 = vmul.f32 %v502, %v4165
        %v4180 = vmul.f32 %v503, %v4165
        %v4181 = vmul.f32 %v504, %v4165
        %v4182 = vmul.f32 %v505, %v4165
        %v4183 = vmul.f32 %v506, %v4165
        %v4184 = vmul.f32 %v507, %v4165
        %v4185 = vmul.f32 %v508, %v4165
        %v4186 = vmul.f32 %v509, %v4165
        %v4187 = vmul.f32 %v510, %v4165
        %v4188 = vmul.f32 %v511, %v4165
        %v4189 = vmul.f32 %v512, %v4165
        %v4190 = vmul.f32 %v513, %v4165
        %v4191 = vmul.f32 %v514, %v4165
        %v4192 = vmul.f32 %v515, %v4165
        %v4193 = vmul.f32 %v516, %v4165
        %v4194 = vmul.f32 %v517, %v4165
        %v4195 = vmul.f32 %v518, %v4165
        %v4196 = vmul.f32 %v519, %v4165
        %v4197 = vmul.f32 %v520, %v4165
        %v4198 = vmul.f32 %v521, %v4165
        %v4199 = vmul.f32 %v522, %v4165
        %v4200 = vmul.f32 %v523, %v4165
        %v4201 = vmul.f32 %v524, %v4165
        %v4202 = vmul.f32 %v525, %v4165
        %v4203 = vmul.f32 %v526, %v4165
        %v4204 = vmul.f32 %v527, %v4165
        %v4205 = vmul.f32 %v528, %v4165
        %v4206 = vmul.f32 %v529, %v4165
        %v4207 = vmul.f32 %v530, %v4165
        %v4208 = vmul.f32 %v531, %v4165
        %v4209 = vmul.f32 %v532, %v4165
        %v4210 = vmul.f32 %v533, %v4165
        %v4211 = vmul.f32 %v534, %v4165
        %v4212 = vmul.f32 %v535, %v4165
        %v4213 = vmul.f32 %v536, %v4165
        %v4262 = vrot.slane %v4166, 2
        %v4263 = vrot.slane %v4167, 2
        %v4264 = vsel %vm2797, %v4262, %v4263
        %v4265 = vrot.slane %v4168, 2
        %v4266 = vsel %vm2797, %v4263, %v4265
        %v4267 = vrot.slane %v4169, 2
        %v4268 = vrot.slane %v4170, 2
        %v4269 = vsel %vm2797, %v4267, %v4268
        %v4270 = vrot.slane %v4171, 2
        %v4271 = vsel %vm2797, %v4268, %v4270
        %v4272 = vrot.slane %v4172, 2
        %v4273 = vrot.slane %v4173, 2
        %v4274 = vsel %vm2797, %v4272, %v4273
        %v4275 = vrot.slane %v4174, 2
        %v4276 = vsel %vm2797, %v4273, %v4275
        %v4277 = vrot.slane %v4175, 2
        %v4278 = vrot.slane %v4176, 2
        %v4279 = vsel %vm2797, %v4277, %v4278
        %v4280 = vrot.slane %v4177, 2
        %v4281 = vsel %vm2797, %v4278, %v4280
        %v4282 = vrot.slane %v4178, 2
        %v4283 = vrot.slane %v4179, 2
        %v4284 = vsel %vm2797, %v4282, %v4283
        %v4285 = vrot.slane %v4180, 2
        %v4286 = vsel %vm2797, %v4283, %v4285
        %v4287 = vrot.slane %v4181, 2
        %v4288 = vrot.slane %v4182, 2
        %v4289 = vsel %vm2797, %v4287, %v4288
        %v4290 = vrot.slane %v4183, 2
        %v4291 = vsel %vm2797, %v4288, %v4290
        %v4292 = vrot.slane %v4184, 2
        %v4293 = vrot.slane %v4185, 2
        %v4294 = vsel %vm2797, %v4292, %v4293
        %v4295 = vrot.slane %v4186, 2
        %v4296 = vsel %vm2797, %v4293, %v4295
        %v4297 = vrot.slane %v4187, 2
        %v4298 = vrot.slane %v4188, 2
        %v4299 = vsel %vm2797, %v4297, %v4298
        %v4300 = vrot.slane %v4189, 2
        %v4301 = vsel %vm2797, %v4298, %v4300
        %v4302 = vrot.slane %v4190, 2
        %v4303 = vrot.slane %v4191, 2
        %v4304 = vsel %vm2797, %v4302, %v4303
        %v4305 = vrot.slane %v4192, 2
        %v4306 = vsel %vm2797, %v4303, %v4305
        %v4307 = vrot.slane %v4193, 2
        %v4308 = vrot.slane %v4194, 2
        %v4309 = vsel %vm2797, %v4307, %v4308
        %v4310 = vrot.slane %v4195, 2
        %v4311 = vsel %vm2797, %v4308, %v4310
        %v4312 = vrot.slane %v4196, 2
        %v4313 = vrot.slane %v4197, 2
        %v4314 = vsel %vm2797, %v4312, %v4313
        %v4315 = vrot.slane %v4198, 2
        %v4316 = vsel %vm2797, %v4313, %v4315
        %v4317 = vrot.slane %v4199, 2
        %v4318 = vrot.slane %v4200, 2
        %v4319 = vsel %vm2797, %v4317, %v4318
        %v4320 = vrot.slane %v4201, 2
        %v4321 = vsel %vm2797, %v4318, %v4320
        %v4322 = vrot.slane %v4202, 2
        %v4323 = vrot.slane %v4203, 2
        %v4324 = vsel %vm2797, %v4322, %v4323
        %v4325 = vrot.slane %v4204, 2
        %v4326 = vsel %vm2797, %v4323, %v4325
        %v4327 = vrot.slane %v4205, 2
        %v4328 = vrot.slane %v4206, 2
        %v4329 = vsel %vm2797, %v4327, %v4328
        %v4330 = vrot.slane %v4207, 2
        %v4331 = vsel %vm2797, %v4328, %v4330
        %v4332 = vrot.slane %v4208, 2
        %v4333 = vrot.slane %v4209, 2
        %v4334 = vsel %vm2797, %v4332, %v4333
        %v4335 = vrot.slane %v4210, 2
        %v4336 = vsel %vm2797, %v4333, %v4335
        %v4337 = vrot.slane %v4211, 2
        %v4338 = vrot.slane %v4212, 2
        %v4339 = vsel %vm2797, %v4337, %v4338
        %v4340 = vrot.slane %v4213, 2
        %v4341 = vsel %vm2797, %v4338, %v4340
        %v4374 = vadd.f32 %v4130, %v4264
        %v4375 = vadd.f32 %v4131, %v4266
        %v4376 = vadd.f32 %v4132, %v4269
        %v4377 = vadd.f32 %v4133, %v4271
        %v4378 = vadd.f32 %v4134, %v4274
        %v4379 = vadd.f32 %v4135, %v4276
        %v4380 = vadd.f32 %v4136, %v4279
        %v4381 = vadd.f32 %v4137, %v4281
        %v4382 = vadd.f32 %v4138, %v4284
        %v4383 = vadd.f32 %v4139, %v4286
        %v4384 = vadd.f32 %v4140, %v4289
        %v4385 = vadd.f32 %v4141, %v4291
        %v4386 = vadd.f32 %v4142, %v4294
        %v4387 = vadd.f32 %v4143, %v4296
        %v4388 = vadd.f32 %v4144, %v4299
        %v4389 = vadd.f32 %v4145, %v4301
        %v4390 = vadd.f32 %v4146, %v4304
        %v4391 = vadd.f32 %v4147, %v4306
        %v4392 = vadd.f32 %v4148, %v4309
        %v4393 = vadd.f32 %v4149, %v4311
        %v4394 = vadd.f32 %v4150, %v4314
        %v4395 = vadd.f32 %v4151, %v4316
        %v4396 = vadd.f32 %v4152, %v4319
        %v4397 = vadd.f32 %v4153, %v4321
        %v4398 = vadd.f32 %v4154, %v4324
        %v4399 = vadd.f32 %v4155, %v4326
        %v4400 = vadd.f32 %v4156, %v4329
        %v4401 = vadd.f32 %v4157, %v4331
        %v4402 = vadd.f32 %v4158, %v4334
        %v4403 = vadd.f32 %v4159, %v4336
        %v4404 = vadd.f32 %v4160, %v4339
        %v4405 = vadd.f32 %v4161, %v4341
        %v4406 = vlaneseq
        %v4407 = vshrl.u32 %v4406, 7
        %v4408 = vsub.s32 3, %v4407
        %v4409 = vrot.slane %v537, %v4408
        %v4410 = vmul.f32 %v471, %v4409
        %v4411 = vmul.f32 %v472, %v4409
        %v4412 = vmul.f32 %v473, %v4409
        %v4413 = vmul.f32 %v474, %v4409
        %v4414 = vmul.f32 %v475, %v4409
        %v4415 = vmul.f32 %v476, %v4409
        %v4416 = vmul.f32 %v477, %v4409
        %v4417 = vmul.f32 %v478, %v4409
        %v4418 = vmul.f32 %v479, %v4409
        %v4419 = vmul.f32 %v480, %v4409
        %v4420 = vmul.f32 %v481, %v4409
        %v4421 = vmul.f32 %v482, %v4409
        %v4422 = vmul.f32 %v483, %v4409
        %v4423 = vmul.f32 %v484, %v4409
        %v4424 = vmul.f32 %v485, %v4409
        %v4425 = vmul.f32 %v486, %v4409
        %v4426 = vmul.f32 %v487, %v4409
        %v4427 = vmul.f32 %v488, %v4409
        %v4428 = vmul.f32 %v489, %v4409
        %v4429 = vmul.f32 %v490, %v4409
        %v4430 = vmul.f32 %v491, %v4409
        %v4431 = vmul.f32 %v492, %v4409
        %v4432 = vmul.f32 %v493, %v4409
        %v4433 = vmul.f32 %v494, %v4409
        %v4434 = vmul.f32 %v495, %v4409
        %v4435 = vmul.f32 %v496, %v4409
        %v4436 = vmul.f32 %v497, %v4409
        %v4437 = vmul.f32 %v498, %v4409
        %v4438 = vmul.f32 %v499, %v4409
        %v4439 = vmul.f32 %v500, %v4409
        %v4440 = vmul.f32 %v501, %v4409
        %v4441 = vmul.f32 %v502, %v4409
        %v4442 = vmul.f32 %v503, %v4409
        %v4443 = vmul.f32 %v504, %v4409
        %v4444 = vmul.f32 %v505, %v4409
        %v4445 = vmul.f32 %v506, %v4409
        %v4446 = vmul.f32 %v507, %v4409
        %v4447 = vmul.f32 %v508, %v4409
        %v4448 = vmul.f32 %v509, %v4409
        %v4449 = vmul.f32 %v510, %v4409
        %v4450 = vmul.f32 %v511, %v4409
        %v4451 = vmul.f32 %v512, %v4409
        %v4452 = vmul.f32 %v513, %v4409
        %v4453 = vmul.f32 %v514, %v4409
        %v4454 = vmul.f32 %v515, %v4409
        %v4455 = vmul.f32 %v516, %v4409
        %v4456 = vmul.f32 %v517, %v4409
        %v4457 = vmul.f32 %v518, %v4409
        %vm4506 = vcmask 1044480
        %v4507 = vrot.slane %v4410, 3
        %v4508 = vrot.slane %v4411, 3
        %v4509 = vsel %vm4506, %v4507, %v4508
        %v4510 = vrot.slane %v4412, 3
        %v4511 = vsel %vm4506, %v4508, %v4510
        %v4512 = vrot.slane %v4413, 3
        %v4513 = vrot.slane %v4414, 3
        %v4514 = vsel %vm4506, %v4512, %v4513
        %v4515 = vrot.slane %v4415, 3
        %v4516 = vsel %vm4506, %v4513, %v4515
        %v4517 = vrot.slane %v4416, 3
        %v4518 = vrot.slane %v4417, 3
        %v4519 = vsel %vm4506, %v4517, %v4518
        %v4520 = vrot.slane %v4418, 3
        %v4521 = vsel %vm4506, %v4518, %v4520
        %v4522 = vrot.slane %v4419, 3
        %v4523 = vrot.slane %v4420, 3
        %v4524 = vsel %vm4506, %v4522, %v4523
        %v4525 = vrot.slane %v4421, 3
        %v4526 = vsel %vm4506, %v4523, %v4525
        %v4527 = vrot.slane %v4422, 3
        %v4528 = vrot.slane %v4423, 3
        %v4529 = vsel %vm4506, %v4527, %v4528
        %v4530 = vrot.slane %v4424, 3
        %v4531 = vsel %vm4506, %v4528, %v4530
        %v4532 = vrot.slane %v4425, 3
        %v4533 = vrot.slane %v4426, 3
        %v4534 = vsel %vm4506, %v4532, %v4533
        %v4535 = vrot.slane %v4427, 3
        %v4536 = vsel %vm4506, %v4533, %v4535
        %v4537 = vrot.slane %v4428, 3
        %v4538 = vrot.slane %v4429, 3
        %v4539 = vsel %vm4506, %v4537, %v4538
        %v4540 = vrot.slane %v4430, 3
        %v4541 = vsel %vm4506, %v4538, %v4540
        %v4542 = vrot.slane %v4431, 3
        %v4543 = vrot.slane %v4432, 3
        %v4544 = vsel %vm4506, %v4542, %v4543
        %v4545 = vrot.slane %v4433, 3
        %v4546 = vsel %vm4506, %v4543, %v4545
        %v4547 = vrot.slane %v4434, 3
        %v4548 = vrot.slane %v4435, 3
        %v4549 = vsel %vm4506, %v4547, %v4548
        %v4550 = vrot.slane %v4436, 3
        %v4551 = vsel %vm4506, %v4548, %v4550
        %v4552 = vrot.slane %v4437, 3
        %v4553 = vrot.slane %v4438, 3
        %v4554 = vsel %vm4506, %v4552, %v4553
        %v4555 = vrot.slane %v4439, 3
        %v4556 = vsel %vm4506, %v4553, %v4555
        %v4557 = vrot.slane %v4440, 3
        %v4558 = vrot.slane %v4441, 3
        %v4559 = vsel %vm4506, %v4557, %v4558
        %v4560 = vrot.slane %v4442, 3
        %v4561 = vsel %vm4506, %v4558, %v4560
        %v4562 = vrot.slane %v4443, 3
        %v4563 = vrot.slane %v4444, 3
        %v4564 = vsel %vm4506, %v4562, %v4563
        %v4565 = vrot.slane %v4445, 3
        %v4566 = vsel %vm4506, %v4563, %v4565
        %v4567 = vrot.slane %v4446, 3
        %v4568 = vrot.slane %v4447, 3
        %v4569 = vsel %vm4506, %v4567, %v4568
        %v4570 = vrot.slane %v4448, 3
        %v4571 = vsel %vm4506, %v4568, %v4570
        %v4572 = vrot.slane %v4449, 3
        %v4573 = vrot.slane %v4450, 3
        %v4574 = vsel %vm4506, %v4572, %v4573
        %v4575 = vrot.slane %v4451, 3
        %v4576 = vsel %vm4506, %v4573, %v4575
        %v4577 = vrot.slane %v4452, 3
        %v4578 = vrot.slane %v4453, 3
        %v4579 = vsel %vm4506, %v4577, %v4578
        %v4580 = vrot.slane %v4454, 3
        %v4581 = vsel %vm4506, %v4578, %v4580
        %v4582 = vrot.slane %v4455, 3
        %v4583 = vrot.slane %v4456, 3
        %v4584 = vsel %vm4506, %v4582, %v4583
        %v4585 = vrot.slane %v4457, 3
        %v4586 = vsel %vm4506, %v4583, %v4585
        %v4619 = vadd.f32 %v4374, %v4509
        %v4620 = vadd.f32 %v4375, %v4511
        %v4621 = vadd.f32 %v4376, %v4514
        %v4622 = vadd.f32 %v4377, %v4516
        %v4623 = vadd.f32 %v4378, %v4519
        %v4624 = vadd.f32 %v4379, %v4521
        %v4625 = vadd.f32 %v4380, %v4524
        %v4626 = vadd.f32 %v4381, %v4526
        %v4627 = vadd.f32 %v4382, %v4529
        %v4628 = vadd.f32 %v4383, %v4531
        %v4629 = vadd.f32 %v4384, %v4534
        %v4630 = vadd.f32 %v4385, %v4536
        %v4631 = vadd.f32 %v4386, %v4539
        %v4632 = vadd.f32 %v4387, %v4541
        %v4633 = vadd.f32 %v4388, %v4544
        %v4634 = vadd.f32 %v4389, %v4546
        %v4635 = vadd.f32 %v4390, %v4549
        %v4636 = vadd.f32 %v4391, %v4551
        %v4637 = vadd.f32 %v4392, %v4554
        %v4638 = vadd.f32 %v4393, %v4556
        %v4639 = vadd.f32 %v4394, %v4559
        %v4640 = vadd.f32 %v4395, %v4561
        %v4641 = vadd.f32 %v4396, %v4564
        %v4642 = vadd.f32 %v4397, %v4566
        %v4643 = vadd.f32 %v4398, %v4569
        %v4644 = vadd.f32 %v4399, %v4571
        %v4645 = vadd.f32 %v4400, %v4574
        %v4646 = vadd.f32 %v4401, %v4576
        %v4647 = vadd.f32 %v4402, %v4579
        %v4648 = vadd.f32 %v4403, %v4581
        %v4649 = vadd.f32 %v4404, %v4584
        %v4650 = vadd.f32 %v4405, %v4586
        %v4651 = vlaneseq
        %v4652 = vshrl.u32 %v4651, 7
        %v4653 = vsub.s32 3, %v4652
        %v4654 = vrot.slane %v538, %v4653
        %v4655 = vmul.f32 %v474, %v4654
        %v4656 = vmul.f32 %v475, %v4654
        %v4657 = vmul.f32 %v476, %v4654
        %v4658 = vmul.f32 %v477, %v4654
        %v4659 = vmul.f32 %v478, %v4654
        %v4660 = vmul.f32 %v479, %v4654
        %v4661 = vmul.f32 %v480, %v4654
        %v4662 = vmul.f32 %v481, %v4654
        %v4663 = vmul.f32 %v482, %v4654
        %v4664 = vmul.f32 %v483, %v4654
        %v4665 = vmul.f32 %v484, %v4654
        %v4666 = vmul.f32 %v485, %v4654
        %v4667 = vmul.f32 %v486, %v4654
        %v4668 = vmul.f32 %v487, %v4654
        %v4669 = vmul.f32 %v488, %v4654
        %v4670 = vmul.f32 %v489, %v4654
        %v4671 = vmul.f32 %v490, %v4654
        %v4672 = vmul.f32 %v491, %v4654
        %v4673 = vmul.f32 %v492, %v4654
        %v4674 = vmul.f32 %v493, %v4654
        %v4675 = vmul.f32 %v494, %v4654
        %v4676 = vmul.f32 %v495, %v4654
        %v4677 = vmul.f32 %v496, %v4654
        %v4678 = vmul.f32 %v497, %v4654
        %v4679 = vmul.f32 %v498, %v4654
        %v4680 = vmul.f32 %v499, %v4654
        %v4681 = vmul.f32 %v500, %v4654
        %v4682 = vmul.f32 %v501, %v4654
        %v4683 = vmul.f32 %v502, %v4654
        %v4684 = vmul.f32 %v503, %v4654
        %v4685 = vmul.f32 %v504, %v4654
        %v4686 = vmul.f32 %v505, %v4654
        %v4687 = vmul.f32 %v506, %v4654
        %v4688 = vmul.f32 %v507, %v4654
        %v4689 = vmul.f32 %v508, %v4654
        %v4690 = vmul.f32 %v509, %v4654
        %v4691 = vmul.f32 %v510, %v4654
        %v4692 = vmul.f32 %v511, %v4654
        %v4693 = vmul.f32 %v512, %v4654
        %v4694 = vmul.f32 %v513, %v4654
        %v4695 = vmul.f32 %v514, %v4654
        %v4696 = vmul.f32 %v515, %v4654
        %v4697 = vmul.f32 %v516, %v4654
        %v4698 = vmul.f32 %v517, %v4654
        %v4699 = vmul.f32 %v518, %v4654
        %v4700 = vmul.f32 %v519, %v4654
        %v4701 = vmul.f32 %v520, %v4654
        %v4702 = vmul.f32 %v521, %v4654
        %v4751 = vrot.slane %v4655, 3
        %v4752 = vrot.slane %v4656, 3
        %v4753 = vsel %vm4506, %v4751, %v4752
        %v4754 = vrot.slane %v4657, 3
        %v4755 = vsel %vm4506, %v4752, %v4754
        %v4756 = vrot.slane %v4658, 3
        %v4757 = vrot.slane %v4659, 3
        %v4758 = vsel %vm4506, %v4756, %v4757
        %v4759 = vrot.slane %v4660, 3
        %v4760 = vsel %vm4506, %v4757, %v4759
        %v4761 = vrot.slane %v4661, 3
        %v4762 = vrot.slane %v4662, 3
        %v4763 = vsel %vm4506, %v4761, %v4762
        %v4764 = vrot.slane %v4663, 3
        %v4765 = vsel %vm4506, %v4762, %v4764
        %v4766 = vrot.slane %v4664, 3
        %v4767 = vrot.slane %v4665, 3
        %v4768 = vsel %vm4506, %v4766, %v4767
        %v4769 = vrot.slane %v4666, 3
        %v4770 = vsel %vm4506, %v4767, %v4769
        %v4771 = vrot.slane %v4667, 3
        %v4772 = vrot.slane %v4668, 3
        %v4773 = vsel %vm4506, %v4771, %v4772
        %v4774 = vrot.slane %v4669, 3
        %v4775 = vsel %vm4506, %v4772, %v4774
        %v4776 = vrot.slane %v4670, 3
        %v4777 = vrot.slane %v4671, 3
        %v4778 = vsel %vm4506, %v4776, %v4777
        %v4779 = vrot.slane %v4672, 3
        %v4780 = vsel %vm4506, %v4777, %v4779
        %v4781 = vrot.slane %v4673, 3
        %v4782 = vrot.slane %v4674, 3
        %v4783 = vsel %vm4506, %v4781, %v4782
        %v4784 = vrot.slane %v4675, 3
        %v4785 = vsel %vm4506, %v4782, %v4784
        %v4786 = vrot.slane %v4676, 3
        %v4787 = vrot.slane %v4677, 3
        %v4788 = vsel %vm4506, %v4786, %v4787
        %v4789 = vrot.slane %v4678, 3
        %v4790 = vsel %vm4506, %v4787, %v4789
        %v4791 = vrot.slane %v4679, 3
        %v4792 = vrot.slane %v4680, 3
        %v4793 = vsel %vm4506, %v4791, %v4792
        %v4794 = vrot.slane %v4681, 3
        %v4795 = vsel %vm4506, %v4792, %v4794
        %v4796 = vrot.slane %v4682, 3
        %v4797 = vrot.slane %v4683, 3
        %v4798 = vsel %vm4506, %v4796, %v4797
        %v4799 = vrot.slane %v4684, 3
        %v4800 = vsel %vm4506, %v4797, %v4799
        %v4801 = vrot.slane %v4685, 3
        %v4802 = vrot.slane %v4686, 3
        %v4803 = vsel %vm4506, %v4801, %v4802
        %v4804 = vrot.slane %v4687, 3
        %v4805 = vsel %vm4506, %v4802, %v4804
        %v4806 = vrot.slane %v4688, 3
        %v4807 = vrot.slane %v4689, 3
        %v4808 = vsel %vm4506, %v4806, %v4807
        %v4809 = vrot.slane %v4690, 3
        %v4810 = vsel %vm4506, %v4807, %v4809
        %v4811 = vrot.slane %v4691, 3
        %v4812 = vrot.slane %v4692, 3
        %v4813 = vsel %vm4506, %v4811, %v4812
        %v4814 = vrot.slane %v4693, 3
        %v4815 = vsel %vm4506, %v4812, %v4814
        %v4816 = vrot.slane %v4694, 3
        %v4817 = vrot.slane %v4695, 3
        %v4818 = vsel %vm4506, %v4816, %v4817
        %v4819 = vrot.slane %v4696, 3
        %v4820 = vsel %vm4506, %v4817, %v4819
        %v4821 = vrot.slane %v4697, 3
        %v4822 = vrot.slane %v4698, 3
        %v4823 = vsel %vm4506, %v4821, %v4822
        %v4824 = vrot.slane %v4699, 3
        %v4825 = vsel %vm4506, %v4822, %v4824
        %v4826 = vrot.slane %v4700, 3
        %v4827 = vrot.slane %v4701, 3
        %v4828 = vsel %vm4506, %v4826, %v4827
        %v4829 = vrot.slane %v4702, 3
        %v4830 = vsel %vm4506, %v4827, %v4829
        %v4863 = vadd.f32 %v4619, %v4753
        %v4864 = vadd.f32 %v4620, %v4755
        %v4865 = vadd.f32 %v4621, %v4758
        %v4866 = vadd.f32 %v4622, %v4760
        %v4867 = vadd.f32 %v4623, %v4763
        %v4868 = vadd.f32 %v4624, %v4765
        %v4869 = vadd.f32 %v4625, %v4768
        %v4870 = vadd.f32 %v4626, %v4770
        %v4871 = vadd.f32 %v4627, %v4773
        %v4872 = vadd.f32 %v4628, %v4775
        %v4873 = vadd.f32 %v4629, %v4778
        %v4874 = vadd.f32 %v4630, %v4780
        %v4875 = vadd.f32 %v4631, %v4783
        %v4876 = vadd.f32 %v4632, %v4785
        %v4877 = vadd.f32 %v4633, %v4788
        %v4878 = vadd.f32 %v4634, %v4790
        %v4879 = vadd.f32 %v4635, %v4793
        %v4880 = vadd.f32 %v4636, %v4795
        %v4881 = vadd.f32 %v4637, %v4798
        %v4882 = vadd.f32 %v4638, %v4800
        %v4883 = vadd.f32 %v4639, %v4803
        %v4884 = vadd.f32 %v4640, %v4805
        %v4885 = vadd.f32 %v4641, %v4808
        %v4886 = vadd.f32 %v4642, %v4810
        %v4887 = vadd.f32 %v4643, %v4813
        %v4888 = vadd.f32 %v4644, %v4815
        %v4889 = vadd.f32 %v4645, %v4818
        %v4890 = vadd.f32 %v4646, %v4820
        %v4891 = vadd.f32 %v4647, %v4823
        %v4892 = vadd.f32 %v4648, %v4825
        %v4893 = vadd.f32 %v4649, %v4828
        %v4894 = vadd.f32 %v4650, %v4830
        %v4895 = vlaneseq
        %v4896 = vshrl.u32 %v4895, 7
        %v4897 = vsub.s32 3, %v4896
        %v4898 = vrot.slane %v539, %v4897
        %v4899 = vmul.f32 %v477, %v4898
        %v4900 = vmul.f32 %v478, %v4898
        %v4901 = vmul.f32 %v479, %v4898
        %v4902 = vmul.f32 %v480, %v4898
        %v4903 = vmul.f32 %v481, %v4898
        %v4904 = vmul.f32 %v482, %v4898
        %v4905 = vmul.f32 %v483, %v4898
        %v4906 = vmul.f32 %v484, %v4898
        %v4907 = vmul.f32 %v485, %v4898
        %v4908 = vmul.f32 %v486, %v4898
        %v4909 = vmul.f32 %v487, %v4898
        %v4910 = vmul.f32 %v488, %v4898
        %v4911 = vmul.f32 %v489, %v4898
        %v4912 = vmul.f32 %v490, %v4898
        %v4913 = vmul.f32 %v491, %v4898
        %v4914 = vmul.f32 %v492, %v4898
        %v4915 = vmul.f32 %v493, %v4898
        %v4916 = vmul.f32 %v494, %v4898
        %v4917 = vmul.f32 %v495, %v4898
        %v4918 = vmul.f32 %v496, %v4898
        %v4919 = vmul.f32 %v497, %v4898
        %v4920 = vmul.f32 %v498, %v4898
        %v4921 = vmul.f32 %v499, %v4898
        %v4922 = vmul.f32 %v500, %v4898
        %v4923 = vmul.f32 %v501, %v4898
        %v4924 = vmul.f32 %v502, %v4898
        %v4925 = vmul.f32 %v503, %v4898
        %v4926 = vmul.f32 %v504, %v4898
        %v4927 = vmul.f32 %v505, %v4898
        %v4928 = vmul.f32 %v506, %v4898
        %v4929 = vmul.f32 %v507, %v4898
        %v4930 = vmul.f32 %v508, %v4898
        %v4931 = vmul.f32 %v509, %v4898
        %v4932 = vmul.f32 %v510, %v4898
        %v4933 = vmul.f32 %v511, %v4898
        %v4934 = vmul.f32 %v512, %v4898
        %v4935 = vmul.f32 %v513, %v4898
        %v4936 = vmul.f32 %v514, %v4898
        %v4937 = vmul.f32 %v515, %v4898
        %v4938 = vmul.f32 %v516, %v4898
        %v4939 = vmul.f32 %v517, %v4898
        %v4940 = vmul.f32 %v518, %v4898
        %v4941 = vmul.f32 %v519, %v4898
        %v4942 = vmul.f32 %v520, %v4898
        %v4943 = vmul.f32 %v521, %v4898
        %v4944 = vmul.f32 %v522, %v4898
        %v4945 = vmul.f32 %v523, %v4898
        %v4946 = vmul.f32 %v524, %v4898
        %v4995 = vrot.slane %v4899, 3
        %v4996 = vrot.slane %v4900, 3
        %v4997 = vsel %vm4506, %v4995, %v4996
        %v4998 = vrot.slane %v4901, 3
        %v4999 = vsel %vm4506, %v4996, %v4998
        %v5000 = vrot.slane %v4902, 3
        %v5001 = vrot.slane %v4903, 3
        %v5002 = vsel %vm4506, %v5000, %v5001
        %v5003 = vrot.slane %v4904, 3
        %v5004 = vsel %vm4506, %v5001, %v5003
        %v5005 = vrot.slane %v4905, 3
        %v5006 = vrot.slane %v4906, 3
        %v5007 = vsel %vm4506, %v5005, %v5006
        %v5008 = vrot.slane %v4907, 3
        %v5009 = vsel %vm4506, %v5006, %v5008
        %v5010 = vrot.slane %v4908, 3
        %v5011 = vrot.slane %v4909, 3
        %v5012 = vsel %vm4506, %v5010, %v5011
        %v5013 = vrot.slane %v4910, 3
        %v5014 = vsel %vm4506, %v5011, %v5013
        %v5015 = vrot.slane %v4911, 3
        %v5016 = vrot.slane %v4912, 3
        %v5017 = vsel %vm4506, %v5015, %v5016
        %v5018 = vrot.slane %v4913, 3
        %v5019 = vsel %vm4506, %v5016, %v5018
        %v5020 = vrot.slane %v4914, 3
        %v5021 = vrot.slane %v4915, 3
        %v5022 = vsel %vm4506, %v5020, %v5021
        %v5023 = vrot.slane %v4916, 3
        %v5024 = vsel %vm4506, %v5021, %v5023
        %v5025 = vrot.slane %v4917, 3
        %v5026 = vrot.slane %v4918, 3
        %v5027 = vsel %vm4506, %v5025, %v5026
        %v5028 = vrot.slane %v4919, 3
        %v5029 = vsel %vm4506, %v5026, %v5028
        %v5030 = vrot.slane %v4920, 3
        %v5031 = vrot.slane %v4921, 3
        %v5032 = vsel %vm4506, %v5030, %v5031
        %v5033 = vrot.slane %v4922, 3
        %v5034 = vsel %vm4506, %v5031, %v5033
        %v5035 = vrot.slane %v4923, 3
        %v5036 = vrot.slane %v4924, 3
        %v5037 = vsel %vm4506, %v5035, %v5036
        %v5038 = vrot.slane %v4925, 3
        %v5039 = vsel %vm4506, %v5036, %v5038
        %v5040 = vrot.slane %v4926, 3
        %v5041 = vrot.slane %v4927, 3
        %v5042 = vsel %vm4506, %v5040, %v5041
        %v5043 = vrot.slane %v4928, 3
        %v5044 = vsel %vm4506, %v5041, %v5043
        %v5045 = vrot.slane %v4929, 3
        %v5046 = vrot.slane %v4930, 3
        %v5047 = vsel %vm4506, %v5045, %v5046
        %v5048 = vrot.slane %v4931, 3
        %v5049 = vsel %vm4506, %v5046, %v5048
        %v5050 = vrot.slane %v4932, 3
        %v5051 = vrot.slane %v4933, 3
        %v5052 = vsel %vm4506, %v5050, %v5051
        %v5053 = vrot.slane %v4934, 3
        %v5054 = vsel %vm4506, %v5051, %v5053
        %v5055 = vrot.slane %v4935, 3
        %v5056 = vrot.slane %v4936, 3
        %v5057 = vsel %vm4506, %v5055, %v5056
        %v5058 = vrot.slane %v4937, 3
        %v5059 = vsel %vm4506, %v5056, %v5058
        %v5060 = vrot.slane %v4938, 3
        %v5061 = vrot.slane %v4939, 3
        %v5062 = vsel %vm4506, %v5060, %v5061
        %v5063 = vrot.slane %v4940, 3
        %v5064 = vsel %vm4506, %v5061, %v5063
        %v5065 = vrot.slane %v4941, 3
        %v5066 = vrot.slane %v4942, 3
        %v5067 = vsel %vm4506, %v5065, %v5066
        %v5068 = vrot.slane %v4943, 3
        %v5069 = vsel %vm4506, %v5066, %v5068
        %v5070 = vrot.slane %v4944, 3
        %v5071 = vrot.slane %v4945, 3
        %v5072 = vsel %vm4506, %v5070, %v5071
        %v5073 = vrot.slane %v4946, 3
        %v5074 = vsel %vm4506, %v5071, %v5073
        %v5107 = vadd.f32 %v4863, %v4997
        %v5108 = vadd.f32 %v4864, %v4999
        %v5109 = vadd.f32 %v4865, %v5002
        %v5110 = vadd.f32 %v4866, %v5004
        %v5111 = vadd.f32 %v4867, %v5007
        %v5112 = vadd.f32 %v4868, %v5009
        %v5113 = vadd.f32 %v4869, %v5012
        %v5114 = vadd.f32 %v4870, %v5014
        %v5115 = vadd.f32 %v4871, %v5017
        %v5116 = vadd.f32 %v4872, %v5019
        %v5117 = vadd.f32 %v4873, %v5022
        %v5118 = vadd.f32 %v4874, %v5024
        %v5119 = vadd.f32 %v4875, %v5027
        %v5120 = vadd.f32 %v4876, %v5029
        %v5121 = vadd.f32 %v4877, %v5032
        %v5122 = vadd.f32 %v4878, %v5034
        %v5123 = vadd.f32 %v4879, %v5037
        %v5124 = vadd.f32 %v4880, %v5039
        %v5125 = vadd.f32 %v4881, %v5042
        %v5126 = vadd.f32 %v4882, %v5044
        %v5127 = vadd.f32 %v4883, %v5047
        %v5128 = vadd.f32 %v4884, %v5049
        %v5129 = vadd.f32 %v4885, %v5052
        %v5130 = vadd.f32 %v4886, %v5054
        %v5131 = vadd.f32 %v4887, %v5057
        %v5132 = vadd.f32 %v4888, %v5059
        %v5133 = vadd.f32 %v4889, %v5062
        %v5134 = vadd.f32 %v4890, %v5064
        %v5135 = vadd.f32 %v4891, %v5067
        %v5136 = vadd.f32 %v4892, %v5069
        %v5137 = vadd.f32 %v4893, %v5072
        %v5138 = vadd.f32 %v4894, %v5074
        %v5139 = vlaneseq
        %v5140 = vshrl.u32 %v5139, 7
        %v5141 = vsub.s32 3, %v5140
        %v5142 = vrot.slane %v540, %v5141
        %v5143 = vmul.f32 %v480, %v5142
        %v5144 = vmul.f32 %v481, %v5142
        %v5145 = vmul.f32 %v482, %v5142
        %v5146 = vmul.f32 %v483, %v5142
        %v5147 = vmul.f32 %v484, %v5142
        %v5148 = vmul.f32 %v485, %v5142
        %v5149 = vmul.f32 %v486, %v5142
        %v5150 = vmul.f32 %v487, %v5142
        %v5151 = vmul.f32 %v488, %v5142
        %v5152 = vmul.f32 %v489, %v5142
        %v5153 = vmul.f32 %v490, %v5142
        %v5154 = vmul.f32 %v491, %v5142
        %v5155 = vmul.f32 %v492, %v5142
        %v5156 = vmul.f32 %v493, %v5142
        %v5157 = vmul.f32 %v494, %v5142
        %v5158 = vmul.f32 %v495, %v5142
        %v5159 = vmul.f32 %v496, %v5142
        %v5160 = vmul.f32 %v497, %v5142
        %v5161 = vmul.f32 %v498, %v5142
        %v5162 = vmul.f32 %v499, %v5142
        %v5163 = vmul.f32 %v500, %v5142
        %v5164 = vmul.f32 %v501, %v5142
        %v5165 = vmul.f32 %v502, %v5142
        %v5166 = vmul.f32 %v503, %v5142
        %v5167 = vmul.f32 %v504, %v5142
        %v5168 = vmul.f32 %v505, %v5142
        %v5169 = vmul.f32 %v506, %v5142
        %v5170 = vmul.f32 %v507, %v5142
        %v5171 = vmul.f32 %v508, %v5142
        %v5172 = vmul.f32 %v509, %v5142
        %v5173 = vmul.f32 %v510, %v5142
        %v5174 = vmul.f32 %v511, %v5142
        %v5175 = vmul.f32 %v512, %v5142
        %v5176 = vmul.f32 %v513, %v5142
        %v5177 = vmul.f32 %v514, %v5142
        %v5178 = vmul.f32 %v515, %v5142
        %v5179 = vmul.f32 %v516, %v5142
        %v5180 = vmul.f32 %v517, %v5142
        %v5181 = vmul.f32 %v518, %v5142
        %v5182 = vmul.f32 %v519, %v5142
        %v5183 = vmul.f32 %v520, %v5142
        %v5184 = vmul.f32 %v521, %v5142
        %v5185 = vmul.f32 %v522, %v5142
        %v5186 = vmul.f32 %v523, %v5142
        %v5187 = vmul.f32 %v524, %v5142
        %v5188 = vmul.f32 %v525, %v5142
        %v5189 = vmul.f32 %v526, %v5142
        %v5190 = vmul.f32 %v527, %v5142
        %v5239 = vrot.slane %v5143, 3
        %v5240 = vrot.slane %v5144, 3
        %v5241 = vsel %vm4506, %v5239, %v5240
        %v5242 = vrot.slane %v5145, 3
        %v5243 = vsel %vm4506, %v5240, %v5242
        %v5244 = vrot.slane %v5146, 3
        %v5245 = vrot.slane %v5147, 3
        %v5246 = vsel %vm4506, %v5244, %v5245
        %v5247 = vrot.slane %v5148, 3
        %v5248 = vsel %vm4506, %v5245, %v5247
        %v5249 = vrot.slane %v5149, 3
        %v5250 = vrot.slane %v5150, 3
        %v5251 = vsel %vm4506, %v5249, %v5250
        %v5252 = vrot.slane %v5151, 3
        %v5253 = vsel %vm4506, %v5250, %v5252
        %v5254 = vrot.slane %v5152, 3
        %v5255 = vrot.slane %v5153, 3
        %v5256 = vsel %vm4506, %v5254, %v5255
        %v5257 = vrot.slane %v5154, 3
        %v5258 = vsel %vm4506, %v5255, %v5257
        %v5259 = vrot.slane %v5155, 3
        %v5260 = vrot.slane %v5156, 3
        %v5261 = vsel %vm4506, %v5259, %v5260
        %v5262 = vrot.slane %v5157, 3
        %v5263 = vsel %vm4506, %v5260, %v5262
        %v5264 = vrot.slane %v5158, 3
        %v5265 = vrot.slane %v5159, 3
        %v5266 = vsel %vm4506, %v5264, %v5265
        %v5267 = vrot.slane %v5160, 3
        %v5268 = vsel %vm4506, %v5265, %v5267
        %v5269 = vrot.slane %v5161, 3
        %v5270 = vrot.slane %v5162, 3
        %v5271 = vsel %vm4506, %v5269, %v5270
        %v5272 = vrot.slane %v5163, 3
        %v5273 = vsel %vm4506, %v5270, %v5272
        %v5274 = vrot.slane %v5164, 3
        %v5275 = vrot.slane %v5165, 3
        %v5276 = vsel %vm4506, %v5274, %v5275
        %v5277 = vrot.slane %v5166, 3
        %v5278 = vsel %vm4506, %v5275, %v5277
        %v5279 = vrot.slane %v5167, 3
        %v5280 = vrot.slane %v5168, 3
        %v5281 = vsel %vm4506, %v5279, %v5280
        %v5282 = vrot.slane %v5169, 3
        %v5283 = vsel %vm4506, %v5280, %v5282
        %v5284 = vrot.slane %v5170, 3
        %v5285 = vrot.slane %v5171, 3
        %v5286 = vsel %vm4506, %v5284, %v5285
        %v5287 = vrot.slane %v5172, 3
        %v5288 = vsel %vm4506, %v5285, %v5287
        %v5289 = vrot.slane %v5173, 3
        %v5290 = vrot.slane %v5174, 3
        %v5291 = vsel %vm4506, %v5289, %v5290
        %v5292 = vrot.slane %v5175, 3
        %v5293 = vsel %vm4506, %v5290, %v5292
        %v5294 = vrot.slane %v5176, 3
        %v5295 = vrot.slane %v5177, 3
        %v5296 = vsel %vm4506, %v5294, %v5295
        %v5297 = vrot.slane %v5178, 3
        %v5298 = vsel %vm4506, %v5295, %v5297
        %v5299 = vrot.slane %v5179, 3
        %v5300 = vrot.slane %v5180, 3
        %v5301 = vsel %vm4506, %v5299, %v5300
        %v5302 = vrot.slane %v5181, 3
        %v5303 = vsel %vm4506, %v5300, %v5302
        %v5304 = vrot.slane %v5182, 3
        %v5305 = vrot.slane %v5183, 3
        %v5306 = vsel %vm4506, %v5304, %v5305
        %v5307 = vrot.slane %v5184, 3
        %v5308 = vsel %vm4506, %v5305, %v5307
        %v5309 = vrot.slane %v5185, 3
        %v5310 = vrot.slane %v5186, 3
        %v5311 = vsel %vm4506, %v5309, %v5310
        %v5312 = vrot.slane %v5187, 3
        %v5313 = vsel %vm4506, %v5310, %v5312
        %v5314 = vrot.slane %v5188, 3
        %v5315 = vrot.slane %v5189, 3
        %v5316 = vsel %vm4506, %v5314, %v5315
        %v5317 = vrot.slane %v5190, 3
        %v5318 = vsel %vm4506, %v5315, %v5317
        %v5351 = vadd.f32 %v5107, %v5241
        %v5352 = vadd.f32 %v5108, %v5243
        %v5353 = vadd.f32 %v5109, %v5246
        %v5354 = vadd.f32 %v5110, %v5248
        %v5355 = vadd.f32 %v5111, %v5251
        %v5356 = vadd.f32 %v5112, %v5253
        %v5357 = vadd.f32 %v5113, %v5256
        %v5358 = vadd.f32 %v5114, %v5258
        %v5359 = vadd.f32 %v5115, %v5261
        %v5360 = vadd.f32 %v5116, %v5263
        %v5361 = vadd.f32 %v5117, %v5266
        %v5362 = vadd.f32 %v5118, %v5268
        %v5363 = vadd.f32 %v5119, %v5271
        %v5364 = vadd.f32 %v5120, %v5273
        %v5365 = vadd.f32 %v5121, %v5276
        %v5366 = vadd.f32 %v5122, %v5278
        %v5367 = vadd.f32 %v5123, %v5281
        %v5368 = vadd.f32 %v5124, %v5283
        %v5369 = vadd.f32 %v5125, %v5286
        %v5370 = vadd.f32 %v5126, %v5288
        %v5371 = vadd.f32 %v5127, %v5291
        %v5372 = vadd.f32 %v5128, %v5293
        %v5373 = vadd.f32 %v5129, %v5296
        %v5374 = vadd.f32 %v5130, %v5298
        %v5375 = vadd.f32 %v5131, %v5301
        %v5376 = vadd.f32 %v5132, %v5303
        %v5377 = vadd.f32 %v5133, %v5306
        %v5378 = vadd.f32 %v5134, %v5308
        %v5379 = vadd.f32 %v5135, %v5311
        %v5380 = vadd.f32 %v5136, %v5313
        %v5381 = vadd.f32 %v5137, %v5316
        %v5382 = vadd.f32 %v5138, %v5318
        %v5383 = vlaneseq
        %v5384 = vshrl.u32 %v5383, 7
        %v5385 = vsub.s32 3, %v5384
        %v5386 = vrot.slane %v541, %v5385
        %v5387 = vmul.f32 %v483, %v5386
        %v5388 = vmul.f32 %v484, %v5386
        %v5389 = vmul.f32 %v485, %v5386
        %v5390 = vmul.f32 %v486, %v5386
        %v5391 = vmul.f32 %v487, %v5386
        %v5392 = vmul.f32 %v488, %v5386
        %v5393 = vmul.f32 %v489, %v5386
        %v5394 = vmul.f32 %v490, %v5386
        %v5395 = vmul.f32 %v491, %v5386
        %v5396 = vmul.f32 %v492, %v5386
        %v5397 = vmul.f32 %v493, %v5386
        %v5398 = vmul.f32 %v494, %v5386
        %v5399 = vmul.f32 %v495, %v5386
        %v5400 = vmul.f32 %v496, %v5386
        %v5401 = vmul.f32 %v497, %v5386
        %v5402 = vmul.f32 %v498, %v5386
        %v5403 = vmul.f32 %v499, %v5386
        %v5404 = vmul.f32 %v500, %v5386
        %v5405 = vmul.f32 %v501, %v5386
        %v5406 = vmul.f32 %v502, %v5386
        %v5407 = vmul.f32 %v503, %v5386
        %v5408 = vmul.f32 %v504, %v5386
        %v5409 = vmul.f32 %v505, %v5386
        %v5410 = vmul.f32 %v506, %v5386
        %v5411 = vmul.f32 %v507, %v5386
        %v5412 = vmul.f32 %v508, %v5386
        %v5413 = vmul.f32 %v509, %v5386
        %v5414 = vmul.f32 %v510, %v5386
        %v5415 = vmul.f32 %v511, %v5386
        %v5416 = vmul.f32 %v512, %v5386
        %v5417 = vmul.f32 %v513, %v5386
        %v5418 = vmul.f32 %v514, %v5386
        %v5419 = vmul.f32 %v515, %v5386
        %v5420 = vmul.f32 %v516, %v5386
        %v5421 = vmul.f32 %v517, %v5386
        %v5422 = vmul.f32 %v518, %v5386
        %v5423 = vmul.f32 %v519, %v5386
        %v5424 = vmul.f32 %v520, %v5386
        %v5425 = vmul.f32 %v521, %v5386
        %v5426 = vmul.f32 %v522, %v5386
        %v5427 = vmul.f32 %v523, %v5386
        %v5428 = vmul.f32 %v524, %v5386
        %v5429 = vmul.f32 %v525, %v5386
        %v5430 = vmul.f32 %v526, %v5386
        %v5431 = vmul.f32 %v527, %v5386
        %v5432 = vmul.f32 %v528, %v5386
        %v5433 = vmul.f32 %v529, %v5386
        %v5434 = vmul.f32 %v530, %v5386
        %v5483 = vrot.slane %v5387, 3
        %v5484 = vrot.slane %v5388, 3
        %v5485 = vsel %vm4506, %v5483, %v5484
        %v5486 = vrot.slane %v5389, 3
        %v5487 = vsel %vm4506, %v5484, %v5486
        %v5488 = vrot.slane %v5390, 3
        %v5489 = vrot.slane %v5391, 3
        %v5490 = vsel %vm4506, %v5488, %v5489
        %v5491 = vrot.slane %v5392, 3
        %v5492 = vsel %vm4506, %v5489, %v5491
        %v5493 = vrot.slane %v5393, 3
        %v5494 = vrot.slane %v5394, 3
        %v5495 = vsel %vm4506, %v5493, %v5494
        %v5496 = vrot.slane %v5395, 3
        %v5497 = vsel %vm4506, %v5494, %v5496
        %v5498 = vrot.slane %v5396, 3
        %v5499 = vrot.slane %v5397, 3
        %v5500 = vsel %vm4506, %v5498, %v5499
        %v5501 = vrot.slane %v5398, 3
        %v5502 = vsel %vm4506, %v5499, %v5501
        %v5503 = vrot.slane %v5399, 3
        %v5504 = vrot.slane %v5400, 3
        %v5505 = vsel %vm4506, %v5503, %v5504
        %v5506 = vrot.slane %v5401, 3
        %v5507 = vsel %vm4506, %v5504, %v5506
        %v5508 = vrot.slane %v5402, 3
        %v5509 = vrot.slane %v5403, 3
        %v5510 = vsel %vm4506, %v5508, %v5509
        %v5511 = vrot.slane %v5404, 3
        %v5512 = vsel %vm4506, %v5509, %v5511
        %v5513 = vrot.slane %v5405, 3
        %v5514 = vrot.slane %v5406, 3
        %v5515 = vsel %vm4506, %v5513, %v5514
        %v5516 = vrot.slane %v5407, 3
        %v5517 = vsel %vm4506, %v5514, %v5516
        %v5518 = vrot.slane %v5408, 3
        %v5519 = vrot.slane %v5409, 3
        %v5520 = vsel %vm4506, %v5518, %v5519
        %v5521 = vrot.slane %v5410, 3
        %v5522 = vsel %vm4506, %v5519, %v5521
        %v5523 = vrot.slane %v5411, 3
        %v5524 = vrot.slane %v5412, 3
        %v5525 = vsel %vm4506, %v5523, %v5524
        %v5526 = vrot.slane %v5413, 3
        %v5527 = vsel %vm4506, %v5524, %v5526
        %v5528 = vrot.slane %v5414, 3
        %v5529 = vrot.slane %v5415, 3
        %v5530 = vsel %vm4506, %v5528, %v5529
        %v5531 = vrot.slane %v5416, 3
        %v5532 = vsel %vm4506, %v5529, %v5531
        %v5533 = vrot.slane %v5417, 3
        %v5534 = vrot.slane %v5418, 3
        %v5535 = vsel %vm4506, %v5533, %v5534
        %v5536 = vrot.slane %v5419, 3
        %v5537 = vsel %vm4506, %v5534, %v5536
        %v5538 = vrot.slane %v5420, 3
        %v5539 = vrot.slane %v5421, 3
        %v5540 = vsel %vm4506, %v5538, %v5539
        %v5541 = vrot.slane %v5422, 3
        %v5542 = vsel %vm4506, %v5539, %v5541
        %v5543 = vrot.slane %v5423, 3
        %v5544 = vrot.slane %v5424, 3
        %v5545 = vsel %vm4506, %v5543, %v5544
        %v5546 = vrot.slane %v5425, 3
        %v5547 = vsel %vm4506, %v5544, %v5546
        %v5548 = vrot.slane %v5426, 3
        %v5549 = vrot.slane %v5427, 3
        %v5550 = vsel %vm4506, %v5548, %v5549
        %v5551 = vrot.slane %v5428, 3
        %v5552 = vsel %vm4506, %v5549, %v5551
        %v5553 = vrot.slane %v5429, 3
        %v5554 = vrot.slane %v5430, 3
        %v5555 = vsel %vm4506, %v5553, %v5554
        %v5556 = vrot.slane %v5431, 3
        %v5557 = vsel %vm4506, %v5554, %v5556
        %v5558 = vrot.slane %v5432, 3
        %v5559 = vrot.slane %v5433, 3
        %v5560 = vsel %vm4506, %v5558, %v5559
        %v5561 = vrot.slane %v5434, 3
        %v5562 = vsel %vm4506, %v5559, %v5561
        %v5595 = vadd.f32 %v5351, %v5485
        %v5596 = vadd.f32 %v5352, %v5487
        %v5597 = vadd.f32 %v5353, %v5490
        %v5598 = vadd.f32 %v5354, %v5492
        %v5599 = vadd.f32 %v5355, %v5495
        %v5600 = vadd.f32 %v5356, %v5497
        %v5601 = vadd.f32 %v5357, %v5500
        %v5602 = vadd.f32 %v5358, %v5502
        %v5603 = vadd.f32 %v5359, %v5505
        %v5604 = vadd.f32 %v5360, %v5507
        %v5605 = vadd.f32 %v5361, %v5510
        %v5606 = vadd.f32 %v5362, %v5512
        %v5607 = vadd.f32 %v5363, %v5515
        %v5608 = vadd.f32 %v5364, %v5517
        %v5609 = vadd.f32 %v5365, %v5520
        %v5610 = vadd.f32 %v5366, %v5522
        %v5611 = vadd.f32 %v5367, %v5525
        %v5612 = vadd.f32 %v5368, %v5527
        %v5613 = vadd.f32 %v5369, %v5530
        %v5614 = vadd.f32 %v5370, %v5532
        %v5615 = vadd.f32 %v5371, %v5535
        %v5616 = vadd.f32 %v5372, %v5537
        %v5617 = vadd.f32 %v5373, %v5540
        %v5618 = vadd.f32 %v5374, %v5542
        %v5619 = vadd.f32 %v5375, %v5545
        %v5620 = vadd.f32 %v5376, %v5547
        %v5621 = vadd.f32 %v5377, %v5550
        %v5622 = vadd.f32 %v5378, %v5552
        %v5623 = vadd.f32 %v5379, %v5555
        %v5624 = vadd.f32 %v5380, %v5557
        %v5625 = vadd.f32 %v5381, %v5560
        %v5626 = vadd.f32 %v5382, %v5562
        %v5627 = vlaneseq
        %v5628 = vshrl.u32 %v5627, 7
        %v5629 = vsub.s32 3, %v5628
        %v5630 = vrot.slane %v542, %v5629
        %v5631 = vmul.f32 %v486, %v5630
        %v5632 = vmul.f32 %v487, %v5630
        %v5633 = vmul.f32 %v488, %v5630
        %v5634 = vmul.f32 %v489, %v5630
        %v5635 = vmul.f32 %v490, %v5630
        %v5636 = vmul.f32 %v491, %v5630
        %v5637 = vmul.f32 %v492, %v5630
        %v5638 = vmul.f32 %v493, %v5630
        %v5639 = vmul.f32 %v494, %v5630
        %v5640 = vmul.f32 %v495, %v5630
        %v5641 = vmul.f32 %v496, %v5630
        %v5642 = vmul.f32 %v497, %v5630
        %v5643 = vmul.f32 %v498, %v5630
        %v5644 = vmul.f32 %v499, %v5630
        %v5645 = vmul.f32 %v500, %v5630
        %v5646 = vmul.f32 %v501, %v5630
        %v5647 = vmul.f32 %v502, %v5630
        %v5648 = vmul.f32 %v503, %v5630
        %v5649 = vmul.f32 %v504, %v5630
        %v5650 = vmul.f32 %v505, %v5630
        %v5651 = vmul.f32 %v506, %v5630
        %v5652 = vmul.f32 %v507, %v5630
        %v5653 = vmul.f32 %v508, %v5630
        %v5654 = vmul.f32 %v509, %v5630
        %v5655 = vmul.f32 %v510, %v5630
        %v5656 = vmul.f32 %v511, %v5630
        %v5657 = vmul.f32 %v512, %v5630
        %v5658 = vmul.f32 %v513, %v5630
        %v5659 = vmul.f32 %v514, %v5630
        %v5660 = vmul.f32 %v515, %v5630
        %v5661 = vmul.f32 %v516, %v5630
        %v5662 = vmul.f32 %v517, %v5630
        %v5663 = vmul.f32 %v518, %v5630
        %v5664 = vmul.f32 %v519, %v5630
        %v5665 = vmul.f32 %v520, %v5630
        %v5666 = vmul.f32 %v521, %v5630
        %v5667 = vmul.f32 %v522, %v5630
        %v5668 = vmul.f32 %v523, %v5630
        %v5669 = vmul.f32 %v524, %v5630
        %v5670 = vmul.f32 %v525, %v5630
        %v5671 = vmul.f32 %v526, %v5630
        %v5672 = vmul.f32 %v527, %v5630
        %v5673 = vmul.f32 %v528, %v5630
        %v5674 = vmul.f32 %v529, %v5630
        %v5675 = vmul.f32 %v530, %v5630
        %v5676 = vmul.f32 %v531, %v5630
        %v5677 = vmul.f32 %v532, %v5630
        %v5678 = vmul.f32 %v533, %v5630
        %v5727 = vrot.slane %v5631, 3
        %v5728 = vrot.slane %v5632, 3
        %v5729 = vsel %vm4506, %v5727, %v5728
        %v5730 = vrot.slane %v5633, 3
        %v5731 = vsel %vm4506, %v5728, %v5730
        %v5732 = vrot.slane %v5634, 3
        %v5733 = vrot.slane %v5635, 3
        %v5734 = vsel %vm4506, %v5732, %v5733
        %v5735 = vrot.slane %v5636, 3
        %v5736 = vsel %vm4506, %v5733, %v5735
        %v5737 = vrot.slane %v5637, 3
        %v5738 = vrot.slane %v5638, 3
        %v5739 = vsel %vm4506, %v5737, %v5738
        %v5740 = vrot.slane %v5639, 3
        %v5741 = vsel %vm4506, %v5738, %v5740
        %v5742 = vrot.slane %v5640, 3
        %v5743 = vrot.slane %v5641, 3
        %v5744 = vsel %vm4506, %v5742, %v5743
        %v5745 = vrot.slane %v5642, 3
        %v5746 = vsel %vm4506, %v5743, %v5745
        %v5747 = vrot.slane %v5643, 3
        %v5748 = vrot.slane %v5644, 3
        %v5749 = vsel %vm4506, %v5747, %v5748
        %v5750 = vrot.slane %v5645, 3
        %v5751 = vsel %vm4506, %v5748, %v5750
        %v5752 = vrot.slane %v5646, 3
        %v5753 = vrot.slane %v5647, 3
        %v5754 = vsel %vm4506, %v5752, %v5753
        %v5755 = vrot.slane %v5648, 3
        %v5756 = vsel %vm4506, %v5753, %v5755
        %v5757 = vrot.slane %v5649, 3
        %v5758 = vrot.slane %v5650, 3
        %v5759 = vsel %vm4506, %v5757, %v5758
        %v5760 = vrot.slane %v5651, 3
        %v5761 = vsel %vm4506, %v5758, %v5760
        %v5762 = vrot.slane %v5652, 3
        %v5763 = vrot.slane %v5653, 3
        %v5764 = vsel %vm4506, %v5762, %v5763
        %v5765 = vrot.slane %v5654, 3
        %v5766 = vsel %vm4506, %v5763, %v5765
        %v5767 = vrot.slane %v5655, 3
        %v5768 = vrot.slane %v5656, 3
        %v5769 = vsel %vm4506, %v5767, %v5768
        %v5770 = vrot.slane %v5657, 3
        %v5771 = vsel %vm4506, %v5768, %v5770
        %v5772 = vrot.slane %v5658, 3
        %v5773 = vrot.slane %v5659, 3
        %v5774 = vsel %vm4506, %v5772, %v5773
        %v5775 = vrot.slane %v5660, 3
        %v5776 = vsel %vm4506, %v5773, %v5775
        %v5777 = vrot.slane %v5661, 3
        %v5778 = vrot.slane %v5662, 3
        %v5779 = vsel %vm4506, %v5777, %v5778
        %v5780 = vrot.slane %v5663, 3
        %v5781 = vsel %vm4506, %v5778, %v5780
        %v5782 = vrot.slane %v5664, 3
        %v5783 = vrot.slane %v5665, 3
        %v5784 = vsel %vm4506, %v5782, %v5783
        %v5785 = vrot.slane %v5666, 3
        %v5786 = vsel %vm4506, %v5783, %v5785
        %v5787 = vrot.slane %v5667, 3
        %v5788 = vrot.slane %v5668, 3
        %v5789 = vsel %vm4506, %v5787, %v5788
        %v5790 = vrot.slane %v5669, 3
        %v5791 = vsel %vm4506, %v5788, %v5790
        %v5792 = vrot.slane %v5670, 3
        %v5793 = vrot.slane %v5671, 3
        %v5794 = vsel %vm4506, %v5792, %v5793
        %v5795 = vrot.slane %v5672, 3
        %v5796 = vsel %vm4506, %v5793, %v5795
        %v5797 = vrot.slane %v5673, 3
        %v5798 = vrot.slane %v5674, 3
        %v5799 = vsel %vm4506, %v5797, %v5798
        %v5800 = vrot.slane %v5675, 3
        %v5801 = vsel %vm4506, %v5798, %v5800
        %v5802 = vrot.slane %v5676, 3
        %v5803 = vrot.slane %v5677, 3
        %v5804 = vsel %vm4506, %v5802, %v5803
        %v5805 = vrot.slane %v5678, 3
        %v5806 = vsel %vm4506, %v5803, %v5805
        %v5839 = vadd.f32 %v5595, %v5729
        %v5840 = vadd.f32 %v5596, %v5731
        %v5841 = vadd.f32 %v5597, %v5734
        %v5842 = vadd.f32 %v5598, %v5736
        %v5843 = vadd.f32 %v5599, %v5739
        %v5844 = vadd.f32 %v5600, %v5741
        %v5845 = vadd.f32 %v5601, %v5744
        %v5846 = vadd.f32 %v5602, %v5746
        %v5847 = vadd.f32 %v5603, %v5749
        %v5848 = vadd.f32 %v5604, %v5751
        %v5849 = vadd.f32 %v5605, %v5754
        %v5850 = vadd.f32 %v5606, %v5756
        %v5851 = vadd.f32 %v5607, %v5759
        %v5852 = vadd.f32 %v5608, %v5761
        %v5853 = vadd.f32 %v5609, %v5764
        %v5854 = vadd.f32 %v5610, %v5766
        %v5855 = vadd.f32 %v5611, %v5769
        %v5856 = vadd.f32 %v5612, %v5771
        %v5857 = vadd.f32 %v5613, %v5774
        %v5858 = vadd.f32 %v5614, %v5776
        %v5859 = vadd.f32 %v5615, %v5779
        %v5860 = vadd.f32 %v5616, %v5781
        %v5861 = vadd.f32 %v5617, %v5784
        %v5862 = vadd.f32 %v5618, %v5786
        %v5863 = vadd.f32 %v5619, %v5789
        %v5864 = vadd.f32 %v5620, %v5791
        %v5865 = vadd.f32 %v5621, %v5794
        %v5866 = vadd.f32 %v5622, %v5796
        %v5867 = vadd.f32 %v5623, %v5799
        %v5868 = vadd.f32 %v5624, %v5801
        %v5869 = vadd.f32 %v5625, %v5804
        %v5870 = vadd.f32 %v5626, %v5806
        %v5871 = vlaneseq
        %v5872 = vshrl.u32 %v5871, 7
        %v5873 = vsub.s32 3, %v5872
        %v5874 = vrot.slane %v543, %v5873
        %v5875 = vmul.f32 %v489, %v5874
        %v5876 = vmul.f32 %v490, %v5874
        %v5877 = vmul.f32 %v491, %v5874
        %v5878 = vmul.f32 %v492, %v5874
        %v5879 = vmul.f32 %v493, %v5874
        %v5880 = vmul.f32 %v494, %v5874
        %v5881 = vmul.f32 %v495, %v5874
        %v5882 = vmul.f32 %v496, %v5874
        %v5883 = vmul.f32 %v497, %v5874
        %v5884 = vmul.f32 %v498, %v5874
        %v5885 = vmul.f32 %v499, %v5874
        %v5886 = vmul.f32 %v500, %v5874
        %v5887 = vmul.f32 %v501, %v5874
        %v5888 = vmul.f32 %v502, %v5874
        %v5889 = vmul.f32 %v503, %v5874
        %v5890 = vmul.f32 %v504, %v5874
        %v5891 = vmul.f32 %v505, %v5874
        %v5892 = vmul.f32 %v506, %v5874
        %v5893 = vmul.f32 %v507, %v5874
        %v5894 = vmul.f32 %v508, %v5874
        %v5895 = vmul.f32 %v509, %v5874
        %v5896 = vmul.f32 %v510, %v5874
        %v5897 = vmul.f32 %v511, %v5874
        %v5898 = vmul.f32 %v512, %v5874
        %v5899 = vmul.f32 %v513, %v5874
        %v5900 = vmul.f32 %v514, %v5874
        %v5901 = vmul.f32 %v515, %v5874
        %v5902 = vmul.f32 %v516, %v5874
        %v5903 = vmul.f32 %v517, %v5874
        %v5904 = vmul.f32 %v518, %v5874
        %v5905 = vmul.f32 %v519, %v5874
        %v5906 = vmul.f32 %v520, %v5874
        %v5907 = vmul.f32 %v521, %v5874
        %v5908 = vmul.f32 %v522, %v5874
        %v5909 = vmul.f32 %v523, %v5874
        %v5910 = vmul.f32 %v524, %v5874
        %v5911 = vmul.f32 %v525, %v5874
        %v5912 = vmul.f32 %v526, %v5874
        %v5913 = vmul.f32 %v527, %v5874
        %v5914 = vmul.f32 %v528, %v5874
        %v5915 = vmul.f32 %v529, %v5874
        %v5916 = vmul.f32 %v530, %v5874
        %v5917 = vmul.f32 %v531, %v5874
        %v5918 = vmul.f32 %v532, %v5874
        %v5919 = vmul.f32 %v533, %v5874
        %v5920 = vmul.f32 %v534, %v5874
        %v5921 = vmul.f32 %v535, %v5874
        %v5922 = vmul.f32 %v536, %v5874
        %v5971 = vrot.slane %v5875, 3
        %v5972 = vrot.slane %v5876, 3
        %v5973 = vsel %vm4506, %v5971, %v5972
        %v5974 = vrot.slane %v5877, 3
        %v5975 = vsel %vm4506, %v5972, %v5974
        %v5976 = vrot.slane %v5878, 3
        %v5977 = vrot.slane %v5879, 3
        %v5978 = vsel %vm4506, %v5976, %v5977
        %v5979 = vrot.slane %v5880, 3
        %v5980 = vsel %vm4506, %v5977, %v5979
        %v5981 = vrot.slane %v5881, 3
        %v5982 = vrot.slane %v5882, 3
        %v5983 = vsel %vm4506, %v5981, %v5982
        %v5984 = vrot.slane %v5883, 3
        %v5985 = vsel %vm4506, %v5982, %v5984
        %v5986 = vrot.slane %v5884, 3
        %v5987 = vrot.slane %v5885, 3
        %v5988 = vsel %vm4506, %v5986, %v5987
        %v5989 = vrot.slane %v5886, 3
        %v5990 = vsel %vm4506, %v5987, %v5989
        %v5991 = vrot.slane %v5887, 3
        %v5992 = vrot.slane %v5888, 3
        %v5993 = vsel %vm4506, %v5991, %v5992
        %v5994 = vrot.slane %v5889, 3
        %v5995 = vsel %vm4506, %v5992, %v5994
        %v5996 = vrot.slane %v5890, 3
        %v5997 = vrot.slane %v5891, 3
        %v5998 = vsel %vm4506, %v5996, %v5997
        %v5999 = vrot.slane %v5892, 3
        %v6000 = vsel %vm4506, %v5997, %v5999
        %v6001 = vrot.slane %v5893, 3
        %v6002 = vrot.slane %v5894, 3
        %v6003 = vsel %vm4506, %v6001, %v6002
        %v6004 = vrot.slane %v5895, 3
        %v6005 = vsel %vm4506, %v6002, %v6004
        %v6006 = vrot.slane %v5896, 3
        %v6007 = vrot.slane %v5897, 3
        %v6008 = vsel %vm4506, %v6006, %v6007
        %v6009 = vrot.slane %v5898, 3
        %v6010 = vsel %vm4506, %v6007, %v6009
        %v6011 = vrot.slane %v5899, 3
        %v6012 = vrot.slane %v5900, 3
        %v6013 = vsel %vm4506, %v6011, %v6012
        %v6014 = vrot.slane %v5901, 3
        %v6015 = vsel %vm4506, %v6012, %v6014
        %v6016 = vrot.slane %v5902, 3
        %v6017 = vrot.slane %v5903, 3
        %v6018 = vsel %vm4506, %v6016, %v6017
        %v6019 = vrot.slane %v5904, 3
        %v6020 = vsel %vm4506, %v6017, %v6019
        %v6021 = vrot.slane %v5905, 3
        %v6022 = vrot.slane %v5906, 3
        %v6023 = vsel %vm4506, %v6021, %v6022
        %v6024 = vrot.slane %v5907, 3
        %v6025 = vsel %vm4506, %v6022, %v6024
        %v6026 = vrot.slane %v5908, 3
        %v6027 = vrot.slane %v5909, 3
        %v6028 = vsel %vm4506, %v6026, %v6027
        %v6029 = vrot.slane %v5910, 3
        %v6030 = vsel %vm4506, %v6027, %v6029
        %v6031 = vrot.slane %v5911, 3
        %v6032 = vrot.slane %v5912, 3
        %v6033 = vsel %vm4506, %v6031, %v6032
        %v6034 = vrot.slane %v5913, 3
        %v6035 = vsel %vm4506, %v6032, %v6034
        %v6036 = vrot.slane %v5914, 3
        %v6037 = vrot.slane %v5915, 3
        %v6038 = vsel %vm4506, %v6036, %v6037
        %v6039 = vrot.slane %v5916, 3
        %v6040 = vsel %vm4506, %v6037, %v6039
        %v6041 = vrot.slane %v5917, 3
        %v6042 = vrot.slane %v5918, 3
        %v6043 = vsel %vm4506, %v6041, %v6042
        %v6044 = vrot.slane %v5919, 3
        %v6045 = vsel %vm4506, %v6042, %v6044
        %v6046 = vrot.slane %v5920, 3
        %v6047 = vrot.slane %v5921, 3
        %v6048 = vsel %vm4506, %v6046, %v6047
        %v6049 = vrot.slane %v5922, 3
        %v6050 = vsel %vm4506, %v6047, %v6049
        %v6083 = vadd.f32 %v5839, %v5973
        %v6084 = vadd.f32 %v5840, %v5975
        %v6085 = vadd.f32 %v5841, %v5978
        %v6086 = vadd.f32 %v5842, %v5980
        %v6087 = vadd.f32 %v5843, %v5983
        %v6088 = vadd.f32 %v5844, %v5985
        %v6089 = vadd.f32 %v5845, %v5988
        %v6090 = vadd.f32 %v5846, %v5990
        %v6091 = vadd.f32 %v5847, %v5993
        %v6092 = vadd.f32 %v5848, %v5995
        %v6093 = vadd.f32 %v5849, %v5998
        %v6094 = vadd.f32 %v5850, %v6000
        %v6095 = vadd.f32 %v5851, %v6003
        %v6096 = vadd.f32 %v5852, %v6005
        %v6097 = vadd.f32 %v5853, %v6008
        %v6098 = vadd.f32 %v5854, %v6010
        %v6099 = vadd.f32 %v5855, %v6013
        %v6100 = vadd.f32 %v5856, %v6015
        %v6101 = vadd.f32 %v5857, %v6018
        %v6102 = vadd.f32 %v5858, %v6020
        %v6103 = vadd.f32 %v5859, %v6023
        %v6104 = vadd.f32 %v5860, %v6025
        %v6105 = vadd.f32 %v5861, %v6028
        %v6106 = vadd.f32 %v5862, %v6030
        %v6107 = vadd.f32 %v5863, %v6033
        %v6108 = vadd.f32 %v5864, %v6035
        %v6109 = vadd.f32 %v5865, %v6038
        %v6110 = vadd.f32 %v5866, %v6040
        %v6111 = vadd.f32 %v5867, %v6043
        %v6112 = vadd.f32 %v5868, %v6045
        %v6113 = vadd.f32 %v5869, %v6048
        %v6114 = vadd.f32 %v5870, %v6050
        %v6115 = vlaneseq
        %v6116 = vshrl.u32 %v6115, 7
        %v6117 = vsub.s32 4, %v6116
        %v6118 = vrot.slane %v537, %v6117
        %v6119 = vmul.f32 %v471, %v6118
        %v6120 = vmul.f32 %v472, %v6118
        %v6121 = vmul.f32 %v473, %v6118
        %v6122 = vmul.f32 %v474, %v6118
        %v6123 = vmul.f32 %v475, %v6118
        %v6124 = vmul.f32 %v476, %v6118
        %v6125 = vmul.f32 %v477, %v6118
        %v6126 = vmul.f32 %v478, %v6118
        %v6127 = vmul.f32 %v479, %v6118
        %v6128 = vmul.f32 %v480, %v6118
        %v6129 = vmul.f32 %v481, %v6118
        %v6130 = vmul.f32 %v482, %v6118
        %v6131 = vmul.f32 %v483, %v6118
        %v6132 = vmul.f32 %v484, %v6118
        %v6133 = vmul.f32 %v485, %v6118
        %v6134 = vmul.f32 %v486, %v6118
        %v6135 = vmul.f32 %v487, %v6118
        %v6136 = vmul.f32 %v488, %v6118
        %v6137 = vmul.f32 %v489, %v6118
        %v6138 = vmul.f32 %v490, %v6118
        %v6139 = vmul.f32 %v491, %v6118
        %v6140 = vmul.f32 %v492, %v6118
        %v6141 = vmul.f32 %v493, %v6118
        %v6142 = vmul.f32 %v494, %v6118
        %v6143 = vmul.f32 %v495, %v6118
        %v6144 = vmul.f32 %v496, %v6118
        %v6145 = vmul.f32 %v497, %v6118
        %v6146 = vmul.f32 %v498, %v6118
        %v6147 = vmul.f32 %v499, %v6118
        %v6148 = vmul.f32 %v500, %v6118
        %v6149 = vmul.f32 %v501, %v6118
        %v6150 = vmul.f32 %v502, %v6118
        %v6151 = vmul.f32 %v503, %v6118
        %v6152 = vmul.f32 %v504, %v6118
        %v6153 = vmul.f32 %v505, %v6118
        %v6154 = vmul.f32 %v506, %v6118
        %v6155 = vmul.f32 %v507, %v6118
        %v6156 = vmul.f32 %v508, %v6118
        %v6157 = vmul.f32 %v509, %v6118
        %v6158 = vmul.f32 %v510, %v6118
        %v6159 = vmul.f32 %v511, %v6118
        %v6160 = vmul.f32 %v512, %v6118
        %v6161 = vmul.f32 %v513, %v6118
        %v6162 = vmul.f32 %v514, %v6118
        %v6163 = vmul.f32 %v515, %v6118
        %v6164 = vmul.f32 %v516, %v6118
        %v6165 = vmul.f32 %v517, %v6118
        %v6166 = vmul.f32 %v518, %v6118
        %vm6215 = vcmask 1043456
        %v6216 = vrot.slane %v6119, 4
        %v6217 = vrot.slane %v6120, 4
        %v6218 = vsel %vm6215, %v6216, %v6217
        %v6219 = vrot.slane %v6121, 4
        %v6220 = vsel %vm6215, %v6217, %v6219
        %v6221 = vrot.slane %v6122, 4
        %v6222 = vrot.slane %v6123, 4
        %v6223 = vsel %vm6215, %v6221, %v6222
        %v6224 = vrot.slane %v6124, 4
        %v6225 = vsel %vm6215, %v6222, %v6224
        %v6226 = vrot.slane %v6125, 4
        %v6227 = vrot.slane %v6126, 4
        %v6228 = vsel %vm6215, %v6226, %v6227
        %v6229 = vrot.slane %v6127, 4
        %v6230 = vsel %vm6215, %v6227, %v6229
        %v6231 = vrot.slane %v6128, 4
        %v6232 = vrot.slane %v6129, 4
        %v6233 = vsel %vm6215, %v6231, %v6232
        %v6234 = vrot.slane %v6130, 4
        %v6235 = vsel %vm6215, %v6232, %v6234
        %v6236 = vrot.slane %v6131, 4
        %v6237 = vrot.slane %v6132, 4
        %v6238 = vsel %vm6215, %v6236, %v6237
        %v6239 = vrot.slane %v6133, 4
        %v6240 = vsel %vm6215, %v6237, %v6239
        %v6241 = vrot.slane %v6134, 4
        %v6242 = vrot.slane %v6135, 4
        %v6243 = vsel %vm6215, %v6241, %v6242
        %v6244 = vrot.slane %v6136, 4
        %v6245 = vsel %vm6215, %v6242, %v6244
        %v6246 = vrot.slane %v6137, 4
        %v6247 = vrot.slane %v6138, 4
        %v6248 = vsel %vm6215, %v6246, %v6247
        %v6249 = vrot.slane %v6139, 4
        %v6250 = vsel %vm6215, %v6247, %v6249
        %v6251 = vrot.slane %v6140, 4
        %v6252 = vrot.slane %v6141, 4
        %v6253 = vsel %vm6215, %v6251, %v6252
        %v6254 = vrot.slane %v6142, 4
        %v6255 = vsel %vm6215, %v6252, %v6254
        %v6256 = vrot.slane %v6143, 4
        %v6257 = vrot.slane %v6144, 4
        %v6258 = vsel %vm6215, %v6256, %v6257
        %v6259 = vrot.slane %v6145, 4
        %v6260 = vsel %vm6215, %v6257, %v6259
        %v6261 = vrot.slane %v6146, 4
        %v6262 = vrot.slane %v6147, 4
        %v6263 = vsel %vm6215, %v6261, %v6262
        %v6264 = vrot.slane %v6148, 4
        %v6265 = vsel %vm6215, %v6262, %v6264
        %v6266 = vrot.slane %v6149, 4
        %v6267 = vrot.slane %v6150, 4
        %v6268 = vsel %vm6215, %v6266, %v6267
        %v6269 = vrot.slane %v6151, 4
        %v6270 = vsel %vm6215, %v6267, %v6269
        %v6271 = vrot.slane %v6152, 4
        %v6272 = vrot.slane %v6153, 4
        %v6273 = vsel %vm6215, %v6271, %v6272
        %v6274 = vrot.slane %v6154, 4
        %v6275 = vsel %vm6215, %v6272, %v6274
        %v6276 = vrot.slane %v6155, 4
        %v6277 = vrot.slane %v6156, 4
        %v6278 = vsel %vm6215, %v6276, %v6277
        %v6279 = vrot.slane %v6157, 4
        %v6280 = vsel %vm6215, %v6277, %v6279
        %v6281 = vrot.slane %v6158, 4
        %v6282 = vrot.slane %v6159, 4
        %v6283 = vsel %vm6215, %v6281, %v6282
        %v6284 = vrot.slane %v6160, 4
        %v6285 = vsel %vm6215, %v6282, %v6284
        %v6286 = vrot.slane %v6161, 4
        %v6287 = vrot.slane %v6162, 4
        %v6288 = vsel %vm6215, %v6286, %v6287
        %v6289 = vrot.slane %v6163, 4
        %v6290 = vsel %vm6215, %v6287, %v6289
        %v6291 = vrot.slane %v6164, 4
        %v6292 = vrot.slane %v6165, 4
        %v6293 = vsel %vm6215, %v6291, %v6292
        %v6294 = vrot.slane %v6166, 4
        %v6295 = vsel %vm6215, %v6292, %v6294
        %v6328 = vadd.f32 %v6083, %v6218
        %v6329 = vadd.f32 %v6084, %v6220
        %v6330 = vadd.f32 %v6085, %v6223
        %v6331 = vadd.f32 %v6086, %v6225
        %v6332 = vadd.f32 %v6087, %v6228
        %v6333 = vadd.f32 %v6088, %v6230
        %v6334 = vadd.f32 %v6089, %v6233
        %v6335 = vadd.f32 %v6090, %v6235
        %v6336 = vadd.f32 %v6091, %v6238
        %v6337 = vadd.f32 %v6092, %v6240
        %v6338 = vadd.f32 %v6093, %v6243
        %v6339 = vadd.f32 %v6094, %v6245
        %v6340 = vadd.f32 %v6095, %v6248
        %v6341 = vadd.f32 %v6096, %v6250
        %v6342 = vadd.f32 %v6097, %v6253
        %v6343 = vadd.f32 %v6098, %v6255
        %v6344 = vadd.f32 %v6099, %v6258
        %v6345 = vadd.f32 %v6100, %v6260
        %v6346 = vadd.f32 %v6101, %v6263
        %v6347 = vadd.f32 %v6102, %v6265
        %v6348 = vadd.f32 %v6103, %v6268
        %v6349 = vadd.f32 %v6104, %v6270
        %v6350 = vadd.f32 %v6105, %v6273
        %v6351 = vadd.f32 %v6106, %v6275
        %v6352 = vadd.f32 %v6107, %v6278
        %v6353 = vadd.f32 %v6108, %v6280
        %v6354 = vadd.f32 %v6109, %v6283
        %v6355 = vadd.f32 %v6110, %v6285
        %v6356 = vadd.f32 %v6111, %v6288
        %v6357 = vadd.f32 %v6112, %v6290
        %v6358 = vadd.f32 %v6113, %v6293
        %v6359 = vadd.f32 %v6114, %v6295
        %v6360 = vlaneseq
        %v6361 = vshrl.u32 %v6360, 7
        %v6362 = vsub.s32 4, %v6361
        %v6363 = vrot.slane %v538, %v6362
        %v6364 = vmul.f32 %v474, %v6363
        %v6365 = vmul.f32 %v475, %v6363
        %v6366 = vmul.f32 %v476, %v6363
        %v6367 = vmul.f32 %v477, %v6363
        %v6368 = vmul.f32 %v478, %v6363
        %v6369 = vmul.f32 %v479, %v6363
        %v6370 = vmul.f32 %v480, %v6363
        %v6371 = vmul.f32 %v481, %v6363
        %v6372 = vmul.f32 %v482, %v6363
        %v6373 = vmul.f32 %v483, %v6363
        %v6374 = vmul.f32 %v484, %v6363
        %v6375 = vmul.f32 %v485, %v6363
        %v6376 = vmul.f32 %v486, %v6363
        %v6377 = vmul.f32 %v487, %v6363
        %v6378 = vmul.f32 %v488, %v6363
        %v6379 = vmul.f32 %v489, %v6363
        %v6380 = vmul.f32 %v490, %v6363
        %v6381 = vmul.f32 %v491, %v6363
        %v6382 = vmul.f32 %v492, %v6363
        %v6383 = vmul.f32 %v493, %v6363
        %v6384 = vmul.f32 %v494, %v6363
        %v6385 = vmul.f32 %v495, %v6363
        %v6386 = vmul.f32 %v496, %v6363
        %v6387 = vmul.f32 %v497, %v6363
        %v6388 = vmul.f32 %v498, %v6363
        %v6389 = vmul.f32 %v499, %v6363
        %v6390 = vmul.f32 %v500, %v6363
        %v6391 = vmul.f32 %v501, %v6363
        %v6392 = vmul.f32 %v502, %v6363
        %v6393 = vmul.f32 %v503, %v6363
        %v6394 = vmul.f32 %v504, %v6363
        %v6395 = vmul.f32 %v505, %v6363
        %v6396 = vmul.f32 %v506, %v6363
        %v6397 = vmul.f32 %v507, %v6363
        %v6398 = vmul.f32 %v508, %v6363
        %v6399 = vmul.f32 %v509, %v6363
        %v6400 = vmul.f32 %v510, %v6363
        %v6401 = vmul.f32 %v511, %v6363
        %v6402 = vmul.f32 %v512, %v6363
        %v6403 = vmul.f32 %v513, %v6363
        %v6404 = vmul.f32 %v514, %v6363
        %v6405 = vmul.f32 %v515, %v6363
        %v6406 = vmul.f32 %v516, %v6363
        %v6407 = vmul.f32 %v517, %v6363
        %v6408 = vmul.f32 %v518, %v6363
        %v6409 = vmul.f32 %v519, %v6363
        %v6410 = vmul.f32 %v520, %v6363
        %v6411 = vmul.f32 %v521, %v6363
        %v6460 = vrot.slane %v6364, 4
        %v6461 = vrot.slane %v6365, 4
        %v6462 = vsel %vm6215, %v6460, %v6461
        %v6463 = vrot.slane %v6366, 4
        %v6464 = vsel %vm6215, %v6461, %v6463
        %v6465 = vrot.slane %v6367, 4
        %v6466 = vrot.slane %v6368, 4
        %v6467 = vsel %vm6215, %v6465, %v6466
        %v6468 = vrot.slane %v6369, 4
        %v6469 = vsel %vm6215, %v6466, %v6468
        %v6470 = vrot.slane %v6370, 4
        %v6471 = vrot.slane %v6371, 4
        %v6472 = vsel %vm6215, %v6470, %v6471
        %v6473 = vrot.slane %v6372, 4
        %v6474 = vsel %vm6215, %v6471, %v6473
        %v6475 = vrot.slane %v6373, 4
        %v6476 = vrot.slane %v6374, 4
        %v6477 = vsel %vm6215, %v6475, %v6476
        %v6478 = vrot.slane %v6375, 4
        %v6479 = vsel %vm6215, %v6476, %v6478
        %v6480 = vrot.slane %v6376, 4
        %v6481 = vrot.slane %v6377, 4
        %v6482 = vsel %vm6215, %v6480, %v6481
        %v6483 = vrot.slane %v6378, 4
        %v6484 = vsel %vm6215, %v6481, %v6483
        %v6485 = vrot.slane %v6379, 4
        %v6486 = vrot.slane %v6380, 4
        %v6487 = vsel %vm6215, %v6485, %v6486
        %v6488 = vrot.slane %v6381, 4
        %v6489 = vsel %vm6215, %v6486, %v6488
        %v6490 = vrot.slane %v6382, 4
        %v6491 = vrot.slane %v6383, 4
        %v6492 = vsel %vm6215, %v6490, %v6491
        %v6493 = vrot.slane %v6384, 4
        %v6494 = vsel %vm6215, %v6491, %v6493
        %v6495 = vrot.slane %v6385, 4
        %v6496 = vrot.slane %v6386, 4
        %v6497 = vsel %vm6215, %v6495, %v6496
        %v6498 = vrot.slane %v6387, 4
        %v6499 = vsel %vm6215, %v6496, %v6498
        %v6500 = vrot.slane %v6388, 4
        %v6501 = vrot.slane %v6389, 4
        %v6502 = vsel %vm6215, %v6500, %v6501
        %v6503 = vrot.slane %v6390, 4
        %v6504 = vsel %vm6215, %v6501, %v6503
        %v6505 = vrot.slane %v6391, 4
        %v6506 = vrot.slane %v6392, 4
        %v6507 = vsel %vm6215, %v6505, %v6506
        %v6508 = vrot.slane %v6393, 4
        %v6509 = vsel %vm6215, %v6506, %v6508
        %v6510 = vrot.slane %v6394, 4
        %v6511 = vrot.slane %v6395, 4
        %v6512 = vsel %vm6215, %v6510, %v6511
        %v6513 = vrot.slane %v6396, 4
        %v6514 = vsel %vm6215, %v6511, %v6513
        %v6515 = vrot.slane %v6397, 4
        %v6516 = vrot.slane %v6398, 4
        %v6517 = vsel %vm6215, %v6515, %v6516
        %v6518 = vrot.slane %v6399, 4
        %v6519 = vsel %vm6215, %v6516, %v6518
        %v6520 = vrot.slane %v6400, 4
        %v6521 = vrot.slane %v6401, 4
        %v6522 = vsel %vm6215, %v6520, %v6521
        %v6523 = vrot.slane %v6402, 4
        %v6524 = vsel %vm6215, %v6521, %v6523
        %v6525 = vrot.slane %v6403, 4
        %v6526 = vrot.slane %v6404, 4
        %v6527 = vsel %vm6215, %v6525, %v6526
        %v6528 = vrot.slane %v6405, 4
        %v6529 = vsel %vm6215, %v6526, %v6528
        %v6530 = vrot.slane %v6406, 4
        %v6531 = vrot.slane %v6407, 4
        %v6532 = vsel %vm6215, %v6530, %v6531
        %v6533 = vrot.slane %v6408, 4
        %v6534 = vsel %vm6215, %v6531, %v6533
        %v6535 = vrot.slane %v6409, 4
        %v6536 = vrot.slane %v6410, 4
        %v6537 = vsel %vm6215, %v6535, %v6536
        %v6538 = vrot.slane %v6411, 4
        %v6539 = vsel %vm6215, %v6536, %v6538
        %v6572 = vadd.f32 %v6328, %v6462
        %v6573 = vadd.f32 %v6329, %v6464
        %v6574 = vadd.f32 %v6330, %v6467
        %v6575 = vadd.f32 %v6331, %v6469
        %v6576 = vadd.f32 %v6332, %v6472
        %v6577 = vadd.f32 %v6333, %v6474
        %v6578 = vadd.f32 %v6334, %v6477
        %v6579 = vadd.f32 %v6335, %v6479
        %v6580 = vadd.f32 %v6336, %v6482
        %v6581 = vadd.f32 %v6337, %v6484
        %v6582 = vadd.f32 %v6338, %v6487
        %v6583 = vadd.f32 %v6339, %v6489
        %v6584 = vadd.f32 %v6340, %v6492
        %v6585 = vadd.f32 %v6341, %v6494
        %v6586 = vadd.f32 %v6342, %v6497
        %v6587 = vadd.f32 %v6343, %v6499
        %v6588 = vadd.f32 %v6344, %v6502
        %v6589 = vadd.f32 %v6345, %v6504
        %v6590 = vadd.f32 %v6346, %v6507
        %v6591 = vadd.f32 %v6347, %v6509
        %v6592 = vadd.f32 %v6348, %v6512
        %v6593 = vadd.f32 %v6349, %v6514
        %v6594 = vadd.f32 %v6350, %v6517
        %v6595 = vadd.f32 %v6351, %v6519
        %v6596 = vadd.f32 %v6352, %v6522
        %v6597 = vadd.f32 %v6353, %v6524
        %v6598 = vadd.f32 %v6354, %v6527
        %v6599 = vadd.f32 %v6355, %v6529
        %v6600 = vadd.f32 %v6356, %v6532
        %v6601 = vadd.f32 %v6357, %v6534
        %v6602 = vadd.f32 %v6358, %v6537
        %v6603 = vadd.f32 %v6359, %v6539
        %v6604 = vlaneseq
        %v6605 = vshrl.u32 %v6604, 7
        %v6606 = vsub.s32 4, %v6605
        %v6607 = vrot.slane %v539, %v6606
        %v6608 = vmul.f32 %v477, %v6607
        %v6609 = vmul.f32 %v478, %v6607
        %v6610 = vmul.f32 %v479, %v6607
        %v6611 = vmul.f32 %v480, %v6607
        %v6612 = vmul.f32 %v481, %v6607
        %v6613 = vmul.f32 %v482, %v6607
        %v6614 = vmul.f32 %v483, %v6607
        %v6615 = vmul.f32 %v484, %v6607
        %v6616 = vmul.f32 %v485, %v6607
        %v6617 = vmul.f32 %v486, %v6607
        %v6618 = vmul.f32 %v487, %v6607
        %v6619 = vmul.f32 %v488, %v6607
        %v6620 = vmul.f32 %v489, %v6607
        %v6621 = vmul.f32 %v490, %v6607
        %v6622 = vmul.f32 %v491, %v6607
        %v6623 = vmul.f32 %v492, %v6607
        %v6624 = vmul.f32 %v493, %v6607
        %v6625 = vmul.f32 %v494, %v6607
        %v6626 = vmul.f32 %v495, %v6607
        %v6627 = vmul.f32 %v496, %v6607
        %v6628 = vmul.f32 %v497, %v6607
        %v6629 = vmul.f32 %v498, %v6607
        %v6630 = vmul.f32 %v499, %v6607
        %v6631 = vmul.f32 %v500, %v6607
        %v6632 = vmul.f32 %v501, %v6607
        %v6633 = vmul.f32 %v502, %v6607
        %v6634 = vmul.f32 %v503, %v6607
        %v6635 = vmul.f32 %v504, %v6607
        %v6636 = vmul.f32 %v505, %v6607
        %v6637 = vmul.f32 %v506, %v6607
        %v6638 = vmul.f32 %v507, %v6607
        %v6639 = vmul.f32 %v508, %v6607
        %v6640 = vmul.f32 %v509, %v6607
        %v6641 = vmul.f32 %v510, %v6607
        %v6642 = vmul.f32 %v511, %v6607
        %v6643 = vmul.f32 %v512, %v6607
        %v6644 = vmul.f32 %v513, %v6607
        %v6645 = vmul.f32 %v514, %v6607
        %v6646 = vmul.f32 %v515, %v6607
        %v6647 = vmul.f32 %v516, %v6607
        %v6648 = vmul.f32 %v517, %v6607
        %v6649 = vmul.f32 %v518, %v6607
        %v6650 = vmul.f32 %v519, %v6607
        %v6651 = vmul.f32 %v520, %v6607
        %v6652 = vmul.f32 %v521, %v6607
        %v6653 = vmul.f32 %v522, %v6607
        %v6654 = vmul.f32 %v523, %v6607
        %v6655 = vmul.f32 %v524, %v6607
        %v6704 = vrot.slane %v6608, 4
        %v6705 = vrot.slane %v6609, 4
        %v6706 = vsel %vm6215, %v6704, %v6705
        %v6707 = vrot.slane %v6610, 4
        %v6708 = vsel %vm6215, %v6705, %v6707
        %v6709 = vrot.slane %v6611, 4
        %v6710 = vrot.slane %v6612, 4
        %v6711 = vsel %vm6215, %v6709, %v6710
        %v6712 = vrot.slane %v6613, 4
        %v6713 = vsel %vm6215, %v6710, %v6712
        %v6714 = vrot.slane %v6614, 4
        %v6715 = vrot.slane %v6615, 4
        %v6716 = vsel %vm6215, %v6714, %v6715
        %v6717 = vrot.slane %v6616, 4
        %v6718 = vsel %vm6215, %v6715, %v6717
        %v6719 = vrot.slane %v6617, 4
        %v6720 = vrot.slane %v6618, 4
        %v6721 = vsel %vm6215, %v6719, %v6720
        %v6722 = vrot.slane %v6619, 4
        %v6723 = vsel %vm6215, %v6720, %v6722
        %v6724 = vrot.slane %v6620, 4
        %v6725 = vrot.slane %v6621, 4
        %v6726 = vsel %vm6215, %v6724, %v6725
        %v6727 = vrot.slane %v6622, 4
        %v6728 = vsel %vm6215, %v6725, %v6727
        %v6729 = vrot.slane %v6623, 4
        %v6730 = vrot.slane %v6624, 4
        %v6731 = vsel %vm6215, %v6729, %v6730
        %v6732 = vrot.slane %v6625, 4
        %v6733 = vsel %vm6215, %v6730, %v6732
        %v6734 = vrot.slane %v6626, 4
        %v6735 = vrot.slane %v6627, 4
        %v6736 = vsel %vm6215, %v6734, %v6735
        %v6737 = vrot.slane %v6628, 4
        %v6738 = vsel %vm6215, %v6735, %v6737
        %v6739 = vrot.slane %v6629, 4
        %v6740 = vrot.slane %v6630, 4
        %v6741 = vsel %vm6215, %v6739, %v6740
        %v6742 = vrot.slane %v6631, 4
        %v6743 = vsel %vm6215, %v6740, %v6742
        %v6744 = vrot.slane %v6632, 4
        %v6745 = vrot.slane %v6633, 4
        %v6746 = vsel %vm6215, %v6744, %v6745
        %v6747 = vrot.slane %v6634, 4
        %v6748 = vsel %vm6215, %v6745, %v6747
        %v6749 = vrot.slane %v6635, 4
        %v6750 = vrot.slane %v6636, 4
        %v6751 = vsel %vm6215, %v6749, %v6750
        %v6752 = vrot.slane %v6637, 4
        %v6753 = vsel %vm6215, %v6750, %v6752
        %v6754 = vrot.slane %v6638, 4
        %v6755 = vrot.slane %v6639, 4
        %v6756 = vsel %vm6215, %v6754, %v6755
        %v6757 = vrot.slane %v6640, 4
        %v6758 = vsel %vm6215, %v6755, %v6757
        %v6759 = vrot.slane %v6641, 4
        %v6760 = vrot.slane %v6642, 4
        %v6761 = vsel %vm6215, %v6759, %v6760
        %v6762 = vrot.slane %v6643, 4
        %v6763 = vsel %vm6215, %v6760, %v6762
        %v6764 = vrot.slane %v6644, 4
        %v6765 = vrot.slane %v6645, 4
        %v6766 = vsel %vm6215, %v6764, %v6765
        %v6767 = vrot.slane %v6646, 4
        %v6768 = vsel %vm6215, %v6765, %v6767
        %v6769 = vrot.slane %v6647, 4
        %v6770 = vrot.slane %v6648, 4
        %v6771 = vsel %vm6215, %v6769, %v6770
        %v6772 = vrot.slane %v6649, 4
        %v6773 = vsel %vm6215, %v6770, %v6772
        %v6774 = vrot.slane %v6650, 4
        %v6775 = vrot.slane %v6651, 4
        %v6776 = vsel %vm6215, %v6774, %v6775
        %v6777 = vrot.slane %v6652, 4
        %v6778 = vsel %vm6215, %v6775, %v6777
        %v6779 = vrot.slane %v6653, 4
        %v6780 = vrot.slane %v6654, 4
        %v6781 = vsel %vm6215, %v6779, %v6780
        %v6782 = vrot.slane %v6655, 4
        %v6783 = vsel %vm6215, %v6780, %v6782
        %v6816 = vadd.f32 %v6572, %v6706
        %v6817 = vadd.f32 %v6573, %v6708
        %v6818 = vadd.f32 %v6574, %v6711
        %v6819 = vadd.f32 %v6575, %v6713
        %v6820 = vadd.f32 %v6576, %v6716
        %v6821 = vadd.f32 %v6577, %v6718
        %v6822 = vadd.f32 %v6578, %v6721
        %v6823 = vadd.f32 %v6579, %v6723
        %v6824 = vadd.f32 %v6580, %v6726
        %v6825 = vadd.f32 %v6581, %v6728
        %v6826 = vadd.f32 %v6582, %v6731
        %v6827 = vadd.f32 %v6583, %v6733
        %v6828 = vadd.f32 %v6584, %v6736
        %v6829 = vadd.f32 %v6585, %v6738
        %v6830 = vadd.f32 %v6586, %v6741
        %v6831 = vadd.f32 %v6587, %v6743
        %v6832 = vadd.f32 %v6588, %v6746
        %v6833 = vadd.f32 %v6589, %v6748
        %v6834 = vadd.f32 %v6590, %v6751
        %v6835 = vadd.f32 %v6591, %v6753
        %v6836 = vadd.f32 %v6592, %v6756
        %v6837 = vadd.f32 %v6593, %v6758
        %v6838 = vadd.f32 %v6594, %v6761
        %v6839 = vadd.f32 %v6595, %v6763
        %v6840 = vadd.f32 %v6596, %v6766
        %v6841 = vadd.f32 %v6597, %v6768
        %v6842 = vadd.f32 %v6598, %v6771
        %v6843 = vadd.f32 %v6599, %v6773
        %v6844 = vadd.f32 %v6600, %v6776
        %v6845 = vadd.f32 %v6601, %v6778
        %v6846 = vadd.f32 %v6602, %v6781
        %v6847 = vadd.f32 %v6603, %v6783
        %v6848 = vlaneseq
        %v6849 = vshrl.u32 %v6848, 7
        %v6850 = vsub.s32 4, %v6849
        %v6851 = vrot.slane %v540, %v6850
        %v6852 = vmul.f32 %v480, %v6851
        %v6853 = vmul.f32 %v481, %v6851
        %v6854 = vmul.f32 %v482, %v6851
        %v6855 = vmul.f32 %v483, %v6851
        %v6856 = vmul.f32 %v484, %v6851
        %v6857 = vmul.f32 %v485, %v6851
        %v6858 = vmul.f32 %v486, %v6851
        %v6859 = vmul.f32 %v487, %v6851
        %v6860 = vmul.f32 %v488, %v6851
        %v6861 = vmul.f32 %v489, %v6851
        %v6862 = vmul.f32 %v490, %v6851
        %v6863 = vmul.f32 %v491, %v6851
        %v6864 = vmul.f32 %v492, %v6851
        %v6865 = vmul.f32 %v493, %v6851
        %v6866 = vmul.f32 %v494, %v6851
        %v6867 = vmul.f32 %v495, %v6851
        %v6868 = vmul.f32 %v496, %v6851
        %v6869 = vmul.f32 %v497, %v6851
        %v6870 = vmul.f32 %v498, %v6851
        %v6871 = vmul.f32 %v499, %v6851
        %v6872 = vmul.f32 %v500, %v6851
        %v6873 = vmul.f32 %v501, %v6851
        %v6874 = vmul.f32 %v502, %v6851
        %v6875 = vmul.f32 %v503, %v6851
        %v6876 = vmul.f32 %v504, %v6851
        %v6877 = vmul.f32 %v505, %v6851
        %v6878 = vmul.f32 %v506, %v6851
        %v6879 = vmul.f32 %v507, %v6851
        %v6880 = vmul.f32 %v508, %v6851
        %v6881 = vmul.f32 %v509, %v6851
        %v6882 = vmul.f32 %v510, %v6851
        %v6883 = vmul.f32 %v511, %v6851
        %v6884 = vmul.f32 %v512, %v6851
        %v6885 = vmul.f32 %v513, %v6851
        %v6886 = vmul.f32 %v514, %v6851
        %v6887 = vmul.f32 %v515, %v6851
        %v6888 = vmul.f32 %v516, %v6851
        %v6889 = vmul.f32 %v517, %v6851
        %v6890 = vmul.f32 %v518, %v6851
        %v6891 = vmul.f32 %v519, %v6851
        %v6892 = vmul.f32 %v520, %v6851
        %v6893 = vmul.f32 %v521, %v6851
        %v6894 = vmul.f32 %v522, %v6851
        %v6895 = vmul.f32 %v523, %v6851
        %v6896 = vmul.f32 %v524, %v6851
        %v6897 = vmul.f32 %v525, %v6851
        %v6898 = vmul.f32 %v526, %v6851
        %v6899 = vmul.f32 %v527, %v6851
        %v6948 = vrot.slane %v6852, 4
        %v6949 = vrot.slane %v6853, 4
        %v6950 = vsel %vm6215, %v6948, %v6949
        %v6951 = vrot.slane %v6854, 4
        %v6952 = vsel %vm6215, %v6949, %v6951
        %v6953 = vrot.slane %v6855, 4
        %v6954 = vrot.slane %v6856, 4
        %v6955 = vsel %vm6215, %v6953, %v6954
        %v6956 = vrot.slane %v6857, 4
        %v6957 = vsel %vm6215, %v6954, %v6956
        %v6958 = vrot.slane %v6858, 4
        %v6959 = vrot.slane %v6859, 4
        %v6960 = vsel %vm6215, %v6958, %v6959
        %v6961 = vrot.slane %v6860, 4
        %v6962 = vsel %vm6215, %v6959, %v6961
        %v6963 = vrot.slane %v6861, 4
        %v6964 = vrot.slane %v6862, 4
        %v6965 = vsel %vm6215, %v6963, %v6964
        %v6966 = vrot.slane %v6863, 4
        %v6967 = vsel %vm6215, %v6964, %v6966
        %v6968 = vrot.slane %v6864, 4
        %v6969 = vrot.slane %v6865, 4
        %v6970 = vsel %vm6215, %v6968, %v6969
        %v6971 = vrot.slane %v6866, 4
        %v6972 = vsel %vm6215, %v6969, %v6971
        %v6973 = vrot.slane %v6867, 4
        %v6974 = vrot.slane %v6868, 4
        %v6975 = vsel %vm6215, %v6973, %v6974
        %v6976 = vrot.slane %v6869, 4
        %v6977 = vsel %vm6215, %v6974, %v6976
        %v6978 = vrot.slane %v6870, 4
        %v6979 = vrot.slane %v6871, 4
        %v6980 = vsel %vm6215, %v6978, %v6979
        %v6981 = vrot.slane %v6872, 4
        %v6982 = vsel %vm6215, %v6979, %v6981
        %v6983 = vrot.slane %v6873, 4
        %v6984 = vrot.slane %v6874, 4
        %v6985 = vsel %vm6215, %v6983, %v6984
        %v6986 = vrot.slane %v6875, 4
        %v6987 = vsel %vm6215, %v6984, %v6986
        %v6988 = vrot.slane %v6876, 4
        %v6989 = vrot.slane %v6877, 4
        %v6990 = vsel %vm6215, %v6988, %v6989
        %v6991 = vrot.slane %v6878, 4
        %v6992 = vsel %vm6215, %v6989, %v6991
        %v6993 = vrot.slane %v6879, 4
        %v6994 = vrot.slane %v6880, 4
        %v6995 = vsel %vm6215, %v6993, %v6994
        %v6996 = vrot.slane %v6881, 4
        %v6997 = vsel %vm6215, %v6994, %v6996
        %v6998 = vrot.slane %v6882, 4
        %v6999 = vrot.slane %v6883, 4
        %v7000 = vsel %vm6215, %v6998, %v6999
        %v7001 = vrot.slane %v6884, 4
        %v7002 = vsel %vm6215, %v6999, %v7001
        %v7003 = vrot.slane %v6885, 4
        %v7004 = vrot.slane %v6886, 4
        %v7005 = vsel %vm6215, %v7003, %v7004
        %v7006 = vrot.slane %v6887, 4
        %v7007 = vsel %vm6215, %v7004, %v7006
        %v7008 = vrot.slane %v6888, 4
        %v7009 = vrot.slane %v6889, 4
        %v7010 = vsel %vm6215, %v7008, %v7009
        %v7011 = vrot.slane %v6890, 4
        %v7012 = vsel %vm6215, %v7009, %v7011
        %v7013 = vrot.slane %v6891, 4
        %v7014 = vrot.slane %v6892, 4
        %v7015 = vsel %vm6215, %v7013, %v7014
        %v7016 = vrot.slane %v6893, 4
        %v7017 = vsel %vm6215, %v7014, %v7016
        %v7018 = vrot.slane %v6894, 4
        %v7019 = vrot.slane %v6895, 4
        %v7020 = vsel %vm6215, %v7018, %v7019
        %v7021 = vrot.slane %v6896, 4
        %v7022 = vsel %vm6215, %v7019, %v7021
        %v7023 = vrot.slane %v6897, 4
        %v7024 = vrot.slane %v6898, 4
        %v7025 = vsel %vm6215, %v7023, %v7024
        %v7026 = vrot.slane %v6899, 4
        %v7027 = vsel %vm6215, %v7024, %v7026
        %v7060 = vadd.f32 %v6816, %v6950
        %v7061 = vadd.f32 %v6817, %v6952
        %v7062 = vadd.f32 %v6818, %v6955
        %v7063 = vadd.f32 %v6819, %v6957
        %v7064 = vadd.f32 %v6820, %v6960
        %v7065 = vadd.f32 %v6821, %v6962
        %v7066 = vadd.f32 %v6822, %v6965
        %v7067 = vadd.f32 %v6823, %v6967
        %v7068 = vadd.f32 %v6824, %v6970
        %v7069 = vadd.f32 %v6825, %v6972
        %v7070 = vadd.f32 %v6826, %v6975
        %v7071 = vadd.f32 %v6827, %v6977
        %v7072 = vadd.f32 %v6828, %v6980
        %v7073 = vadd.f32 %v6829, %v6982
        %v7074 = vadd.f32 %v6830, %v6985
        %v7075 = vadd.f32 %v6831, %v6987
        %v7076 = vadd.f32 %v6832, %v6990
        %v7077 = vadd.f32 %v6833, %v6992
        %v7078 = vadd.f32 %v6834, %v6995
        %v7079 = vadd.f32 %v6835, %v6997
        %v7080 = vadd.f32 %v6836, %v7000
        %v7081 = vadd.f32 %v6837, %v7002
        %v7082 = vadd.f32 %v6838, %v7005
        %v7083 = vadd.f32 %v6839, %v7007
        %v7084 = vadd.f32 %v6840, %v7010
        %v7085 = vadd.f32 %v6841, %v7012
        %v7086 = vadd.f32 %v6842, %v7015
        %v7087 = vadd.f32 %v6843, %v7017
        %v7088 = vadd.f32 %v6844, %v7020
        %v7089 = vadd.f32 %v6845, %v7022
        %v7090 = vadd.f32 %v6846, %v7025
        %v7091 = vadd.f32 %v6847, %v7027
        %v7092 = vlaneseq
        %v7093 = vshrl.u32 %v7092, 7
        %v7094 = vsub.s32 4, %v7093
        %v7095 = vrot.slane %v541, %v7094
        %v7096 = vmul.f32 %v483, %v7095
        %v7097 = vmul.f32 %v484, %v7095
        %v7098 = vmul.f32 %v485, %v7095
        %v7099 = vmul.f32 %v486, %v7095
        %v7100 = vmul.f32 %v487, %v7095
        %v7101 = vmul.f32 %v488, %v7095
        %v7102 = vmul.f32 %v489, %v7095
        %v7103 = vmul.f32 %v490, %v7095
        %v7104 = vmul.f32 %v491, %v7095
        %v7105 = vmul.f32 %v492, %v7095
        %v7106 = vmul.f32 %v493, %v7095
        %v7107 = vmul.f32 %v494, %v7095
        %v7108 = vmul.f32 %v495, %v7095
        %v7109 = vmul.f32 %v496, %v7095
        %v7110 = vmul.f32 %v497, %v7095
        %v7111 = vmul.f32 %v498, %v7095
        %v7112 = vmul.f32 %v499, %v7095
        %v7113 = vmul.f32 %v500, %v7095
        %v7114 = vmul.f32 %v501, %v7095
        %v7115 = vmul.f32 %v502, %v7095
        %v7116 = vmul.f32 %v503, %v7095
        %v7117 = vmul.f32 %v504, %v7095
        %v7118 = vmul.f32 %v505, %v7095
        %v7119 = vmul.f32 %v506, %v7095
        %v7120 = vmul.f32 %v507, %v7095
        %v7121 = vmul.f32 %v508, %v7095
        %v7122 = vmul.f32 %v509, %v7095
        %v7123 = vmul.f32 %v510, %v7095
        %v7124 = vmul.f32 %v511, %v7095
        %v7125 = vmul.f32 %v512, %v7095
        %v7126 = vmul.f32 %v513, %v7095
        %v7127 = vmul.f32 %v514, %v7095
        %v7128 = vmul.f32 %v515, %v7095
        %v7129 = vmul.f32 %v516, %v7095
        %v7130 = vmul.f32 %v517, %v7095
        %v7131 = vmul.f32 %v518, %v7095
        %v7132 = vmul.f32 %v519, %v7095
        %v7133 = vmul.f32 %v520, %v7095
        %v7134 = vmul.f32 %v521, %v7095
        %v7135 = vmul.f32 %v522, %v7095
        %v7136 = vmul.f32 %v523, %v7095
        %v7137 = vmul.f32 %v524, %v7095
        %v7138 = vmul.f32 %v525, %v7095
        %v7139 = vmul.f32 %v526, %v7095
        %v7140 = vmul.f32 %v527, %v7095
        %v7141 = vmul.f32 %v528, %v7095
        %v7142 = vmul.f32 %v529, %v7095
        %v7143 = vmul.f32 %v530, %v7095
        %v7192 = vrot.slane %v7096, 4
        %v7193 = vrot.slane %v7097, 4
        %v7194 = vsel %vm6215, %v7192, %v7193
        %v7195 = vrot.slane %v7098, 4
        %v7196 = vsel %vm6215, %v7193, %v7195
        %v7197 = vrot.slane %v7099, 4
        %v7198 = vrot.slane %v7100, 4
        %v7199 = vsel %vm6215, %v7197, %v7198
        %v7200 = vrot.slane %v7101, 4
        %v7201 = vsel %vm6215, %v7198, %v7200
        %v7202 = vrot.slane %v7102, 4
        %v7203 = vrot.slane %v7103, 4
        %v7204 = vsel %vm6215, %v7202, %v7203
        %v7205 = vrot.slane %v7104, 4
        %v7206 = vsel %vm6215, %v7203, %v7205
        %v7207 = vrot.slane %v7105, 4
        %v7208 = vrot.slane %v7106, 4
        %v7209 = vsel %vm6215, %v7207, %v7208
        %v7210 = vrot.slane %v7107, 4
        %v7211 = vsel %vm6215, %v7208, %v7210
        %v7212 = vrot.slane %v7108, 4
        %v7213 = vrot.slane %v7109, 4
        %v7214 = vsel %vm6215, %v7212, %v7213
        %v7215 = vrot.slane %v7110, 4
        %v7216 = vsel %vm6215, %v7213, %v7215
        %v7217 = vrot.slane %v7111, 4
        %v7218 = vrot.slane %v7112, 4
        %v7219 = vsel %vm6215, %v7217, %v7218
        %v7220 = vrot.slane %v7113, 4
        %v7221 = vsel %vm6215, %v7218, %v7220
        %v7222 = vrot.slane %v7114, 4
        %v7223 = vrot.slane %v7115, 4
        %v7224 = vsel %vm6215, %v7222, %v7223
        %v7225 = vrot.slane %v7116, 4
        %v7226 = vsel %vm6215, %v7223, %v7225
        %v7227 = vrot.slane %v7117, 4
        %v7228 = vrot.slane %v7118, 4
        %v7229 = vsel %vm6215, %v7227, %v7228
        %v7230 = vrot.slane %v7119, 4
        %v7231 = vsel %vm6215, %v7228, %v7230
        %v7232 = vrot.slane %v7120, 4
        %v7233 = vrot.slane %v7121, 4
        %v7234 = vsel %vm6215, %v7232, %v7233
        %v7235 = vrot.slane %v7122, 4
        %v7236 = vsel %vm6215, %v7233, %v7235
        %v7237 = vrot.slane %v7123, 4
        %v7238 = vrot.slane %v7124, 4
        %v7239 = vsel %vm6215, %v7237, %v7238
        %v7240 = vrot.slane %v7125, 4
        %v7241 = vsel %vm6215, %v7238, %v7240
        %v7242 = vrot.slane %v7126, 4
        %v7243 = vrot.slane %v7127, 4
        %v7244 = vsel %vm6215, %v7242, %v7243
        %v7245 = vrot.slane %v7128, 4
        %v7246 = vsel %vm6215, %v7243, %v7245
        %v7247 = vrot.slane %v7129, 4
        %v7248 = vrot.slane %v7130, 4
        %v7249 = vsel %vm6215, %v7247, %v7248
        %v7250 = vrot.slane %v7131, 4
        %v7251 = vsel %vm6215, %v7248, %v7250
        %v7252 = vrot.slane %v7132, 4
        %v7253 = vrot.slane %v7133, 4
        %v7254 = vsel %vm6215, %v7252, %v7253
        %v7255 = vrot.slane %v7134, 4
        %v7256 = vsel %vm6215, %v7253, %v7255
        %v7257 = vrot.slane %v7135, 4
        %v7258 = vrot.slane %v7136, 4
        %v7259 = vsel %vm6215, %v7257, %v7258
        %v7260 = vrot.slane %v7137, 4
        %v7261 = vsel %vm6215, %v7258, %v7260
        %v7262 = vrot.slane %v7138, 4
        %v7263 = vrot.slane %v7139, 4
        %v7264 = vsel %vm6215, %v7262, %v7263
        %v7265 = vrot.slane %v7140, 4
        %v7266 = vsel %vm6215, %v7263, %v7265
        %v7267 = vrot.slane %v7141, 4
        %v7268 = vrot.slane %v7142, 4
        %v7269 = vsel %vm6215, %v7267, %v7268
        %v7270 = vrot.slane %v7143, 4
        %v7271 = vsel %vm6215, %v7268, %v7270
        %v7304 = vadd.f32 %v7060, %v7194
        %v7305 = vadd.f32 %v7061, %v7196
        %v7306 = vadd.f32 %v7062, %v7199
        %v7307 = vadd.f32 %v7063, %v7201
        %v7308 = vadd.f32 %v7064, %v7204
        %v7309 = vadd.f32 %v7065, %v7206
        %v7310 = vadd.f32 %v7066, %v7209
        %v7311 = vadd.f32 %v7067, %v7211
        %v7312 = vadd.f32 %v7068, %v7214
        %v7313 = vadd.f32 %v7069, %v7216
        %v7314 = vadd.f32 %v7070, %v7219
        %v7315 = vadd.f32 %v7071, %v7221
        %v7316 = vadd.f32 %v7072, %v7224
        %v7317 = vadd.f32 %v7073, %v7226
        %v7318 = vadd.f32 %v7074, %v7229
        %v7319 = vadd.f32 %v7075, %v7231
        %v7320 = vadd.f32 %v7076, %v7234
        %v7321 = vadd.f32 %v7077, %v7236
        %v7322 = vadd.f32 %v7078, %v7239
        %v7323 = vadd.f32 %v7079, %v7241
        %v7324 = vadd.f32 %v7080, %v7244
        %v7325 = vadd.f32 %v7081, %v7246
        %v7326 = vadd.f32 %v7082, %v7249
        %v7327 = vadd.f32 %v7083, %v7251
        %v7328 = vadd.f32 %v7084, %v7254
        %v7329 = vadd.f32 %v7085, %v7256
        %v7330 = vadd.f32 %v7086, %v7259
        %v7331 = vadd.f32 %v7087, %v7261
        %v7332 = vadd.f32 %v7088, %v7264
        %v7333 = vadd.f32 %v7089, %v7266
        %v7334 = vadd.f32 %v7090, %v7269
        %v7335 = vadd.f32 %v7091, %v7271
        %v7336 = vlaneseq
        %v7337 = vshrl.u32 %v7336, 7
        %v7338 = vsub.s32 4, %v7337
        %v7339 = vrot.slane %v542, %v7338
        %v7340 = vmul.f32 %v486, %v7339
        %v7341 = vmul.f32 %v487, %v7339
        %v7342 = vmul.f32 %v488, %v7339
        %v7343 = vmul.f32 %v489, %v7339
        %v7344 = vmul.f32 %v490, %v7339
        %v7345 = vmul.f32 %v491, %v7339
        %v7346 = vmul.f32 %v492, %v7339
        %v7347 = vmul.f32 %v493, %v7339
        %v7348 = vmul.f32 %v494, %v7339
        %v7349 = vmul.f32 %v495, %v7339
        %v7350 = vmul.f32 %v496, %v7339
        %v7351 = vmul.f32 %v497, %v7339
        %v7352 = vmul.f32 %v498, %v7339
        %v7353 = vmul.f32 %v499, %v7339
        %v7354 = vmul.f32 %v500, %v7339
        %v7355 = vmul.f32 %v501, %v7339
        %v7356 = vmul.f32 %v502, %v7339
        %v7357 = vmul.f32 %v503, %v7339
        %v7358 = vmul.f32 %v504, %v7339
        %v7359 = vmul.f32 %v505, %v7339
        %v7360 = vmul.f32 %v506, %v7339
        %v7361 = vmul.f32 %v507, %v7339
        %v7362 = vmul.f32 %v508, %v7339
        %v7363 = vmul.f32 %v509, %v7339
        %v7364 = vmul.f32 %v510, %v7339
        %v7365 = vmul.f32 %v511, %v7339
        %v7366 = vmul.f32 %v512, %v7339
        %v7367 = vmul.f32 %v513, %v7339
        %v7368 = vmul.f32 %v514, %v7339
        %v7369 = vmul.f32 %v515, %v7339
        %v7370 = vmul.f32 %v516, %v7339
        %v7371 = vmul.f32 %v517, %v7339
        %v7372 = vmul.f32 %v518, %v7339
        %v7373 = vmul.f32 %v519, %v7339
        %v7374 = vmul.f32 %v520, %v7339
        %v7375 = vmul.f32 %v521, %v7339
        %v7376 = vmul.f32 %v522, %v7339
        %v7377 = vmul.f32 %v523, %v7339
        %v7378 = vmul.f32 %v524, %v7339
        %v7379 = vmul.f32 %v525, %v7339
        %v7380 = vmul.f32 %v526, %v7339
        %v7381 = vmul.f32 %v527, %v7339
        %v7382 = vmul.f32 %v528, %v7339
        %v7383 = vmul.f32 %v529, %v7339
        %v7384 = vmul.f32 %v530, %v7339
        %v7385 = vmul.f32 %v531, %v7339
        %v7386 = vmul.f32 %v532, %v7339
        %v7387 = vmul.f32 %v533, %v7339
        %v7436 = vrot.slane %v7340, 4
        %v7437 = vrot.slane %v7341, 4
        %v7438 = vsel %vm6215, %v7436, %v7437
        %v7439 = vrot.slane %v7342, 4
        %v7440 = vsel %vm6215, %v7437, %v7439
        %v7441 = vrot.slane %v7343, 4
        %v7442 = vrot.slane %v7344, 4
        %v7443 = vsel %vm6215, %v7441, %v7442
        %v7444 = vrot.slane %v7345, 4
        %v7445 = vsel %vm6215, %v7442, %v7444
        %v7446 = vrot.slane %v7346, 4
        %v7447 = vrot.slane %v7347, 4
        %v7448 = vsel %vm6215, %v7446, %v7447
        %v7449 = vrot.slane %v7348, 4
        %v7450 = vsel %vm6215, %v7447, %v7449
        %v7451 = vrot.slane %v7349, 4
        %v7452 = vrot.slane %v7350, 4
        %v7453 = vsel %vm6215, %v7451, %v7452
        %v7454 = vrot.slane %v7351, 4
        %v7455 = vsel %vm6215, %v7452, %v7454
        %v7456 = vrot.slane %v7352, 4
        %v7457 = vrot.slane %v7353, 4
        %v7458 = vsel %vm6215, %v7456, %v7457
        %v7459 = vrot.slane %v7354, 4
        %v7460 = vsel %vm6215, %v7457, %v7459
        %v7461 = vrot.slane %v7355, 4
        %v7462 = vrot.slane %v7356, 4
        %v7463 = vsel %vm6215, %v7461, %v7462
        %v7464 = vrot.slane %v7357, 4
        %v7465 = vsel %vm6215, %v7462, %v7464
        %v7466 = vrot.slane %v7358, 4
        %v7467 = vrot.slane %v7359, 4
        %v7468 = vsel %vm6215, %v7466, %v7467
        %v7469 = vrot.slane %v7360, 4
        %v7470 = vsel %vm6215, %v7467, %v7469
        %v7471 = vrot.slane %v7361, 4
        %v7472 = vrot.slane %v7362, 4
        %v7473 = vsel %vm6215, %v7471, %v7472
        %v7474 = vrot.slane %v7363, 4
        %v7475 = vsel %vm6215, %v7472, %v7474
        %v7476 = vrot.slane %v7364, 4
        %v7477 = vrot.slane %v7365, 4
        %v7478 = vsel %vm6215, %v7476, %v7477
        %v7479 = vrot.slane %v7366, 4
        %v7480 = vsel %vm6215, %v7477, %v7479
        %v7481 = vrot.slane %v7367, 4
        %v7482 = vrot.slane %v7368, 4
        %v7483 = vsel %vm6215, %v7481, %v7482
        %v7484 = vrot.slane %v7369, 4
        %v7485 = vsel %vm6215, %v7482, %v7484
        %v7486 = vrot.slane %v7370, 4
        %v7487 = vrot.slane %v7371, 4
        %v7488 = vsel %vm6215, %v7486, %v7487
        %v7489 = vrot.slane %v7372, 4
        %v7490 = vsel %vm6215, %v7487, %v7489
        %v7491 = vrot.slane %v7373, 4
        %v7492 = vrot.slane %v7374, 4
        %v7493 = vsel %vm6215, %v7491, %v7492
        %v7494 = vrot.slane %v7375, 4
        %v7495 = vsel %vm6215, %v7492, %v7494
        %v7496 = vrot.slane %v7376, 4
        %v7497 = vrot.slane %v7377, 4
        %v7498 = vsel %vm6215, %v7496, %v7497
        %v7499 = vrot.slane %v7378, 4
        %v7500 = vsel %vm6215, %v7497, %v7499
        %v7501 = vrot.slane %v7379, 4
        %v7502 = vrot.slane %v7380, 4
        %v7503 = vsel %vm6215, %v7501, %v7502
        %v7504 = vrot.slane %v7381, 4
        %v7505 = vsel %vm6215, %v7502, %v7504
        %v7506 = vrot.slane %v7382, 4
        %v7507 = vrot.slane %v7383, 4
        %v7508 = vsel %vm6215, %v7506, %v7507
        %v7509 = vrot.slane %v7384, 4
        %v7510 = vsel %vm6215, %v7507, %v7509
        %v7511 = vrot.slane %v7385, 4
        %v7512 = vrot.slane %v7386, 4
        %v7513 = vsel %vm6215, %v7511, %v7512
        %v7514 = vrot.slane %v7387, 4
        %v7515 = vsel %vm6215, %v7512, %v7514
        %v7548 = vadd.f32 %v7304, %v7438
        %v7549 = vadd.f32 %v7305, %v7440
        %v7550 = vadd.f32 %v7306, %v7443
        %v7551 = vadd.f32 %v7307, %v7445
        %v7552 = vadd.f32 %v7308, %v7448
        %v7553 = vadd.f32 %v7309, %v7450
        %v7554 = vadd.f32 %v7310, %v7453
        %v7555 = vadd.f32 %v7311, %v7455
        %v7556 = vadd.f32 %v7312, %v7458
        %v7557 = vadd.f32 %v7313, %v7460
        %v7558 = vadd.f32 %v7314, %v7463
        %v7559 = vadd.f32 %v7315, %v7465
        %v7560 = vadd.f32 %v7316, %v7468
        %v7561 = vadd.f32 %v7317, %v7470
        %v7562 = vadd.f32 %v7318, %v7473
        %v7563 = vadd.f32 %v7319, %v7475
        %v7564 = vadd.f32 %v7320, %v7478
        %v7565 = vadd.f32 %v7321, %v7480
        %v7566 = vadd.f32 %v7322, %v7483
        %v7567 = vadd.f32 %v7323, %v7485
        %v7568 = vadd.f32 %v7324, %v7488
        %v7569 = vadd.f32 %v7325, %v7490
        %v7570 = vadd.f32 %v7326, %v7493
        %v7571 = vadd.f32 %v7327, %v7495
        %v7572 = vadd.f32 %v7328, %v7498
        %v7573 = vadd.f32 %v7329, %v7500
        %v7574 = vadd.f32 %v7330, %v7503
        %v7575 = vadd.f32 %v7331, %v7505
        %v7576 = vadd.f32 %v7332, %v7508
        %v7577 = vadd.f32 %v7333, %v7510
        %v7578 = vadd.f32 %v7334, %v7513
        %v7579 = vadd.f32 %v7335, %v7515
        %v7580 = vlaneseq
        %v7581 = vshrl.u32 %v7580, 7
        %v7582 = vsub.s32 4, %v7581
        %v7583 = vrot.slane %v543, %v7582
        %v7584 = vmul.f32 %v489, %v7583
        %v7585 = vmul.f32 %v490, %v7583
        %v7586 = vmul.f32 %v491, %v7583
        %v7587 = vmul.f32 %v492, %v7583
        %v7588 = vmul.f32 %v493, %v7583
        %v7589 = vmul.f32 %v494, %v7583
        %v7590 = vmul.f32 %v495, %v7583
        %v7591 = vmul.f32 %v496, %v7583
        %v7592 = vmul.f32 %v497, %v7583
        %v7593 = vmul.f32 %v498, %v7583
        %v7594 = vmul.f32 %v499, %v7583
        %v7595 = vmul.f32 %v500, %v7583
        %v7596 = vmul.f32 %v501, %v7583
        %v7597 = vmul.f32 %v502, %v7583
        %v7598 = vmul.f32 %v503, %v7583
        %v7599 = vmul.f32 %v504, %v7583
        %v7600 = vmul.f32 %v505, %v7583
        %v7601 = vmul.f32 %v506, %v7583
        %v7602 = vmul.f32 %v507, %v7583
        %v7603 = vmul.f32 %v508, %v7583
        %v7604 = vmul.f32 %v509, %v7583
        %v7605 = vmul.f32 %v510, %v7583
        %v7606 = vmul.f32 %v511, %v7583
        %v7607 = vmul.f32 %v512, %v7583
        %v7608 = vmul.f32 %v513, %v7583
        %v7609 = vmul.f32 %v514, %v7583
        %v7610 = vmul.f32 %v515, %v7583
        %v7611 = vmul.f32 %v516, %v7583
        %v7612 = vmul.f32 %v517, %v7583
        %v7613 = vmul.f32 %v518, %v7583
        %v7614 = vmul.f32 %v519, %v7583
        %v7615 = vmul.f32 %v520, %v7583
        %v7616 = vmul.f32 %v521, %v7583
        %v7617 = vmul.f32 %v522, %v7583
        %v7618 = vmul.f32 %v523, %v7583
        %v7619 = vmul.f32 %v524, %v7583
        %v7620 = vmul.f32 %v525, %v7583
        %v7621 = vmul.f32 %v526, %v7583
        %v7622 = vmul.f32 %v527, %v7583
        %v7623 = vmul.f32 %v528, %v7583
        %v7624 = vmul.f32 %v529, %v7583
        %v7625 = vmul.f32 %v530, %v7583
        %v7626 = vmul.f32 %v531, %v7583
        %v7627 = vmul.f32 %v532, %v7583
        %v7628 = vmul.f32 %v533, %v7583
        %v7629 = vmul.f32 %v534, %v7583
        %v7630 = vmul.f32 %v535, %v7583
        %v7631 = vmul.f32 %v536, %v7583
        %v7680 = vrot.slane %v7584, 4
        %v7681 = vrot.slane %v7585, 4
        %v7682 = vsel %vm6215, %v7680, %v7681
        %v7683 = vrot.slane %v7586, 4
        %v7684 = vsel %vm6215, %v7681, %v7683
        %v7685 = vrot.slane %v7587, 4
        %v7686 = vrot.slane %v7588, 4
        %v7687 = vsel %vm6215, %v7685, %v7686
        %v7688 = vrot.slane %v7589, 4
        %v7689 = vsel %vm6215, %v7686, %v7688
        %v7690 = vrot.slane %v7590, 4
        %v7691 = vrot.slane %v7591, 4
        %v7692 = vsel %vm6215, %v7690, %v7691
        %v7693 = vrot.slane %v7592, 4
        %v7694 = vsel %vm6215, %v7691, %v7693
        %v7695 = vrot.slane %v7593, 4
        %v7696 = vrot.slane %v7594, 4
        %v7697 = vsel %vm6215, %v7695, %v7696
        %v7698 = vrot.slane %v7595, 4
        %v7699 = vsel %vm6215, %v7696, %v7698
        %v7700 = vrot.slane %v7596, 4
        %v7701 = vrot.slane %v7597, 4
        %v7702 = vsel %vm6215, %v7700, %v7701
        %v7703 = vrot.slane %v7598, 4
        %v7704 = vsel %vm6215, %v7701, %v7703
        %v7705 = vrot.slane %v7599, 4
        %v7706 = vrot.slane %v7600, 4
        %v7707 = vsel %vm6215, %v7705, %v7706
        %v7708 = vrot.slane %v7601, 4
        %v7709 = vsel %vm6215, %v7706, %v7708
        %v7710 = vrot.slane %v7602, 4
        %v7711 = vrot.slane %v7603, 4
        %v7712 = vsel %vm6215, %v7710, %v7711
        %v7713 = vrot.slane %v7604, 4
        %v7714 = vsel %vm6215, %v7711, %v7713
        %v7715 = vrot.slane %v7605, 4
        %v7716 = vrot.slane %v7606, 4
        %v7717 = vsel %vm6215, %v7715, %v7716
        %v7718 = vrot.slane %v7607, 4
        %v7719 = vsel %vm6215, %v7716, %v7718
        %v7720 = vrot.slane %v7608, 4
        %v7721 = vrot.slane %v7609, 4
        %v7722 = vsel %vm6215, %v7720, %v7721
        %v7723 = vrot.slane %v7610, 4
        %v7724 = vsel %vm6215, %v7721, %v7723
        %v7725 = vrot.slane %v7611, 4
        %v7726 = vrot.slane %v7612, 4
        %v7727 = vsel %vm6215, %v7725, %v7726
        %v7728 = vrot.slane %v7613, 4
        %v7729 = vsel %vm6215, %v7726, %v7728
        %v7730 = vrot.slane %v7614, 4
        %v7731 = vrot.slane %v7615, 4
        %v7732 = vsel %vm6215, %v7730, %v7731
        %v7733 = vrot.slane %v7616, 4
        %v7734 = vsel %vm6215, %v7731, %v7733
        %v7735 = vrot.slane %v7617, 4
        %v7736 = vrot.slane %v7618, 4
        %v7737 = vsel %vm6215, %v7735, %v7736
        %v7738 = vrot.slane %v7619, 4
        %v7739 = vsel %vm6215, %v7736, %v7738
        %v7740 = vrot.slane %v7620, 4
        %v7741 = vrot.slane %v7621, 4
        %v7742 = vsel %vm6215, %v7740, %v7741
        %v7743 = vrot.slane %v7622, 4
        %v7744 = vsel %vm6215, %v7741, %v7743
        %v7745 = vrot.slane %v7623, 4
        %v7746 = vrot.slane %v7624, 4
        %v7747 = vsel %vm6215, %v7745, %v7746
        %v7748 = vrot.slane %v7625, 4
        %v7749 = vsel %vm6215, %v7746, %v7748
        %v7750 = vrot.slane %v7626, 4
        %v7751 = vrot.slane %v7627, 4
        %v7752 = vsel %vm6215, %v7750, %v7751
        %v7753 = vrot.slane %v7628, 4
        %v7754 = vsel %vm6215, %v7751, %v7753
        %v7755 = vrot.slane %v7629, 4
        %v7756 = vrot.slane %v7630, 4
        %v7757 = vsel %vm6215, %v7755, %v7756
        %v7758 = vrot.slane %v7631, 4
        %v7759 = vsel %vm6215, %v7756, %v7758
        %v7792 = vadd.f32 %v7548, %v7682
        %v7793 = vadd.f32 %v7549, %v7684
        %v7794 = vadd.f32 %v7550, %v7687
        %v7795 = vadd.f32 %v7551, %v7689
        %v7796 = vadd.f32 %v7552, %v7692
        %v7797 = vadd.f32 %v7553, %v7694
        %v7798 = vadd.f32 %v7554, %v7697
        %v7799 = vadd.f32 %v7555, %v7699
        %v7800 = vadd.f32 %v7556, %v7702
        %v7801 = vadd.f32 %v7557, %v7704
        %v7802 = vadd.f32 %v7558, %v7707
        %v7803 = vadd.f32 %v7559, %v7709
        %v7804 = vadd.f32 %v7560, %v7712
        %v7805 = vadd.f32 %v7561, %v7714
        %v7806 = vadd.f32 %v7562, %v7717
        %v7807 = vadd.f32 %v7563, %v7719
        %v7808 = vadd.f32 %v7564, %v7722
        %v7809 = vadd.f32 %v7565, %v7724
        %v7810 = vadd.f32 %v7566, %v7727
        %v7811 = vadd.f32 %v7567, %v7729
        %v7812 = vadd.f32 %v7568, %v7732
        %v7813 = vadd.f32 %v7569, %v7734
        %v7814 = vadd.f32 %v7570, %v7737
        %v7815 = vadd.f32 %v7571, %v7739
        %v7816 = vadd.f32 %v7572, %v7742
        %v7817 = vadd.f32 %v7573, %v7744
        %v7818 = vadd.f32 %v7574, %v7747
        %v7819 = vadd.f32 %v7575, %v7749
        %v7820 = vadd.f32 %v7576, %v7752
        %v7821 = vadd.f32 %v7577, %v7754
        %v7822 = vadd.f32 %v7578, %v7757
        %v7823 = vadd.f32 %v7579, %v7759
        %v7824 = vlaneseq
        %v7825 = vshrl.u32 %v7824, 7
        %v7826 = vsub.s32 5, %v7825
        %v7827 = vrot.slane %v537, %v7826
        %v7828 = vmul.f32 %v471, %v7827
        %v7829 = vmul.f32 %v472, %v7827
        %v7830 = vmul.f32 %v473, %v7827
        %v7831 = vmul.f32 %v474, %v7827
        %v7832 = vmul.f32 %v475, %v7827
        %v7833 = vmul.f32 %v476, %v7827
        %v7834 = vmul.f32 %v477, %v7827
        %v7835 = vmul.f32 %v478, %v7827
        %v7836 = vmul.f32 %v479, %v7827
        %v7837 = vmul.f32 %v480, %v7827
        %v7838 = vmul.f32 %v481, %v7827
        %v7839 = vmul.f32 %v482, %v7827
        %v7840 = vmul.f32 %v483, %v7827
        %v7841 = vmul.f32 %v484, %v7827
        %v7842 = vmul.f32 %v485, %v7827
        %v7843 = vmul.f32 %v486, %v7827
        %v7844 = vmul.f32 %v487, %v7827
        %v7845 = vmul.f32 %v488, %v7827
        %v7846 = vmul.f32 %v489, %v7827
        %v7847 = vmul.f32 %v490, %v7827
        %v7848 = vmul.f32 %v491, %v7827
        %v7849 = vmul.f32 %v492, %v7827
        %v7850 = vmul.f32 %v493, %v7827
        %v7851 = vmul.f32 %v494, %v7827
        %v7852 = vmul.f32 %v495, %v7827
        %v7853 = vmul.f32 %v496, %v7827
        %v7854 = vmul.f32 %v497, %v7827
        %v7855 = vmul.f32 %v498, %v7827
        %v7856 = vmul.f32 %v499, %v7827
        %v7857 = vmul.f32 %v500, %v7827
        %v7858 = vmul.f32 %v501, %v7827
        %v7859 = vmul.f32 %v502, %v7827
        %v7860 = vmul.f32 %v503, %v7827
        %v7861 = vmul.f32 %v504, %v7827
        %v7862 = vmul.f32 %v505, %v7827
        %v7863 = vmul.f32 %v506, %v7827
        %v7864 = vmul.f32 %v507, %v7827
        %v7865 = vmul.f32 %v508, %v7827
        %v7866 = vmul.f32 %v509, %v7827
        %v7867 = vmul.f32 %v510, %v7827
        %v7868 = vmul.f32 %v511, %v7827
        %v7869 = vmul.f32 %v512, %v7827
        %v7870 = vmul.f32 %v513, %v7827
        %v7871 = vmul.f32 %v514, %v7827
        %v7872 = vmul.f32 %v515, %v7827
        %v7873 = vmul.f32 %v516, %v7827
        %v7874 = vmul.f32 %v517, %v7827
        %v7875 = vmul.f32 %v518, %v7827
        %vm7924 = vcmask 1042432
        %v7925 = vrot.slane %v7828, 5
        %v7926 = vrot.slane %v7829, 5
        %v7927 = vsel %vm7924, %v7925, %v7926
        %v7928 = vrot.slane %v7830, 5
        %v7929 = vsel %vm7924, %v7926, %v7928
        %v7930 = vrot.slane %v7831, 5
        %v7931 = vrot.slane %v7832, 5
        %v7932 = vsel %vm7924, %v7930, %v7931
        %v7933 = vrot.slane %v7833, 5
        %v7934 = vsel %vm7924, %v7931, %v7933
        %v7935 = vrot.slane %v7834, 5
        %v7936 = vrot.slane %v7835, 5
        %v7937 = vsel %vm7924, %v7935, %v7936
        %v7938 = vrot.slane %v7836, 5
        %v7939 = vsel %vm7924, %v7936, %v7938
        %v7940 = vrot.slane %v7837, 5
        %v7941 = vrot.slane %v7838, 5
        %v7942 = vsel %vm7924, %v7940, %v7941
        %v7943 = vrot.slane %v7839, 5
        %v7944 = vsel %vm7924, %v7941, %v7943
        %v7945 = vrot.slane %v7840, 5
        %v7946 = vrot.slane %v7841, 5
        %v7947 = vsel %vm7924, %v7945, %v7946
        %v7948 = vrot.slane %v7842, 5
        %v7949 = vsel %vm7924, %v7946, %v7948
        %v7950 = vrot.slane %v7843, 5
        %v7951 = vrot.slane %v7844, 5
        %v7952 = vsel %vm7924, %v7950, %v7951
        %v7953 = vrot.slane %v7845, 5
        %v7954 = vsel %vm7924, %v7951, %v7953
        %v7955 = vrot.slane %v7846, 5
        %v7956 = vrot.slane %v7847, 5
        %v7957 = vsel %vm7924, %v7955, %v7956
        %v7958 = vrot.slane %v7848, 5
        %v7959 = vsel %vm7924, %v7956, %v7958
        %v7960 = vrot.slane %v7849, 5
        %v7961 = vrot.slane %v7850, 5
        %v7962 = vsel %vm7924, %v7960, %v7961
        %v7963 = vrot.slane %v7851, 5
        %v7964 = vsel %vm7924, %v7961, %v7963
        %v7965 = vrot.slane %v7852, 5
        %v7966 = vrot.slane %v7853, 5
        %v7967 = vsel %vm7924, %v7965, %v7966
        %v7968 = vrot.slane %v7854, 5
        %v7969 = vsel %vm7924, %v7966, %v7968
        %v7970 = vrot.slane %v7855, 5
        %v7971 = vrot.slane %v7856, 5
        %v7972 = vsel %vm7924, %v7970, %v7971
        %v7973 = vrot.slane %v7857, 5
        %v7974 = vsel %vm7924, %v7971, %v7973
        %v7975 = vrot.slane %v7858, 5
        %v7976 = vrot.slane %v7859, 5
        %v7977 = vsel %vm7924, %v7975, %v7976
        %v7978 = vrot.slane %v7860, 5
        %v7979 = vsel %vm7924, %v7976, %v7978
        %v7980 = vrot.slane %v7861, 5
        %v7981 = vrot.slane %v7862, 5
        %v7982 = vsel %vm7924, %v7980, %v7981
        %v7983 = vrot.slane %v7863, 5
        %v7984 = vsel %vm7924, %v7981, %v7983
        %v7985 = vrot.slane %v7864, 5
        %v7986 = vrot.slane %v7865, 5
        %v7987 = vsel %vm7924, %v7985, %v7986
        %v7988 = vrot.slane %v7866, 5
        %v7989 = vsel %vm7924, %v7986, %v7988
        %v7990 = vrot.slane %v7867, 5
        %v7991 = vrot.slane %v7868, 5
        %v7992 = vsel %vm7924, %v7990, %v7991
        %v7993 = vrot.slane %v7869, 5
        %v7994 = vsel %vm7924, %v7991, %v7993
        %v7995 = vrot.slane %v7870, 5
        %v7996 = vrot.slane %v7871, 5
        %v7997 = vsel %vm7924, %v7995, %v7996
        %v7998 = vrot.slane %v7872, 5
        %v7999 = vsel %vm7924, %v7996, %v7998
        %v8000 = vrot.slane %v7873, 5
        %v8001 = vrot.slane %v7874, 5
        %v8002 = vsel %vm7924, %v8000, %v8001
        %v8003 = vrot.slane %v7875, 5
        %v8004 = vsel %vm7924, %v8001, %v8003
        %v8037 = vadd.f32 %v7792, %v7927
        %v8038 = vadd.f32 %v7793, %v7929
        %v8039 = vadd.f32 %v7794, %v7932
        %v8040 = vadd.f32 %v7795, %v7934
        %v8041 = vadd.f32 %v7796, %v7937
        %v8042 = vadd.f32 %v7797, %v7939
        %v8043 = vadd.f32 %v7798, %v7942
        %v8044 = vadd.f32 %v7799, %v7944
        %v8045 = vadd.f32 %v7800, %v7947
        %v8046 = vadd.f32 %v7801, %v7949
        %v8047 = vadd.f32 %v7802, %v7952
        %v8048 = vadd.f32 %v7803, %v7954
        %v8049 = vadd.f32 %v7804, %v7957
        %v8050 = vadd.f32 %v7805, %v7959
        %v8051 = vadd.f32 %v7806, %v7962
        %v8052 = vadd.f32 %v7807, %v7964
        %v8053 = vadd.f32 %v7808, %v7967
        %v8054 = vadd.f32 %v7809, %v7969
        %v8055 = vadd.f32 %v7810, %v7972
        %v8056 = vadd.f32 %v7811, %v7974
        %v8057 = vadd.f32 %v7812, %v7977
        %v8058 = vadd.f32 %v7813, %v7979
        %v8059 = vadd.f32 %v7814, %v7982
        %v8060 = vadd.f32 %v7815, %v7984
        %v8061 = vadd.f32 %v7816, %v7987
        %v8062 = vadd.f32 %v7817, %v7989
        %v8063 = vadd.f32 %v7818, %v7992
        %v8064 = vadd.f32 %v7819, %v7994
        %v8065 = vadd.f32 %v7820, %v7997
        %v8066 = vadd.f32 %v7821, %v7999
        %v8067 = vadd.f32 %v7822, %v8002
        %v8068 = vadd.f32 %v7823, %v8004
        %v8069 = vlaneseq
        %v8070 = vshrl.u32 %v8069, 7
        %v8071 = vsub.s32 5, %v8070
        %v8072 = vrot.slane %v538, %v8071
        %v8073 = vmul.f32 %v474, %v8072
        %v8074 = vmul.f32 %v475, %v8072
        %v8075 = vmul.f32 %v476, %v8072
        %v8076 = vmul.f32 %v477, %v8072
        %v8077 = vmul.f32 %v478, %v8072
        %v8078 = vmul.f32 %v479, %v8072
        %v8079 = vmul.f32 %v480, %v8072
        %v8080 = vmul.f32 %v481, %v8072
        %v8081 = vmul.f32 %v482, %v8072
        %v8082 = vmul.f32 %v483, %v8072
        %v8083 = vmul.f32 %v484, %v8072
        %v8084 = vmul.f32 %v485, %v8072
        %v8085 = vmul.f32 %v486, %v8072
        %v8086 = vmul.f32 %v487, %v8072
        %v8087 = vmul.f32 %v488, %v8072
        %v8088 = vmul.f32 %v489, %v8072
        %v8089 = vmul.f32 %v490, %v8072
        %v8090 = vmul.f32 %v491, %v8072
        %v8091 = vmul.f32 %v492, %v8072
        %v8092 = vmul.f32 %v493, %v8072
        %v8093 = vmul.f32 %v494, %v8072
        %v8094 = vmul.f32 %v495, %v8072
        %v8095 = vmul.f32 %v496, %v8072
        %v8096 = vmul.f32 %v497, %v8072
        %v8097 = vmul.f32 %v498, %v8072
        %v8098 = vmul.f32 %v499, %v8072
        %v8099 = vmul.f32 %v500, %v8072
        %v8100 = vmul.f32 %v501, %v8072
        %v8101 = vmul.f32 %v502, %v8072
        %v8102 = vmul.f32 %v503, %v8072
        %v8103 = vmul.f32 %v504, %v8072
        %v8104 = vmul.f32 %v505, %v8072
        %v8105 = vmul.f32 %v506, %v8072
        %v8106 = vmul.f32 %v507, %v8072
        %v8107 = vmul.f32 %v508, %v8072
        %v8108 = vmul.f32 %v509, %v8072
        %v8109 = vmul.f32 %v510, %v8072
        %v8110 = vmul.f32 %v511, %v8072
        %v8111 = vmul.f32 %v512, %v8072
        %v8112 = vmul.f32 %v513, %v8072
        %v8113 = vmul.f32 %v514, %v8072
        %v8114 = vmul.f32 %v515, %v8072
        %v8115 = vmul.f32 %v516, %v8072
        %v8116 = vmul.f32 %v517, %v8072
        %v8117 = vmul.f32 %v518, %v8072
        %v8118 = vmul.f32 %v519, %v8072
        %v8119 = vmul.f32 %v520, %v8072
        %v8120 = vmul.f32 %v521, %v8072
        %v8169 = vrot.slane %v8073, 5
        %v8170 = vrot.slane %v8074, 5
        %v8171 = vsel %vm7924, %v8169, %v8170
        %v8172 = vrot.slane %v8075, 5
        %v8173 = vsel %vm7924, %v8170, %v8172
        %v8174 = vrot.slane %v8076, 5
        %v8175 = vrot.slane %v8077, 5
        %v8176 = vsel %vm7924, %v8174, %v8175
        %v8177 = vrot.slane %v8078, 5
        %v8178 = vsel %vm7924, %v8175, %v8177
        %v8179 = vrot.slane %v8079, 5
        %v8180 = vrot.slane %v8080, 5
        %v8181 = vsel %vm7924, %v8179, %v8180
        %v8182 = vrot.slane %v8081, 5
        %v8183 = vsel %vm7924, %v8180, %v8182
        %v8184 = vrot.slane %v8082, 5
        %v8185 = vrot.slane %v8083, 5
        %v8186 = vsel %vm7924, %v8184, %v8185
        %v8187 = vrot.slane %v8084, 5
        %v8188 = vsel %vm7924, %v8185, %v8187
        %v8189 = vrot.slane %v8085, 5
        %v8190 = vrot.slane %v8086, 5
        %v8191 = vsel %vm7924, %v8189, %v8190
        %v8192 = vrot.slane %v8087, 5
        %v8193 = vsel %vm7924, %v8190, %v8192
        %v8194 = vrot.slane %v8088, 5
        %v8195 = vrot.slane %v8089, 5
        %v8196 = vsel %vm7924, %v8194, %v8195
        %v8197 = vrot.slane %v8090, 5
        %v8198 = vsel %vm7924, %v8195, %v8197
        %v8199 = vrot.slane %v8091, 5
        %v8200 = vrot.slane %v8092, 5
        %v8201 = vsel %vm7924, %v8199, %v8200
        %v8202 = vrot.slane %v8093, 5
        %v8203 = vsel %vm7924, %v8200, %v8202
        %v8204 = vrot.slane %v8094, 5
        %v8205 = vrot.slane %v8095, 5
        %v8206 = vsel %vm7924, %v8204, %v8205
        %v8207 = vrot.slane %v8096, 5
        %v8208 = vsel %vm7924, %v8205, %v8207
        %v8209 = vrot.slane %v8097, 5
        %v8210 = vrot.slane %v8098, 5
        %v8211 = vsel %vm7924, %v8209, %v8210
        %v8212 = vrot.slane %v8099, 5
        %v8213 = vsel %vm7924, %v8210, %v8212
        %v8214 = vrot.slane %v8100, 5
        %v8215 = vrot.slane %v8101, 5
        %v8216 = vsel %vm7924, %v8214, %v8215
        %v8217 = vrot.slane %v8102, 5
        %v8218 = vsel %vm7924, %v8215, %v8217
        %v8219 = vrot.slane %v8103, 5
        %v8220 = vrot.slane %v8104, 5
        %v8221 = vsel %vm7924, %v8219, %v8220
        %v8222 = vrot.slane %v8105, 5
        %v8223 = vsel %vm7924, %v8220, %v8222
        %v8224 = vrot.slane %v8106, 5
        %v8225 = vrot.slane %v8107, 5
        %v8226 = vsel %vm7924, %v8224, %v8225
        %v8227 = vrot.slane %v8108, 5
        %v8228 = vsel %vm7924, %v8225, %v8227
        %v8229 = vrot.slane %v8109, 5
        %v8230 = vrot.slane %v8110, 5
        %v8231 = vsel %vm7924, %v8229, %v8230
        %v8232 = vrot.slane %v8111, 5
        %v8233 = vsel %vm7924, %v8230, %v8232
        %v8234 = vrot.slane %v8112, 5
        %v8235 = vrot.slane %v8113, 5
        %v8236 = vsel %vm7924, %v8234, %v8235
        %v8237 = vrot.slane %v8114, 5
        %v8238 = vsel %vm7924, %v8235, %v8237
        %v8239 = vrot.slane %v8115, 5
        %v8240 = vrot.slane %v8116, 5
        %v8241 = vsel %vm7924, %v8239, %v8240
        %v8242 = vrot.slane %v8117, 5
        %v8243 = vsel %vm7924, %v8240, %v8242
        %v8244 = vrot.slane %v8118, 5
        %v8245 = vrot.slane %v8119, 5
        %v8246 = vsel %vm7924, %v8244, %v8245
        %v8247 = vrot.slane %v8120, 5
        %v8248 = vsel %vm7924, %v8245, %v8247
        %v8281 = vadd.f32 %v8037, %v8171
        %v8282 = vadd.f32 %v8038, %v8173
        %v8283 = vadd.f32 %v8039, %v8176
        %v8284 = vadd.f32 %v8040, %v8178
        %v8285 = vadd.f32 %v8041, %v8181
        %v8286 = vadd.f32 %v8042, %v8183
        %v8287 = vadd.f32 %v8043, %v8186
        %v8288 = vadd.f32 %v8044, %v8188
        %v8289 = vadd.f32 %v8045, %v8191
        %v8290 = vadd.f32 %v8046, %v8193
        %v8291 = vadd.f32 %v8047, %v8196
        %v8292 = vadd.f32 %v8048, %v8198
        %v8293 = vadd.f32 %v8049, %v8201
        %v8294 = vadd.f32 %v8050, %v8203
        %v8295 = vadd.f32 %v8051, %v8206
        %v8296 = vadd.f32 %v8052, %v8208
        %v8297 = vadd.f32 %v8053, %v8211
        %v8298 = vadd.f32 %v8054, %v8213
        %v8299 = vadd.f32 %v8055, %v8216
        %v8300 = vadd.f32 %v8056, %v8218
        %v8301 = vadd.f32 %v8057, %v8221
        %v8302 = vadd.f32 %v8058, %v8223
        %v8303 = vadd.f32 %v8059, %v8226
        %v8304 = vadd.f32 %v8060, %v8228
        %v8305 = vadd.f32 %v8061, %v8231
        %v8306 = vadd.f32 %v8062, %v8233
        %v8307 = vadd.f32 %v8063, %v8236
        %v8308 = vadd.f32 %v8064, %v8238
        %v8309 = vadd.f32 %v8065, %v8241
        %v8310 = vadd.f32 %v8066, %v8243
        %v8311 = vadd.f32 %v8067, %v8246
        %v8312 = vadd.f32 %v8068, %v8248
        %v8313 = vlaneseq
        %v8314 = vshrl.u32 %v8313, 7
        %v8315 = vsub.s32 5, %v8314
        %v8316 = vrot.slane %v539, %v8315
        %v8317 = vmul.f32 %v477, %v8316
        %v8318 = vmul.f32 %v478, %v8316
        %v8319 = vmul.f32 %v479, %v8316
        %v8320 = vmul.f32 %v480, %v8316
        %v8321 = vmul.f32 %v481, %v8316
        %v8322 = vmul.f32 %v482, %v8316
        %v8323 = vmul.f32 %v483, %v8316
        %v8324 = vmul.f32 %v484, %v8316
        %v8325 = vmul.f32 %v485, %v8316
        %v8326 = vmul.f32 %v486, %v8316
        %v8327 = vmul.f32 %v487, %v8316
        %v8328 = vmul.f32 %v488, %v8316
        %v8329 = vmul.f32 %v489, %v8316
        %v8330 = vmul.f32 %v490, %v8316
        %v8331 = vmul.f32 %v491, %v8316
        %v8332 = vmul.f32 %v492, %v8316
        %v8333 = vmul.f32 %v493, %v8316
        %v8334 = vmul.f32 %v494, %v8316
        %v8335 = vmul.f32 %v495, %v8316
        %v8336 = vmul.f32 %v496, %v8316
        %v8337 = vmul.f32 %v497, %v8316
        %v8338 = vmul.f32 %v498, %v8316
        %v8339 = vmul.f32 %v499, %v8316
        %v8340 = vmul.f32 %v500, %v8316
        %v8341 = vmul.f32 %v501, %v8316
        %v8342 = vmul.f32 %v502, %v8316
        %v8343 = vmul.f32 %v503, %v8316
        %v8344 = vmul.f32 %v504, %v8316
        %v8345 = vmul.f32 %v505, %v8316
        %v8346 = vmul.f32 %v506, %v8316
        %v8347 = vmul.f32 %v507, %v8316
        %v8348 = vmul.f32 %v508, %v8316
        %v8349 = vmul.f32 %v509, %v8316
        %v8350 = vmul.f32 %v510, %v8316
        %v8351 = vmul.f32 %v511, %v8316
        %v8352 = vmul.f32 %v512, %v8316
        %v8353 = vmul.f32 %v513, %v8316
        %v8354 = vmul.f32 %v514, %v8316
        %v8355 = vmul.f32 %v515, %v8316
        %v8356 = vmul.f32 %v516, %v8316
        %v8357 = vmul.f32 %v517, %v8316
        %v8358 = vmul.f32 %v518, %v8316
        %v8359 = vmul.f32 %v519, %v8316
        %v8360 = vmul.f32 %v520, %v8316
        %v8361 = vmul.f32 %v521, %v8316
        %v8362 = vmul.f32 %v522, %v8316
        %v8363 = vmul.f32 %v523, %v8316
        %v8364 = vmul.f32 %v524, %v8316
        %v8413 = vrot.slane %v8317, 5
        %v8414 = vrot.slane %v8318, 5
        %v8415 = vsel %vm7924, %v8413, %v8414
        %v8416 = vrot.slane %v8319, 5
        %v8417 = vsel %vm7924, %v8414, %v8416
        %v8418 = vrot.slane %v8320, 5
        %v8419 = vrot.slane %v8321, 5
        %v8420 = vsel %vm7924, %v8418, %v8419
        %v8421 = vrot.slane %v8322, 5
        %v8422 = vsel %vm7924, %v8419, %v8421
        %v8423 = vrot.slane %v8323, 5
        %v8424 = vrot.slane %v8324, 5
        %v8425 = vsel %vm7924, %v8423, %v8424
        %v8426 = vrot.slane %v8325, 5
        %v8427 = vsel %vm7924, %v8424, %v8426
        %v8428 = vrot.slane %v8326, 5
        %v8429 = vrot.slane %v8327, 5
        %v8430 = vsel %vm7924, %v8428, %v8429
        %v8431 = vrot.slane %v8328, 5
        %v8432 = vsel %vm7924, %v8429, %v8431
        %v8433 = vrot.slane %v8329, 5
        %v8434 = vrot.slane %v8330, 5
        %v8435 = vsel %vm7924, %v8433, %v8434
        %v8436 = vrot.slane %v8331, 5
        %v8437 = vsel %vm7924, %v8434, %v8436
        %v8438 = vrot.slane %v8332, 5
        %v8439 = vrot.slane %v8333, 5
        %v8440 = vsel %vm7924, %v8438, %v8439
        %v8441 = vrot.slane %v8334, 5
        %v8442 = vsel %vm7924, %v8439, %v8441
        %v8443 = vrot.slane %v8335, 5
        %v8444 = vrot.slane %v8336, 5
        %v8445 = vsel %vm7924, %v8443, %v8444
        %v8446 = vrot.slane %v8337, 5
        %v8447 = vsel %vm7924, %v8444, %v8446
        %v8448 = vrot.slane %v8338, 5
        %v8449 = vrot.slane %v8339, 5
        %v8450 = vsel %vm7924, %v8448, %v8449
        %v8451 = vrot.slane %v8340, 5
        %v8452 = vsel %vm7924, %v8449, %v8451
        %v8453 = vrot.slane %v8341, 5
        %v8454 = vrot.slane %v8342, 5
        %v8455 = vsel %vm7924, %v8453, %v8454
        %v8456 = vrot.slane %v8343, 5
        %v8457 = vsel %vm7924, %v8454, %v8456
        %v8458 = vrot.slane %v8344, 5
        %v8459 = vrot.slane %v8345, 5
        %v8460 = vsel %vm7924, %v8458, %v8459
        %v8461 = vrot.slane %v8346, 5
        %v8462 = vsel %vm7924, %v8459, %v8461
        %v8463 = vrot.slane %v8347, 5
        %v8464 = vrot.slane %v8348, 5
        %v8465 = vsel %vm7924, %v8463, %v8464
        %v8466 = vrot.slane %v8349, 5
        %v8467 = vsel %vm7924, %v8464, %v8466
        %v8468 = vrot.slane %v8350, 5
        %v8469 = vrot.slane %v8351, 5
        %v8470 = vsel %vm7924, %v8468, %v8469
        %v8471 = vrot.slane %v8352, 5
        %v8472 = vsel %vm7924, %v8469, %v8471
        %v8473 = vrot.slane %v8353, 5
        %v8474 = vrot.slane %v8354, 5
        %v8475 = vsel %vm7924, %v8473, %v8474
        %v8476 = vrot.slane %v8355, 5
        %v8477 = vsel %vm7924, %v8474, %v8476
        %v8478 = vrot.slane %v8356, 5
        %v8479 = vrot.slane %v8357, 5
        %v8480 = vsel %vm7924, %v8478, %v8479
        %v8481 = vrot.slane %v8358, 5
        %v8482 = vsel %vm7924, %v8479, %v8481
        %v8483 = vrot.slane %v8359, 5
        %v8484 = vrot.slane %v8360, 5
        %v8485 = vsel %vm7924, %v8483, %v8484
        %v8486 = vrot.slane %v8361, 5
        %v8487 = vsel %vm7924, %v8484, %v8486
        %v8488 = vrot.slane %v8362, 5
        %v8489 = vrot.slane %v8363, 5
        %v8490 = vsel %vm7924, %v8488, %v8489
        %v8491 = vrot.slane %v8364, 5
        %v8492 = vsel %vm7924, %v8489, %v8491
        %v8525 = vadd.f32 %v8281, %v8415
        %v8526 = vadd.f32 %v8282, %v8417
        %v8527 = vadd.f32 %v8283, %v8420
        %v8528 = vadd.f32 %v8284, %v8422
        %v8529 = vadd.f32 %v8285, %v8425
        %v8530 = vadd.f32 %v8286, %v8427
        %v8531 = vadd.f32 %v8287, %v8430
        %v8532 = vadd.f32 %v8288, %v8432
        %v8533 = vadd.f32 %v8289, %v8435
        %v8534 = vadd.f32 %v8290, %v8437
        %v8535 = vadd.f32 %v8291, %v8440
        %v8536 = vadd.f32 %v8292, %v8442
        %v8537 = vadd.f32 %v8293, %v8445
        %v8538 = vadd.f32 %v8294, %v8447
        %v8539 = vadd.f32 %v8295, %v8450
        %v8540 = vadd.f32 %v8296, %v8452
        %v8541 = vadd.f32 %v8297, %v8455
        %v8542 = vadd.f32 %v8298, %v8457
        %v8543 = vadd.f32 %v8299, %v8460
        %v8544 = vadd.f32 %v8300, %v8462
        %v8545 = vadd.f32 %v8301, %v8465
        %v8546 = vadd.f32 %v8302, %v8467
        %v8547 = vadd.f32 %v8303, %v8470
        %v8548 = vadd.f32 %v8304, %v8472
        %v8549 = vadd.f32 %v8305, %v8475
        %v8550 = vadd.f32 %v8306, %v8477
        %v8551 = vadd.f32 %v8307, %v8480
        %v8552 = vadd.f32 %v8308, %v8482
        %v8553 = vadd.f32 %v8309, %v8485
        %v8554 = vadd.f32 %v8310, %v8487
        %v8555 = vadd.f32 %v8311, %v8490
        %v8556 = vadd.f32 %v8312, %v8492
        %v8557 = vlaneseq
        %v8558 = vshrl.u32 %v8557, 7
        %v8559 = vsub.s32 5, %v8558
        %v8560 = vrot.slane %v540, %v8559
        %v8561 = vmul.f32 %v480, %v8560
        %v8562 = vmul.f32 %v481, %v8560
        %v8563 = vmul.f32 %v482, %v8560
        %v8564 = vmul.f32 %v483, %v8560
        %v8565 = vmul.f32 %v484, %v8560
        %v8566 = vmul.f32 %v485, %v8560
        %v8567 = vmul.f32 %v486, %v8560
        %v8568 = vmul.f32 %v487, %v8560
        %v8569 = vmul.f32 %v488, %v8560
        %v8570 = vmul.f32 %v489, %v8560
        %v8571 = vmul.f32 %v490, %v8560
        %v8572 = vmul.f32 %v491, %v8560
        %v8573 = vmul.f32 %v492, %v8560
        %v8574 = vmul.f32 %v493, %v8560
        %v8575 = vmul.f32 %v494, %v8560
        %v8576 = vmul.f32 %v495, %v8560
        %v8577 = vmul.f32 %v496, %v8560
        %v8578 = vmul.f32 %v497, %v8560
        %v8579 = vmul.f32 %v498, %v8560
        %v8580 = vmul.f32 %v499, %v8560
        %v8581 = vmul.f32 %v500, %v8560
        %v8582 = vmul.f32 %v501, %v8560
        %v8583 = vmul.f32 %v502, %v8560
        %v8584 = vmul.f32 %v503, %v8560
        %v8585 = vmul.f32 %v504, %v8560
        %v8586 = vmul.f32 %v505, %v8560
        %v8587 = vmul.f32 %v506, %v8560
        %v8588 = vmul.f32 %v507, %v8560
        %v8589 = vmul.f32 %v508, %v8560
        %v8590 = vmul.f32 %v509, %v8560
        %v8591 = vmul.f32 %v510, %v8560
        %v8592 = vmul.f32 %v511, %v8560
        %v8593 = vmul.f32 %v512, %v8560
        %v8594 = vmul.f32 %v513, %v8560
        %v8595 = vmul.f32 %v514, %v8560
        %v8596 = vmul.f32 %v515, %v8560
        %v8597 = vmul.f32 %v516, %v8560
        %v8598 = vmul.f32 %v517, %v8560
        %v8599 = vmul.f32 %v518, %v8560
        %v8600 = vmul.f32 %v519, %v8560
        %v8601 = vmul.f32 %v520, %v8560
        %v8602 = vmul.f32 %v521, %v8560
        %v8603 = vmul.f32 %v522, %v8560
        %v8604 = vmul.f32 %v523, %v8560
        %v8605 = vmul.f32 %v524, %v8560
        %v8606 = vmul.f32 %v525, %v8560
        %v8607 = vmul.f32 %v526, %v8560
        %v8608 = vmul.f32 %v527, %v8560
        %v8657 = vrot.slane %v8561, 5
        %v8658 = vrot.slane %v8562, 5
        %v8659 = vsel %vm7924, %v8657, %v8658
        %v8660 = vrot.slane %v8563, 5
        %v8661 = vsel %vm7924, %v8658, %v8660
        %v8662 = vrot.slane %v8564, 5
        %v8663 = vrot.slane %v8565, 5
        %v8664 = vsel %vm7924, %v8662, %v8663
        %v8665 = vrot.slane %v8566, 5
        %v8666 = vsel %vm7924, %v8663, %v8665
        %v8667 = vrot.slane %v8567, 5
        %v8668 = vrot.slane %v8568, 5
        %v8669 = vsel %vm7924, %v8667, %v8668
        %v8670 = vrot.slane %v8569, 5
        %v8671 = vsel %vm7924, %v8668, %v8670
        %v8672 = vrot.slane %v8570, 5
        %v8673 = vrot.slane %v8571, 5
        %v8674 = vsel %vm7924, %v8672, %v8673
        %v8675 = vrot.slane %v8572, 5
        %v8676 = vsel %vm7924, %v8673, %v8675
        %v8677 = vrot.slane %v8573, 5
        %v8678 = vrot.slane %v8574, 5
        %v8679 = vsel %vm7924, %v8677, %v8678
        %v8680 = vrot.slane %v8575, 5
        %v8681 = vsel %vm7924, %v8678, %v8680
        %v8682 = vrot.slane %v8576, 5
        %v8683 = vrot.slane %v8577, 5
        %v8684 = vsel %vm7924, %v8682, %v8683
        %v8685 = vrot.slane %v8578, 5
        %v8686 = vsel %vm7924, %v8683, %v8685
        %v8687 = vrot.slane %v8579, 5
        %v8688 = vrot.slane %v8580, 5
        %v8689 = vsel %vm7924, %v8687, %v8688
        %v8690 = vrot.slane %v8581, 5
        %v8691 = vsel %vm7924, %v8688, %v8690
        %v8692 = vrot.slane %v8582, 5
        %v8693 = vrot.slane %v8583, 5
        %v8694 = vsel %vm7924, %v8692, %v8693
        %v8695 = vrot.slane %v8584, 5
        %v8696 = vsel %vm7924, %v8693, %v8695
        %v8697 = vrot.slane %v8585, 5
        %v8698 = vrot.slane %v8586, 5
        %v8699 = vsel %vm7924, %v8697, %v8698
        %v8700 = vrot.slane %v8587, 5
        %v8701 = vsel %vm7924, %v8698, %v8700
        %v8702 = vrot.slane %v8588, 5
        %v8703 = vrot.slane %v8589, 5
        %v8704 = vsel %vm7924, %v8702, %v8703
        %v8705 = vrot.slane %v8590, 5
        %v8706 = vsel %vm7924, %v8703, %v8705
        %v8707 = vrot.slane %v8591, 5
        %v8708 = vrot.slane %v8592, 5
        %v8709 = vsel %vm7924, %v8707, %v8708
        %v8710 = vrot.slane %v8593, 5
        %v8711 = vsel %vm7924, %v8708, %v8710
        %v8712 = vrot.slane %v8594, 5
        %v8713 = vrot.slane %v8595, 5
        %v8714 = vsel %vm7924, %v8712, %v8713
        %v8715 = vrot.slane %v8596, 5
        %v8716 = vsel %vm7924, %v8713, %v8715
        %v8717 = vrot.slane %v8597, 5
        %v8718 = vrot.slane %v8598, 5
        %v8719 = vsel %vm7924, %v8717, %v8718
        %v8720 = vrot.slane %v8599, 5
        %v8721 = vsel %vm7924, %v8718, %v8720
        %v8722 = vrot.slane %v8600, 5
        %v8723 = vrot.slane %v8601, 5
        %v8724 = vsel %vm7924, %v8722, %v8723
        %v8725 = vrot.slane %v8602, 5
        %v8726 = vsel %vm7924, %v8723, %v8725
        %v8727 = vrot.slane %v8603, 5
        %v8728 = vrot.slane %v8604, 5
        %v8729 = vsel %vm7924, %v8727, %v8728
        %v8730 = vrot.slane %v8605, 5
        %v8731 = vsel %vm7924, %v8728, %v8730
        %v8732 = vrot.slane %v8606, 5
        %v8733 = vrot.slane %v8607, 5
        %v8734 = vsel %vm7924, %v8732, %v8733
        %v8735 = vrot.slane %v8608, 5
        %v8736 = vsel %vm7924, %v8733, %v8735
        %v8769 = vadd.f32 %v8525, %v8659
        %v8770 = vadd.f32 %v8526, %v8661
        %v8771 = vadd.f32 %v8527, %v8664
        %v8772 = vadd.f32 %v8528, %v8666
        %v8773 = vadd.f32 %v8529, %v8669
        %v8774 = vadd.f32 %v8530, %v8671
        %v8775 = vadd.f32 %v8531, %v8674
        %v8776 = vadd.f32 %v8532, %v8676
        %v8777 = vadd.f32 %v8533, %v8679
        %v8778 = vadd.f32 %v8534, %v8681
        %v8779 = vadd.f32 %v8535, %v8684
        %v8780 = vadd.f32 %v8536, %v8686
        %v8781 = vadd.f32 %v8537, %v8689
        %v8782 = vadd.f32 %v8538, %v8691
        %v8783 = vadd.f32 %v8539, %v8694
        %v8784 = vadd.f32 %v8540, %v8696
        %v8785 = vadd.f32 %v8541, %v8699
        %v8786 = vadd.f32 %v8542, %v8701
        %v8787 = vadd.f32 %v8543, %v8704
        %v8788 = vadd.f32 %v8544, %v8706
        %v8789 = vadd.f32 %v8545, %v8709
        %v8790 = vadd.f32 %v8546, %v8711
        %v8791 = vadd.f32 %v8547, %v8714
        %v8792 = vadd.f32 %v8548, %v8716
        %v8793 = vadd.f32 %v8549, %v8719
        %v8794 = vadd.f32 %v8550, %v8721
        %v8795 = vadd.f32 %v8551, %v8724
        %v8796 = vadd.f32 %v8552, %v8726
        %v8797 = vadd.f32 %v8553, %v8729
        %v8798 = vadd.f32 %v8554, %v8731
        %v8799 = vadd.f32 %v8555, %v8734
        %v8800 = vadd.f32 %v8556, %v8736
        %v8801 = vlaneseq
        %v8802 = vshrl.u32 %v8801, 7
        %v8803 = vsub.s32 5, %v8802
        %v8804 = vrot.slane %v541, %v8803
        %v8805 = vmul.f32 %v483, %v8804
        %v8806 = vmul.f32 %v484, %v8804
        %v8807 = vmul.f32 %v485, %v8804
        %v8808 = vmul.f32 %v486, %v8804
        %v8809 = vmul.f32 %v487, %v8804
        %v8810 = vmul.f32 %v488, %v8804
        %v8811 = vmul.f32 %v489, %v8804
        %v8812 = vmul.f32 %v490, %v8804
        %v8813 = vmul.f32 %v491, %v8804
        %v8814 = vmul.f32 %v492, %v8804
        %v8815 = vmul.f32 %v493, %v8804
        %v8816 = vmul.f32 %v494, %v8804
        %v8817 = vmul.f32 %v495, %v8804
        %v8818 = vmul.f32 %v496, %v8804
        %v8819 = vmul.f32 %v497, %v8804
        %v8820 = vmul.f32 %v498, %v8804
        %v8821 = vmul.f32 %v499, %v8804
        %v8822 = vmul.f32 %v500, %v8804
        %v8823 = vmul.f32 %v501, %v8804
        %v8824 = vmul.f32 %v502, %v8804
        %v8825 = vmul.f32 %v503, %v8804
        %v8826 = vmul.f32 %v504, %v8804
        %v8827 = vmul.f32 %v505, %v8804
        %v8828 = vmul.f32 %v506, %v8804
        %v8829 = vmul.f32 %v507, %v8804
        %v8830 = vmul.f32 %v508, %v8804
        %v8831 = vmul.f32 %v509, %v8804
        %v8832 = vmul.f32 %v510, %v8804
        %v8833 = vmul.f32 %v511, %v8804
        %v8834 = vmul.f32 %v512, %v8804
        %v8835 = vmul.f32 %v513, %v8804
        %v8836 = vmul.f32 %v514, %v8804
        %v8837 = vmul.f32 %v515, %v8804
        %v8838 = vmul.f32 %v516, %v8804
        %v8839 = vmul.f32 %v517, %v8804
        %v8840 = vmul.f32 %v518, %v8804
        %v8841 = vmul.f32 %v519, %v8804
        %v8842 = vmul.f32 %v520, %v8804
        %v8843 = vmul.f32 %v521, %v8804
        %v8844 = vmul.f32 %v522, %v8804
        %v8845 = vmul.f32 %v523, %v8804
        %v8846 = vmul.f32 %v524, %v8804
        %v8847 = vmul.f32 %v525, %v8804
        %v8848 = vmul.f32 %v526, %v8804
        %v8849 = vmul.f32 %v527, %v8804
        %v8850 = vmul.f32 %v528, %v8804
        %v8851 = vmul.f32 %v529, %v8804
        %v8852 = vmul.f32 %v530, %v8804
        %v8901 = vrot.slane %v8805, 5
        %v8902 = vrot.slane %v8806, 5
        %v8903 = vsel %vm7924, %v8901, %v8902
        %v8904 = vrot.slane %v8807, 5
        %v8905 = vsel %vm7924, %v8902, %v8904
        %v8906 = vrot.slane %v8808, 5
        %v8907 = vrot.slane %v8809, 5
        %v8908 = vsel %vm7924, %v8906, %v8907
        %v8909 = vrot.slane %v8810, 5
        %v8910 = vsel %vm7924, %v8907, %v8909
        %v8911 = vrot.slane %v8811, 5
        %v8912 = vrot.slane %v8812, 5
        %v8913 = vsel %vm7924, %v8911, %v8912
        %v8914 = vrot.slane %v8813, 5
        %v8915 = vsel %vm7924, %v8912, %v8914
        %v8916 = vrot.slane %v8814, 5
        %v8917 = vrot.slane %v8815, 5
        %v8918 = vsel %vm7924, %v8916, %v8917
        %v8919 = vrot.slane %v8816, 5
        %v8920 = vsel %vm7924, %v8917, %v8919
        %v8921 = vrot.slane %v8817, 5
        %v8922 = vrot.slane %v8818, 5
        %v8923 = vsel %vm7924, %v8921, %v8922
        %v8924 = vrot.slane %v8819, 5
        %v8925 = vsel %vm7924, %v8922, %v8924
        %v8926 = vrot.slane %v8820, 5
        %v8927 = vrot.slane %v8821, 5
        %v8928 = vsel %vm7924, %v8926, %v8927
        %v8929 = vrot.slane %v8822, 5
        %v8930 = vsel %vm7924, %v8927, %v8929
        %v8931 = vrot.slane %v8823, 5
        %v8932 = vrot.slane %v8824, 5
        %v8933 = vsel %vm7924, %v8931, %v8932
        %v8934 = vrot.slane %v8825, 5
        %v8935 = vsel %vm7924, %v8932, %v8934
        %v8936 = vrot.slane %v8826, 5
        %v8937 = vrot.slane %v8827, 5
        %v8938 = vsel %vm7924, %v8936, %v8937
        %v8939 = vrot.slane %v8828, 5
        %v8940 = vsel %vm7924, %v8937, %v8939
        %v8941 = vrot.slane %v8829, 5
        %v8942 = vrot.slane %v8830, 5
        %v8943 = vsel %vm7924, %v8941, %v8942
        %v8944 = vrot.slane %v8831, 5
        %v8945 = vsel %vm7924, %v8942, %v8944
        %v8946 = vrot.slane %v8832, 5
        %v8947 = vrot.slane %v8833, 5
        %v8948 = vsel %vm7924, %v8946, %v8947
        %v8949 = vrot.slane %v8834, 5
        %v8950 = vsel %vm7924, %v8947, %v8949
        %v8951 = vrot.slane %v8835, 5
        %v8952 = vrot.slane %v8836, 5
        %v8953 = vsel %vm7924, %v8951, %v8952
        %v8954 = vrot.slane %v8837, 5
        %v8955 = vsel %vm7924, %v8952, %v8954
        %v8956 = vrot.slane %v8838, 5
        %v8957 = vrot.slane %v8839, 5
        %v8958 = vsel %vm7924, %v8956, %v8957
        %v8959 = vrot.slane %v8840, 5
        %v8960 = vsel %vm7924, %v8957, %v8959
        %v8961 = vrot.slane %v8841, 5
        %v8962 = vrot.slane %v8842, 5
        %v8963 = vsel %vm7924, %v8961, %v8962
        %v8964 = vrot.slane %v8843, 5
        %v8965 = vsel %vm7924, %v8962, %v8964
        %v8966 = vrot.slane %v8844, 5
        %v8967 = vrot.slane %v8845, 5
        %v8968 = vsel %vm7924, %v8966, %v8967
        %v8969 = vrot.slane %v8846, 5
        %v8970 = vsel %vm7924, %v8967, %v8969
        %v8971 = vrot.slane %v8847, 5
        %v8972 = vrot.slane %v8848, 5
        %v8973 = vsel %vm7924, %v8971, %v8972
        %v8974 = vrot.slane %v8849, 5
        %v8975 = vsel %vm7924, %v8972, %v8974
        %v8976 = vrot.slane %v8850, 5
        %v8977 = vrot.slane %v8851, 5
        %v8978 = vsel %vm7924, %v8976, %v8977
        %v8979 = vrot.slane %v8852, 5
        %v8980 = vsel %vm7924, %v8977, %v8979
        %v9013 = vadd.f32 %v8769, %v8903
        %v9014 = vadd.f32 %v8770, %v8905
        %v9015 = vadd.f32 %v8771, %v8908
        %v9016 = vadd.f32 %v8772, %v8910
        %v9017 = vadd.f32 %v8773, %v8913
        %v9018 = vadd.f32 %v8774, %v8915
        %v9019 = vadd.f32 %v8775, %v8918
        %v9020 = vadd.f32 %v8776, %v8920
        %v9021 = vadd.f32 %v8777, %v8923
        %v9022 = vadd.f32 %v8778, %v8925
        %v9023 = vadd.f32 %v8779, %v8928
        %v9024 = vadd.f32 %v8780, %v8930
        %v9025 = vadd.f32 %v8781, %v8933
        %v9026 = vadd.f32 %v8782, %v8935
        %v9027 = vadd.f32 %v8783, %v8938
        %v9028 = vadd.f32 %v8784, %v8940
        %v9029 = vadd.f32 %v8785, %v8943
        %v9030 = vadd.f32 %v8786, %v8945
        %v9031 = vadd.f32 %v8787, %v8948
        %v9032 = vadd.f32 %v8788, %v8950
        %v9033 = vadd.f32 %v8789, %v8953
        %v9034 = vadd.f32 %v8790, %v8955
        %v9035 = vadd.f32 %v8791, %v8958
        %v9036 = vadd.f32 %v8792, %v8960
        %v9037 = vadd.f32 %v8793, %v8963
        %v9038 = vadd.f32 %v8794, %v8965
        %v9039 = vadd.f32 %v8795, %v8968
        %v9040 = vadd.f32 %v8796, %v8970
        %v9041 = vadd.f32 %v8797, %v8973
        %v9042 = vadd.f32 %v8798, %v8975
        %v9043 = vadd.f32 %v8799, %v8978
        %v9044 = vadd.f32 %v8800, %v8980
        %v9045 = vlaneseq
        %v9046 = vshrl.u32 %v9045, 7
        %v9047 = vsub.s32 5, %v9046
        %v9048 = vrot.slane %v542, %v9047
        %v9049 = vmul.f32 %v486, %v9048
        %v9050 = vmul.f32 %v487, %v9048
        %v9051 = vmul.f32 %v488, %v9048
        %v9052 = vmul.f32 %v489, %v9048
        %v9053 = vmul.f32 %v490, %v9048
        %v9054 = vmul.f32 %v491, %v9048
        %v9055 = vmul.f32 %v492, %v9048
        %v9056 = vmul.f32 %v493, %v9048
        %v9057 = vmul.f32 %v494, %v9048
        %v9058 = vmul.f32 %v495, %v9048
        %v9059 = vmul.f32 %v496, %v9048
        %v9060 = vmul.f32 %v497, %v9048
        %v9061 = vmul.f32 %v498, %v9048
        %v9062 = vmul.f32 %v499, %v9048
        %v9063 = vmul.f32 %v500, %v9048
        %v9064 = vmul.f32 %v501, %v9048
        %v9065 = vmul.f32 %v502, %v9048
        %v9066 = vmul.f32 %v503, %v9048
        %v9067 = vmul.f32 %v504, %v9048
        %v9068 = vmul.f32 %v505, %v9048
        %v9069 = vmul.f32 %v506, %v9048
        %v9070 = vmul.f32 %v507, %v9048
        %v9071 = vmul.f32 %v508, %v9048
        %v9072 = vmul.f32 %v509, %v9048
        %v9073 = vmul.f32 %v510, %v9048
        %v9074 = vmul.f32 %v511, %v9048
        %v9075 = vmul.f32 %v512, %v9048
        %v9076 = vmul.f32 %v513, %v9048
        %v9077 = vmul.f32 %v514, %v9048
        %v9078 = vmul.f32 %v515, %v9048
        %v9079 = vmul.f32 %v516, %v9048
        %v9080 = vmul.f32 %v517, %v9048
        %v9081 = vmul.f32 %v518, %v9048
        %v9082 = vmul.f32 %v519, %v9048
        %v9083 = vmul.f32 %v520, %v9048
        %v9084 = vmul.f32 %v521, %v9048
        %v9085 = vmul.f32 %v522, %v9048
        %v9086 = vmul.f32 %v523, %v9048
        %v9087 = vmul.f32 %v524, %v9048
        %v9088 = vmul.f32 %v525, %v9048
        %v9089 = vmul.f32 %v526, %v9048
        %v9090 = vmul.f32 %v527, %v9048
        %v9091 = vmul.f32 %v528, %v9048
        %v9092 = vmul.f32 %v529, %v9048
        %v9093 = vmul.f32 %v530, %v9048
        %v9094 = vmul.f32 %v531, %v9048
        %v9095 = vmul.f32 %v532, %v9048
        %v9096 = vmul.f32 %v533, %v9048
        %v9145 = vrot.slane %v9049, 5
        %v9146 = vrot.slane %v9050, 5
        %v9147 = vsel %vm7924, %v9145, %v9146
        %v9148 = vrot.slane %v9051, 5
        %v9149 = vsel %vm7924, %v9146, %v9148
        %v9150 = vrot.slane %v9052, 5
        %v9151 = vrot.slane %v9053, 5
        %v9152 = vsel %vm7924, %v9150, %v9151
        %v9153 = vrot.slane %v9054, 5
        %v9154 = vsel %vm7924, %v9151, %v9153
        %v9155 = vrot.slane %v9055, 5
        %v9156 = vrot.slane %v9056, 5
        %v9157 = vsel %vm7924, %v9155, %v9156
        %v9158 = vrot.slane %v9057, 5
        %v9159 = vsel %vm7924, %v9156, %v9158
        %v9160 = vrot.slane %v9058, 5
        %v9161 = vrot.slane %v9059, 5
        %v9162 = vsel %vm7924, %v9160, %v9161
        %v9163 = vrot.slane %v9060, 5
        %v9164 = vsel %vm7924, %v9161, %v9163
        %v9165 = vrot.slane %v9061, 5
        %v9166 = vrot.slane %v9062, 5
        %v9167 = vsel %vm7924, %v9165, %v9166
        %v9168 = vrot.slane %v9063, 5
        %v9169 = vsel %vm7924, %v9166, %v9168
        %v9170 = vrot.slane %v9064, 5
        %v9171 = vrot.slane %v9065, 5
        %v9172 = vsel %vm7924, %v9170, %v9171
        %v9173 = vrot.slane %v9066, 5
        %v9174 = vsel %vm7924, %v9171, %v9173
        %v9175 = vrot.slane %v9067, 5
        %v9176 = vrot.slane %v9068, 5
        %v9177 = vsel %vm7924, %v9175, %v9176
        %v9178 = vrot.slane %v9069, 5
        %v9179 = vsel %vm7924, %v9176, %v9178
        %v9180 = vrot.slane %v9070, 5
        %v9181 = vrot.slane %v9071, 5
        %v9182 = vsel %vm7924, %v9180, %v9181
        %v9183 = vrot.slane %v9072, 5
        %v9184 = vsel %vm7924, %v9181, %v9183
        %v9185 = vrot.slane %v9073, 5
        %v9186 = vrot.slane %v9074, 5
        %v9187 = vsel %vm7924, %v9185, %v9186
        %v9188 = vrot.slane %v9075, 5
        %v9189 = vsel %vm7924, %v9186, %v9188
        %v9190 = vrot.slane %v9076, 5
        %v9191 = vrot.slane %v9077, 5
        %v9192 = vsel %vm7924, %v9190, %v9191
        %v9193 = vrot.slane %v9078, 5
        %v9194 = vsel %vm7924, %v9191, %v9193
        %v9195 = vrot.slane %v9079, 5
        %v9196 = vrot.slane %v9080, 5
        %v9197 = vsel %vm7924, %v9195, %v9196
        %v9198 = vrot.slane %v9081, 5
        %v9199 = vsel %vm7924, %v9196, %v9198
        %v9200 = vrot.slane %v9082, 5
        %v9201 = vrot.slane %v9083, 5
        %v9202 = vsel %vm7924, %v9200, %v9201
        %v9203 = vrot.slane %v9084, 5
        %v9204 = vsel %vm7924, %v9201, %v9203
        %v9205 = vrot.slane %v9085, 5
        %v9206 = vrot.slane %v9086, 5
        %v9207 = vsel %vm7924, %v9205, %v9206
        %v9208 = vrot.slane %v9087, 5
        %v9209 = vsel %vm7924, %v9206, %v9208
        %v9210 = vrot.slane %v9088, 5
        %v9211 = vrot.slane %v9089, 5
        %v9212 = vsel %vm7924, %v9210, %v9211
        %v9213 = vrot.slane %v9090, 5
        %v9214 = vsel %vm7924, %v9211, %v9213
        %v9215 = vrot.slane %v9091, 5
        %v9216 = vrot.slane %v9092, 5
        %v9217 = vsel %vm7924, %v9215, %v9216
        %v9218 = vrot.slane %v9093, 5
        %v9219 = vsel %vm7924, %v9216, %v9218
        %v9220 = vrot.slane %v9094, 5
        %v9221 = vrot.slane %v9095, 5
        %v9222 = vsel %vm7924, %v9220, %v9221
        %v9223 = vrot.slane %v9096, 5
        %v9224 = vsel %vm7924, %v9221, %v9223
        %v9257 = vadd.f32 %v9013, %v9147
        %v9258 = vadd.f32 %v9014, %v9149
        %v9259 = vadd.f32 %v9015, %v9152
        %v9260 = vadd.f32 %v9016, %v9154
        %v9261 = vadd.f32 %v9017, %v9157
        %v9262 = vadd.f32 %v9018, %v9159
        %v9263 = vadd.f32 %v9019, %v9162
        %v9264 = vadd.f32 %v9020, %v9164
        %v9265 = vadd.f32 %v9021, %v9167
        %v9266 = vadd.f32 %v9022, %v9169
        %v9267 = vadd.f32 %v9023, %v9172
        %v9268 = vadd.f32 %v9024, %v9174
        %v9269 = vadd.f32 %v9025, %v9177
        %v9270 = vadd.f32 %v9026, %v9179
        %v9271 = vadd.f32 %v9027, %v9182
        %v9272 = vadd.f32 %v9028, %v9184
        %v9273 = vadd.f32 %v9029, %v9187
        %v9274 = vadd.f32 %v9030, %v9189
        %v9275 = vadd.f32 %v9031, %v9192
        %v9276 = vadd.f32 %v9032, %v9194
        %v9277 = vadd.f32 %v9033, %v9197
        %v9278 = vadd.f32 %v9034, %v9199
        %v9279 = vadd.f32 %v9035, %v9202
        %v9280 = vadd.f32 %v9036, %v9204
        %v9281 = vadd.f32 %v9037, %v9207
        %v9282 = vadd.f32 %v9038, %v9209
        %v9283 = vadd.f32 %v9039, %v9212
        %v9284 = vadd.f32 %v9040, %v9214
        %v9285 = vadd.f32 %v9041, %v9217
        %v9286 = vadd.f32 %v9042, %v9219
        %v9287 = vadd.f32 %v9043, %v9222
        %v9288 = vadd.f32 %v9044, %v9224
        %v9289 = vlaneseq
        %v9290 = vshrl.u32 %v9289, 7
        %v9291 = vsub.s32 5, %v9290
        %v9292 = vrot.slane %v543, %v9291
        %v9293 = vmul.f32 %v489, %v9292
        %v9294 = vmul.f32 %v490, %v9292
        %v9295 = vmul.f32 %v491, %v9292
        %v9296 = vmul.f32 %v492, %v9292
        %v9297 = vmul.f32 %v493, %v9292
        %v9298 = vmul.f32 %v494, %v9292
        %v9299 = vmul.f32 %v495, %v9292
        %v9300 = vmul.f32 %v496, %v9292
        %v9301 = vmul.f32 %v497, %v9292
        %v9302 = vmul.f32 %v498, %v9292
        %v9303 = vmul.f32 %v499, %v9292
        %v9304 = vmul.f32 %v500, %v9292
        %v9305 = vmul.f32 %v501, %v9292
        %v9306 = vmul.f32 %v502, %v9292
        %v9307 = vmul.f32 %v503, %v9292
        %v9308 = vmul.f32 %v504, %v9292
        %v9309 = vmul.f32 %v505, %v9292
        %v9310 = vmul.f32 %v506, %v9292
        %v9311 = vmul.f32 %v507, %v9292
        %v9312 = vmul.f32 %v508, %v9292
        %v9313 = vmul.f32 %v509, %v9292
        %v9314 = vmul.f32 %v510, %v9292
        %v9315 = vmul.f32 %v511, %v9292
        %v9316 = vmul.f32 %v512, %v9292
        %v9317 = vmul.f32 %v513, %v9292
        %v9318 = vmul.f32 %v514, %v9292
        %v9319 = vmul.f32 %v515, %v9292
        %v9320 = vmul.f32 %v516, %v9292
        %v9321 = vmul.f32 %v517, %v9292
        %v9322 = vmul.f32 %v518, %v9292
        %v9323 = vmul.f32 %v519, %v9292
        %v9324 = vmul.f32 %v520, %v9292
        %v9325 = vmul.f32 %v521, %v9292
        %v9326 = vmul.f32 %v522, %v9292
        %v9327 = vmul.f32 %v523, %v9292
        %v9328 = vmul.f32 %v524, %v9292
        %v9329 = vmul.f32 %v525, %v9292
        %v9330 = vmul.f32 %v526, %v9292
        %v9331 = vmul.f32 %v527, %v9292
        %v9332 = vmul.f32 %v528, %v9292
        %v9333 = vmul.f32 %v529, %v9292
        %v9334 = vmul.f32 %v530, %v9292
        %v9335 = vmul.f32 %v531, %v9292
        %v9336 = vmul.f32 %v532, %v9292
        %v9337 = vmul.f32 %v533, %v9292
        %v9338 = vmul.f32 %v534, %v9292
        %v9339 = vmul.f32 %v535, %v9292
        %v9340 = vmul.f32 %v536, %v9292
        %v9389 = vrot.slane %v9293, 5
        %v9390 = vrot.slane %v9294, 5
        %v9391 = vsel %vm7924, %v9389, %v9390
        %v9392 = vrot.slane %v9295, 5
        %v9393 = vsel %vm7924, %v9390, %v9392
        %v9394 = vrot.slane %v9296, 5
        %v9395 = vrot.slane %v9297, 5
        %v9396 = vsel %vm7924, %v9394, %v9395
        %v9397 = vrot.slane %v9298, 5
        %v9398 = vsel %vm7924, %v9395, %v9397
        %v9399 = vrot.slane %v9299, 5
        %v9400 = vrot.slane %v9300, 5
        %v9401 = vsel %vm7924, %v9399, %v9400
        %v9402 = vrot.slane %v9301, 5
        %v9403 = vsel %vm7924, %v9400, %v9402
        %v9404 = vrot.slane %v9302, 5
        %v9405 = vrot.slane %v9303, 5
        %v9406 = vsel %vm7924, %v9404, %v9405
        %v9407 = vrot.slane %v9304, 5
        %v9408 = vsel %vm7924, %v9405, %v9407
        %v9409 = vrot.slane %v9305, 5
        %v9410 = vrot.slane %v9306, 5
        %v9411 = vsel %vm7924, %v9409, %v9410
        %v9412 = vrot.slane %v9307, 5
        %v9413 = vsel %vm7924, %v9410, %v9412
        %v9414 = vrot.slane %v9308, 5
        %v9415 = vrot.slane %v9309, 5
        %v9416 = vsel %vm7924, %v9414, %v9415
        %v9417 = vrot.slane %v9310, 5
        %v9418 = vsel %vm7924, %v9415, %v9417
        %v9419 = vrot.slane %v9311, 5
        %v9420 = vrot.slane %v9312, 5
        %v9421 = vsel %vm7924, %v9419, %v9420
        %v9422 = vrot.slane %v9313, 5
        %v9423 = vsel %vm7924, %v9420, %v9422
        %v9424 = vrot.slane %v9314, 5
        %v9425 = vrot.slane %v9315, 5
        %v9426 = vsel %vm7924, %v9424, %v9425
        %v9427 = vrot.slane %v9316, 5
        %v9428 = vsel %vm7924, %v9425, %v9427
        %v9429 = vrot.slane %v9317, 5
        %v9430 = vrot.slane %v9318, 5
        %v9431 = vsel %vm7924, %v9429, %v9430
        %v9432 = vrot.slane %v9319, 5
        %v9433 = vsel %vm7924, %v9430, %v9432
        %v9434 = vrot.slane %v9320, 5
        %v9435 = vrot.slane %v9321, 5
        %v9436 = vsel %vm7924, %v9434, %v9435
        %v9437 = vrot.slane %v9322, 5
        %v9438 = vsel %vm7924, %v9435, %v9437
        %v9439 = vrot.slane %v9323, 5
        %v9440 = vrot.slane %v9324, 5
        %v9441 = vsel %vm7924, %v9439, %v9440
        %v9442 = vrot.slane %v9325, 5
        %v9443 = vsel %vm7924, %v9440, %v9442
        %v9444 = vrot.slane %v9326, 5
        %v9445 = vrot.slane %v9327, 5
        %v9446 = vsel %vm7924, %v9444, %v9445
        %v9447 = vrot.slane %v9328, 5
        %v9448 = vsel %vm7924, %v9445, %v9447
        %v9449 = vrot.slane %v9329, 5
        %v9450 = vrot.slane %v9330, 5
        %v9451 = vsel %vm7924, %v9449, %v9450
        %v9452 = vrot.slane %v9331, 5
        %v9453 = vsel %vm7924, %v9450, %v9452
        %v9454 = vrot.slane %v9332, 5
        %v9455 = vrot.slane %v9333, 5
        %v9456 = vsel %vm7924, %v9454, %v9455
        %v9457 = vrot.slane %v9334, 5
        %v9458 = vsel %vm7924, %v9455, %v9457
        %v9459 = vrot.slane %v9335, 5
        %v9460 = vrot.slane %v9336, 5
        %v9461 = vsel %vm7924, %v9459, %v9460
        %v9462 = vrot.slane %v9337, 5
        %v9463 = vsel %vm7924, %v9460, %v9462
        %v9464 = vrot.slane %v9338, 5
        %v9465 = vrot.slane %v9339, 5
        %v9466 = vsel %vm7924, %v9464, %v9465
        %v9467 = vrot.slane %v9340, 5
        %v9468 = vsel %vm7924, %v9465, %v9467
        %v9501 = vadd.f32 %v9257, %v9391
        %v9502 = vadd.f32 %v9258, %v9393
        %v9503 = vadd.f32 %v9259, %v9396
        %v9504 = vadd.f32 %v9260, %v9398
        %v9505 = vadd.f32 %v9261, %v9401
        %v9506 = vadd.f32 %v9262, %v9403
        %v9507 = vadd.f32 %v9263, %v9406
        %v9508 = vadd.f32 %v9264, %v9408
        %v9509 = vadd.f32 %v9265, %v9411
        %v9510 = vadd.f32 %v9266, %v9413
        %v9511 = vadd.f32 %v9267, %v9416
        %v9512 = vadd.f32 %v9268, %v9418
        %v9513 = vadd.f32 %v9269, %v9421
        %v9514 = vadd.f32 %v9270, %v9423
        %v9515 = vadd.f32 %v9271, %v9426
        %v9516 = vadd.f32 %v9272, %v9428
        %v9517 = vadd.f32 %v9273, %v9431
        %v9518 = vadd.f32 %v9274, %v9433
        %v9519 = vadd.f32 %v9275, %v9436
        %v9520 = vadd.f32 %v9276, %v9438
        %v9521 = vadd.f32 %v9277, %v9441
        %v9522 = vadd.f32 %v9278, %v9443
        %v9523 = vadd.f32 %v9279, %v9446
        %v9524 = vadd.f32 %v9280, %v9448
        %v9525 = vadd.f32 %v9281, %v9451
        %v9526 = vadd.f32 %v9282, %v9453
        %v9527 = vadd.f32 %v9283, %v9456
        %v9528 = vadd.f32 %v9284, %v9458
        %v9529 = vadd.f32 %v9285, %v9461
        %v9530 = vadd.f32 %v9286, %v9463
        %v9531 = vadd.f32 %v9287, %v9466
        %v9532 = vadd.f32 %v9288, %v9468
        %v9533 = vlaneseq
        %v9534 = vshrl.u32 %v9533, 7
        %v9535 = vsub.s32 6, %v9534
        %v9536 = vrot.slane %v537, %v9535
        %v9537 = vmul.f32 %v471, %v9536
        %v9538 = vmul.f32 %v472, %v9536
        %v9539 = vmul.f32 %v473, %v9536
        %v9540 = vmul.f32 %v474, %v9536
        %v9541 = vmul.f32 %v475, %v9536
        %v9542 = vmul.f32 %v476, %v9536
        %v9543 = vmul.f32 %v477, %v9536
        %v9544 = vmul.f32 %v478, %v9536
        %v9545 = vmul.f32 %v479, %v9536
        %v9546 = vmul.f32 %v480, %v9536
        %v9547 = vmul.f32 %v481, %v9536
        %v9548 = vmul.f32 %v482, %v9536
        %v9549 = vmul.f32 %v483, %v9536
        %v9550 = vmul.f32 %v484, %v9536
        %v9551 = vmul.f32 %v485, %v9536
        %v9552 = vmul.f32 %v486, %v9536
        %v9553 = vmul.f32 %v487, %v9536
        %v9554 = vmul.f32 %v488, %v9536
        %v9555 = vmul.f32 %v489, %v9536
        %v9556 = vmul.f32 %v490, %v9536
        %v9557 = vmul.f32 %v491, %v9536
        %v9558 = vmul.f32 %v492, %v9536
        %v9559 = vmul.f32 %v493, %v9536
        %v9560 = vmul.f32 %v494, %v9536
        %v9561 = vmul.f32 %v495, %v9536
        %v9562 = vmul.f32 %v496, %v9536
        %v9563 = vmul.f32 %v497, %v9536
        %v9564 = vmul.f32 %v498, %v9536
        %v9565 = vmul.f32 %v499, %v9536
        %v9566 = vmul.f32 %v500, %v9536
        %v9567 = vmul.f32 %v501, %v9536
        %v9568 = vmul.f32 %v502, %v9536
        %v9569 = vmul.f32 %v503, %v9536
        %v9570 = vmul.f32 %v504, %v9536
        %v9571 = vmul.f32 %v505, %v9536
        %v9572 = vmul.f32 %v506, %v9536
        %v9573 = vmul.f32 %v507, %v9536
        %v9574 = vmul.f32 %v508, %v9536
        %v9575 = vmul.f32 %v509, %v9536
        %v9576 = vmul.f32 %v510, %v9536
        %v9577 = vmul.f32 %v511, %v9536
        %v9578 = vmul.f32 %v512, %v9536
        %v9579 = vmul.f32 %v513, %v9536
        %v9580 = vmul.f32 %v514, %v9536
        %v9581 = vmul.f32 %v515, %v9536
        %v9582 = vmul.f32 %v516, %v9536
        %v9583 = vmul.f32 %v517, %v9536
        %v9584 = vmul.f32 %v518, %v9536
        %vm9633 = vcmask 1041408
        %v9634 = vrot.slane %v9537, 6
        %v9635 = vrot.slane %v9538, 6
        %v9636 = vsel %vm9633, %v9634, %v9635
        %v9637 = vrot.slane %v9539, 6
        %v9638 = vsel %vm9633, %v9635, %v9637
        %v9639 = vrot.slane %v9540, 6
        %v9640 = vrot.slane %v9541, 6
        %v9641 = vsel %vm9633, %v9639, %v9640
        %v9642 = vrot.slane %v9542, 6
        %v9643 = vsel %vm9633, %v9640, %v9642
        %v9644 = vrot.slane %v9543, 6
        %v9645 = vrot.slane %v9544, 6
        %v9646 = vsel %vm9633, %v9644, %v9645
        %v9647 = vrot.slane %v9545, 6
        %v9648 = vsel %vm9633, %v9645, %v9647
        %v9649 = vrot.slane %v9546, 6
        %v9650 = vrot.slane %v9547, 6
        %v9651 = vsel %vm9633, %v9649, %v9650
        %v9652 = vrot.slane %v9548, 6
        %v9653 = vsel %vm9633, %v9650, %v9652
        %v9654 = vrot.slane %v9549, 6
        %v9655 = vrot.slane %v9550, 6
        %v9656 = vsel %vm9633, %v9654, %v9655
        %v9657 = vrot.slane %v9551, 6
        %v9658 = vsel %vm9633, %v9655, %v9657
        %v9659 = vrot.slane %v9552, 6
        %v9660 = vrot.slane %v9553, 6
        %v9661 = vsel %vm9633, %v9659, %v9660
        %v9662 = vrot.slane %v9554, 6
        %v9663 = vsel %vm9633, %v9660, %v9662
        %v9664 = vrot.slane %v9555, 6
        %v9665 = vrot.slane %v9556, 6
        %v9666 = vsel %vm9633, %v9664, %v9665
        %v9667 = vrot.slane %v9557, 6
        %v9668 = vsel %vm9633, %v9665, %v9667
        %v9669 = vrot.slane %v9558, 6
        %v9670 = vrot.slane %v9559, 6
        %v9671 = vsel %vm9633, %v9669, %v9670
        %v9672 = vrot.slane %v9560, 6
        %v9673 = vsel %vm9633, %v9670, %v9672
        %v9674 = vrot.slane %v9561, 6
        %v9675 = vrot.slane %v9562, 6
        %v9676 = vsel %vm9633, %v9674, %v9675
        %v9677 = vrot.slane %v9563, 6
        %v9678 = vsel %vm9633, %v9675, %v9677
        %v9679 = vrot.slane %v9564, 6
        %v9680 = vrot.slane %v9565, 6
        %v9681 = vsel %vm9633, %v9679, %v9680
        %v9682 = vrot.slane %v9566, 6
        %v9683 = vsel %vm9633, %v9680, %v9682
        %v9684 = vrot.slane %v9567, 6
        %v9685 = vrot.slane %v9568, 6
        %v9686 = vsel %vm9633, %v9684, %v9685
        %v9687 = vrot.slane %v9569, 6
        %v9688 = vsel %vm9633, %v9685, %v9687
        %v9689 = vrot.slane %v9570, 6
        %v9690 = vrot.slane %v9571, 6
        %v9691 = vsel %vm9633, %v9689, %v9690
        %v9692 = vrot.slane %v9572, 6
        %v9693 = vsel %vm9633, %v9690, %v9692
        %v9694 = vrot.slane %v9573, 6
        %v9695 = vrot.slane %v9574, 6
        %v9696 = vsel %vm9633, %v9694, %v9695
        %v9697 = vrot.slane %v9575, 6
        %v9698 = vsel %vm9633, %v9695, %v9697
        %v9699 = vrot.slane %v9576, 6
        %v9700 = vrot.slane %v9577, 6
        %v9701 = vsel %vm9633, %v9699, %v9700
        %v9702 = vrot.slane %v9578, 6
        %v9703 = vsel %vm9633, %v9700, %v9702
        %v9704 = vrot.slane %v9579, 6
        %v9705 = vrot.slane %v9580, 6
        %v9706 = vsel %vm9633, %v9704, %v9705
        %v9707 = vrot.slane %v9581, 6
        %v9708 = vsel %vm9633, %v9705, %v9707
        %v9709 = vrot.slane %v9582, 6
        %v9710 = vrot.slane %v9583, 6
        %v9711 = vsel %vm9633, %v9709, %v9710
        %v9712 = vrot.slane %v9584, 6
        %v9713 = vsel %vm9633, %v9710, %v9712
        %v9746 = vadd.f32 %v9501, %v9636
        %v9747 = vadd.f32 %v9502, %v9638
        %v9748 = vadd.f32 %v9503, %v9641
        %v9749 = vadd.f32 %v9504, %v9643
        %v9750 = vadd.f32 %v9505, %v9646
        %v9751 = vadd.f32 %v9506, %v9648
        %v9752 = vadd.f32 %v9507, %v9651
        %v9753 = vadd.f32 %v9508, %v9653
        %v9754 = vadd.f32 %v9509, %v9656
        %v9755 = vadd.f32 %v9510, %v9658
        %v9756 = vadd.f32 %v9511, %v9661
        %v9757 = vadd.f32 %v9512, %v9663
        %v9758 = vadd.f32 %v9513, %v9666
        %v9759 = vadd.f32 %v9514, %v9668
        %v9760 = vadd.f32 %v9515, %v9671
        %v9761 = vadd.f32 %v9516, %v9673
        %v9762 = vadd.f32 %v9517, %v9676
        %v9763 = vadd.f32 %v9518, %v9678
        %v9764 = vadd.f32 %v9519, %v9681
        %v9765 = vadd.f32 %v9520, %v9683
        %v9766 = vadd.f32 %v9521, %v9686
        %v9767 = vadd.f32 %v9522, %v9688
        %v9768 = vadd.f32 %v9523, %v9691
        %v9769 = vadd.f32 %v9524, %v9693
        %v9770 = vadd.f32 %v9525, %v9696
        %v9771 = vadd.f32 %v9526, %v9698
        %v9772 = vadd.f32 %v9527, %v9701
        %v9773 = vadd.f32 %v9528, %v9703
        %v9774 = vadd.f32 %v9529, %v9706
        %v9775 = vadd.f32 %v9530, %v9708
        %v9776 = vadd.f32 %v9531, %v9711
        %v9777 = vadd.f32 %v9532, %v9713
        %v9778 = vlaneseq
        %v9779 = vshrl.u32 %v9778, 7
        %v9780 = vsub.s32 6, %v9779
        %v9781 = vrot.slane %v538, %v9780
        %v9782 = vmul.f32 %v474, %v9781
        %v9783 = vmul.f32 %v475, %v9781
        %v9784 = vmul.f32 %v476, %v9781
        %v9785 = vmul.f32 %v477, %v9781
        %v9786 = vmul.f32 %v478, %v9781
        %v9787 = vmul.f32 %v479, %v9781
        %v9788 = vmul.f32 %v480, %v9781
        %v9789 = vmul.f32 %v481, %v9781
        %v9790 = vmul.f32 %v482, %v9781
        %v9791 = vmul.f32 %v483, %v9781
        %v9792 = vmul.f32 %v484, %v9781
        %v9793 = vmul.f32 %v485, %v9781
        %v9794 = vmul.f32 %v486, %v9781
        %v9795 = vmul.f32 %v487, %v9781
        %v9796 = vmul.f32 %v488, %v9781
        %v9797 = vmul.f32 %v489, %v9781
        %v9798 = vmul.f32 %v490, %v9781
        %v9799 = vmul.f32 %v491, %v9781
        %v9800 = vmul.f32 %v492, %v9781
        %v9801 = vmul.f32 %v493, %v9781
        %v9802 = vmul.f32 %v494, %v9781
        %v9803 = vmul.f32 %v495, %v9781
        %v9804 = vmul.f32 %v496, %v9781
        %v9805 = vmul.f32 %v497, %v9781
        %v9806 = vmul.f32 %v498, %v9781
        %v9807 = vmul.f32 %v499, %v9781
        %v9808 = vmul.f32 %v500, %v9781
        %v9809 = vmul.f32 %v501, %v9781
        %v9810 = vmul.f32 %v502, %v9781
        %v9811 = vmul.f32 %v503, %v9781
        %v9812 = vmul.f32 %v504, %v9781
        %v9813 = vmul.f32 %v505, %v9781
        %v9814 = vmul.f32 %v506, %v9781
        %v9815 = vmul.f32 %v507, %v9781
        %v9816 = vmul.f32 %v508, %v9781
        %v9817 = vmul.f32 %v509, %v9781
        %v9818 = vmul.f32 %v510, %v9781
        %v9819 = vmul.f32 %v511, %v9781
        %v9820 = vmul.f32 %v512, %v9781
        %v9821 = vmul.f32 %v513, %v9781
        %v9822 = vmul.f32 %v514, %v9781
        %v9823 = vmul.f32 %v515, %v9781
        %v9824 = vmul.f32 %v516, %v9781
        %v9825 = vmul.f32 %v517, %v9781
        %v9826 = vmul.f32 %v518, %v9781
        %v9827 = vmul.f32 %v519, %v9781
        %v9828 = vmul.f32 %v520, %v9781
        %v9829 = vmul.f32 %v521, %v9781
        %v9878 = vrot.slane %v9782, 6
        %v9879 = vrot.slane %v9783, 6
        %v9880 = vsel %vm9633, %v9878, %v9879
        %v9881 = vrot.slane %v9784, 6
        %v9882 = vsel %vm9633, %v9879, %v9881
        %v9883 = vrot.slane %v9785, 6
        %v9884 = vrot.slane %v9786, 6
        %v9885 = vsel %vm9633, %v9883, %v9884
        %v9886 = vrot.slane %v9787, 6
        %v9887 = vsel %vm9633, %v9884, %v9886
        %v9888 = vrot.slane %v9788, 6
        %v9889 = vrot.slane %v9789, 6
        %v9890 = vsel %vm9633, %v9888, %v9889
        %v9891 = vrot.slane %v9790, 6
        %v9892 = vsel %vm9633, %v9889, %v9891
        %v9893 = vrot.slane %v9791, 6
        %v9894 = vrot.slane %v9792, 6
        %v9895 = vsel %vm9633, %v9893, %v9894
        %v9896 = vrot.slane %v9793, 6
        %v9897 = vsel %vm9633, %v9894, %v9896
        %v9898 = vrot.slane %v9794, 6
        %v9899 = vrot.slane %v9795, 6
        %v9900 = vsel %vm9633, %v9898, %v9899
        %v9901 = vrot.slane %v9796, 6
        %v9902 = vsel %vm9633, %v9899, %v9901
        %v9903 = vrot.slane %v9797, 6
        %v9904 = vrot.slane %v9798, 6
        %v9905 = vsel %vm9633, %v9903, %v9904
        %v9906 = vrot.slane %v9799, 6
        %v9907 = vsel %vm9633, %v9904, %v9906
        %v9908 = vrot.slane %v9800, 6
        %v9909 = vrot.slane %v9801, 6
        %v9910 = vsel %vm9633, %v9908, %v9909
        %v9911 = vrot.slane %v9802, 6
        %v9912 = vsel %vm9633, %v9909, %v9911
        %v9913 = vrot.slane %v9803, 6
        %v9914 = vrot.slane %v9804, 6
        %v9915 = vsel %vm9633, %v9913, %v9914
        %v9916 = vrot.slane %v9805, 6
        %v9917 = vsel %vm9633, %v9914, %v9916
        %v9918 = vrot.slane %v9806, 6
        %v9919 = vrot.slane %v9807, 6
        %v9920 = vsel %vm9633, %v9918, %v9919
        %v9921 = vrot.slane %v9808, 6
        %v9922 = vsel %vm9633, %v9919, %v9921
        %v9923 = vrot.slane %v9809, 6
        %v9924 = vrot.slane %v9810, 6
        %v9925 = vsel %vm9633, %v9923, %v9924
        %v9926 = vrot.slane %v9811, 6
        %v9927 = vsel %vm9633, %v9924, %v9926
        %v9928 = vrot.slane %v9812, 6
        %v9929 = vrot.slane %v9813, 6
        %v9930 = vsel %vm9633, %v9928, %v9929
        %v9931 = vrot.slane %v9814, 6
        %v9932 = vsel %vm9633, %v9929, %v9931
        %v9933 = vrot.slane %v9815, 6
        %v9934 = vrot.slane %v9816, 6
        %v9935 = vsel %vm9633, %v9933, %v9934
        %v9936 = vrot.slane %v9817, 6
        %v9937 = vsel %vm9633, %v9934, %v9936
        %v9938 = vrot.slane %v9818, 6
        %v9939 = vrot.slane %v9819, 6
        %v9940 = vsel %vm9633, %v9938, %v9939
        %v9941 = vrot.slane %v9820, 6
        %v9942 = vsel %vm9633, %v9939, %v9941
        %v9943 = vrot.slane %v9821, 6
        %v9944 = vrot.slane %v9822, 6
        %v9945 = vsel %vm9633, %v9943, %v9944
        %v9946 = vrot.slane %v9823, 6
        %v9947 = vsel %vm9633, %v9944, %v9946
        %v9948 = vrot.slane %v9824, 6
        %v9949 = vrot.slane %v9825, 6
        %v9950 = vsel %vm9633, %v9948, %v9949
        %v9951 = vrot.slane %v9826, 6
        %v9952 = vsel %vm9633, %v9949, %v9951
        %v9953 = vrot.slane %v9827, 6
        %v9954 = vrot.slane %v9828, 6
        %v9955 = vsel %vm9633, %v9953, %v9954
        %v9956 = vrot.slane %v9829, 6
        %v9957 = vsel %vm9633, %v9954, %v9956
        %v9990 = vadd.f32 %v9746, %v9880
        %v9991 = vadd.f32 %v9747, %v9882
        %v9992 = vadd.f32 %v9748, %v9885
        %v9993 = vadd.f32 %v9749, %v9887
        %v9994 = vadd.f32 %v9750, %v9890
        %v9995 = vadd.f32 %v9751, %v9892
        %v9996 = vadd.f32 %v9752, %v9895
        %v9997 = vadd.f32 %v9753, %v9897
        %v9998 = vadd.f32 %v9754, %v9900
        %v9999 = vadd.f32 %v9755, %v9902
        %v10000 = vadd.f32 %v9756, %v9905
        %v10001 = vadd.f32 %v9757, %v9907
        %v10002 = vadd.f32 %v9758, %v9910
        %v10003 = vadd.f32 %v9759, %v9912
        %v10004 = vadd.f32 %v9760, %v9915
        %v10005 = vadd.f32 %v9761, %v9917
        %v10006 = vadd.f32 %v9762, %v9920
        %v10007 = vadd.f32 %v9763, %v9922
        %v10008 = vadd.f32 %v9764, %v9925
        %v10009 = vadd.f32 %v9765, %v9927
        %v10010 = vadd.f32 %v9766, %v9930
        %v10011 = vadd.f32 %v9767, %v9932
        %v10012 = vadd.f32 %v9768, %v9935
        %v10013 = vadd.f32 %v9769, %v9937
        %v10014 = vadd.f32 %v9770, %v9940
        %v10015 = vadd.f32 %v9771, %v9942
        %v10016 = vadd.f32 %v9772, %v9945
        %v10017 = vadd.f32 %v9773, %v9947
        %v10018 = vadd.f32 %v9774, %v9950
        %v10019 = vadd.f32 %v9775, %v9952
        %v10020 = vadd.f32 %v9776, %v9955
        %v10021 = vadd.f32 %v9777, %v9957
        %v10022 = vlaneseq
        %v10023 = vshrl.u32 %v10022, 7
        %v10024 = vsub.s32 6, %v10023
        %v10025 = vrot.slane %v539, %v10024
        %v10026 = vmul.f32 %v477, %v10025
        %v10027 = vmul.f32 %v478, %v10025
        %v10028 = vmul.f32 %v479, %v10025
        %v10029 = vmul.f32 %v480, %v10025
        %v10030 = vmul.f32 %v481, %v10025
        %v10031 = vmul.f32 %v482, %v10025
        %v10032 = vmul.f32 %v483, %v10025
        %v10033 = vmul.f32 %v484, %v10025
        %v10034 = vmul.f32 %v485, %v10025
        %v10035 = vmul.f32 %v486, %v10025
        %v10036 = vmul.f32 %v487, %v10025
        %v10037 = vmul.f32 %v488, %v10025
        %v10038 = vmul.f32 %v489, %v10025
        %v10039 = vmul.f32 %v490, %v10025
        %v10040 = vmul.f32 %v491, %v10025
        %v10041 = vmul.f32 %v492, %v10025
        %v10042 = vmul.f32 %v493, %v10025
        %v10043 = vmul.f32 %v494, %v10025
        %v10044 = vmul.f32 %v495, %v10025
        %v10045 = vmul.f32 %v496, %v10025
        %v10046 = vmul.f32 %v497, %v10025
        %v10047 = vmul.f32 %v498, %v10025
        %v10048 = vmul.f32 %v499, %v10025
        %v10049 = vmul.f32 %v500, %v10025
        %v10050 = vmul.f32 %v501, %v10025
        %v10051 = vmul.f32 %v502, %v10025
        %v10052 = vmul.f32 %v503, %v10025
        %v10053 = vmul.f32 %v504, %v10025
        %v10054 = vmul.f32 %v505, %v10025
        %v10055 = vmul.f32 %v506, %v10025
        %v10056 = vmul.f32 %v507, %v10025
        %v10057 = vmul.f32 %v508, %v10025
        %v10058 = vmul.f32 %v509, %v10025
        %v10059 = vmul.f32 %v510, %v10025
        %v10060 = vmul.f32 %v511, %v10025
        %v10061 = vmul.f32 %v512, %v10025
        %v10062 = vmul.f32 %v513, %v10025
        %v10063 = vmul.f32 %v514, %v10025
        %v10064 = vmul.f32 %v515, %v10025
        %v10065 = vmul.f32 %v516, %v10025
        %v10066 = vmul.f32 %v517, %v10025
        %v10067 = vmul.f32 %v518, %v10025
        %v10068 = vmul.f32 %v519, %v10025
        %v10069 = vmul.f32 %v520, %v10025
        %v10070 = vmul.f32 %v521, %v10025
        %v10071 = vmul.f32 %v522, %v10025
        %v10072 = vmul.f32 %v523, %v10025
        %v10073 = vmul.f32 %v524, %v10025
        %v10122 = vrot.slane %v10026, 6
        %v10123 = vrot.slane %v10027, 6
        %v10124 = vsel %vm9633, %v10122, %v10123
        %v10125 = vrot.slane %v10028, 6
        %v10126 = vsel %vm9633, %v10123, %v10125
        %v10127 = vrot.slane %v10029, 6
        %v10128 = vrot.slane %v10030, 6
        %v10129 = vsel %vm9633, %v10127, %v10128
        %v10130 = vrot.slane %v10031, 6
        %v10131 = vsel %vm9633, %v10128, %v10130
        %v10132 = vrot.slane %v10032, 6
        %v10133 = vrot.slane %v10033, 6
        %v10134 = vsel %vm9633, %v10132, %v10133
        %v10135 = vrot.slane %v10034, 6
        %v10136 = vsel %vm9633, %v10133, %v10135
        %v10137 = vrot.slane %v10035, 6
        %v10138 = vrot.slane %v10036, 6
        %v10139 = vsel %vm9633, %v10137, %v10138
        %v10140 = vrot.slane %v10037, 6
        %v10141 = vsel %vm9633, %v10138, %v10140
        %v10142 = vrot.slane %v10038, 6
        %v10143 = vrot.slane %v10039, 6
        %v10144 = vsel %vm9633, %v10142, %v10143
        %v10145 = vrot.slane %v10040, 6
        %v10146 = vsel %vm9633, %v10143, %v10145
        %v10147 = vrot.slane %v10041, 6
        %v10148 = vrot.slane %v10042, 6
        %v10149 = vsel %vm9633, %v10147, %v10148
        %v10150 = vrot.slane %v10043, 6
        %v10151 = vsel %vm9633, %v10148, %v10150
        %v10152 = vrot.slane %v10044, 6
        %v10153 = vrot.slane %v10045, 6
        %v10154 = vsel %vm9633, %v10152, %v10153
        %v10155 = vrot.slane %v10046, 6
        %v10156 = vsel %vm9633, %v10153, %v10155
        %v10157 = vrot.slane %v10047, 6
        %v10158 = vrot.slane %v10048, 6
        %v10159 = vsel %vm9633, %v10157, %v10158
        %v10160 = vrot.slane %v10049, 6
        %v10161 = vsel %vm9633, %v10158, %v10160
        %v10162 = vrot.slane %v10050, 6
        %v10163 = vrot.slane %v10051, 6
        %v10164 = vsel %vm9633, %v10162, %v10163
        %v10165 = vrot.slane %v10052, 6
        %v10166 = vsel %vm9633, %v10163, %v10165
        %v10167 = vrot.slane %v10053, 6
        %v10168 = vrot.slane %v10054, 6
        %v10169 = vsel %vm9633, %v10167, %v10168
        %v10170 = vrot.slane %v10055, 6
        %v10171 = vsel %vm9633, %v10168, %v10170
        %v10172 = vrot.slane %v10056, 6
        %v10173 = vrot.slane %v10057, 6
        %v10174 = vsel %vm9633, %v10172, %v10173
        %v10175 = vrot.slane %v10058, 6
        %v10176 = vsel %vm9633, %v10173, %v10175
        %v10177 = vrot.slane %v10059, 6
        %v10178 = vrot.slane %v10060, 6
        %v10179 = vsel %vm9633, %v10177, %v10178
        %v10180 = vrot.slane %v10061, 6
        %v10181 = vsel %vm9633, %v10178, %v10180
        %v10182 = vrot.slane %v10062, 6
        %v10183 = vrot.slane %v10063, 6
        %v10184 = vsel %vm9633, %v10182, %v10183
        %v10185 = vrot.slane %v10064, 6
        %v10186 = vsel %vm9633, %v10183, %v10185
        %v10187 = vrot.slane %v10065, 6
        %v10188 = vrot.slane %v10066, 6
        %v10189 = vsel %vm9633, %v10187, %v10188
        %v10190 = vrot.slane %v10067, 6
        %v10191 = vsel %vm9633, %v10188, %v10190
        %v10192 = vrot.slane %v10068, 6
        %v10193 = vrot.slane %v10069, 6
        %v10194 = vsel %vm9633, %v10192, %v10193
        %v10195 = vrot.slane %v10070, 6
        %v10196 = vsel %vm9633, %v10193, %v10195
        %v10197 = vrot.slane %v10071, 6
        %v10198 = vrot.slane %v10072, 6
        %v10199 = vsel %vm9633, %v10197, %v10198
        %v10200 = vrot.slane %v10073, 6
        %v10201 = vsel %vm9633, %v10198, %v10200
        %v10234 = vadd.f32 %v9990, %v10124
        %v10235 = vadd.f32 %v9991, %v10126
        %v10236 = vadd.f32 %v9992, %v10129
        %v10237 = vadd.f32 %v9993, %v10131
        %v10238 = vadd.f32 %v9994, %v10134
        %v10239 = vadd.f32 %v9995, %v10136
        %v10240 = vadd.f32 %v9996, %v10139
        %v10241 = vadd.f32 %v9997, %v10141
        %v10242 = vadd.f32 %v9998, %v10144
        %v10243 = vadd.f32 %v9999, %v10146
        %v10244 = vadd.f32 %v10000, %v10149
        %v10245 = vadd.f32 %v10001, %v10151
        %v10246 = vadd.f32 %v10002, %v10154
        %v10247 = vadd.f32 %v10003, %v10156
        %v10248 = vadd.f32 %v10004, %v10159
        %v10249 = vadd.f32 %v10005, %v10161
        %v10250 = vadd.f32 %v10006, %v10164
        %v10251 = vadd.f32 %v10007, %v10166
        %v10252 = vadd.f32 %v10008, %v10169
        %v10253 = vadd.f32 %v10009, %v10171
        %v10254 = vadd.f32 %v10010, %v10174
        %v10255 = vadd.f32 %v10011, %v10176
        %v10256 = vadd.f32 %v10012, %v10179
        %v10257 = vadd.f32 %v10013, %v10181
        %v10258 = vadd.f32 %v10014, %v10184
        %v10259 = vadd.f32 %v10015, %v10186
        %v10260 = vadd.f32 %v10016, %v10189
        %v10261 = vadd.f32 %v10017, %v10191
        %v10262 = vadd.f32 %v10018, %v10194
        %v10263 = vadd.f32 %v10019, %v10196
        %v10264 = vadd.f32 %v10020, %v10199
        %v10265 = vadd.f32 %v10021, %v10201
        %v10266 = vlaneseq
        %v10267 = vshrl.u32 %v10266, 7
        %v10268 = vsub.s32 6, %v10267
        %v10269 = vrot.slane %v540, %v10268
        %v10270 = vmul.f32 %v480, %v10269
        %v10271 = vmul.f32 %v481, %v10269
        %v10272 = vmul.f32 %v482, %v10269
        %v10273 = vmul.f32 %v483, %v10269
        %v10274 = vmul.f32 %v484, %v10269
        %v10275 = vmul.f32 %v485, %v10269
        %v10276 = vmul.f32 %v486, %v10269
        %v10277 = vmul.f32 %v487, %v10269
        %v10278 = vmul.f32 %v488, %v10269
        %v10279 = vmul.f32 %v489, %v10269
        %v10280 = vmul.f32 %v490, %v10269
        %v10281 = vmul.f32 %v491, %v10269
        %v10282 = vmul.f32 %v492, %v10269
        %v10283 = vmul.f32 %v493, %v10269
        %v10284 = vmul.f32 %v494, %v10269
        %v10285 = vmul.f32 %v495, %v10269
        %v10286 = vmul.f32 %v496, %v10269
        %v10287 = vmul.f32 %v497, %v10269
        %v10288 = vmul.f32 %v498, %v10269
        %v10289 = vmul.f32 %v499, %v10269
        %v10290 = vmul.f32 %v500, %v10269
        %v10291 = vmul.f32 %v501, %v10269
        %v10292 = vmul.f32 %v502, %v10269
        %v10293 = vmul.f32 %v503, %v10269
        %v10294 = vmul.f32 %v504, %v10269
        %v10295 = vmul.f32 %v505, %v10269
        %v10296 = vmul.f32 %v506, %v10269
        %v10297 = vmul.f32 %v507, %v10269
        %v10298 = vmul.f32 %v508, %v10269
        %v10299 = vmul.f32 %v509, %v10269
        %v10300 = vmul.f32 %v510, %v10269
        %v10301 = vmul.f32 %v511, %v10269
        %v10302 = vmul.f32 %v512, %v10269
        %v10303 = vmul.f32 %v513, %v10269
        %v10304 = vmul.f32 %v514, %v10269
        %v10305 = vmul.f32 %v515, %v10269
        %v10306 = vmul.f32 %v516, %v10269
        %v10307 = vmul.f32 %v517, %v10269
        %v10308 = vmul.f32 %v518, %v10269
        %v10309 = vmul.f32 %v519, %v10269
        %v10310 = vmul.f32 %v520, %v10269
        %v10311 = vmul.f32 %v521, %v10269
        %v10312 = vmul.f32 %v522, %v10269
        %v10313 = vmul.f32 %v523, %v10269
        %v10314 = vmul.f32 %v524, %v10269
        %v10315 = vmul.f32 %v525, %v10269
        %v10316 = vmul.f32 %v526, %v10269
        %v10317 = vmul.f32 %v527, %v10269
        %v10366 = vrot.slane %v10270, 6
        %v10367 = vrot.slane %v10271, 6
        %v10368 = vsel %vm9633, %v10366, %v10367
        %v10369 = vrot.slane %v10272, 6
        %v10370 = vsel %vm9633, %v10367, %v10369
        %v10371 = vrot.slane %v10273, 6
        %v10372 = vrot.slane %v10274, 6
        %v10373 = vsel %vm9633, %v10371, %v10372
        %v10374 = vrot.slane %v10275, 6
        %v10375 = vsel %vm9633, %v10372, %v10374
        %v10376 = vrot.slane %v10276, 6
        %v10377 = vrot.slane %v10277, 6
        %v10378 = vsel %vm9633, %v10376, %v10377
        %v10379 = vrot.slane %v10278, 6
        %v10380 = vsel %vm9633, %v10377, %v10379
        %v10381 = vrot.slane %v10279, 6
        %v10382 = vrot.slane %v10280, 6
        %v10383 = vsel %vm9633, %v10381, %v10382
        %v10384 = vrot.slane %v10281, 6
        %v10385 = vsel %vm9633, %v10382, %v10384
        %v10386 = vrot.slane %v10282, 6
        %v10387 = vrot.slane %v10283, 6
        %v10388 = vsel %vm9633, %v10386, %v10387
        %v10389 = vrot.slane %v10284, 6
        %v10390 = vsel %vm9633, %v10387, %v10389
        %v10391 = vrot.slane %v10285, 6
        %v10392 = vrot.slane %v10286, 6
        %v10393 = vsel %vm9633, %v10391, %v10392
        %v10394 = vrot.slane %v10287, 6
        %v10395 = vsel %vm9633, %v10392, %v10394
        %v10396 = vrot.slane %v10288, 6
        %v10397 = vrot.slane %v10289, 6
        %v10398 = vsel %vm9633, %v10396, %v10397
        %v10399 = vrot.slane %v10290, 6
        %v10400 = vsel %vm9633, %v10397, %v10399
        %v10401 = vrot.slane %v10291, 6
        %v10402 = vrot.slane %v10292, 6
        %v10403 = vsel %vm9633, %v10401, %v10402
        %v10404 = vrot.slane %v10293, 6
        %v10405 = vsel %vm9633, %v10402, %v10404
        %v10406 = vrot.slane %v10294, 6
        %v10407 = vrot.slane %v10295, 6
        %v10408 = vsel %vm9633, %v10406, %v10407
        %v10409 = vrot.slane %v10296, 6
        %v10410 = vsel %vm9633, %v10407, %v10409
        %v10411 = vrot.slane %v10297, 6
        %v10412 = vrot.slane %v10298, 6
        %v10413 = vsel %vm9633, %v10411, %v10412
        %v10414 = vrot.slane %v10299, 6
        %v10415 = vsel %vm9633, %v10412, %v10414
        %v10416 = vrot.slane %v10300, 6
        %v10417 = vrot.slane %v10301, 6
        %v10418 = vsel %vm9633, %v10416, %v10417
        %v10419 = vrot.slane %v10302, 6
        %v10420 = vsel %vm9633, %v10417, %v10419
        %v10421 = vrot.slane %v10303, 6
        %v10422 = vrot.slane %v10304, 6
        %v10423 = vsel %vm9633, %v10421, %v10422
        %v10424 = vrot.slane %v10305, 6
        %v10425 = vsel %vm9633, %v10422, %v10424
        %v10426 = vrot.slane %v10306, 6
        %v10427 = vrot.slane %v10307, 6
        %v10428 = vsel %vm9633, %v10426, %v10427
        %v10429 = vrot.slane %v10308, 6
        %v10430 = vsel %vm9633, %v10427, %v10429
        %v10431 = vrot.slane %v10309, 6
        %v10432 = vrot.slane %v10310, 6
        %v10433 = vsel %vm9633, %v10431, %v10432
        %v10434 = vrot.slane %v10311, 6
        %v10435 = vsel %vm9633, %v10432, %v10434
        %v10436 = vrot.slane %v10312, 6
        %v10437 = vrot.slane %v10313, 6
        %v10438 = vsel %vm9633, %v10436, %v10437
        %v10439 = vrot.slane %v10314, 6
        %v10440 = vsel %vm9633, %v10437, %v10439
        %v10441 = vrot.slane %v10315, 6
        %v10442 = vrot.slane %v10316, 6
        %v10443 = vsel %vm9633, %v10441, %v10442
        %v10444 = vrot.slane %v10317, 6
        %v10445 = vsel %vm9633, %v10442, %v10444
        %v10478 = vadd.f32 %v10234, %v10368
        %v10479 = vadd.f32 %v10235, %v10370
        %v10480 = vadd.f32 %v10236, %v10373
        %v10481 = vadd.f32 %v10237, %v10375
        %v10482 = vadd.f32 %v10238, %v10378
        %v10483 = vadd.f32 %v10239, %v10380
        %v10484 = vadd.f32 %v10240, %v10383
        %v10485 = vadd.f32 %v10241, %v10385
        %v10486 = vadd.f32 %v10242, %v10388
        %v10487 = vadd.f32 %v10243, %v10390
        %v10488 = vadd.f32 %v10244, %v10393
        %v10489 = vadd.f32 %v10245, %v10395
        %v10490 = vadd.f32 %v10246, %v10398
        %v10491 = vadd.f32 %v10247, %v10400
        %v10492 = vadd.f32 %v10248, %v10403
        %v10493 = vadd.f32 %v10249, %v10405
        %v10494 = vadd.f32 %v10250, %v10408
        %v10495 = vadd.f32 %v10251, %v10410
        %v10496 = vadd.f32 %v10252, %v10413
        %v10497 = vadd.f32 %v10253, %v10415
        %v10498 = vadd.f32 %v10254, %v10418
        %v10499 = vadd.f32 %v10255, %v10420
        %v10500 = vadd.f32 %v10256, %v10423
        %v10501 = vadd.f32 %v10257, %v10425
        %v10502 = vadd.f32 %v10258, %v10428
        %v10503 = vadd.f32 %v10259, %v10430
        %v10504 = vadd.f32 %v10260, %v10433
        %v10505 = vadd.f32 %v10261, %v10435
        %v10506 = vadd.f32 %v10262, %v10438
        %v10507 = vadd.f32 %v10263, %v10440
        %v10508 = vadd.f32 %v10264, %v10443
        %v10509 = vadd.f32 %v10265, %v10445
        %v10510 = vlaneseq
        %v10511 = vshrl.u32 %v10510, 7
        %v10512 = vsub.s32 6, %v10511
        %v10513 = vrot.slane %v541, %v10512
        %v10514 = vmul.f32 %v483, %v10513
        %v10515 = vmul.f32 %v484, %v10513
        %v10516 = vmul.f32 %v485, %v10513
        %v10517 = vmul.f32 %v486, %v10513
        %v10518 = vmul.f32 %v487, %v10513
        %v10519 = vmul.f32 %v488, %v10513
        %v10520 = vmul.f32 %v489, %v10513
        %v10521 = vmul.f32 %v490, %v10513
        %v10522 = vmul.f32 %v491, %v10513
        %v10523 = vmul.f32 %v492, %v10513
        %v10524 = vmul.f32 %v493, %v10513
        %v10525 = vmul.f32 %v494, %v10513
        %v10526 = vmul.f32 %v495, %v10513
        %v10527 = vmul.f32 %v496, %v10513
        %v10528 = vmul.f32 %v497, %v10513
        %v10529 = vmul.f32 %v498, %v10513
        %v10530 = vmul.f32 %v499, %v10513
        %v10531 = vmul.f32 %v500, %v10513
        %v10532 = vmul.f32 %v501, %v10513
        %v10533 = vmul.f32 %v502, %v10513
        %v10534 = vmul.f32 %v503, %v10513
        %v10535 = vmul.f32 %v504, %v10513
        %v10536 = vmul.f32 %v505, %v10513
        %v10537 = vmul.f32 %v506, %v10513
        %v10538 = vmul.f32 %v507, %v10513
        %v10539 = vmul.f32 %v508, %v10513
        %v10540 = vmul.f32 %v509, %v10513
        %v10541 = vmul.f32 %v510, %v10513
        %v10542 = vmul.f32 %v511, %v10513
        %v10543 = vmul.f32 %v512, %v10513
        %v10544 = vmul.f32 %v513, %v10513
        %v10545 = vmul.f32 %v514, %v10513
        %v10546 = vmul.f32 %v515, %v10513
        %v10547 = vmul.f32 %v516, %v10513
        %v10548 = vmul.f32 %v517, %v10513
        %v10549 = vmul.f32 %v518, %v10513
        %v10550 = vmul.f32 %v519, %v10513
        %v10551 = vmul.f32 %v520, %v10513
        %v10552 = vmul.f32 %v521, %v10513
        %v10553 = vmul.f32 %v522, %v10513
        %v10554 = vmul.f32 %v523, %v10513
        %v10555 = vmul.f32 %v524, %v10513
        %v10556 = vmul.f32 %v525, %v10513
        %v10557 = vmul.f32 %v526, %v10513
        %v10558 = vmul.f32 %v527, %v10513
        %v10559 = vmul.f32 %v528, %v10513
        %v10560 = vmul.f32 %v529, %v10513
        %v10561 = vmul.f32 %v530, %v10513
        %v10610 = vrot.slane %v10514, 6
        %v10611 = vrot.slane %v10515, 6
        %v10612 = vsel %vm9633, %v10610, %v10611
        %v10613 = vrot.slane %v10516, 6
        %v10614 = vsel %vm9633, %v10611, %v10613
        %v10615 = vrot.slane %v10517, 6
        %v10616 = vrot.slane %v10518, 6
        %v10617 = vsel %vm9633, %v10615, %v10616
        %v10618 = vrot.slane %v10519, 6
        %v10619 = vsel %vm9633, %v10616, %v10618
        %v10620 = vrot.slane %v10520, 6
        %v10621 = vrot.slane %v10521, 6
        %v10622 = vsel %vm9633, %v10620, %v10621
        %v10623 = vrot.slane %v10522, 6
        %v10624 = vsel %vm9633, %v10621, %v10623
        %v10625 = vrot.slane %v10523, 6
        %v10626 = vrot.slane %v10524, 6
        %v10627 = vsel %vm9633, %v10625, %v10626
        %v10628 = vrot.slane %v10525, 6
        %v10629 = vsel %vm9633, %v10626, %v10628
        %v10630 = vrot.slane %v10526, 6
        %v10631 = vrot.slane %v10527, 6
        %v10632 = vsel %vm9633, %v10630, %v10631
        %v10633 = vrot.slane %v10528, 6
        %v10634 = vsel %vm9633, %v10631, %v10633
        %v10635 = vrot.slane %v10529, 6
        %v10636 = vrot.slane %v10530, 6
        %v10637 = vsel %vm9633, %v10635, %v10636
        %v10638 = vrot.slane %v10531, 6
        %v10639 = vsel %vm9633, %v10636, %v10638
        %v10640 = vrot.slane %v10532, 6
        %v10641 = vrot.slane %v10533, 6
        %v10642 = vsel %vm9633, %v10640, %v10641
        %v10643 = vrot.slane %v10534, 6
        %v10644 = vsel %vm9633, %v10641, %v10643
        %v10645 = vrot.slane %v10535, 6
        %v10646 = vrot.slane %v10536, 6
        %v10647 = vsel %vm9633, %v10645, %v10646
        %v10648 = vrot.slane %v10537, 6
        %v10649 = vsel %vm9633, %v10646, %v10648
        %v10650 = vrot.slane %v10538, 6
        %v10651 = vrot.slane %v10539, 6
        %v10652 = vsel %vm9633, %v10650, %v10651
        %v10653 = vrot.slane %v10540, 6
        %v10654 = vsel %vm9633, %v10651, %v10653
        %v10655 = vrot.slane %v10541, 6
        %v10656 = vrot.slane %v10542, 6
        %v10657 = vsel %vm9633, %v10655, %v10656
        %v10658 = vrot.slane %v10543, 6
        %v10659 = vsel %vm9633, %v10656, %v10658
        %v10660 = vrot.slane %v10544, 6
        %v10661 = vrot.slane %v10545, 6
        %v10662 = vsel %vm9633, %v10660, %v10661
        %v10663 = vrot.slane %v10546, 6
        %v10664 = vsel %vm9633, %v10661, %v10663
        %v10665 = vrot.slane %v10547, 6
        %v10666 = vrot.slane %v10548, 6
        %v10667 = vsel %vm9633, %v10665, %v10666
        %v10668 = vrot.slane %v10549, 6
        %v10669 = vsel %vm9633, %v10666, %v10668
        %v10670 = vrot.slane %v10550, 6
        %v10671 = vrot.slane %v10551, 6
        %v10672 = vsel %vm9633, %v10670, %v10671
        %v10673 = vrot.slane %v10552, 6
        %v10674 = vsel %vm9633, %v10671, %v10673
        %v10675 = vrot.slane %v10553, 6
        %v10676 = vrot.slane %v10554, 6
        %v10677 = vsel %vm9633, %v10675, %v10676
        %v10678 = vrot.slane %v10555, 6
        %v10679 = vsel %vm9633, %v10676, %v10678
        %v10680 = vrot.slane %v10556, 6
        %v10681 = vrot.slane %v10557, 6
        %v10682 = vsel %vm9633, %v10680, %v10681
        %v10683 = vrot.slane %v10558, 6
        %v10684 = vsel %vm9633, %v10681, %v10683
        %v10685 = vrot.slane %v10559, 6
        %v10686 = vrot.slane %v10560, 6
        %v10687 = vsel %vm9633, %v10685, %v10686
        %v10688 = vrot.slane %v10561, 6
        %v10689 = vsel %vm9633, %v10686, %v10688
        %v10722 = vadd.f32 %v10478, %v10612
        %v10723 = vadd.f32 %v10479, %v10614
        %v10724 = vadd.f32 %v10480, %v10617
        %v10725 = vadd.f32 %v10481, %v10619
        %v10726 = vadd.f32 %v10482, %v10622
        %v10727 = vadd.f32 %v10483, %v10624
        %v10728 = vadd.f32 %v10484, %v10627
        %v10729 = vadd.f32 %v10485, %v10629
        %v10730 = vadd.f32 %v10486, %v10632
        %v10731 = vadd.f32 %v10487, %v10634
        %v10732 = vadd.f32 %v10488, %v10637
        %v10733 = vadd.f32 %v10489, %v10639
        %v10734 = vadd.f32 %v10490, %v10642
        %v10735 = vadd.f32 %v10491, %v10644
        %v10736 = vadd.f32 %v10492, %v10647
        %v10737 = vadd.f32 %v10493, %v10649
        %v10738 = vadd.f32 %v10494, %v10652
        %v10739 = vadd.f32 %v10495, %v10654
        %v10740 = vadd.f32 %v10496, %v10657
        %v10741 = vadd.f32 %v10497, %v10659
        %v10742 = vadd.f32 %v10498, %v10662
        %v10743 = vadd.f32 %v10499, %v10664
        %v10744 = vadd.f32 %v10500, %v10667
        %v10745 = vadd.f32 %v10501, %v10669
        %v10746 = vadd.f32 %v10502, %v10672
        %v10747 = vadd.f32 %v10503, %v10674
        %v10748 = vadd.f32 %v10504, %v10677
        %v10749 = vadd.f32 %v10505, %v10679
        %v10750 = vadd.f32 %v10506, %v10682
        %v10751 = vadd.f32 %v10507, %v10684
        %v10752 = vadd.f32 %v10508, %v10687
        %v10753 = vadd.f32 %v10509, %v10689
        %v10754 = vlaneseq
        %v10755 = vshrl.u32 %v10754, 7
        %v10756 = vsub.s32 6, %v10755
        %v10757 = vrot.slane %v542, %v10756
        %v10758 = vmul.f32 %v486, %v10757
        %v10759 = vmul.f32 %v487, %v10757
        %v10760 = vmul.f32 %v488, %v10757
        %v10761 = vmul.f32 %v489, %v10757
        %v10762 = vmul.f32 %v490, %v10757
        %v10763 = vmul.f32 %v491, %v10757
        %v10764 = vmul.f32 %v492, %v10757
        %v10765 = vmul.f32 %v493, %v10757
        %v10766 = vmul.f32 %v494, %v10757
        %v10767 = vmul.f32 %v495, %v10757
        %v10768 = vmul.f32 %v496, %v10757
        %v10769 = vmul.f32 %v497, %v10757
        %v10770 = vmul.f32 %v498, %v10757
        %v10771 = vmul.f32 %v499, %v10757
        %v10772 = vmul.f32 %v500, %v10757
        %v10773 = vmul.f32 %v501, %v10757
        %v10774 = vmul.f32 %v502, %v10757
        %v10775 = vmul.f32 %v503, %v10757
        %v10776 = vmul.f32 %v504, %v10757
        %v10777 = vmul.f32 %v505, %v10757
        %v10778 = vmul.f32 %v506, %v10757
        %v10779 = vmul.f32 %v507, %v10757
        %v10780 = vmul.f32 %v508, %v10757
        %v10781 = vmul.f32 %v509, %v10757
        %v10782 = vmul.f32 %v510, %v10757
        %v10783 = vmul.f32 %v511, %v10757
        %v10784 = vmul.f32 %v512, %v10757
        %v10785 = vmul.f32 %v513, %v10757
        %v10786 = vmul.f32 %v514, %v10757
        %v10787 = vmul.f32 %v515, %v10757
        %v10788 = vmul.f32 %v516, %v10757
        %v10789 = vmul.f32 %v517, %v10757
        %v10790 = vmul.f32 %v518, %v10757
        %v10791 = vmul.f32 %v519, %v10757
        %v10792 = vmul.f32 %v520, %v10757
        %v10793 = vmul.f32 %v521, %v10757
        %v10794 = vmul.f32 %v522, %v10757
        %v10795 = vmul.f32 %v523, %v10757
        %v10796 = vmul.f32 %v524, %v10757
        %v10797 = vmul.f32 %v525, %v10757
        %v10798 = vmul.f32 %v526, %v10757
        %v10799 = vmul.f32 %v527, %v10757
        %v10800 = vmul.f32 %v528, %v10757
        %v10801 = vmul.f32 %v529, %v10757
        %v10802 = vmul.f32 %v530, %v10757
        %v10803 = vmul.f32 %v531, %v10757
        %v10804 = vmul.f32 %v532, %v10757
        %v10805 = vmul.f32 %v533, %v10757
        %v10854 = vrot.slane %v10758, 6
        %v10855 = vrot.slane %v10759, 6
        %v10856 = vsel %vm9633, %v10854, %v10855
        %v10857 = vrot.slane %v10760, 6
        %v10858 = vsel %vm9633, %v10855, %v10857
        %v10859 = vrot.slane %v10761, 6
        %v10860 = vrot.slane %v10762, 6
        %v10861 = vsel %vm9633, %v10859, %v10860
        %v10862 = vrot.slane %v10763, 6
        %v10863 = vsel %vm9633, %v10860, %v10862
        %v10864 = vrot.slane %v10764, 6
        %v10865 = vrot.slane %v10765, 6
        %v10866 = vsel %vm9633, %v10864, %v10865
        %v10867 = vrot.slane %v10766, 6
        %v10868 = vsel %vm9633, %v10865, %v10867
        %v10869 = vrot.slane %v10767, 6
        %v10870 = vrot.slane %v10768, 6
        %v10871 = vsel %vm9633, %v10869, %v10870
        %v10872 = vrot.slane %v10769, 6
        %v10873 = vsel %vm9633, %v10870, %v10872
        %v10874 = vrot.slane %v10770, 6
        %v10875 = vrot.slane %v10771, 6
        %v10876 = vsel %vm9633, %v10874, %v10875
        %v10877 = vrot.slane %v10772, 6
        %v10878 = vsel %vm9633, %v10875, %v10877
        %v10879 = vrot.slane %v10773, 6
        %v10880 = vrot.slane %v10774, 6
        %v10881 = vsel %vm9633, %v10879, %v10880
        %v10882 = vrot.slane %v10775, 6
        %v10883 = vsel %vm9633, %v10880, %v10882
        %v10884 = vrot.slane %v10776, 6
        %v10885 = vrot.slane %v10777, 6
        %v10886 = vsel %vm9633, %v10884, %v10885
        %v10887 = vrot.slane %v10778, 6
        %v10888 = vsel %vm9633, %v10885, %v10887
        %v10889 = vrot.slane %v10779, 6
        %v10890 = vrot.slane %v10780, 6
        %v10891 = vsel %vm9633, %v10889, %v10890
        %v10892 = vrot.slane %v10781, 6
        %v10893 = vsel %vm9633, %v10890, %v10892
        %v10894 = vrot.slane %v10782, 6
        %v10895 = vrot.slane %v10783, 6
        %v10896 = vsel %vm9633, %v10894, %v10895
        %v10897 = vrot.slane %v10784, 6
        %v10898 = vsel %vm9633, %v10895, %v10897
        %v10899 = vrot.slane %v10785, 6
        %v10900 = vrot.slane %v10786, 6
        %v10901 = vsel %vm9633, %v10899, %v10900
        %v10902 = vrot.slane %v10787, 6
        %v10903 = vsel %vm9633, %v10900, %v10902
        %v10904 = vrot.slane %v10788, 6
        %v10905 = vrot.slane %v10789, 6
        %v10906 = vsel %vm9633, %v10904, %v10905
        %v10907 = vrot.slane %v10790, 6
        %v10908 = vsel %vm9633, %v10905, %v10907
        %v10909 = vrot.slane %v10791, 6
        %v10910 = vrot.slane %v10792, 6
        %v10911 = vsel %vm9633, %v10909, %v10910
        %v10912 = vrot.slane %v10793, 6
        %v10913 = vsel %vm9633, %v10910, %v10912
        %v10914 = vrot.slane %v10794, 6
        %v10915 = vrot.slane %v10795, 6
        %v10916 = vsel %vm9633, %v10914, %v10915
        %v10917 = vrot.slane %v10796, 6
        %v10918 = vsel %vm9633, %v10915, %v10917
        %v10919 = vrot.slane %v10797, 6
        %v10920 = vrot.slane %v10798, 6
        %v10921 = vsel %vm9633, %v10919, %v10920
        %v10922 = vrot.slane %v10799, 6
        %v10923 = vsel %vm9633, %v10920, %v10922
        %v10924 = vrot.slane %v10800, 6
        %v10925 = vrot.slane %v10801, 6
        %v10926 = vsel %vm9633, %v10924, %v10925
        %v10927 = vrot.slane %v10802, 6
        %v10928 = vsel %vm9633, %v10925, %v10927
        %v10929 = vrot.slane %v10803, 6
        %v10930 = vrot.slane %v10804, 6
        %v10931 = vsel %vm9633, %v10929, %v10930
        %v10932 = vrot.slane %v10805, 6
        %v10933 = vsel %vm9633, %v10930, %v10932
        %v10966 = vadd.f32 %v10722, %v10856
        %v10967 = vadd.f32 %v10723, %v10858
        %v10968 = vadd.f32 %v10724, %v10861
        %v10969 = vadd.f32 %v10725, %v10863
        %v10970 = vadd.f32 %v10726, %v10866
        %v10971 = vadd.f32 %v10727, %v10868
        %v10972 = vadd.f32 %v10728, %v10871
        %v10973 = vadd.f32 %v10729, %v10873
        %v10974 = vadd.f32 %v10730, %v10876
        %v10975 = vadd.f32 %v10731, %v10878
        %v10976 = vadd.f32 %v10732, %v10881
        %v10977 = vadd.f32 %v10733, %v10883
        %v10978 = vadd.f32 %v10734, %v10886
        %v10979 = vadd.f32 %v10735, %v10888
        %v10980 = vadd.f32 %v10736, %v10891
        %v10981 = vadd.f32 %v10737, %v10893
        %v10982 = vadd.f32 %v10738, %v10896
        %v10983 = vadd.f32 %v10739, %v10898
        %v10984 = vadd.f32 %v10740, %v10901
        %v10985 = vadd.f32 %v10741, %v10903
        %v10986 = vadd.f32 %v10742, %v10906
        %v10987 = vadd.f32 %v10743, %v10908
        %v10988 = vadd.f32 %v10744, %v10911
        %v10989 = vadd.f32 %v10745, %v10913
        %v10990 = vadd.f32 %v10746, %v10916
        %v10991 = vadd.f32 %v10747, %v10918
        %v10992 = vadd.f32 %v10748, %v10921
        %v10993 = vadd.f32 %v10749, %v10923
        %v10994 = vadd.f32 %v10750, %v10926
        %v10995 = vadd.f32 %v10751, %v10928
        %v10996 = vadd.f32 %v10752, %v10931
        %v10997 = vadd.f32 %v10753, %v10933
        %v10998 = vlaneseq
        %v10999 = vshrl.u32 %v10998, 7
        %v11000 = vsub.s32 6, %v10999
        %v11001 = vrot.slane %v543, %v11000
        %v11002 = vmul.f32 %v489, %v11001
        %v11003 = vmul.f32 %v490, %v11001
        %v11004 = vmul.f32 %v491, %v11001
        %v11005 = vmul.f32 %v492, %v11001
        %v11006 = vmul.f32 %v493, %v11001
        %v11007 = vmul.f32 %v494, %v11001
        %v11008 = vmul.f32 %v495, %v11001
        %v11009 = vmul.f32 %v496, %v11001
        %v11010 = vmul.f32 %v497, %v11001
        %v11011 = vmul.f32 %v498, %v11001
        %v11012 = vmul.f32 %v499, %v11001
        %v11013 = vmul.f32 %v500, %v11001
        %v11014 = vmul.f32 %v501, %v11001
        %v11015 = vmul.f32 %v502, %v11001
        %v11016 = vmul.f32 %v503, %v11001
        %v11017 = vmul.f32 %v504, %v11001
        %v11018 = vmul.f32 %v505, %v11001
        %v11019 = vmul.f32 %v506, %v11001
        %v11020 = vmul.f32 %v507, %v11001
        %v11021 = vmul.f32 %v508, %v11001
        %v11022 = vmul.f32 %v509, %v11001
        %v11023 = vmul.f32 %v510, %v11001
        %v11024 = vmul.f32 %v511, %v11001
        %v11025 = vmul.f32 %v512, %v11001
        %v11026 = vmul.f32 %v513, %v11001
        %v11027 = vmul.f32 %v514, %v11001
        %v11028 = vmul.f32 %v515, %v11001
        %v11029 = vmul.f32 %v516, %v11001
        %v11030 = vmul.f32 %v517, %v11001
        %v11031 = vmul.f32 %v518, %v11001
        %v11032 = vmul.f32 %v519, %v11001
        %v11033 = vmul.f32 %v520, %v11001
        %v11034 = vmul.f32 %v521, %v11001
        %v11035 = vmul.f32 %v522, %v11001
        %v11036 = vmul.f32 %v523, %v11001
        %v11037 = vmul.f32 %v524, %v11001
        %v11038 = vmul.f32 %v525, %v11001
        %v11039 = vmul.f32 %v526, %v11001
        %v11040 = vmul.f32 %v527, %v11001
        %v11041 = vmul.f32 %v528, %v11001
        %v11042 = vmul.f32 %v529, %v11001
        %v11043 = vmul.f32 %v530, %v11001
        %v11044 = vmul.f32 %v531, %v11001
        %v11045 = vmul.f32 %v532, %v11001
        %v11046 = vmul.f32 %v533, %v11001
        %v11047 = vmul.f32 %v534, %v11001
        %v11048 = vmul.f32 %v535, %v11001
        %v11049 = vmul.f32 %v536, %v11001
        %v11098 = vrot.slane %v11002, 6
        %v11099 = vrot.slane %v11003, 6
        %v11100 = vsel %vm9633, %v11098, %v11099
        %v11101 = vrot.slane %v11004, 6
        %v11102 = vsel %vm9633, %v11099, %v11101
        %v11103 = vrot.slane %v11005, 6
        %v11104 = vrot.slane %v11006, 6
        %v11105 = vsel %vm9633, %v11103, %v11104
        %v11106 = vrot.slane %v11007, 6
        %v11107 = vsel %vm9633, %v11104, %v11106
        %v11108 = vrot.slane %v11008, 6
        %v11109 = vrot.slane %v11009, 6
        %v11110 = vsel %vm9633, %v11108, %v11109
        %v11111 = vrot.slane %v11010, 6
        %v11112 = vsel %vm9633, %v11109, %v11111
        %v11113 = vrot.slane %v11011, 6
        %v11114 = vrot.slane %v11012, 6
        %v11115 = vsel %vm9633, %v11113, %v11114
        %v11116 = vrot.slane %v11013, 6
        %v11117 = vsel %vm9633, %v11114, %v11116
        %v11118 = vrot.slane %v11014, 6
        %v11119 = vrot.slane %v11015, 6
        %v11120 = vsel %vm9633, %v11118, %v11119
        %v11121 = vrot.slane %v11016, 6
        %v11122 = vsel %vm9633, %v11119, %v11121
        %v11123 = vrot.slane %v11017, 6
        %v11124 = vrot.slane %v11018, 6
        %v11125 = vsel %vm9633, %v11123, %v11124
        %v11126 = vrot.slane %v11019, 6
        %v11127 = vsel %vm9633, %v11124, %v11126
        %v11128 = vrot.slane %v11020, 6
        %v11129 = vrot.slane %v11021, 6
        %v11130 = vsel %vm9633, %v11128, %v11129
        %v11131 = vrot.slane %v11022, 6
        %v11132 = vsel %vm9633, %v11129, %v11131
        %v11133 = vrot.slane %v11023, 6
        %v11134 = vrot.slane %v11024, 6
        %v11135 = vsel %vm9633, %v11133, %v11134
        %v11136 = vrot.slane %v11025, 6
        %v11137 = vsel %vm9633, %v11134, %v11136
        %v11138 = vrot.slane %v11026, 6
        %v11139 = vrot.slane %v11027, 6
        %v11140 = vsel %vm9633, %v11138, %v11139
        %v11141 = vrot.slane %v11028, 6
        %v11142 = vsel %vm9633, %v11139, %v11141
        %v11143 = vrot.slane %v11029, 6
        %v11144 = vrot.slane %v11030, 6
        %v11145 = vsel %vm9633, %v11143, %v11144
        %v11146 = vrot.slane %v11031, 6
        %v11147 = vsel %vm9633, %v11144, %v11146
        %v11148 = vrot.slane %v11032, 6
        %v11149 = vrot.slane %v11033, 6
        %v11150 = vsel %vm9633, %v11148, %v11149
        %v11151 = vrot.slane %v11034, 6
        %v11152 = vsel %vm9633, %v11149, %v11151
        %v11153 = vrot.slane %v11035, 6
        %v11154 = vrot.slane %v11036, 6
        %v11155 = vsel %vm9633, %v11153, %v11154
        %v11156 = vrot.slane %v11037, 6
        %v11157 = vsel %vm9633, %v11154, %v11156
        %v11158 = vrot.slane %v11038, 6
        %v11159 = vrot.slane %v11039, 6
        %v11160 = vsel %vm9633, %v11158, %v11159
        %v11161 = vrot.slane %v11040, 6
        %v11162 = vsel %vm9633, %v11159, %v11161
        %v11163 = vrot.slane %v11041, 6
        %v11164 = vrot.slane %v11042, 6
        %v11165 = vsel %vm9633, %v11163, %v11164
        %v11166 = vrot.slane %v11043, 6
        %v11167 = vsel %vm9633, %v11164, %v11166
        %v11168 = vrot.slane %v11044, 6
        %v11169 = vrot.slane %v11045, 6
        %v11170 = vsel %vm9633, %v11168, %v11169
        %v11171 = vrot.slane %v11046, 6
        %v11172 = vsel %vm9633, %v11169, %v11171
        %v11173 = vrot.slane %v11047, 6
        %v11174 = vrot.slane %v11048, 6
        %v11175 = vsel %vm9633, %v11173, %v11174
        %v11176 = vrot.slane %v11049, 6
        %v11177 = vsel %vm9633, %v11174, %v11176
        %v11210 = vadd.f32 %v10966, %v11100
        %v11211 = vadd.f32 %v10967, %v11102
        %v11212 = vadd.f32 %v10968, %v11105
        %v11213 = vadd.f32 %v10969, %v11107
        %v11214 = vadd.f32 %v10970, %v11110
        %v11215 = vadd.f32 %v10971, %v11112
        %v11216 = vadd.f32 %v10972, %v11115
        %v11217 = vadd.f32 %v10973, %v11117
        %v11218 = vadd.f32 %v10974, %v11120
        %v11219 = vadd.f32 %v10975, %v11122
        %v11220 = vadd.f32 %v10976, %v11125
        %v11221 = vadd.f32 %v10977, %v11127
        %v11222 = vadd.f32 %v10978, %v11130
        %v11223 = vadd.f32 %v10979, %v11132
        %v11224 = vadd.f32 %v10980, %v11135
        %v11225 = vadd.f32 %v10981, %v11137
        %v11226 = vadd.f32 %v10982, %v11140
        %v11227 = vadd.f32 %v10983, %v11142
        %v11228 = vadd.f32 %v10984, %v11145
        %v11229 = vadd.f32 %v10985, %v11147
        %v11230 = vadd.f32 %v10986, %v11150
        %v11231 = vadd.f32 %v10987, %v11152
        %v11232 = vadd.f32 %v10988, %v11155
        %v11233 = vadd.f32 %v10989, %v11157
        %v11234 = vadd.f32 %v10990, %v11160
        %v11235 = vadd.f32 %v10991, %v11162
        %v11236 = vadd.f32 %v10992, %v11165
        %v11237 = vadd.f32 %v10993, %v11167
        %v11238 = vadd.f32 %v10994, %v11170
        %v11239 = vadd.f32 %v10995, %v11172
        %v11240 = vadd.f32 %v10996, %v11175
        %v11241 = vadd.f32 %v10997, %v11177
        %v11242 = vld [vmem:[%s2] sm:$0x1]
        %v11244 = vlaneseq
        %v11245 = vshrl.u32 %v11244, 7
        %v11246 = vsub.s32 0, %v11245
        %v11247 = vrot.slane %v11242, %v11246
        %v11249 = vadd.f32 %v11210, %v11247
        %v11250 = vadd.f32 %v11211, %v11247
        %v11251 = vadd.f32 %v11212, %v11247
        %v11252 = vadd.f32 %v11213, %v11247
        %v11253 = vadd.f32 %v11214, %v11247
        %v11254 = vadd.f32 %v11215, %v11247
        %v11255 = vadd.f32 %v11216, %v11247
        %v11256 = vadd.f32 %v11217, %v11247
        %v11257 = vadd.f32 %v11218, %v11247
        %v11258 = vadd.f32 %v11219, %v11247
        %v11259 = vadd.f32 %v11220, %v11247
        %v11260 = vadd.f32 %v11221, %v11247
        %v11261 = vadd.f32 %v11222, %v11247
        %v11262 = vadd.f32 %v11223, %v11247
        %v11263 = vadd.f32 %v11224, %v11247
        %v11264 = vadd.f32 %v11225, %v11247
        %v11265 = vadd.f32 %v11226, %v11247
        %v11266 = vadd.f32 %v11227, %v11247
        %v11267 = vadd.f32 %v11228, %v11247
        %v11268 = vadd.f32 %v11229, %v11247
        %v11269 = vadd.f32 %v11230, %v11247
        %v11270 = vadd.f32 %v11231, %v11247
        %v11271 = vadd.f32 %v11232, %v11247
        %v11272 = vadd.f32 %v11233, %v11247
        %v11273 = vadd.f32 %v11234, %v11247
        %v11274 = vadd.f32 %v11235, %v11247
        %v11275 = vadd.f32 %v11236, %v11247
        %v11276 = vadd.f32 %v11237, %v11247
        %v11277 = vadd.f32 %v11238, %v11247
        %v11278 = vadd.f32 %v11239, %v11247
        %v11279 = vadd.f32 %v11240, %v11247
        %v11280 = vadd.f32 %v11241, %v11247
        %v11281 = vsel %vm352, %v11249, 0.0
        %11282 = vadd.xlane.f32.xlu0 %v11281
        %v11283 = vpop.xlane.xlu0 %11282
        %v11284 = vsel %vm352, %v11250, 0.0
        %11285 = vadd.xlane.f32.xlu0 %v11284
        %v11286 = vpop.xlane.xlu0 %11285
        %v11287 = vsel %vm352, %v11251, 0.0
        %11288 = vadd.xlane.f32.xlu0 %v11287
        %v11289 = vpop.xlane.xlu0 %11288
        %v11290 = vsel %vm352, %v11252, 0.0
        %11291 = vadd.xlane.f32.xlu0 %v11290
        %v11292 = vpop.xlane.xlu0 %11291
        %v11293 = vsel %vm352, %v11253, 0.0
        %11294 = vadd.xlane.f32.xlu0 %v11293
        %v11295 = vpop.xlane.xlu0 %11294
        %v11296 = vsel %vm352, %v11254, 0.0
        %11297 = vadd.xlane.f32.xlu0 %v11296
        %v11298 = vpop.xlane.xlu0 %11297
        %v11299 = vsel %vm352, %v11255, 0.0
        %11300 = vadd.xlane.f32.xlu0 %v11299
        %v11301 = vpop.xlane.xlu0 %11300
        %v11302 = vsel %vm352, %v11256, 0.0
        %11303 = vadd.xlane.f32.xlu0 %v11302
        %v11304 = vpop.xlane.xlu0 %11303
        %v11305 = vsel %vm352, %v11257, 0.0
        %11306 = vadd.xlane.f32.xlu0 %v11305
        %v11307 = vpop.xlane.xlu0 %11306
        %v11308 = vsel %vm352, %v11258, 0.0
        %11309 = vadd.xlane.f32.xlu0 %v11308
        %v11310 = vpop.xlane.xlu0 %11309
        %v11311 = vsel %vm352, %v11259, 0.0
        %11312 = vadd.xlane.f32.xlu0 %v11311
        %v11313 = vpop.xlane.xlu0 %11312
        %v11314 = vsel %vm352, %v11260, 0.0
        %11315 = vadd.xlane.f32.xlu0 %v11314
        %v11316 = vpop.xlane.xlu0 %11315
        %v11317 = vsel %vm352, %v11261, 0.0
        %11318 = vadd.xlane.f32.xlu0 %v11317
        %v11319 = vpop.xlane.xlu0 %11318
        %v11320 = vsel %vm352, %v11262, 0.0
        %11321 = vadd.xlane.f32.xlu0 %v11320
        %v11322 = vpop.xlane.xlu0 %11321
        %v11323 = vsel %vm352, %v11263, 0.0
        %11324 = vadd.xlane.f32.xlu0 %v11323
        %v11325 = vpop.xlane.xlu0 %11324
        %v11326 = vsel %vm352, %v11264, 0.0
        %11327 = vadd.xlane.f32.xlu0 %v11326
        %v11328 = vpop.xlane.xlu0 %11327
        %v11329 = vsel %vm352, %v11265, 0.0
        %11330 = vadd.xlane.f32.xlu0 %v11329
        %v11331 = vpop.xlane.xlu0 %11330
        %v11332 = vsel %vm352, %v11266, 0.0
        %11333 = vadd.xlane.f32.xlu0 %v11332
        %v11334 = vpop.xlane.xlu0 %11333
        %v11335 = vsel %vm352, %v11267, 0.0
        %11336 = vadd.xlane.f32.xlu0 %v11335
        %v11337 = vpop.xlane.xlu0 %11336
        %v11338 = vsel %vm352, %v11268, 0.0
        %11339 = vadd.xlane.f32.xlu0 %v11338
        %v11340 = vpop.xlane.xlu0 %11339
        %v11341 = vsel %vm352, %v11269, 0.0
        %11342 = vadd.xlane.f32.xlu0 %v11341
        %v11343 = vpop.xlane.xlu0 %11342
        %v11344 = vsel %vm352, %v11270, 0.0
        %11345 = vadd.xlane.f32.xlu0 %v11344
        %v11346 = vpop.xlane.xlu0 %11345
        %v11347 = vsel %vm352, %v11271, 0.0
        %11348 = vadd.xlane.f32.xlu0 %v11347
        %v11349 = vpop.xlane.xlu0 %11348
        %v11350 = vsel %vm352, %v11272, 0.0
        %11351 = vadd.xlane.f32.xlu0 %v11350
        %v11352 = vpop.xlane.xlu0 %11351
        %v11353 = vsel %vm352, %v11273, 0.0
        %11354 = vadd.xlane.f32.xlu0 %v11353
        %v11355 = vpop.xlane.xlu0 %11354
        %v11356 = vsel %vm352, %v11274, 0.0
        %11357 = vadd.xlane.f32.xlu0 %v11356
        %v11358 = vpop.xlane.xlu0 %11357
        %v11359 = vsel %vm352, %v11275, 0.0
        %11360 = vadd.xlane.f32.xlu0 %v11359
        %v11361 = vpop.xlane.xlu0 %11360
        %v11362 = vsel %vm352, %v11276, 0.0
        %11363 = vadd.xlane.f32.xlu0 %v11362
        %v11364 = vpop.xlane.xlu0 %11363
        %v11365 = vsel %vm352, %v11277, 0.0
        %11366 = vadd.xlane.f32.xlu0 %v11365
        %v11367 = vpop.xlane.xlu0 %11366
        %v11368 = vsel %vm352, %v11278, 0.0
        %11369 = vadd.xlane.f32.xlu0 %v11368
        %v11370 = vpop.xlane.xlu0 %11369
        %v11371 = vsel %vm352, %v11279, 0.0
        %11372 = vadd.xlane.f32.xlu0 %v11371
        %v11373 = vpop.xlane.xlu0 %11372
        %v11374 = vsel %vm352, %v11280, 0.0
        %11375 = vadd.xlane.f32.xlu0 %v11374
        %v11376 = vpop.xlane.xlu0 %11375
        %v11377 = vmul.f32 %v11249, %v11249
        %v11378 = vmul.f32 %v11250, %v11250
        %v11379 = vmul.f32 %v11251, %v11251
        %v11380 = vmul.f32 %v11252, %v11252
        %v11381 = vmul.f32 %v11253, %v11253
        %v11382 = vmul.f32 %v11254, %v11254
        %v11383 = vmul.f32 %v11255, %v11255
        %v11384 = vmul.f32 %v11256, %v11256
        %v11385 = vmul.f32 %v11257, %v11257
        %v11386 = vmul.f32 %v11258, %v11258
        %v11387 = vmul.f32 %v11259, %v11259
        %v11388 = vmul.f32 %v11260, %v11260
        %v11389 = vmul.f32 %v11261, %v11261
        %v11390 = vmul.f32 %v11262, %v11262
        %v11391 = vmul.f32 %v11263, %v11263
        %v11392 = vmul.f32 %v11264, %v11264
        %v11393 = vmul.f32 %v11265, %v11265
        %v11394 = vmul.f32 %v11266, %v11266
        %v11395 = vmul.f32 %v11267, %v11267
        %v11396 = vmul.f32 %v11268, %v11268
        %v11397 = vmul.f32 %v11269, %v11269
        %v11398 = vmul.f32 %v11270, %v11270
        %v11399 = vmul.f32 %v11271, %v11271
        %v11400 = vmul.f32 %v11272, %v11272
        %v11401 = vmul.f32 %v11273, %v11273
        %v11402 = vmul.f32 %v11274, %v11274
        %v11403 = vmul.f32 %v11275, %v11275
        %v11404 = vmul.f32 %v11276, %v11276
        %v11405 = vmul.f32 %v11277, %v11277
        %v11406 = vmul.f32 %v11278, %v11278
        %v11407 = vmul.f32 %v11279, %v11279
        %v11408 = vmul.f32 %v11280, %v11280
        %v11409 = vsel %vm352, %v11377, 0.0
        %11410 = vadd.xlane.f32.xlu0 %v11409
        %v11411 = vpop.xlane.xlu0 %11410
        %v11412 = vsel %vm352, %v11378, 0.0
        %11413 = vadd.xlane.f32.xlu0 %v11412
        %v11414 = vpop.xlane.xlu0 %11413
        %v11415 = vsel %vm352, %v11379, 0.0
        %11416 = vadd.xlane.f32.xlu0 %v11415
        %v11417 = vpop.xlane.xlu0 %11416
        %v11418 = vsel %vm352, %v11380, 0.0
        %11419 = vadd.xlane.f32.xlu0 %v11418
        %v11420 = vpop.xlane.xlu0 %11419
        %v11421 = vsel %vm352, %v11381, 0.0
        %11422 = vadd.xlane.f32.xlu0 %v11421
        %v11423 = vpop.xlane.xlu0 %11422
        %v11424 = vsel %vm352, %v11382, 0.0
        %11425 = vadd.xlane.f32.xlu0 %v11424
        %v11426 = vpop.xlane.xlu0 %11425
        %v11427 = vsel %vm352, %v11383, 0.0
        %11428 = vadd.xlane.f32.xlu0 %v11427
        %v11429 = vpop.xlane.xlu0 %11428
        %v11430 = vsel %vm352, %v11384, 0.0
        %11431 = vadd.xlane.f32.xlu0 %v11430
        %v11432 = vpop.xlane.xlu0 %11431
        %v11433 = vsel %vm352, %v11385, 0.0
        %11434 = vadd.xlane.f32.xlu0 %v11433
        %v11435 = vpop.xlane.xlu0 %11434
        %v11436 = vsel %vm352, %v11386, 0.0
        %11437 = vadd.xlane.f32.xlu0 %v11436
        %v11438 = vpop.xlane.xlu0 %11437
        %v11439 = vsel %vm352, %v11387, 0.0
        %11440 = vadd.xlane.f32.xlu0 %v11439
        %v11441 = vpop.xlane.xlu0 %11440
        %v11442 = vsel %vm352, %v11388, 0.0
        %11443 = vadd.xlane.f32.xlu0 %v11442
        %v11444 = vpop.xlane.xlu0 %11443
        %v11445 = vsel %vm352, %v11389, 0.0
        %11446 = vadd.xlane.f32.xlu0 %v11445
        %v11447 = vpop.xlane.xlu0 %11446
        %v11448 = vsel %vm352, %v11390, 0.0
        %11449 = vadd.xlane.f32.xlu0 %v11448
        %v11450 = vpop.xlane.xlu0 %11449
        %v11451 = vsel %vm352, %v11391, 0.0
        %11452 = vadd.xlane.f32.xlu0 %v11451
        %v11453 = vpop.xlane.xlu0 %11452
        %v11454 = vsel %vm352, %v11392, 0.0
        %11455 = vadd.xlane.f32.xlu0 %v11454
        %v11456 = vpop.xlane.xlu0 %11455
        %v11457 = vsel %vm352, %v11393, 0.0
        %11458 = vadd.xlane.f32.xlu0 %v11457
        %v11459 = vpop.xlane.xlu0 %11458
        %v11460 = vsel %vm352, %v11394, 0.0
        %11461 = vadd.xlane.f32.xlu0 %v11460
        %v11462 = vpop.xlane.xlu0 %11461
        %v11463 = vsel %vm352, %v11395, 0.0
        %11464 = vadd.xlane.f32.xlu0 %v11463
        %v11465 = vpop.xlane.xlu0 %11464
        %v11466 = vsel %vm352, %v11396, 0.0
        %11467 = vadd.xlane.f32.xlu0 %v11466
        %v11468 = vpop.xlane.xlu0 %11467
        %v11469 = vsel %vm352, %v11397, 0.0
        %11470 = vadd.xlane.f32.xlu0 %v11469
        %v11471 = vpop.xlane.xlu0 %11470
        %v11472 = vsel %vm352, %v11398, 0.0
        %11473 = vadd.xlane.f32.xlu0 %v11472
        %v11474 = vpop.xlane.xlu0 %11473
        %v11475 = vsel %vm352, %v11399, 0.0
        %11476 = vadd.xlane.f32.xlu0 %v11475
        %v11477 = vpop.xlane.xlu0 %11476
        %v11478 = vsel %vm352, %v11400, 0.0
        %11479 = vadd.xlane.f32.xlu0 %v11478
        %v11480 = vpop.xlane.xlu0 %11479
        %v11481 = vsel %vm352, %v11401, 0.0
        %11482 = vadd.xlane.f32.xlu0 %v11481
        %v11483 = vpop.xlane.xlu0 %11482
        %v11484 = vsel %vm352, %v11402, 0.0
        %11485 = vadd.xlane.f32.xlu0 %v11484
        %v11486 = vpop.xlane.xlu0 %11485
        %v11487 = vsel %vm352, %v11403, 0.0
        %11488 = vadd.xlane.f32.xlu0 %v11487
        %v11489 = vpop.xlane.xlu0 %11488
        %v11490 = vsel %vm352, %v11404, 0.0
        %11491 = vadd.xlane.f32.xlu0 %v11490
        %v11492 = vpop.xlane.xlu0 %11491
        %v11493 = vsel %vm352, %v11405, 0.0
        %11494 = vadd.xlane.f32.xlu0 %v11493
        %v11495 = vpop.xlane.xlu0 %11494
        %v11496 = vsel %vm352, %v11406, 0.0
        %11497 = vadd.xlane.f32.xlu0 %v11496
        %v11498 = vpop.xlane.xlu0 %11497
        %v11499 = vsel %vm352, %v11407, 0.0
        %11500 = vadd.xlane.f32.xlu0 %v11499
        %v11501 = vpop.xlane.xlu0 %11500
        %v11502 = vsel %vm352, %v11408, 0.0
        %11503 = vadd.xlane.f32.xlu0 %v11502
        %v11504 = vpop.xlane.xlu0 %11503
        %v11505 = vmul.f32 %v11283, 0.03125
        %v11506 = vmul.f32 %v11286, 0.03125
        %v11507 = vmul.f32 %v11289, 0.03125
        %v11508 = vmul.f32 %v11292, 0.03125
        %v11509 = vmul.f32 %v11295, 0.03125
        %v11510 = vmul.f32 %v11298, 0.03125
        %v11511 = vmul.f32 %v11301, 0.03125
        %v11512 = vmul.f32 %v11304, 0.03125
        %v11513 = vmul.f32 %v11307, 0.03125
        %v11514 = vmul.f32 %v11310, 0.03125
        %v11515 = vmul.f32 %v11313, 0.03125
        %v11516 = vmul.f32 %v11316, 0.03125
        %v11517 = vmul.f32 %v11319, 0.03125
        %v11518 = vmul.f32 %v11322, 0.03125
        %v11519 = vmul.f32 %v11325, 0.03125
        %v11520 = vmul.f32 %v11328, 0.03125
        %v11521 = vmul.f32 %v11331, 0.03125
        %v11522 = vmul.f32 %v11334, 0.03125
        %v11523 = vmul.f32 %v11337, 0.03125
        %v11524 = vmul.f32 %v11340, 0.03125
        %v11525 = vmul.f32 %v11343, 0.03125
        %v11526 = vmul.f32 %v11346, 0.03125
        %v11527 = vmul.f32 %v11349, 0.03125
        %v11528 = vmul.f32 %v11352, 0.03125
        %v11529 = vmul.f32 %v11355, 0.03125
        %v11530 = vmul.f32 %v11358, 0.03125
        %v11531 = vmul.f32 %v11361, 0.03125
        %v11532 = vmul.f32 %v11364, 0.03125
        %v11533 = vmul.f32 %v11367, 0.03125
        %v11534 = vmul.f32 %v11370, 0.03125
        %v11535 = vmul.f32 %v11373, 0.03125
        %v11536 = vmul.f32 %v11376, 0.03125
        %v11537 = vmul.f32 %v11411, 0.03125
        %v11538 = vmul.f32 %v11414, 0.03125
        %v11539 = vmul.f32 %v11417, 0.03125
        %v11540 = vmul.f32 %v11420, 0.03125
        %v11541 = vmul.f32 %v11423, 0.03125
        %v11542 = vmul.f32 %v11426, 0.03125
        %v11543 = vmul.f32 %v11429, 0.03125
        %v11544 = vmul.f32 %v11432, 0.03125
        %v11545 = vmul.f32 %v11435, 0.03125
        %v11546 = vmul.f32 %v11438, 0.03125
        %v11547 = vmul.f32 %v11441, 0.03125
        %v11548 = vmul.f32 %v11444, 0.03125
        %v11549 = vmul.f32 %v11447, 0.03125
        %v11550 = vmul.f32 %v11450, 0.03125
        %v11551 = vmul.f32 %v11453, 0.03125
        %v11552 = vmul.f32 %v11456, 0.03125
        %v11553 = vmul.f32 %v11459, 0.03125
        %v11554 = vmul.f32 %v11462, 0.03125
        %v11555 = vmul.f32 %v11465, 0.03125
        %v11556 = vmul.f32 %v11468, 0.03125
        %v11557 = vmul.f32 %v11471, 0.03125
        %v11558 = vmul.f32 %v11474, 0.03125
        %v11559 = vmul.f32 %v11477, 0.03125
        %v11560 = vmul.f32 %v11480, 0.03125
        %v11561 = vmul.f32 %v11483, 0.03125
        %v11562 = vmul.f32 %v11486, 0.03125
        %v11563 = vmul.f32 %v11489, 0.03125
        %v11564 = vmul.f32 %v11492, 0.03125
        %v11565 = vmul.f32 %v11495, 0.03125
        %v11566 = vmul.f32 %v11498, 0.03125
        %v11567 = vmul.f32 %v11501, 0.03125
        %v11568 = vmul.f32 %v11504, 0.03125
        %v11569 = vmul.f32 %v11505, %v11505
        %v11570 = vmul.f32 %v11506, %v11506
        %v11571 = vmul.f32 %v11507, %v11507
        %v11572 = vmul.f32 %v11508, %v11508
        %v11573 = vmul.f32 %v11509, %v11509
        %v11574 = vmul.f32 %v11510, %v11510
        %v11575 = vmul.f32 %v11511, %v11511
        %v11576 = vmul.f32 %v11512, %v11512
        %v11577 = vmul.f32 %v11513, %v11513
        %v11578 = vmul.f32 %v11514, %v11514
        %v11579 = vmul.f32 %v11515, %v11515
        %v11580 = vmul.f32 %v11516, %v11516
        %v11581 = vmul.f32 %v11517, %v11517
        %v11582 = vmul.f32 %v11518, %v11518
        %v11583 = vmul.f32 %v11519, %v11519
        %v11584 = vmul.f32 %v11520, %v11520
        %v11585 = vmul.f32 %v11521, %v11521
        %v11586 = vmul.f32 %v11522, %v11522
        %v11587 = vmul.f32 %v11523, %v11523
        %v11588 = vmul.f32 %v11524, %v11524
        %v11589 = vmul.f32 %v11525, %v11525
        %v11590 = vmul.f32 %v11526, %v11526
        %v11591 = vmul.f32 %v11527, %v11527
        %v11592 = vmul.f32 %v11528, %v11528
        %v11593 = vmul.f32 %v11529, %v11529
        %v11594 = vmul.f32 %v11530, %v11530
        %v11595 = vmul.f32 %v11531, %v11531
        %v11596 = vmul.f32 %v11532, %v11532
        %v11597 = vmul.f32 %v11533, %v11533
        %v11598 = vmul.f32 %v11534, %v11534
        %v11599 = vmul.f32 %v11535, %v11535
        %v11600 = vmul.f32 %v11536, %v11536
        %v11601 = vsub.f32 %v11537, %v11569
        %v11602 = vsub.f32 %v11538, %v11570
        %v11603 = vsub.f32 %v11539, %v11571
        %v11604 = vsub.f32 %v11540, %v11572
        %v11605 = vsub.f32 %v11541, %v11573
        %v11606 = vsub.f32 %v11542, %v11574
        %v11607 = vsub.f32 %v11543, %v11575
        %v11608 = vsub.f32 %v11544, %v11576
        %v11609 = vsub.f32 %v11545, %v11577
        %v11610 = vsub.f32 %v11546, %v11578
        %v11611 = vsub.f32 %v11547, %v11579
        %v11612 = vsub.f32 %v11548, %v11580
        %v11613 = vsub.f32 %v11549, %v11581
        %v11614 = vsub.f32 %v11550, %v11582
        %v11615 = vsub.f32 %v11551, %v11583
        %v11616 = vsub.f32 %v11552, %v11584
        %v11617 = vsub.f32 %v11553, %v11585
        %v11618 = vsub.f32 %v11554, %v11586
        %v11619 = vsub.f32 %v11555, %v11587
        %v11620 = vsub.f32 %v11556, %v11588
        %v11621 = vsub.f32 %v11557, %v11589
        %v11622 = vsub.f32 %v11558, %v11590
        %v11623 = vsub.f32 %v11559, %v11591
        %v11624 = vsub.f32 %v11560, %v11592
        %v11625 = vsub.f32 %v11561, %v11593
        %v11626 = vsub.f32 %v11562, %v11594
        %v11627 = vsub.f32 %v11563, %v11595
        %v11628 = vsub.f32 %v11564, %v11596
        %v11629 = vsub.f32 %v11565, %v11597
        %v11630 = vsub.f32 %v11566, %v11598
        %v11631 = vsub.f32 %v11567, %v11599
        %v11632 = vsub.f32 %v11568, %v11600
        %v11633 = vsub.f32 %v11249, %v11505
        %v11634 = vsub.f32 %v11250, %v11506
        %v11635 = vsub.f32 %v11251, %v11507
        %v11636 = vsub.f32 %v11252, %v11508
        %v11637 = vsub.f32 %v11253, %v11509
        %v11638 = vsub.f32 %v11254, %v11510
        %v11639 = vsub.f32 %v11255, %v11511
        %v11640 = vsub.f32 %v11256, %v11512
        %v11641 = vsub.f32 %v11257, %v11513
        %v11642 = vsub.f32 %v11258, %v11514
        %v11643 = vsub.f32 %v11259, %v11515
        %v11644 = vsub.f32 %v11260, %v11516
        %v11645 = vsub.f32 %v11261, %v11517
        %v11646 = vsub.f32 %v11262, %v11518
        %v11647 = vsub.f32 %v11263, %v11519
        %v11648 = vsub.f32 %v11264, %v11520
        %v11649 = vsub.f32 %v11265, %v11521
        %v11650 = vsub.f32 %v11266, %v11522
        %v11651 = vsub.f32 %v11267, %v11523
        %v11652 = vsub.f32 %v11268, %v11524
        %v11653 = vsub.f32 %v11269, %v11525
        %v11654 = vsub.f32 %v11270, %v11526
        %v11655 = vsub.f32 %v11271, %v11527
        %v11656 = vsub.f32 %v11272, %v11528
        %v11657 = vsub.f32 %v11273, %v11529
        %v11658 = vsub.f32 %v11274, %v11530
        %v11659 = vsub.f32 %v11275, %v11531
        %v11660 = vsub.f32 %v11276, %v11532
        %v11661 = vsub.f32 %v11277, %v11533
        %v11662 = vsub.f32 %v11278, %v11534
        %v11663 = vsub.f32 %v11279, %v11535
        %v11664 = vsub.f32 %v11280, %v11536
        %v11665 = vadd.f32 %v11601, 1e-06
        %v11666 = vadd.f32 %v11602, 1e-06
        %v11667 = vadd.f32 %v11603, 1e-06
        %v11668 = vadd.f32 %v11604, 1e-06
        %v11669 = vadd.f32 %v11605, 1e-06
        %v11670 = vadd.f32 %v11606, 1e-06
        %v11671 = vadd.f32 %v11607, 1e-06
        %v11672 = vadd.f32 %v11608, 1e-06
        %v11673 = vadd.f32 %v11609, 1e-06
        %v11674 = vadd.f32 %v11610, 1e-06
        %v11675 = vadd.f32 %v11611, 1e-06
        %v11676 = vadd.f32 %v11612, 1e-06
        %v11677 = vadd.f32 %v11613, 1e-06
        %v11678 = vadd.f32 %v11614, 1e-06
        %v11679 = vadd.f32 %v11615, 1e-06
        %v11680 = vadd.f32 %v11616, 1e-06
        %v11681 = vadd.f32 %v11617, 1e-06
        %v11682 = vadd.f32 %v11618, 1e-06
        %v11683 = vadd.f32 %v11619, 1e-06
        %v11684 = vadd.f32 %v11620, 1e-06
        %v11685 = vadd.f32 %v11621, 1e-06
        %v11686 = vadd.f32 %v11622, 1e-06
        %v11687 = vadd.f32 %v11623, 1e-06
        %v11688 = vadd.f32 %v11624, 1e-06
        %v11689 = vadd.f32 %v11625, 1e-06
        %v11690 = vadd.f32 %v11626, 1e-06
        %v11691 = vadd.f32 %v11627, 1e-06
        %v11692 = vadd.f32 %v11628, 1e-06
        %v11693 = vadd.f32 %v11629, 1e-06
        %v11694 = vadd.f32 %v11630, 1e-06
        %v11695 = vadd.f32 %v11631, 1e-06
        %v11696 = vadd.f32 %v11632, 1e-06
        %v11697 = vrsqrt.pop %v11665
        %v11698 = vrsqrt.pop %v11666
        %v11699 = vrsqrt.pop %v11667
        %v11700 = vrsqrt.pop %v11668
        %v11701 = vrsqrt.pop %v11669
        %v11702 = vrsqrt.pop %v11670
        %v11703 = vrsqrt.pop %v11671
        %v11704 = vrsqrt.pop %v11672
        %v11705 = vrsqrt.pop %v11673
        %v11706 = vrsqrt.pop %v11674
        %v11707 = vrsqrt.pop %v11675
        %v11708 = vrsqrt.pop %v11676
        %v11709 = vrsqrt.pop %v11677
        %v11710 = vrsqrt.pop %v11678
        %v11711 = vrsqrt.pop %v11679
        %v11712 = vrsqrt.pop %v11680
        %v11713 = vrsqrt.pop %v11681
        %v11714 = vrsqrt.pop %v11682
        %v11715 = vrsqrt.pop %v11683
        %v11716 = vrsqrt.pop %v11684
        %v11717 = vrsqrt.pop %v11685
        %v11718 = vrsqrt.pop %v11686
        %v11719 = vrsqrt.pop %v11687
        %v11720 = vrsqrt.pop %v11688
        %v11721 = vrsqrt.pop %v11689
        %v11722 = vrsqrt.pop %v11690
        %v11723 = vrsqrt.pop %v11691
        %v11724 = vrsqrt.pop %v11692
        %v11725 = vrsqrt.pop %v11693
        %v11726 = vrsqrt.pop %v11694
        %v11727 = vrsqrt.pop %v11695
        %v11728 = vrsqrt.pop %v11696
        %v11729 = vmul.f32 %v11633, %v11697
        %v11730 = vmul.f32 %v11634, %v11698
        %v11731 = vmul.f32 %v11635, %v11699
        %v11732 = vmul.f32 %v11636, %v11700
        %v11733 = vmul.f32 %v11637, %v11701
        %v11734 = vmul.f32 %v11638, %v11702
        %v11735 = vmul.f32 %v11639, %v11703
        %v11736 = vmul.f32 %v11640, %v11704
        %v11737 = vmul.f32 %v11641, %v11705
        %v11738 = vmul.f32 %v11642, %v11706
        %v11739 = vmul.f32 %v11643, %v11707
        %v11740 = vmul.f32 %v11644, %v11708
        %v11741 = vmul.f32 %v11645, %v11709
        %v11742 = vmul.f32 %v11646, %v11710
        %v11743 = vmul.f32 %v11647, %v11711
        %v11744 = vmul.f32 %v11648, %v11712
        %v11745 = vmul.f32 %v11649, %v11713
        %v11746 = vmul.f32 %v11650, %v11714
        %v11747 = vmul.f32 %v11651, %v11715
        %v11748 = vmul.f32 %v11652, %v11716
        %v11749 = vmul.f32 %v11653, %v11717
        %v11750 = vmul.f32 %v11654, %v11718
        %v11751 = vmul.f32 %v11655, %v11719
        %v11752 = vmul.f32 %v11656, %v11720
        %v11753 = vmul.f32 %v11657, %v11721
        %v11754 = vmul.f32 %v11658, %v11722
        %v11755 = vmul.f32 %v11659, %v11723
        %v11756 = vmul.f32 %v11660, %v11724
        %v11757 = vmul.f32 %v11661, %v11725
        %v11758 = vmul.f32 %v11662, %v11726
        %v11759 = vmul.f32 %v11663, %v11727
        %v11760 = vmul.f32 %v11664, %v11728
        %v11761 = vld [vmem:[%s3] sm:$0x1]
        %v11763 = vlaneseq
        %v11764 = vshrl.u32 %v11763, 7
        %v11765 = vsub.s32 0, %v11764
        %v11766 = vrot.slane %v11761, %v11765
        %v11768 = vmul.f32 %v11729, %v11766
        %v11769 = vmul.f32 %v11730, %v11766
        %v11770 = vmul.f32 %v11731, %v11766
        %v11771 = vmul.f32 %v11732, %v11766
        %v11772 = vmul.f32 %v11733, %v11766
        %v11773 = vmul.f32 %v11734, %v11766
        %v11774 = vmul.f32 %v11735, %v11766
        %v11775 = vmul.f32 %v11736, %v11766
        %v11776 = vmul.f32 %v11737, %v11766
        %v11777 = vmul.f32 %v11738, %v11766
        %v11778 = vmul.f32 %v11739, %v11766
        %v11779 = vmul.f32 %v11740, %v11766
        %v11780 = vmul.f32 %v11741, %v11766
        %v11781 = vmul.f32 %v11742, %v11766
        %v11782 = vmul.f32 %v11743, %v11766
        %v11783 = vmul.f32 %v11744, %v11766
        %v11784 = vmul.f32 %v11745, %v11766
        %v11785 = vmul.f32 %v11746, %v11766
        %v11786 = vmul.f32 %v11747, %v11766
        %v11787 = vmul.f32 %v11748, %v11766
        %v11788 = vmul.f32 %v11749, %v11766
        %v11789 = vmul.f32 %v11750, %v11766
        %v11790 = vmul.f32 %v11751, %v11766
        %v11791 = vmul.f32 %v11752, %v11766
        %v11792 = vmul.f32 %v11753, %v11766
        %v11793 = vmul.f32 %v11754, %v11766
        %v11794 = vmul.f32 %v11755, %v11766
        %v11795 = vmul.f32 %v11756, %v11766
        %v11796 = vmul.f32 %v11757, %v11766
        %v11797 = vmul.f32 %v11758, %v11766
        %v11798 = vmul.f32 %v11759, %v11766
        %v11799 = vmul.f32 %v11760, %v11766
        %v11800 = vld [vmem:[%s4] sm:$0x1]
        %v11802 = vlaneseq
        %v11803 = vshrl.u32 %v11802, 7
        %v11804 = vsub.s32 0, %v11803
        %v11805 = vrot.slane %v11800, %v11804
        %v11807 = vadd.f32 %v11768, %v11805
        %v11808 = vadd.f32 %v11769, %v11805
        %v11809 = vadd.f32 %v11770, %v11805
        %v11810 = vadd.f32 %v11771, %v11805
        %v11811 = vadd.f32 %v11772, %v11805
        %v11812 = vadd.f32 %v11773, %v11805
        %v11813 = vadd.f32 %v11774, %v11805
        %v11814 = vadd.f32 %v11775, %v11805
        %v11815 = vadd.f32 %v11776, %v11805
        %v11816 = vadd.f32 %v11777, %v11805
        %v11817 = vadd.f32 %v11778, %v11805
        %v11818 = vadd.f32 %v11779, %v11805
        %v11819 = vadd.f32 %v11780, %v11805
        %v11820 = vadd.f32 %v11781, %v11805
        %v11821 = vadd.f32 %v11782, %v11805
        %v11822 = vadd.f32 %v11783, %v11805
        %v11823 = vadd.f32 %v11784, %v11805
        %v11824 = vadd.f32 %v11785, %v11805
        %v11825 = vadd.f32 %v11786, %v11805
        %v11826 = vadd.f32 %v11787, %v11805
        %v11827 = vadd.f32 %v11788, %v11805
        %v11828 = vadd.f32 %v11789, %v11805
        %v11829 = vadd.f32 %v11790, %v11805
        %v11830 = vadd.f32 %v11791, %v11805
        %v11831 = vadd.f32 %v11792, %v11805
        %v11832 = vadd.f32 %v11793, %v11805
        %v11833 = vadd.f32 %v11794, %v11805
        %v11834 = vadd.f32 %v11795, %v11805
        %v11835 = vadd.f32 %v11796, %v11805
        %v11836 = vadd.f32 %v11797, %v11805
        %v11837 = vadd.f32 %v11798, %v11805
        %v11838 = vadd.f32 %v11799, %v11805
        %v11839 = vpack.c.bf16 %v11808, %v11807
        %v11840 = vpack.c.bf16 %v11810, %v11809
        %v11841 = vpack.c.bf16 %v11812, %v11811
        %v11842 = vpack.c.bf16 %v11814, %v11813
        %v11843 = vpack.c.bf16 %v11816, %v11815
        %v11844 = vpack.c.bf16 %v11818, %v11817
        %v11845 = vpack.c.bf16 %v11820, %v11819
        %v11846 = vpack.c.bf16 %v11822, %v11821
        %v11847 = vpack.c.bf16 %v11824, %v11823
        %v11848 = vpack.c.bf16 %v11826, %v11825
        %v11849 = vpack.c.bf16 %v11828, %v11827
        %v11850 = vpack.c.bf16 %v11830, %v11829
        %v11851 = vpack.c.bf16 %v11832, %v11831
        %v11852 = vpack.c.bf16 %v11834, %v11833
        %v11853 = vpack.c.bf16 %v11836, %v11835
        %v11854 = vpack.c.bf16 %v11838, %v11837
        %v11855 = vld [vmem:[%s5] sm:$0xf]
        %v11856 = vld [vmem:[%s5 + $0x4] sm:$0xf]
        %v11857 = vld [vmem:[%s5 + $0x8] sm:$0xf]
        %v11858 = vld [vmem:[%s5 + $0xc] sm:$0xf]
        %v11859 = vld [vmem:[%s6] sm:$0x1]
        %v11861 = vlaneseq
        %v11862 = vshrl.u32 %v11861, 7
        %v11863 = vsub.s32 0, %v11862
        %v11864 = vrot.slane %v11859, %v11863
        %v11870 = vunpack.c.l.b16 %v11855
        %v11871 = vunpack.c.l.b16 %v11856
        %v11872 = vunpack.c.l.b16 %v11857
        %v11873 = vunpack.c.l.b16 %v11858
        %v11874 = vpack.c.b16 %v11871, %v11870
        %v11875 = vpack.c.b16 %v11873, %v11872
        %v11879 = vsel %vm352, %v11839, 0
        %v11882 = vsel %vm352, %v11840, 0
        %v11885 = vsel %vm352, %v11841, 0
        %v11888 = vsel %vm352, %v11842, 0
        %v11891 = vsel %vm352, %v11843, 0
        %v11894 = vsel %vm352, %v11844, 0
        %v11897 = vsel %vm352, %v11845, 0
        %v11900 = vsel %vm352, %v11846, 0
        %v11903 = vsel %vm352, %v11847, 0
        %v11906 = vsel %vm352, %v11848, 0
        %v11909 = vsel %vm352, %v11849, 0
        %v11912 = vsel %vm352, %v11850, 0
        %v11915 = vsel %vm352, %v11851, 0
        %v11918 = vsel %vm352, %v11852, 0
        %v11921 = vsel %vm352, %v11853, 0
        %v11924 = vsel %vm352, %v11854, 0
        %11926 = vmatprep.subr.bf16.mxu0 0
        %11927 = vmatpush1.bf16.msra.mxu0 0
        %11928 = vmatprep.subr.bf16.mxu0 0
        %11929 = vmatpush1.bf16.msra.mxu0 0
        %11930 = vmatprep.subr.bf16.mxu0 0
        %11931 = vmatpush1.bf16.msra.mxu0 0
        %11932 = vmatprep.subr.bf16.mxu0 0
        %11933 = vmatpush1.bf16.msra.mxu0 0
        %11934 = vmatprep.subr.bf16.mxu0 0
        %11935 = vmatpush1.bf16.msra.mxu0 0
        %11936 = vmatprep.subr.bf16.mxu0 0
        %11937 = vmatpush1.bf16.msra.mxu0 0
        %11938 = vmatprep.subr.bf16.mxu0 0
        %11939 = vmatpush1.bf16.msra.mxu0 %v11875
        %11940 = vmatprep.subr.bf16.mxu0 0
        %11941 = vmatpush1.bf16.msra.mxu0 %v11874
        %11942 = vmatprep.subr.bf16.mxu0 0
        %11943 = vmatpush2.bf16.msra.mxu0 0
        %11944 = vmatprep.subr.bf16.mxu0 0
        %11945 = vmatpush2.bf16.msra.mxu0 0
        %11946 = vmatprep.subr.bf16.mxu0 0
        %11947 = vmatpush2.bf16.msra.mxu0 0
        %11948 = vmatprep.subr.bf16.mxu0 0
        %11949 = vmatpush2.bf16.msra.mxu0 0
        %11950 = vmatprep.subr.bf16.mxu0 0
        %11951 = vmatpush2.bf16.msra.mxu0 0
        %11952 = vmatprep.subr.bf16.mxu0 0
        %11953 = vmatpush2.bf16.msra.mxu0 0
        %11954 = vmatprep.subr.bf16.mxu0 0
        %11955 = vmatpush2.bf16.msra.mxu0 0
        %11956 = vmatprep.subr.bf16.mxu0 0
        %11957 = vmatpush2.bf16.msra.mxu0 0
        %11958 = vmatprep.mubr.bf16.mxu0 0
        %11959 = vmatmul.mubr.bf16.gmra.mxu0 %v11879
        %v11960 = vpop.f32.mrf.mxu0
        %v11961 = vadd.f32 %v11864, %v11960
        %v11962 = vpop.f32.mrf.mxu0
        %v11963 = vpop.f32.mrf.mxu0
        %v11964 = vadd.f32 %v11864, %v11963
        %v11965 = vpop.f32.mrf.mxu0
        %11966 = vmatprep.mubr.bf16.mxu0 0
        %11967 = vmatmul.mubr.bf16.gmra.mxu0 %v11882
        %v11968 = vpop.f32.mrf.mxu0
        %v11969 = vadd.f32 %v11864, %v11968
        %v11970 = vpop.f32.mrf.mxu0
        %v11971 = vpop.f32.mrf.mxu0
        %v11972 = vadd.f32 %v11864, %v11971
        %v11973 = vpop.f32.mrf.mxu0
        %11974 = vmatprep.mubr.bf16.mxu0 0
        %11975 = vmatmul.mubr.bf16.gmra.mxu0 %v11885
        %v11976 = vpop.f32.mrf.mxu0
        %v11977 = vadd.f32 %v11864, %v11976
        %v11978 = vpop.f32.mrf.mxu0
        %v11979 = vpop.f32.mrf.mxu0
        %v11980 = vadd.f32 %v11864, %v11979
        %v11981 = vpop.f32.mrf.mxu0
        %11982 = vmatprep.mubr.bf16.mxu0 0
        %11983 = vmatmul.mubr.bf16.gmra.mxu0 %v11888
        %v11984 = vpop.f32.mrf.mxu0
        %v11985 = vadd.f32 %v11864, %v11984
        %v11986 = vpop.f32.mrf.mxu0
        %v11987 = vpop.f32.mrf.mxu0
        %v11988 = vadd.f32 %v11864, %v11987
        %v11989 = vpop.f32.mrf.mxu0
        %11990 = vmatprep.mubr.bf16.mxu0 0
        %11991 = vmatmul.mubr.bf16.gmra.mxu0 %v11891
        %v11992 = vpop.f32.mrf.mxu0
        %v11993 = vadd.f32 %v11864, %v11992
        %v11994 = vpop.f32.mrf.mxu0
        %v11995 = vpop.f32.mrf.mxu0
        %v11996 = vadd.f32 %v11864, %v11995
        %v11997 = vpop.f32.mrf.mxu0
        %11998 = vmatprep.mubr.bf16.mxu0 0
        %11999 = vmatmul.mubr.bf16.gmra.mxu0 %v11894
        %v12000 = vpop.f32.mrf.mxu0
        %v12001 = vadd.f32 %v11864, %v12000
        %v12002 = vpop.f32.mrf.mxu0
        %v12003 = vpop.f32.mrf.mxu0
        %v12004 = vadd.f32 %v11864, %v12003
        %v12005 = vpop.f32.mrf.mxu0
        %12006 = vmatprep.mubr.bf16.mxu0 0
        %12007 = vmatmul.mubr.bf16.gmra.mxu0 %v11897
        %v12008 = vpop.f32.mrf.mxu0
        %v12009 = vadd.f32 %v11864, %v12008
        %v12010 = vpop.f32.mrf.mxu0
        %v12011 = vpop.f32.mrf.mxu0
        %v12012 = vadd.f32 %v11864, %v12011
        %v12013 = vpop.f32.mrf.mxu0
        %12014 = vmatprep.mubr.bf16.mxu0 0
        %12015 = vmatmul.mubr.bf16.gmra.mxu0 %v11900
        %v12016 = vpop.f32.mrf.mxu0
        %v12017 = vadd.f32 %v11864, %v12016
        %v12018 = vpop.f32.mrf.mxu0
        %v12019 = vpop.f32.mrf.mxu0
        %v12020 = vadd.f32 %v11864, %v12019
        %v12021 = vpop.f32.mrf.mxu0
        %12022 = vmatprep.mubr.bf16.mxu0 0
        %12023 = vmatmul.mubr.bf16.gmra.mxu0 %v11903
        %v12024 = vpop.f32.mrf.mxu0
        %v12025 = vadd.f32 %v11864, %v12024
        %v12026 = vpop.f32.mrf.mxu0
        %v12027 = vpop.f32.mrf.mxu0
        %v12028 = vadd.f32 %v11864, %v12027
        %v12029 = vpop.f32.mrf.mxu0
        %12030 = vmatprep.mubr.bf16.mxu0 0
        %12031 = vmatmul.mubr.bf16.gmra.mxu0 %v11906
        %v12032 = vpop.f32.mrf.mxu0
        %v12033 = vadd.f32 %v11864, %v12032
        %v12034 = vpop.f32.mrf.mxu0
        %v12035 = vpop.f32.mrf.mxu0
        %v12036 = vadd.f32 %v11864, %v12035
        %v12037 = vpop.f32.mrf.mxu0
        %12038 = vmatprep.mubr.bf16.mxu0 0
        %12039 = vmatmul.mubr.bf16.gmra.mxu0 %v11909
        %v12040 = vpop.f32.mrf.mxu0
        %v12041 = vadd.f32 %v11864, %v12040
        %v12042 = vpop.f32.mrf.mxu0
        %v12043 = vpop.f32.mrf.mxu0
        %v12044 = vadd.f32 %v11864, %v12043
        %v12045 = vpop.f32.mrf.mxu0
        %12046 = vmatprep.mubr.bf16.mxu0 0
        %12047 = vmatmul.mubr.bf16.gmra.mxu0 %v11912
        %v12048 = vpop.f32.mrf.mxu0
        %v12049 = vadd.f32 %v11864, %v12048
        %v12050 = vpop.f32.mrf.mxu0
        %v12051 = vpop.f32.mrf.mxu0
        %v12052 = vadd.f32 %v11864, %v12051
        %v12053 = vpop.f32.mrf.mxu0
        %12054 = vmatprep.mubr.bf16.mxu0 0
        %12055 = vmatmul.mubr.bf16.gmra.mxu0 %v11915
        %v12056 = vpop.f32.mrf.mxu0
        %v12057 = vadd.f32 %v11864, %v12056
        %v12058 = vpop.f32.mrf.mxu0
        %v12059 = vpop.f32.mrf.mxu0
        %v12060 = vadd.f32 %v11864, %v12059
        %v12061 = vpop.f32.mrf.mxu0
        %12062 = vmatprep.mubr.bf16.mxu0 0
        %12063 = vmatmul.mubr.bf16.gmra.mxu0 %v11918
        %v12064 = vpop.f32.mrf.mxu0
        %v12065 = vadd.f32 %v11864, %v12064
        %v12066 = vpop.f32.mrf.mxu0
        %v12067 = vpop.f32.mrf.mxu0
        %v12068 = vadd.f32 %v11864, %v12067
        %v12069 = vpop.f32.mrf.mxu0
        %12070 = vmatprep.mubr.bf16.mxu0 0
        %12071 = vmatmul.mubr.bf16.gmra.mxu0 %v11921
        %v12072 = vpop.f32.mrf.mxu0
        %v12073 = vadd.f32 %v11864, %v12072
        %v12074 = vpop.f32.mrf.mxu0
        %v12075 = vpop.f32.mrf.mxu0
        %v12076 = vadd.f32 %v11864, %v12075
        %v12077 = vpop.f32.mrf.mxu0
        %12078 = vmatprep.mubr.bf16.mxu0 0
        %12079 = vmatmul.mubr.bf16.gmra.mxu0 %v11924
        %v12080 = vpop.f32.mrf.mxu0
        %v12081 = vadd.f32 %v11864, %v12080
        %v12082 = vpop.f32.mrf.mxu0
        %v12083 = vpop.f32.mrf.mxu0
        %v12084 = vadd.f32 %v11864, %v12083
        %v12085 = vpop.f32.mrf.mxu0
        %12086 = vdwg.mxu0
        %v12087 = vmul.f32 %v11961, %v11961
        %v12088 = vmul.f32 %v11964, %v11964
        %v12089 = vmul.f32 %v11969, %v11969
        %v12090 = vmul.f32 %v11972, %v11972
        %v12091 = vmul.f32 %v11977, %v11977
        %v12092 = vmul.f32 %v11980, %v11980
        %v12093 = vmul.f32 %v11985, %v11985
        %v12094 = vmul.f32 %v11988, %v11988
        %v12095 = vmul.f32 %v11993, %v11993
        %v12096 = vmul.f32 %v11996, %v11996
        %v12097 = vmul.f32 %v12001, %v12001
        %v12098 = vmul.f32 %v12004, %v12004
        %v12099 = vmul.f32 %v12009, %v12009
        %v12100 = vmul.f32 %v12012, %v12012
        %v12101 = vmul.f32 %v12017, %v12017
        %v12102 = vmul.f32 %v12020, %v12020
        %v12103 = vmul.f32 %v12025, %v12025
        %v12104 = vmul.f32 %v12028, %v12028
        %v12105 = vmul.f32 %v12033, %v12033
        %v12106 = vmul.f32 %v12036, %v12036
        %v12107 = vmul.f32 %v12041, %v12041
        %v12108 = vmul.f32 %v12044, %v12044
        %v12109 = vmul.f32 %v12049, %v12049
        %v12110 = vmul.f32 %v12052, %v12052
        %v12111 = vmul.f32 %v12057, %v12057
        %v12112 = vmul.f32 %v12060, %v12060
        %v12113 = vmul.f32 %v12065, %v12065
        %v12114 = vmul.f32 %v12068, %v12068
        %v12115 = vmul.f32 %v12073, %v12073
        %v12116 = vmul.f32 %v12076, %v12076
        %v12117 = vmul.f32 %v12081, %v12081
        %v12118 = vmul.f32 %v12084, %v12084
        %v12119 = vmul.f32 %v11961, %v12087
        %v12120 = vmul.f32 %v11964, %v12088
        %v12121 = vmul.f32 %v11969, %v12089
        %v12122 = vmul.f32 %v11972, %v12090
        %v12123 = vmul.f32 %v11977, %v12091
        %v12124 = vmul.f32 %v11980, %v12092
        %v12125 = vmul.f32 %v11985, %v12093
        %v12126 = vmul.f32 %v11988, %v12094
        %v12127 = vmul.f32 %v11993, %v12095
        %v12128 = vmul.f32 %v11996, %v12096
        %v12129 = vmul.f32 %v12001, %v12097
        %v12130 = vmul.f32 %v12004, %v12098
        %v12131 = vmul.f32 %v12009, %v12099
        %v12132 = vmul.f32 %v12012, %v12100
        %v12133 = vmul.f32 %v12017, %v12101
        %v12134 = vmul.f32 %v12020, %v12102
        %v12135 = vmul.f32 %v12025, %v12103
        %v12136 = vmul.f32 %v12028, %v12104
        %v12137 = vmul.f32 %v12033, %v12105
        %v12138 = vmul.f32 %v12036, %v12106
        %v12139 = vmul.f32 %v12041, %v12107
        %v12140 = vmul.f32 %v12044, %v12108
        %v12141 = vmul.f32 %v12049, %v12109
        %v12142 = vmul.f32 %v12052, %v12110
        %v12143 = vmul.f32 %v12057, %v12111
        %v12144 = vmul.f32 %v12060, %v12112
        %v12145 = vmul.f32 %v12065, %v12113
        %v12146 = vmul.f32 %v12068, %v12114
        %v12147 = vmul.f32 %v12073, %v12115
        %v12148 = vmul.f32 %v12076, %v12116
        %v12149 = vmul.f32 %v12081, %v12117
        %v12150 = vmul.f32 %v12084, %v12118
        %v12151 = vmul.f32 %v12119, 0.044715
        %v12152 = vmul.f32 %v12120, 0.044715
        %v12153 = vmul.f32 %v12121, 0.044715
        %v12154 = vmul.f32 %v12122, 0.044715
        %v12155 = vmul.f32 %v12123, 0.044715
        %v12156 = vmul.f32 %v12124, 0.044715
        %v12157 = vmul.f32 %v12125, 0.044715
        %v12158 = vmul.f32 %v12126, 0.044715
        %v12159 = vmul.f32 %v12127, 0.044715
        %v12160 = vmul.f32 %v12128, 0.044715
        %v12161 = vmul.f32 %v12129, 0.044715
        %v12162 = vmul.f32 %v12130, 0.044715
        %v12163 = vmul.f32 %v12131, 0.044715
        %v12164 = vmul.f32 %v12132, 0.044715
        %v12165 = vmul.f32 %v12133, 0.044715
        %v12166 = vmul.f32 %v12134, 0.044715
        %v12167 = vmul.f32 %v12135, 0.044715
        %v12168 = vmul.f32 %v12136, 0.044715
        %v12169 = vmul.f32 %v12137, 0.044715
        %v12170 = vmul.f32 %v12138, 0.044715
        %v12171 = vmul.f32 %v12139, 0.044715
        %v12172 = vmul.f32 %v12140, 0.044715
        %v12173 = vmul.f32 %v12141, 0.044715
        %v12174 = vmul.f32 %v12142, 0.044715
        %v12175 = vmul.f32 %v12143, 0.044715
        %v12176 = vmul.f32 %v12144, 0.044715
        %v12177 = vmul.f32 %v12145, 0.044715
        %v12178 = vmul.f32 %v12146, 0.044715
        %v12179 = vmul.f32 %v12147, 0.044715
        %v12180 = vmul.f32 %v12148, 0.044715
        %v12181 = vmul.f32 %v12149, 0.044715
        %v12182 = vmul.f32 %v12150, 0.044715
        %v12183 = vadd.f32 %v11961, %v12151
        %v12184 = vadd.f32 %v11964, %v12152
        %v12185 = vadd.f32 %v11969, %v12153
        %v12186 = vadd.f32 %v11972, %v12154
        %v12187 = vadd.f32 %v11977, %v12155
        %v12188 = vadd.f32 %v11980, %v12156
        %v12189 = vadd.f32 %v11985, %v12157
        %v12190 = vadd.f32 %v11988, %v12158
        %v12191 = vadd.f32 %v11993, %v12159
        %v12192 = vadd.f32 %v11996, %v12160
        %v12193 = vadd.f32 %v12001, %v12161
        %v12194 = vadd.f32 %v12004, %v12162
        %v12195 = vadd.f32 %v12009, %v12163
        %v12196 = vadd.f32 %v12012, %v12164
        %v12197 = vadd.f32 %v12017, %v12165
        %v12198 = vadd.f32 %v12020, %v12166
        %v12199 = vadd.f32 %v12025, %v12167
        %v12200 = vadd.f32 %v12028, %v12168
        %v12201 = vadd.f32 %v12033, %v12169
        %v12202 = vadd.f32 %v12036, %v12170
        %v12203 = vadd.f32 %v12041, %v12171
        %v12204 = vadd.f32 %v12044, %v12172
        %v12205 = vadd.f32 %v12049, %v12173
        %v12206 = vadd.f32 %v12052, %v12174
        %v12207 = vadd.f32 %v12057, %v12175
        %v12208 = vadd.f32 %v12060, %v12176
        %v12209 = vadd.f32 %v12065, %v12177
        %v12210 = vadd.f32 %v12068, %v12178
        %v12211 = vadd.f32 %v12073, %v12179
        %v12212 = vadd.f32 %v12076, %v12180
        %v12213 = vadd.f32 %v12081, %v12181
        %v12214 = vadd.f32 %v12084, %v12182
        %v12215 = vmul.f32 %v12183, 0.7978846
        %v12216 = vmul.f32 %v12184, 0.7978846
        %v12217 = vmul.f32 %v12185, 0.7978846
        %v12218 = vmul.f32 %v12186, 0.7978846
        %v12219 = vmul.f32 %v12187, 0.7978846
        %v12220 = vmul.f32 %v12188, 0.7978846
        %v12221 = vmul.f32 %v12189, 0.7978846
        %v12222 = vmul.f32 %v12190, 0.7978846
        %v12223 = vmul.f32 %v12191, 0.7978846
        %v12224 = vmul.f32 %v12192, 0.7978846
        %v12225 = vmul.f32 %v12193, 0.7978846
        %v12226 = vmul.f32 %v12194, 0.7978846
        %v12227 = vmul.f32 %v12195, 0.7978846
        %v12228 = vmul.f32 %v12196, 0.7978846
        %v12229 = vmul.f32 %v12197, 0.7978846
        %v12230 = vmul.f32 %v12198, 0.7978846
        %v12231 = vmul.f32 %v12199, 0.7978846
        %v12232 = vmul.f32 %v12200, 0.7978846
        %v12233 = vmul.f32 %v12201, 0.7978846
        %v12234 = vmul.f32 %v12202, 0.7978846
        %v12235 = vmul.f32 %v12203, 0.7978846
        %v12236 = vmul.f32 %v12204, 0.7978846
        %v12237 = vmul.f32 %v12205, 0.7978846
        %v12238 = vmul.f32 %v12206, 0.7978846
        %v12239 = vmul.f32 %v12207, 0.7978846
        %v12240 = vmul.f32 %v12208, 0.7978846
        %v12241 = vmul.f32 %v12209, 0.7978846
        %v12242 = vmul.f32 %v12210, 0.7978846
        %v12243 = vmul.f32 %v12211, 0.7978846
        %v12244 = vmul.f32 %v12212, 0.7978846
        %v12245 = vmul.f32 %v12213, 0.7978846
        %v12246 = vmul.f32 %v12214, 0.7978846
        %v12247 = vtanh.pop %v12215
        %v12248 = vtanh.pop %v12216
        %v12249 = vtanh.pop %v12217
        %v12250 = vtanh.pop %v12218
        %v12251 = vtanh.pop %v12219
        %v12252 = vtanh.pop %v12220
        %v12253 = vtanh.pop %v12221
        %v12254 = vtanh.pop %v12222
        %v12255 = vtanh.pop %v12223
        %v12256 = vtanh.pop %v12224
        %v12257 = vtanh.pop %v12225
        %v12258 = vtanh.pop %v12226
        %v12259 = vtanh.pop %v12227
        %v12260 = vtanh.pop %v12228
        %v12261 = vtanh.pop %v12229
        %v12262 = vtanh.pop %v12230
        %v12263 = vtanh.pop %v12231
        %v12264 = vtanh.pop %v12232
        %v12265 = vtanh.pop %v12233
        %v12266 = vtanh.pop %v12234
        %v12267 = vtanh.pop %v12235
        %v12268 = vtanh.pop %v12236
        %v12269 = vtanh.pop %v12237
        %v12270 = vtanh.pop %v12238
        %v12271 = vtanh.pop %v12239
        %v12272 = vtanh.pop %v12240
        %v12273 = vtanh.pop %v12241
        %v12274 = vtanh.pop %v12242
        %v12275 = vtanh.pop %v12243
        %v12276 = vtanh.pop %v12244
        %v12277 = vtanh.pop %v12245
        %v12278 = vtanh.pop %v12246
        %v12279 = vadd.f32 %v12247, 1.0
        %v12280 = vadd.f32 %v12248, 1.0
        %v12281 = vadd.f32 %v12249, 1.0
        %v12282 = vadd.f32 %v12250, 1.0
        %v12283 = vadd.f32 %v12251, 1.0
        %v12284 = vadd.f32 %v12252, 1.0
        %v12285 = vadd.f32 %v12253, 1.0
        %v12286 = vadd.f32 %v12254, 1.0
        %v12287 = vadd.f32 %v12255, 1.0
        %v12288 = vadd.f32 %v12256, 1.0
        %v12289 = vadd.f32 %v12257, 1.0
        %v12290 = vadd.f32 %v12258, 1.0
        %v12291 = vadd.f32 %v12259, 1.0
        %v12292 = vadd.f32 %v12260, 1.0
        %v12293 = vadd.f32 %v12261, 1.0
        %v12294 = vadd.f32 %v12262, 1.0
        %v12295 = vadd.f32 %v12263, 1.0
        %v12296 = vadd.f32 %v12264, 1.0
        %v12297 = vadd.f32 %v12265, 1.0
        %v12298 = vadd.f32 %v12266, 1.0
        %v12299 = vadd.f32 %v12267, 1.0
        %v12300 = vadd.f32 %v12268, 1.0
        %v12301 = vadd.f32 %v12269, 1.0
        %v12302 = vadd.f32 %v12270, 1.0
        %v12303 = vadd.f32 %v12271, 1.0
        %v12304 = vadd.f32 %v12272, 1.0
        %v12305 = vadd.f32 %v12273, 1.0
        %v12306 = vadd.f32 %v12274, 1.0
        %v12307 = vadd.f32 %v12275, 1.0
        %v12308 = vadd.f32 %v12276, 1.0
        %v12309 = vadd.f32 %v12277, 1.0
        %v12310 = vadd.f32 %v12278, 1.0
        %v12311 = vmul.f32 %v12279, 0.5
        %v12312 = vmul.f32 %v12280, 0.5
        %v12313 = vmul.f32 %v12281, 0.5
        %v12314 = vmul.f32 %v12282, 0.5
        %v12315 = vmul.f32 %v12283, 0.5
        %v12316 = vmul.f32 %v12284, 0.5
        %v12317 = vmul.f32 %v12285, 0.5
        %v12318 = vmul.f32 %v12286, 0.5
        %v12319 = vmul.f32 %v12287, 0.5
        %v12320 = vmul.f32 %v12288, 0.5
        %v12321 = vmul.f32 %v12289, 0.5
        %v12322 = vmul.f32 %v12290, 0.5
        %v12323 = vmul.f32 %v12291, 0.5
        %v12324 = vmul.f32 %v12292, 0.5
        %v12325 = vmul.f32 %v12293, 0.5
        %v12326 = vmul.f32 %v12294, 0.5
        %v12327 = vmul.f32 %v12295, 0.5
        %v12328 = vmul.f32 %v12296, 0.5
        %v12329 = vmul.f32 %v12297, 0.5
        %v12330 = vmul.f32 %v12298, 0.5
        %v12331 = vmul.f32 %v12299, 0.5
        %v12332 = vmul.f32 %v12300, 0.5
        %v12333 = vmul.f32 %v12301, 0.5
        %v12334 = vmul.f32 %v12302, 0.5
        %v12335 = vmul.f32 %v12303, 0.5
        %v12336 = vmul.f32 %v12304, 0.5
        %v12337 = vmul.f32 %v12305, 0.5
        %v12338 = vmul.f32 %v12306, 0.5
        %v12339 = vmul.f32 %v12307, 0.5
        %v12340 = vmul.f32 %v12308, 0.5
        %v12341 = vmul.f32 %v12309, 0.5
        %v12342 = vmul.f32 %v12310, 0.5
        %v12343 = vmul.f32 %v11961, %v12311
        %v12344 = vmul.f32 %v11964, %v12312
        %v12345 = vmul.f32 %v11969, %v12313
        %v12346 = vmul.f32 %v11972, %v12314
        %v12347 = vmul.f32 %v11977, %v12315
        %v12348 = vmul.f32 %v11980, %v12316
        %v12349 = vmul.f32 %v11985, %v12317
        %v12350 = vmul.f32 %v11988, %v12318
        %v12351 = vmul.f32 %v11993, %v12319
        %v12352 = vmul.f32 %v11996, %v12320
        %v12353 = vmul.f32 %v12001, %v12321
        %v12354 = vmul.f32 %v12004, %v12322
        %v12355 = vmul.f32 %v12009, %v12323
        %v12356 = vmul.f32 %v12012, %v12324
        %v12357 = vmul.f32 %v12017, %v12325
        %v12358 = vmul.f32 %v12020, %v12326
        %v12359 = vmul.f32 %v12025, %v12327
        %v12360 = vmul.f32 %v12028, %v12328
        %v12361 = vmul.f32 %v12033, %v12329
        %v12362 = vmul.f32 %v12036, %v12330
        %v12363 = vmul.f32 %v12041, %v12331
        %v12364 = vmul.f32 %v12044, %v12332
        %v12365 = vmul.f32 %v12049, %v12333
        %v12366 = vmul.f32 %v12052, %v12334
        %v12367 = vmul.f32 %v12057, %v12335
        %v12368 = vmul.f32 %v12060, %v12336
        %v12369 = vmul.f32 %v12065, %v12337
        %v12370 = vmul.f32 %v12068, %v12338
        %v12371 = vmul.f32 %v12073, %v12339
        %v12372 = vmul.f32 %v12076, %v12340
        %v12373 = vmul.f32 %v12081, %v12341
        %v12374 = vmul.f32 %v12084, %v12342
        %v12375 = vpack.c.bf16 %v12344, %v12343
        %v12376 = vpack.c.bf16 %v12346, %v12345
        %v12377 = vpack.c.bf16 %v12348, %v12347
        %v12378 = vpack.c.bf16 %v12350, %v12349
        %v12379 = vpack.c.bf16 %v12352, %v12351
        %v12380 = vpack.c.bf16 %v12354, %v12353
        %v12381 = vpack.c.bf16 %v12356, %v12355
        %v12382 = vpack.c.bf16 %v12358, %v12357
        %v12383 = vpack.c.bf16 %v12360, %v12359
        %v12384 = vpack.c.bf16 %v12362, %v12361
        %v12385 = vpack.c.bf16 %v12364, %v12363
        %v12386 = vpack.c.bf16 %v12366, %v12365
        %v12387 = vpack.c.bf16 %v12368, %v12367
        %v12388 = vpack.c.bf16 %v12370, %v12369
        %v12389 = vpack.c.bf16 %v12372, %v12371
        %v12390 = vpack.c.bf16 %v12374, %v12373
        %v12391 = vld [vmem:[%s7] sm:$0xf]
        %v12392 = vld [vmem:[%s7 + $0x4] sm:$0xf]
        %v12393 = vld [vmem:[%s7 + $0x8] sm:$0xf]
        %v12394 = vld [vmem:[%s7 + $0xc] sm:$0xf]
        %v12395 = vld [vmem:[%s7 + $0x10] sm:$0xf]
        %v12396 = vld [vmem:[%s7 + $0x14] sm:$0xf]
        %v12397 = vld [vmem:[%s7 + $0x18] sm:$0xf]
        %v12398 = vld [vmem:[%s7 + $0x1c] sm:$0xf]
        %v12399 = vld [vmem:[%s7 + $0x20] sm:$0xf]
        %v12400 = vld [vmem:[%s7 + $0x24] sm:$0xf]
        %v12401 = vld [vmem:[%s7 + $0x28] sm:$0xf]
        %v12402 = vld [vmem:[%s7 + $0x2c] sm:$0xf]
        %v12403 = vld [vmem:[%s7 + $0x30] sm:$0xf]
        %v12404 = vld [vmem:[%s7 + $0x34] sm:$0xf]
        %v12405 = vld [vmem:[%s7 + $0x38] sm:$0xf]
        %v12406 = vld [vmem:[%s7 + $0x3c] sm:$0xf]
        %v12407 = vld [vmem:[%s8] sm:$0x1]
        %v12409 = vlaneseq
        %v12410 = vshrl.u32 %v12409, 7
        %v12411 = vsub.s32 0, %v12410
        %v12412 = vrot.slane %v12407, %v12411
        %v12430 = vunpack.c.l.b16 %v12391
        %v12431 = vunpack.c.l.b16 %v12392
        %v12432 = vunpack.c.l.b16 %v12393
        %v12433 = vunpack.c.l.b16 %v12394
        %v12434 = vunpack.c.l.b16 %v12395
        %v12435 = vunpack.c.l.b16 %v12396
        %v12436 = vunpack.c.l.b16 %v12397
        %v12437 = vunpack.c.l.b16 %v12398
        %v12438 = vunpack.c.l.b16 %v12399
        %v12439 = vunpack.c.l.b16 %v12400
        %v12440 = vunpack.c.l.b16 %v12401
        %v12441 = vunpack.c.l.b16 %v12402
        %v12442 = vunpack.c.l.b16 %v12403
        %v12443 = vunpack.c.l.b16 %v12404
        %v12444 = vunpack.c.l.b16 %v12405
        %v12445 = vunpack.c.l.b16 %v12406
        %v12446 = vpack.c.b16 %v12431, %v12430
        %v12447 = vpack.c.b16 %v12433, %v12432
        %v12448 = vpack.c.b16 %v12435, %v12434
        %v12449 = vpack.c.b16 %v12437, %v12436
        %v12450 = vpack.c.b16 %v12439, %v12438
        %v12451 = vpack.c.b16 %v12441, %v12440
        %v12452 = vpack.c.b16 %v12443, %v12442
        %v12453 = vpack.c.b16 %v12445, %v12444
        %12462 = vmatprep.subr.bf16.mxu0 0
        %12463 = vmatpush1.bf16.msra.mxu0 %v12453
        %12464 = vmatprep.subr.bf16.mxu0 0
        %12465 = vmatpush1.bf16.msra.mxu0 %v12452
        %12466 = vmatprep.subr.bf16.mxu0 0
        %12467 = vmatpush1.bf16.msra.mxu0 %v12451
        %12468 = vmatprep.subr.bf16.mxu0 0
        %12469 = vmatpush1.bf16.msra.mxu0 %v12450
        %12470 = vmatprep.subr.bf16.mxu0 0
        %12471 = vmatpush1.bf16.msra.mxu0 %v12449
        %12472 = vmatprep.subr.bf16.mxu0 0
        %12473 = vmatpush1.bf16.msra.mxu0 %v12448
        %12474 = vmatprep.subr.bf16.mxu0 0
        %12475 = vmatpush1.bf16.msra.mxu0 %v12447
        %12476 = vmatprep.subr.bf16.mxu0 0
        %12477 = vmatpush1.bf16.msra.mxu0 %v12446
        %12478 = vmatprep.subr.bf16.mxu0 0
        %12479 = vmatpush2.bf16.msra.mxu0 0
        %12480 = vmatprep.subr.bf16.mxu0 0
        %12481 = vmatpush2.bf16.msra.mxu0 0
        %12482 = vmatprep.subr.bf16.mxu0 0
        %12483 = vmatpush2.bf16.msra.mxu0 0
        %12484 = vmatprep.subr.bf16.mxu0 0
        %12485 = vmatpush2.bf16.msra.mxu0 0
        %12486 = vmatprep.subr.bf16.mxu0 0
        %12487 = vmatpush2.bf16.msra.mxu0 0
        %12488 = vmatprep.subr.bf16.mxu0 0
        %12489 = vmatpush2.bf16.msra.mxu0 0
        %12490 = vmatprep.subr.bf16.mxu0 0
        %12491 = vmatpush2.bf16.msra.mxu0 0
        %12492 = vmatprep.subr.bf16.mxu0 0
        %12493 = vmatpush2.bf16.msra.mxu0 0
        %12494 = vmatprep.mubr.bf16.mxu0 0
        %12495 = vmatmul.mubr.bf16.gmra.mxu0 %v12375
        %v12496 = vpop.f32.mrf.mxu0
        %v12497 = vadd.f32 %v12412, %v12496
        %v12498 = vpop.f32.mrf.mxu0
        %v12499 = vpop.f32.mrf.mxu0
        %v12500 = vadd.f32 %v12412, %v12499
        %v12501 = vpop.f32.mrf.mxu0
        %12502 = vmatprep.mubr.bf16.mxu0 0
        %12503 = vmatmul.mubr.bf16.gmra.mxu0 %v12376
        %v12504 = vpop.f32.mrf.mxu0
        %v12505 = vadd.f32 %v12412, %v12504
        %v12506 = vpop.f32.mrf.mxu0
        %v12507 = vpop.f32.mrf.mxu0
        %v12508 = vadd.f32 %v12412, %v12507
        %v12509 = vpop.f32.mrf.mxu0
        %12510 = vmatprep.mubr.bf16.mxu0 0
        %12511 = vmatmul.mubr.bf16.gmra.mxu0 %v12377
        %v12512 = vpop.f32.mrf.mxu0
        %v12513 = vadd.f32 %v12412, %v12512
        %v12514 = vpop.f32.mrf.mxu0
        %v12515 = vpop.f32.mrf.mxu0
        %v12516 = vadd.f32 %v12412, %v12515
        %v12517 = vpop.f32.mrf.mxu0
        %12518 = vmatprep.mubr.bf16.mxu0 0
        %12519 = vmatmul.mubr.bf16.gmra.mxu0 %v12378
        %v12520 = vpop.f32.mrf.mxu0
        %v12521 = vadd.f32 %v12412, %v12520
        %v12522 = vpop.f32.mrf.mxu0
        %v12523 = vpop.f32.mrf.mxu0
        %v12524 = vadd.f32 %v12412, %v12523
        %v12525 = vpop.f32.mrf.mxu0
        %12526 = vmatprep.mubr.bf16.mxu0 0
        %12527 = vmatmul.mubr.bf16.gmra.mxu0 %v12379
        %v12528 = vpop.f32.mrf.mxu0
        %v12529 = vadd.f32 %v12412, %v12528
        %v12530 = vpop.f32.mrf.mxu0
        %v12531 = vpop.f32.mrf.mxu0
        %v12532 = vadd.f32 %v12412, %v12531
        %v12533 = vpop.f32.mrf.mxu0
        %12534 = vmatprep.mubr.bf16.mxu0 0
        %12535 = vmatmul.mubr.bf16.gmra.mxu0 %v12380
        %v12536 = vpop.f32.mrf.mxu0
        %v12537 = vadd.f32 %v12412, %v12536
        %v12538 = vpop.f32.mrf.mxu0
        %v12539 = vpop.f32.mrf.mxu0
        %v12540 = vadd.f32 %v12412, %v12539
        %v12541 = vpop.f32.mrf.mxu0
        %12542 = vmatprep.mubr.bf16.mxu0 0
        %12543 = vmatmul.mubr.bf16.gmra.mxu0 %v12381
        %v12544 = vpop.f32.mrf.mxu0
        %v12545 = vadd.f32 %v12412, %v12544
        %v12546 = vpop.f32.mrf.mxu0
        %v12547 = vpop.f32.mrf.mxu0
        %v12548 = vadd.f32 %v12412, %v12547
        %v12549 = vpop.f32.mrf.mxu0
        %12550 = vmatprep.mubr.bf16.mxu0 0
        %12551 = vmatmul.mubr.bf16.gmra.mxu0 %v12382
        %v12552 = vpop.f32.mrf.mxu0
        %v12553 = vadd.f32 %v12412, %v12552
        %v12554 = vpop.f32.mrf.mxu0
        %v12555 = vpop.f32.mrf.mxu0
        %v12556 = vadd.f32 %v12412, %v12555
        %v12557 = vpop.f32.mrf.mxu0
        %12558 = vmatprep.mubr.bf16.mxu0 0
        %12559 = vmatmul.mubr.bf16.gmra.mxu0 %v12383
        %v12560 = vpop.f32.mrf.mxu0
        %v12561 = vadd.f32 %v12412, %v12560
        %v12562 = vpop.f32.mrf.mxu0
        %v12563 = vpop.f32.mrf.mxu0
        %v12564 = vadd.f32 %v12412, %v12563
        %v12565 = vpop.f32.mrf.mxu0
        %12566 = vmatprep.mubr.bf16.mxu0 0
        %12567 = vmatmul.mubr.bf16.gmra.mxu0 %v12384
        %v12568 = vpop.f32.mrf.mxu0
        %v12569 = vadd.f32 %v12412, %v12568
        %v12570 = vpop.f32.mrf.mxu0
        %v12571 = vpop.f32.mrf.mxu0
        %v12572 = vadd.f32 %v12412, %v12571
        %v12573 = vpop.f32.mrf.mxu0
        %12574 = vmatprep.mubr.bf16.mxu0 0
        %12575 = vmatmul.mubr.bf16.gmra.mxu0 %v12385
        %v12576 = vpop.f32.mrf.mxu0
        %v12577 = vadd.f32 %v12412, %v12576
        %v12578 = vpop.f32.mrf.mxu0
        %v12579 = vpop.f32.mrf.mxu0
        %v12580 = vadd.f32 %v12412, %v12579
        %v12581 = vpop.f32.mrf.mxu0
        %12582 = vmatprep.mubr.bf16.mxu0 0
        %12583 = vmatmul.mubr.bf16.gmra.mxu0 %v12386
        %v12584 = vpop.f32.mrf.mxu0
        %v12585 = vadd.f32 %v12412, %v12584
        %v12586 = vpop.f32.mrf.mxu0
        %v12587 = vpop.f32.mrf.mxu0
        %v12588 = vadd.f32 %v12412, %v12587
        %v12589 = vpop.f32.mrf.mxu0
        %12590 = vmatprep.mubr.bf16.mxu0 0
        %12591 = vmatmul.mubr.bf16.gmra.mxu0 %v12387
        %v12592 = vpop.f32.mrf.mxu0
        %v12593 = vadd.f32 %v12412, %v12592
        %v12594 = vpop.f32.mrf.mxu0
        %v12595 = vpop.f32.mrf.mxu0
        %v12596 = vadd.f32 %v12412, %v12595
        %v12597 = vpop.f32.mrf.mxu0
        %12598 = vmatprep.mubr.bf16.mxu0 0
        %12599 = vmatmul.mubr.bf16.gmra.mxu0 %v12388
        %v12600 = vpop.f32.mrf.mxu0
        %v12601 = vadd.f32 %v12412, %v12600
        %v12602 = vpop.f32.mrf.mxu0
        %v12603 = vpop.f32.mrf.mxu0
        %v12604 = vadd.f32 %v12412, %v12603
        %v12605 = vpop.f32.mrf.mxu0
        %12606 = vmatprep.mubr.bf16.mxu0 0
        %12607 = vmatmul.mubr.bf16.gmra.mxu0 %v12389
        %v12608 = vpop.f32.mrf.mxu0
        %v12609 = vadd.f32 %v12412, %v12608
        %v12610 = vpop.f32.mrf.mxu0
        %v12611 = vpop.f32.mrf.mxu0
        %v12612 = vadd.f32 %v12412, %v12611
        %v12613 = vpop.f32.mrf.mxu0
        %12614 = vmatprep.mubr.bf16.mxu0 0
        %12615 = vmatmul.mubr.bf16.gmra.mxu0 %v12390
        %v12616 = vpop.f32.mrf.mxu0
        %v12617 = vadd.f32 %v12412, %v12616
        %v12618 = vpop.f32.mrf.mxu0
        %v12619 = vpop.f32.mrf.mxu0
        %v12620 = vadd.f32 %v12412, %v12619
        %v12621 = vpop.f32.mrf.mxu0
        %12622 = vdwg.mxu0
        %v12623 = vld [vmem:[%s316] sm:$0xff]
        %v12624 = vld [vmem:[%s316 + $0x8] sm:$0xff]
        %v12625 = vld [vmem:[%s316 + $0x10] sm:$0xff]
        %v12626 = vld [vmem:[%s316 + $0x18] sm:$0xff]
        %v12627 = vld [vmem:[%s316 + $0x20] sm:$0xff]
        %v12628 = vld [vmem:[%s316 + $0x28] sm:$0xff]
        %v12629 = vld [vmem:[%s316 + $0x30] sm:$0xff]
        %v12630 = vld [vmem:[%s316 + $0x38] sm:$0xff]
        %v12631 = vld [vmem:[%s316 + $0x40] sm:$0xff]
        %v12632 = vld [vmem:[%s316 + $0x48] sm:$0xff]
        %v12633 = vld [vmem:[%s316 + $0x50] sm:$0xff]
        %v12634 = vld [vmem:[%s316 + $0x58] sm:$0xff]
        %v12635 = vld [vmem:[%s316 + $0x60] sm:$0xff]
        %v12636 = vld [vmem:[%s316 + $0x68] sm:$0xff]
        %v12637 = vld [vmem:[%s316 + $0x70] sm:$0xff]
        %v12638 = vld [vmem:[%s316 + $0x78] sm:$0xff]
        %v12639 = vld [vmem:[%s316 + $0x80] sm:$0xff]
        %v12640 = vld [vmem:[%s316 + $0x88] sm:$0xff]
        %v12641 = vld [vmem:[%s316 + $0x90] sm:$0xff]
        %v12642 = vld [vmem:[%s316 + $0x98] sm:$0xff]
        %v12643 = vld [vmem:[%s316 + $0xa0] sm:$0xff]
        %v12644 = vld [vmem:[%s316 + $0xa8] sm:$0xff]
        %v12645 = vld [vmem:[%s316 + $0xb0] sm:$0xff]
        %v12646 = vld [vmem:[%s316 + $0xb8] sm:$0xff]
        %v12647 = vld [vmem:[%s316 + $0xc0] sm:$0xff]
        %v12648 = vld [vmem:[%s316 + $0xc8] sm:$0xff]
        %v12649 = vld [vmem:[%s316 + $0xd0] sm:$0xff]
        %v12650 = vld [vmem:[%s316 + $0xd8] sm:$0xff]
        %v12651 = vld [vmem:[%s316 + $0xe0] sm:$0xff]
        %v12652 = vld [vmem:[%s316 + $0xe8] sm:$0xff]
        %v12653 = vld [vmem:[%s316 + $0xf0] sm:$0xff]
        %v12654 = vld [vmem:[%s316 + $0xf8] sm:$0xff]
        %v12655 = vadd.f32 %v12623, %v12497
        %v12656 = vadd.f32 %v12624, %v12500
        %v12657 = vadd.f32 %v12625, %v12505
        %v12658 = vadd.f32 %v12626, %v12508
        %v12659 = vadd.f32 %v12627, %v12513
        %v12660 = vadd.f32 %v12628, %v12516
        %v12661 = vadd.f32 %v12629, %v12521
        %v12662 = vadd.f32 %v12630, %v12524
        %v12663 = vadd.f32 %v12631, %v12529
        %v12664 = vadd.f32 %v12632, %v12532
        %v12665 = vadd.f32 %v12633, %v12537
        %v12666 = vadd.f32 %v12634, %v12540
        %v12667 = vadd.f32 %v12635, %v12545
        %v12668 = vadd.f32 %v12636, %v12548
        %v12669 = vadd.f32 %v12637, %v12553
        %v12670 = vadd.f32 %v12638, %v12556
        %v12671 = vadd.f32 %v12639, %v12561
        %v12672 = vadd.f32 %v12640, %v12564
        %v12673 = vadd.f32 %v12641, %v12569
        %v12674 = vadd.f32 %v12642, %v12572
        %v12675 = vadd.f32 %v12643, %v12577
        %v12676 = vadd.f32 %v12644, %v12580
        %v12677 = vadd.f32 %v12645, %v12585
        %v12678 = vadd.f32 %v12646, %v12588
        %v12679 = vadd.f32 %v12647, %v12593
        %v12680 = vadd.f32 %v12648, %v12596
        %v12681 = vadd.f32 %v12649, %v12601
        %v12682 = vadd.f32 %v12650, %v12604
        %v12683 = vadd.f32 %v12651, %v12609
        %v12684 = vadd.f32 %v12652, %v12612
        %v12685 = vadd.f32 %v12653, %v12617
        %v12686 = vadd.f32 %v12654, %v12620
        %12687 = vst.msk [vmem:[%s350] sm:$0xff] %vm352, %v12655
        %12688 = vst.msk [vmem:[%s350 + $0x8] sm:$0xff] %vm352, %v12656
        %12689 = vst.msk [vmem:[%s350 + $0x10] sm:$0xff] %vm352, %v12657
        %12690 = vst.msk [vmem:[%s350 + $0x18] sm:$0xff] %vm352, %v12658
        %12691 = vst.msk [vmem:[%s350 + $0x20] sm:$0xff] %vm352, %v12659
        %12692 = vst.msk [vmem:[%s350 + $0x28] sm:$0xff] %vm352, %v12660
        %12693 = vst.msk [vmem:[%s350 + $0x30] sm:$0xff] %vm352, %v12661
        %12694 = vst.msk [vmem:[%s350 + $0x38] sm:$0xff] %vm352, %v12662
        %12695 = vst.msk [vmem:[%s350 + $0x40] sm:$0xff] %vm352, %v12663
        %12696 = vst.msk [vmem:[%s350 + $0x48] sm:$0xff] %vm352, %v12664
        %12697 = vst.msk [vmem:[%s350 + $0x50] sm:$0xff] %vm352, %v12665
        %12698 = vst.msk [vmem:[%s350 + $0x58] sm:$0xff] %vm352, %v12666
        %12699 = vst.msk [vmem:[%s350 + $0x60] sm:$0xff] %vm352, %v12667
        %12700 = vst.msk [vmem:[%s350 + $0x68] sm:$0xff] %vm352, %v12668
        %12701 = vst.msk [vmem:[%s350 + $0x70] sm:$0xff] %vm352, %v12669
        %12702 = vst.msk [vmem:[%s350 + $0x78] sm:$0xff] %vm352, %v12670
        %12703 = vst.msk [vmem:[%s350 + $0x80] sm:$0xff] %vm352, %v12671
        %12704 = vst.msk [vmem:[%s350 + $0x88] sm:$0xff] %vm352, %v12672
        %12705 = vst.msk [vmem:[%s350 + $0x90] sm:$0xff] %vm352, %v12673
        %12706 = vst.msk [vmem:[%s350 + $0x98] sm:$0xff] %vm352, %v12674
        %12707 = vst.msk [vmem:[%s350 + $0xa0] sm:$0xff] %vm352, %v12675
        %12708 = vst.msk [vmem:[%s350 + $0xa8] sm:$0xff] %vm352, %v12676
        %12709 = vst.msk [vmem:[%s350 + $0xb0] sm:$0xff] %vm352, %v12677
        %12710 = vst.msk [vmem:[%s350 + $0xb8] sm:$0xff] %vm352, %v12678
        %12711 = vst.msk [vmem:[%s350 + $0xc0] sm:$0xff] %vm352, %v12679
        %12712 = vst.msk [vmem:[%s350 + $0xc8] sm:$0xff] %vm352, %v12680
        %12713 = vst.msk [vmem:[%s350 + $0xd0] sm:$0xff] %vm352, %v12681
        %12714 = vst.msk [vmem:[%s350 + $0xd8] sm:$0xff] %vm352, %v12682
        %12715 = vst.msk [vmem:[%s350 + $0xe0] sm:$0xff] %vm352, %v12683
        %12716 = vst.msk [vmem:[%s350 + $0xe8] sm:$0xff] %vm352, %v12684
        %12717 = vst.msk [vmem:[%s350 + $0xf0] sm:$0xff] %vm352, %v12685
        %12718 = vst.msk [vmem:[%s350 + $0xf8] sm:$0xff] %vm352, %v12686
        %s12719 = sand.u32 %s228, 1
        %s12720 = scalar_lea.sflag [#allocation5], %s12719
        %s12721 = sand.u32 %s228, 1
        %s12722 = smul.addr %s12721, 256
        %s12723 = scalar_lea.vmem [#allocation6], %s12722
        // Predicated region
        $region61: #{tpu_custom_call.1} parent=55 // pred_check
          %p12724 = pneg %p238
        $region62: #{tpu_custom_call.1} parent=55 // pred_check_branch
          %12726 = sbr.rel (%p12724) target = $region64
        $region63: #{tpu_custom_call.1} parent=55 // pred_region
          %s12728 = ssub.s32 4096, 4096
          %12729 = vsyncadd %s12720, %s12728
          %s12730 = smul.addr %s26, 32
          %s12731 = smul.addr %s12730, 128
          %s12732 = scalar_lea.hbm %s9, %s12731
          %s12733 = sshll.u32 %s12723, 4
          %s12734 = int_to_ptr.vmem [resolvable:$true] %s12733
          %12739 = dma.vmem_to_hbm [thread:$0]  %s12734, 4096, %s12732, %s12720, 128, 128, 8
        $region64: #{tpu_custom_call.1} parent=55 // pred_fallthru
          _
      $region56: #{tpu_custom_call.1} parent=5 // pred_fallthru
        _
      %p12740 = scmp.le.s32.totalorder 2, %s21
      // Predicated region
      $region65: #{tpu_custom_call.1} parent=5 // pred_check
        %p12741 = pneg %p12740
      $region66: #{tpu_custom_call.1} parent=5 // pred_check_branch
        %12743 = sbr.rel (%p12741) target = $region68
      $region67: #{tpu_custom_call.1} parent=5 // pred_region
        %s12744 = ssub.s32 %s21, 2
        // Predicated region
        $region69: #{tpu_custom_call.1} parent=67 // pred_check
          %p12745 = pneg %p244
        $region70: #{tpu_custom_call.1} parent=67 // pred_check_branch
          %12747 = sbr.rel (%p12745) target = $region72
        $region71: #{tpu_custom_call.1} parent=67 // pred_region
          %s12748 = sand.u32 %s229, 1
          %s12749 = scalar_lea.sflag [#allocation5], %s12748
          %s12750 = sand.u32 %s229, 1
          %s12751 = smul.addr %s12750, 256
          %s12752 = scalar_lea.vmem [#allocation6], %s12751
          %12753 = dma.done %s12749, 4096
        $region72: #{tpu_custom_call.1} parent=67 // pred_fallthru
          _
      $region68: #{tpu_custom_call.1} parent=5 // pred_fallthru
        _
    $region6: #{tpu_custom_call.1} parent=1 // loop_footer
      %s25 = sadd.s32 1, %s21
    $region7: #{tpu_custom_call.1} parent=1 // loop_footer_branch
      %20 = sbr.rel target = $region3
    $region8: #{tpu_custom_call.1} parent=1 // loop_exit
      _
    %12754 = vsyncpa [#allocation4], 1
    %s12755 = scalar_lea.sflag [#allocation4], 1
    %12756 = vsyncpa %s12755, 1
    %12757 = vsyncpa [#allocation5], 1
    %s12758 = scalar_lea.sflag [#allocation5], 1
    %12759 = vsyncpa %s12758, 1

</llo_original>
